<compile_context>
chip_gen: v5e
topology: v5e:2x2
jax: 0.10.0
libtpu: 0.0.40
codegen_flags: <defaults>
</compile_context>

<pallas_src>
import functools

import jax
import jax.numpy as jnp
from jax.experimental import pallas as pl
from jax.experimental.pallas import tpu as pltpu

COMPUTE_DTYPE = jnp.bfloat16  # analog of torch float16 on TPU
PADL = 16                     # left pad in activation scratches (bf16 sublane pack)


def _rmvpe_kernel(x_ref, w1_ref, b1_ref, w2_ref, b2_ref, w3_ref, b3_ref,
                  o_ref, a1_ref, a2_ref, *, th, w, h):
    dt = a1_ref.dtype
    r1, r2 = th + 4, th + 2            # rows produced by layer 1 / layer 2
    tile = pl.program_id(1)            # row-tile index inside the image
    g0 = tile * th                     # global row of output row 0
    c0 = PADL - 1                      # column of the left conv zero-pad

    def row_mask(y, rows, first_row):
        # Inter-layer SAME zero padding: halo rows outside [0, H) must be
        # exactly zero (not conv-of-zeros + bias).  Cheap VPU work; kept
        # unconditional so the kernel is correct under any megacore split.
        gid = jax.lax.broadcasted_iota(jnp.int32, (rows, 1, 1), 0) + first_row
        return jnp.where((gid >= 0) & (gid < h), y, 0.0)

    def store_act(a_ref, y, rows):
        zcol = jnp.zeros((rows, 1, 32), dt)
        a_ref[:, c0:c0 + 1, :] = zcol                 # left conv zero column
        a_ref[:, PADL + w:PADL + w + 1, :] = zcol     # right conv zero column
        a_ref[:, PADL:PADL + w, :] = y.astype(dt)     # aligned interior store

    # ---- layer 1: Conv2d(1, 32, 3, p=1) + ReLU  (VPU, 9 shift-MACs) ----------
    xv = x_ref[0]                                     # (th+6, w+2, 32) bf16
    acc = None
    for k in range(9):
        dh, dw = divmod(k, 3)
        term = xv[dh:dh + r1, dw:dw + w, :] * w1_ref[k]      # f32 promote
        acc = term if acc is None else acc + term
    y = row_mask(jnp.maximum(acc + b1_ref[...], 0.0), r1, g0 - 2)
    store_act(a1_ref, y, r1)

    # ---- layer 2: Conv2d(32, 32, 3, p=1) + ReLU  (MXU, fused K=288 im2col) ---
    a1 = a1_ref[...]
    taps = [a1[dh:dh + r2, c0 + dw:c0 + dw + w, :]
            for dh in range(3) for dw in range(3)]
    patch = jnp.concatenate(taps, axis=-1).reshape(r2 * w, 9 * 32)   # bf16
    y = jnp.dot(patch, w2_ref[...], preferred_element_type=jnp.float32)
    y = jnp.maximum(y + b2_ref[...], 0.0).reshape(r2, w, 32)
    store_act(a2_ref, row_mask(y, r2, g0 - 1), r2)

    # ---- layer 3: Conv2d(32, 1, 3, p=1)  (VPU, 9 shift-MACs + lane reduce) ---
    a2 = a2_ref[...]
    acc = None
    for k in range(9):
        dh, dw = divmod(k, 3)
        term = a2[dh:dh + th, c0 + dw:c0 + dw + w, :] * w3_ref[k]
        acc = term if acc is None else acc + term
    y = acc.sum(axis=-1) + b3_ref[0, 0]               # (th, w) lane-dense
    o_ref[0] = y.astype(o_ref.dtype)


def _ceil_to(x, m):
    return -(-x // m) * m


def _tile_vmem_bytes(th, w, itemsize):
    """Byte-accurate per-step VMEM estimate (incl. 128-lane padding + f32 temps)."""
    lane = 128
    sp = 8 * max(1, 4 // itemsize)            # sublane pack: 8 (f32) / 16 (bf16)
    r1, r2 = th + 4, th + 2
    scr_w = _ceil_to(PADL + w + 1, sp)
    b = 0
    b += r1 * scr_w * lane * itemsize                          # a1 scratch
    b += r2 * scr_w * lane * itemsize                          # a2 scratch
    b += 2 * (th + 6) * _ceil_to(w + 2, sp) * lane * itemsize  # input (2 bufs)
    b += 2 * _ceil_to(th, sp) * _ceil_to(w, lane) * itemsize   # output (2 bufs)
    b += r2 * _ceil_to(w, sp) * _ceil_to(9 * 32, lane) * itemsize  # im2col patch
    b += r2 * _ceil_to(w, 8) * lane * 4                        # layer-2 f32 out
    b += r1 * _ceil_to(w, 8) * lane * 4                        # layer-1 f32 acc
    b += th * _ceil_to(w, 8) * lane * 4                        # layer-3 f32 acc
    b += 512 * 1024                                            # weights + slack
    return b


def _vmem_budget_bytes():
    cap = 64 * 1024 * 1024                     # conservative default (v7x)
    try:
        cap = int(pltpu.get_tpu_info().vmem_capacity_bytes)
    except Exception:
        pass
    return min(48 * 1024 * 1024, int(cap * 0.65))


def _pick_tile_rows(h, w, itemsize, budget_bytes):
    target = int(budget_bytes * 0.75)
    th = 8
    for cand in range(8, 257, 8):              # >=128 amortizes the 6-row halo
        if _tile_vmem_bytes(cand, w, itemsize) <= target:
            th = cand
    return min(th, max(int(h), 1))


def rmvpe_forward(x_nchw, params, is_half=True, tile_rows=None):
    """Equivalent of RMVPE.forward: x (N,1,H,W) -> (N,1,H,W)."""
    w1, b1, w2, b2, w3, b3 = params
    dt = COMPUTE_DTYPE if is_half else jnp.float32

    n, c, h, w = x_nchw.shape
    assert c == 1, "RMVPE model expects a single input channel"

    # ---- weights pre-reshaped (wrapper-side) -------------------------------
    w1v = w1[:, :, 0, :].reshape(9, 1, 32).astype(jnp.float32)   # per-tap rows
    w2m = w2.reshape(9 * 32, 32).astype(dt)                      # fused-K im2col
    w3v = w3[:, :, :, 0].reshape(9, 1, 32).astype(jnp.float32)
    b1f = b1.reshape(1, 32).astype(jnp.float32)
    b2f = b2.reshape(1, 32).astype(jnp.float32)
    b3f = b3.reshape(1, 1).astype(jnp.float32)

    # ---- row tiling with a 3-row halo per side (3 stacked 3x3 convs) --------
    budget = _vmem_budget_bytes()
    itemsize = jnp.dtype(dt).itemsize
    if tile_rows is None:
        th = _pick_tile_rows(h, w, itemsize, budget)
    else:
        th = h if h <= tile_rows else max(8, int(tile_rows) // 8 * 8)
    n_tiles = -(-h // th)
    h_pad = n_tiles * th

    x = x_nchw[:, 0, :, :].astype(dt)                              # (N, H, W)
    x_p = jnp.pad(x, ((0, 0), (3, h_pad - h + 3), (1, 1)))         # halo + conv pad
    x_win = jnp.stack([x_p[:, i * th:i * th + th + 6, :]
                       for i in range(n_tiles)], axis=1)           # (N,nT,TH+6,W+2)
    x_win = x_win.reshape(n * n_tiles, th + 6, w + 2)
    # Channel-last replication (layout plumbing for the VPU layer-1 path; the
    # VMEM input block is 128-lane padded either way, see header comment).
    x_rep = jnp.broadcast_to(x_win[..., None],
                             (n * n_tiles, th + 6, w + 2, 32))

    kernel = functools.partial(_rmvpe_kernel, th=th, w=w, h=h)

    out = pl.pallas_call(
        kernel,
        out_shape=jax.ShapeDtypeStruct((n * n_tiles, th, w), dt),
        grid=(n, n_tiles),
        in_specs=[
            pl.BlockSpec((1, th + 6, w + 2, 32),
                         lambda b, t: (b * n_tiles + t, 0, 0, 0)),
            pl.BlockSpec((9, 1, 32), lambda b, t: (0, 0, 0)),     # w1 taps
            pl.BlockSpec((1, 32), lambda b, t: (0, 0)),           # b1
            pl.BlockSpec((9 * 32, 32), lambda b, t: (0, 0)),      # w2 (im2col)
            pl.BlockSpec((1, 32), lambda b, t: (0, 0)),           # b2
            pl.BlockSpec((9, 1, 32), lambda b, t: (0, 0, 0)),     # w3 taps
            pl.BlockSpec(memory_space=pltpu.MemorySpace.SMEM),    # b3 scalar
        ],
        out_specs=pl.BlockSpec((1, th, w), lambda b, t: (b * n_tiles + t, 0, 0)),
        scratch_shapes=[
            pltpu.VMEM((th + 4, PADL + w + 1, 32), dt),   # layer-1 activation
            pltpu.VMEM((th + 2, PADL + w + 1, 32), dt),   # layer-2 activation
        ],
        compiler_params=pltpu.CompilerParams(
            dimension_semantics=("parallel", "parallel"),
            vmem_limit_bytes=budget),
    )(x_rep, w1v, b1f, w2m, b2f, w3v, b3f)

    out = out.reshape(n, n_tiles * th, w)[:, :h, :]                # drop pad rows
    return out[:, None, :, :]                                      # NCHW (N,1,H,W)


def init_params(key):
    """Deterministic synthetic weights (HWIO layout)."""
    ks = jax.random.split(key, 6)
    w1 = jax.random.normal(ks[0], (3, 3, 1, 32), jnp.float32) * 0.20
    b1 = jax.random.normal(ks[1], (1, 32), jnp.float32) * 0.10
    w2 = jax.random.normal(ks[2], (3, 3, 32, 32), jnp.float32) * 0.05
    b2 = jax.random.normal(ks[3], (1, 32), jnp.float32) * 0.05
    w3 = jax.random.normal(ks[4], (3, 3, 32, 1), jnp.float32) * 0.05
    b3 = jax.random.normal(ks[5], (1, 1), jnp.float32) * 0.05
    return (w1, b1, w2, b2, w3, b3)


def _reference_forward(x_nchw, params, is_half=True):
    """Pure-JAX reference (lax conv) mirroring the kernel's bf16 storage."""
    w1, b1, w2, b2, w3, b3 = params
    dt = COMPUTE_DTYPE if is_half else jnp.float32
    x = jnp.transpose(x_nchw, (0, 2, 3, 1)).astype(dt)  # NHWC

    def conv(a, w_, b_):
        y = jax.lax.conv_general_dilated(
            a.astype(jnp.float32), w_.astype(dt).astype(jnp.float32),
            window_strides=(1, 1), padding="SAME",
            dimension_numbers=("NHWC", "HWIO", "NHWC"))
        return y + b_.astype(jnp.float32).reshape(1, 1, 1, -1)

    y = jnp.maximum(conv(x, w1, b1), 0.0).astype(dt)
    y = jnp.maximum(conv(y, w2, b2), 0.0).astype(dt)
    y = conv(y, w3, b3).astype(dt)
    return jnp.transpose(y, (0, 3, 1, 2))


if __name__ == "__main__":
    key = jax.random.PRNGKey(0)
    k_x, k_x2, k_p = jax.random.split(key, 3)
    params = init_params(k_p)

    # case 1: small single-tile input (batch=2, 1 channel, 16x16)
    x = jax.random.normal(k_x, (2, 1, 16, 16), jnp.float32)
    fwd = jax.jit(functools.partial(rmvpe_forward, is_half=True))
    out = jax.block_until_ready(fwd(x, params))
    assert out.shape == (2, 1, 16, 16), out.shape
    assert out.dtype == COMPUTE_DTYPE, out.dtype
    ref = _reference_forward(x, params, is_half=True)
    diff = float(jnp.max(jnp.abs(out.astype(jnp.float32) -
                                 ref.astype(jnp.float32))))
    assert diff < 1e-1, f"single-tile mismatch vs reference: {diff}"

    # case 2: taller input forcing multiple row tiles (halo + row masking + the
    # padded bottom tile) with explicit tile_rows=16
    x2 = jax.random.normal(k_x2, (1, 1, 40, 16), jnp.float32)
    fwd2 = jax.jit(functools.partial(rmvpe_forward, is_half=True, tile_rows=16))
    out2 = jax.block_until_ready(fwd2(x2, params))
    assert out2.shape == (1, 1, 40, 16), out2.shape
    ref2 = _reference_forward(x2, params, is_half=True)
    diff2 = float(jnp.max(jnp.abs(out2.astype(jnp.float32) -
                                  ref2.astype(jnp.float32))))
    assert diff2 < 1e-1, f"multi-tile mismatch vs reference: {diff2}"

    print("KERNEL_OK")
</pallas_src>

<mosaic_0001>
module attributes {stable_mosaic.version = 11 : i64} {
  func.func @_rmvpe_kernel(%arg0: i32, %arg1: i32, %arg2: memref<1x22x18x32xbf16, #tpu.memory_space<vmem>>, %arg3: memref<9x1x32xf32, #tpu.memory_space<vmem>>, %arg4: memref<1x32xf32, #tpu.memory_space<vmem>>, %arg5: memref<288x32xbf16, #tpu.memory_space<vmem>>, %arg6: memref<1x32xf32, #tpu.memory_space<vmem>>, %arg7: memref<9x1x32xf32, #tpu.memory_space<vmem>>, %arg8: memref<1x1xf32, #tpu.memory_space<smem>>, %arg9: memref<1x16x16xbf16, #tpu.memory_space<vmem>>, %arg10: memref<20x33x32xbf16, #tpu.memory_space<vmem>>, %arg11: memref<18x33x32xbf16, #tpu.memory_space<vmem>>) attributes {dimension_semantics = [#tpu.dimension_semantics<parallel>, #tpu.dimension_semantics<parallel>], iteration_bounds = array<i64: 2, 1>, scalar_prefetch = 0 : i64, scratch_operands = 2 : i64, tpu.core_type = #tpu.core_type<tc>, window_params = [{transform_indices = @transform_0, window_bounds = array<i64: 1, 22, 18, 32>}, {pipeline_mode = #tpu.pipeline_mode<synchronous>, transform_indices = @transform_1, window_bounds = array<i64: 9, 1, 32>}, {pipeline_mode = #tpu.pipeline_mode<synchronous>, transform_indices = @transform_2, window_bounds = array<i64: 1, 32>}, {pipeline_mode = #tpu.pipeline_mode<synchronous>, transform_indices = @transform_3, window_bounds = array<i64: 288, 32>}, {pipeline_mode = #tpu.pipeline_mode<synchronous>, transform_indices = @transform_4, window_bounds = array<i64: 1, 32>}, {pipeline_mode = #tpu.pipeline_mode<synchronous>, transform_indices = @transform_5, window_bounds = array<i64: 9, 1, 32>}, {transform_indices = @transform_6, window_bounds = array<i64: 1, 1>}, {transform_indices = @transform_7, window_bounds = array<i64: 1, 16, 16>}]} {
    %c16_i32 = arith.constant 16 : i32
    %0 = arith.muli %arg1, %c16_i32 : i32
    %c0 = arith.constant 0 : index
    %c0_0 = arith.constant 0 : index
    %c0_1 = arith.constant 0 : index
    %c0_2 = arith.constant 0 : index
    %1 = vector.load %arg2[%c0, %c0_0, %c0_1, %c0_2] : memref<1x22x18x32xbf16, #tpu.memory_space<vmem>>, vector<1x22x18x32xbf16>
    %2 = vector.shape_cast %1 : vector<1x22x18x32xbf16> to vector<22x18x32xbf16>
    %3 = vector.extract_strided_slice %2 {offsets = [0, 0, 0], sizes = [20, 16, 32], strides = [1, 1, 1]} : vector<22x18x32xbf16> to vector<20x16x32xbf16>
    %c0_3 = arith.constant 0 : index
    %c0_4 = arith.constant 0 : index
    %c0_5 = arith.constant 0 : index
    %4 = vector.load %arg3[%c0_3, %c0_4, %c0_5] : memref<9x1x32xf32, #tpu.memory_space<vmem>>, vector<1x1x32xf32>
    %5 = vector.shape_cast %4 : vector<1x1x32xf32> to vector<1x32xf32>
    %6 = arith.extf %3 : vector<20x16x32xbf16> to vector<20x16x32xf32>
    %7 = vector.shape_cast %5 : vector<1x32xf32> to vector<1x1x32xf32>
    %8 = vector.broadcast %7 : vector<1x1x32xf32> to vector<20x16x32xf32>
    %9 = arith.mulf %6, %8 : vector<20x16x32xf32>
    %10 = vector.extract_strided_slice %2 {offsets = [0, 1, 0], sizes = [20, 16, 32], strides = [1, 1, 1]} : vector<22x18x32xbf16> to vector<20x16x32xbf16>
    %c1 = arith.constant 1 : index
    %c0_6 = arith.constant 0 : index
    %c0_7 = arith.constant 0 : index
    %11 = vector.load %arg3[%c1, %c0_6, %c0_7] : memref<9x1x32xf32, #tpu.memory_space<vmem>>, vector<1x1x32xf32>
    %12 = vector.shape_cast %11 : vector<1x1x32xf32> to vector<1x32xf32>
    %13 = arith.extf %10 : vector<20x16x32xbf16> to vector<20x16x32xf32>
    %14 = vector.shape_cast %12 : vector<1x32xf32> to vector<1x1x32xf32>
    %15 = vector.broadcast %14 : vector<1x1x32xf32> to vector<20x16x32xf32>
    %16 = arith.mulf %13, %15 : vector<20x16x32xf32>
    %17 = arith.addf %9, %16 : vector<20x16x32xf32>
    %18 = vector.extract_strided_slice %2 {offsets = [0, 2, 0], sizes = [20, 16, 32], strides = [1, 1, 1]} : vector<22x18x32xbf16> to vector<20x16x32xbf16>
    %c2 = arith.constant 2 : index
    %c0_8 = arith.constant 0 : index
    %c0_9 = arith.constant 0 : index
    %19 = vector.load %arg3[%c2, %c0_8, %c0_9] : memref<9x1x32xf32, #tpu.memory_space<vmem>>, vector<1x1x32xf32>
    %20 = vector.shape_cast %19 : vector<1x1x32xf32> to vector<1x32xf32>
    %21 = arith.extf %18 : vector<20x16x32xbf16> to vector<20x16x32xf32>
    %22 = vector.shape_cast %20 : vector<1x32xf32> to vector<1x1x32xf32>
    %23 = vector.broadcast %22 : vector<1x1x32xf32> to vector<20x16x32xf32>
    %24 = arith.mulf %21, %23 : vector<20x16x32xf32>
    %25 = arith.addf %17, %24 : vector<20x16x32xf32>
    %26 = vector.extract_strided_slice %2 {offsets = [1, 0, 0], sizes = [20, 16, 32], strides = [1, 1, 1]} : vector<22x18x32xbf16> to vector<20x16x32xbf16>
    %c3 = arith.constant 3 : index
    %c0_10 = arith.constant 0 : index
    %c0_11 = arith.constant 0 : index
    %27 = vector.load %arg3[%c3, %c0_10, %c0_11] : memref<9x1x32xf32, #tpu.memory_space<vmem>>, vector<1x1x32xf32>
    %28 = vector.shape_cast %27 : vector<1x1x32xf32> to vector<1x32xf32>
    %29 = arith.extf %26 : vector<20x16x32xbf16> to vector<20x16x32xf32>
    %30 = vector.shape_cast %28 : vector<1x32xf32> to vector<1x1x32xf32>
    %31 = vector.broadcast %30 : vector<1x1x32xf32> to vector<20x16x32xf32>
    %32 = arith.mulf %29, %31 : vector<20x16x32xf32>
    %33 = arith.addf %25, %32 : vector<20x16x32xf32>
    %34 = vector.extract_strided_slice %2 {offsets = [1, 1, 0], sizes = [20, 16, 32], strides = [1, 1, 1]} : vector<22x18x32xbf16> to vector<20x16x32xbf16>
    %c4 = arith.constant 4 : index
    %c0_12 = arith.constant 0 : index
    %c0_13 = arith.constant 0 : index
    %35 = vector.load %arg3[%c4, %c0_12, %c0_13] : memref<9x1x32xf32, #tpu.memory_space<vmem>>, vector<1x1x32xf32>
    %36 = vector.shape_cast %35 : vector<1x1x32xf32> to vector<1x32xf32>
    %37 = arith.extf %34 : vector<20x16x32xbf16> to vector<20x16x32xf32>
    %38 = vector.shape_cast %36 : vector<1x32xf32> to vector<1x1x32xf32>
    %39 = vector.broadcast %38 : vector<1x1x32xf32> to vector<20x16x32xf32>
    %40 = arith.mulf %37, %39 : vector<20x16x32xf32>
    %41 = arith.addf %33, %40 : vector<20x16x32xf32>
    %42 = vector.extract_strided_slice %2 {offsets = [1, 2, 0], sizes = [20, 16, 32], strides = [1, 1, 1]} : vector<22x18x32xbf16> to vector<20x16x32xbf16>
    %c5 = arith.constant 5 : index
    %c0_14 = arith.constant 0 : index
    %c0_15 = arith.constant 0 : index
    %43 = vector.load %arg3[%c5, %c0_14, %c0_15] : memref<9x1x32xf32, #tpu.memory_space<vmem>>, vector<1x1x32xf32>
    %44 = vector.shape_cast %43 : vector<1x1x32xf32> to vector<1x32xf32>
    %45 = arith.extf %42 : vector<20x16x32xbf16> to vector<20x16x32xf32>
    %46 = vector.shape_cast %44 : vector<1x32xf32> to vector<1x1x32xf32>
    %47 = vector.broadcast %46 : vector<1x1x32xf32> to vector<20x16x32xf32>
    %48 = arith.mulf %45, %47 : vector<20x16x32xf32>
    %49 = arith.addf %41, %48 : vector<20x16x32xf32>
    %50 = vector.extract_strided_slice %2 {offsets = [2, 0, 0], sizes = [20, 16, 32], strides = [1, 1, 1]} : vector<22x18x32xbf16> to vector<20x16x32xbf16>
    %c6 = arith.constant 6 : index
    %c0_16 = arith.constant 0 : index
    %c0_17 = arith.constant 0 : index
    %51 = vector.load %arg3[%c6, %c0_16, %c0_17] : memref<9x1x32xf32, #tpu.memory_space<vmem>>, vector<1x1x32xf32>
    %52 = vector.shape_cast %51 : vector<1x1x32xf32> to vector<1x32xf32>
    %53 = arith.extf %50 : vector<20x16x32xbf16> to vector<20x16x32xf32>
    %54 = vector.shape_cast %52 : vector<1x32xf32> to vector<1x1x32xf32>
    %55 = vector.broadcast %54 : vector<1x1x32xf32> to vector<20x16x32xf32>
    %56 = arith.mulf %53, %55 : vector<20x16x32xf32>
    %57 = arith.addf %49, %56 : vector<20x16x32xf32>
    %58 = vector.extract_strided_slice %2 {offsets = [2, 1, 0], sizes = [20, 16, 32], strides = [1, 1, 1]} : vector<22x18x32xbf16> to vector<20x16x32xbf16>
    %c7 = arith.constant 7 : index
    %c0_18 = arith.constant 0 : index
    %c0_19 = arith.constant 0 : index
    %59 = vector.load %arg3[%c7, %c0_18, %c0_19] : memref<9x1x32xf32, #tpu.memory_space<vmem>>, vector<1x1x32xf32>
    %60 = vector.shape_cast %59 : vector<1x1x32xf32> to vector<1x32xf32>
    %61 = arith.extf %58 : vector<20x16x32xbf16> to vector<20x16x32xf32>
    %62 = vector.shape_cast %60 : vector<1x32xf32> to vector<1x1x32xf32>
    %63 = vector.broadcast %62 : vector<1x1x32xf32> to vector<20x16x32xf32>
    %64 = arith.mulf %61, %63 : vector<20x16x32xf32>
    %65 = arith.addf %57, %64 : vector<20x16x32xf32>
    %66 = vector.extract_strided_slice %2 {offsets = [2, 2, 0], sizes = [20, 16, 32], strides = [1, 1, 1]} : vector<22x18x32xbf16> to vector<20x16x32xbf16>
    %c8 = arith.constant 8 : index
    %c0_20 = arith.constant 0 : index
    %c0_21 = arith.constant 0 : index
    %67 = vector.load %arg3[%c8, %c0_20, %c0_21] : memref<9x1x32xf32, #tpu.memory_space<vmem>>, vector<1x1x32xf32>
    %68 = vector.shape_cast %67 : vector<1x1x32xf32> to vector<1x32xf32>
    %69 = arith.extf %66 : vector<20x16x32xbf16> to vector<20x16x32xf32>
    %70 = vector.shape_cast %68 : vector<1x32xf32> to vector<1x1x32xf32>
    %71 = vector.broadcast %70 : vector<1x1x32xf32> to vector<20x16x32xf32>
    %72 = arith.mulf %69, %71 : vector<20x16x32xf32>
    %73 = arith.addf %65, %72 : vector<20x16x32xf32>
    %c0_22 = arith.constant 0 : index
    %c0_23 = arith.constant 0 : index
    %74 = vector.load %arg4[%c0_22, %c0_23] : memref<1x32xf32, #tpu.memory_space<vmem>>, vector<1x32xf32>
    %75 = vector.shape_cast %74 : vector<1x32xf32> to vector<1x1x32xf32>
    %76 = vector.broadcast %75 : vector<1x1x32xf32> to vector<20x16x32xf32>
    %77 = arith.addf %73, %76 : vector<20x16x32xf32>
    %cst = arith.constant 0.000000e+00 : f32
    %78 = vector.broadcast %cst : f32 to vector<20x16x32xf32>
    %79 = arith.maximumf %77, %78 : vector<20x16x32xf32>
    %c2_i32 = arith.constant 2 : i32
    %80 = arith.subi %0, %c2_i32 : i32
    %81 = tpu.iota {dimensions = array<i32: 0>} : vector<20x1x1xi32>
    %82 = vector.broadcast %80 : i32 to vector<20x1x1xi32>
    %83 = arith.addi %81, %82 : vector<20x1x1xi32>
    %c0_i32 = arith.constant 0 : i32
    %84 = vector.broadcast %c0_i32 : i32 to vector<20x1x1xi32>
    %85 = arith.cmpi sge, %83, %84 : vector<20x1x1xi32>
    %c16_i32_24 = arith.constant 16 : i32
    %86 = vector.broadcast %c16_i32_24 : i32 to vector<20x1x1xi32>
    %87 = arith.cmpi slt, %83, %86 : vector<20x1x1xi32>
    %88 = arith.andi %85, %87 : vector<20x1x1xi1>
    %cst_25 = arith.constant 0.000000e+00 : f32
    %89 = vector.shape_cast %88 : vector<20x1x1xi1> to vector<20x1x1xi1>
    %90 = vector.broadcast %89 : vector<20x1x1xi1> to vector<20x16x32xi1>
    %91 = vector.broadcast %cst_25 : f32 to vector<20x16x32xf32>
    %92 = arith.select %90, %79, %91 : vector<20x16x32xi1>, vector<20x16x32xf32>
    %cst_26 = arith.constant 0.000000e+00 : bf16
    %93 = vector.broadcast %cst_26 : bf16 to vector<20x1x32xbf16>
    %c0_27 = arith.constant 0 : index
    %c15 = arith.constant 15 : index
    %c0_28 = arith.constant 0 : index
    %94 = vector.load %arg10[%c0_27, %c15, %c0_28] : memref<20x33x32xbf16, #tpu.memory_space<vmem>>, vector<20x1x32xbf16>
    tpu.vector_store %arg10[%c0_27, %c15, %c0_28], %93 {strides = array<i32>} : memref<20x33x32xbf16, #tpu.memory_space<vmem>>, vector<20x1x32xbf16>,
    %c0_29 = arith.constant 0 : index
    %c32 = arith.constant 32 : index
    %c0_30 = arith.constant 0 : index
    %95 = vector.load %arg10[%c0_29, %c32, %c0_30] : memref<20x33x32xbf16, #tpu.memory_space<vmem>>, vector<20x1x32xbf16>
    tpu.vector_store %arg10[%c0_29, %c32, %c0_30], %93 {strides = array<i32>} : memref<20x33x32xbf16, #tpu.memory_space<vmem>>, vector<20x1x32xbf16>,
    %96 = arith.truncf %92 : vector<20x16x32xf32> to vector<20x16x32xbf16>
    %c0_31 = arith.constant 0 : index
    %c16 = arith.constant 16 : index
    %c0_32 = arith.constant 0 : index
    %97 = vector.load %arg10[%c0_31, %c16, %c0_32] : memref<20x33x32xbf16, #tpu.memory_space<vmem>>, vector<20x16x32xbf16>
    tpu.vector_store %arg10[%c0_31, %c16, %c0_32], %96 {strides = array<i32>} : memref<20x33x32xbf16, #tpu.memory_space<vmem>>, vector<20x16x32xbf16>,
    %c0_33 = arith.constant 0 : index
    %c0_34 = arith.constant 0 : index
    %c0_35 = arith.constant 0 : index
    %98 = vector.load %arg10[%c0_33, %c0_34, %c0_35] : memref<20x33x32xbf16, #tpu.memory_space<vmem>>, vector<20x33x32xbf16>
    %99 = vector.extract_strided_slice %98 {offsets = [0, 15, 0], sizes = [18, 16, 32], strides = [1, 1, 1]} : vector<20x33x32xbf16> to vector<18x16x32xbf16>
    %100 = vector.extract_strided_slice %98 {offsets = [0, 16, 0], sizes = [18, 16, 32], strides = [1, 1, 1]} : vector<20x33x32xbf16> to vector<18x16x32xbf16>
    %101 = vector.extract_strided_slice %98 {offsets = [0, 17, 0], sizes = [18, 16, 32], strides = [1, 1, 1]} : vector<20x33x32xbf16> to vector<18x16x32xbf16>
    %102 = vector.extract_strided_slice %98 {offsets = [1, 15, 0], sizes = [18, 16, 32], strides = [1, 1, 1]} : vector<20x33x32xbf16> to vector<18x16x32xbf16>
    %103 = vector.extract_strided_slice %98 {offsets = [1, 16, 0], sizes = [18, 16, 32], strides = [1, 1, 1]} : vector<20x33x32xbf16> to vector<18x16x32xbf16>
    %104 = vector.extract_strided_slice %98 {offsets = [1, 17, 0], sizes = [18, 16, 32], strides = [1, 1, 1]} : vector<20x33x32xbf16> to vector<18x16x32xbf16>
    %105 = vector.extract_strided_slice %98 {offsets = [2, 15, 0], sizes = [18, 16, 32], strides = [1, 1, 1]} : vector<20x33x32xbf16> to vector<18x16x32xbf16>
    %106 = vector.extract_strided_slice %98 {offsets = [2, 16, 0], sizes = [18, 16, 32], strides = [1, 1, 1]} : vector<20x33x32xbf16> to vector<18x16x32xbf16>
    %107 = vector.extract_strided_slice %98 {offsets = [2, 17, 0], sizes = [18, 16, 32], strides = [1, 1, 1]} : vector<20x33x32xbf16> to vector<18x16x32xbf16>
    %108 = tpu.concatenate %99, %100, %101, %102, %103, %104, %105, %106, %107 in 2 : vector<18x16x32xbf16>, vector<18x16x32xbf16>, vector<18x16x32xbf16>, vector<18x16x32xbf16>, vector<18x16x32xbf16>, vector<18x16x32xbf16>, vector<18x16x32xbf16>, vector<18x16x32xbf16>, vector<18x16x32xbf16> -> vector<18x16x288xbf16>
    %109 = vector.shape_cast %108 : vector<18x16x288xbf16> to vector<288x288xbf16>
    %c0_36 = arith.constant 0 : index
    %c0_37 = arith.constant 0 : index
    %110 = vector.load %arg5[%c0_36, %c0_37] : memref<288x32xbf16, #tpu.memory_space<vmem>>, vector<288x32xbf16>
    %cst_38 = arith.constant dense<0.000000e+00> : vector<288x32xf32>
    %111 = tpu.matmul %109, %110, %cst_38 {dimension_numbers = #tpu.dot_dimension_numbers<[1], [0], [0], [1], [0, 0, 1, 1], [], []>} : vector<288x288xbf16>, vector<288x32xbf16>, vector<288x32xf32> -> vector<288x32xf32>
    %c0_39 = arith.constant 0 : index
    %c0_40 = arith.constant 0 : index
    %112 = vector.load %arg6[%c0_39, %c0_40] : memref<1x32xf32, #tpu.memory_space<vmem>>, vector<1x32xf32>
    %113 = vector.broadcast %112 : vector<1x32xf32> to vector<288x32xf32>
    %114 = arith.addf %111, %113 : vector<288x32xf32>
    %cst_41 = arith.constant 0.000000e+00 : f32
    %115 = vector.broadcast %cst_41 : f32 to vector<288x32xf32>
    %116 = arith.maximumf %114, %115 : vector<288x32xf32>
    %117 = vector.shape_cast %116 : vector<288x32xf32> to vector<18x16x32xf32>
    %c1_i32 = arith.constant 1 : i32
    %118 = arith.subi %0, %c1_i32 : i32
    %119 = tpu.iota {dimensions = array<i32: 0>} : vector<18x1x1xi32>
    %120 = vector.broadcast %118 : i32 to vector<18x1x1xi32>
    %121 = arith.addi %119, %120 : vector<18x1x1xi32>
    %c0_i32_42 = arith.constant 0 : i32
    %122 = vector.broadcast %c0_i32_42 : i32 to vector<18x1x1xi32>
    %123 = arith.cmpi sge, %121, %122 : vector<18x1x1xi32>
    %c16_i32_43 = arith.constant 16 : i32
    %124 = vector.broadcast %c16_i32_43 : i32 to vector<18x1x1xi32>
    %125 = arith.cmpi slt, %121, %124 : vector<18x1x1xi32>
    %126 = arith.andi %123, %125 : vector<18x1x1xi1>
    %cst_44 = arith.constant 0.000000e+00 : f32
    %127 = vector.shape_cast %126 : vector<18x1x1xi1> to vector<18x1x1xi1>
    %128 = vector.broadcast %127 : vector<18x1x1xi1> to vector<18x16x32xi1>
    %129 = vector.broadcast %cst_44 : f32 to vector<18x16x32xf32>
    %130 = arith.select %128, %117, %129 : vector<18x16x32xi1>, vector<18x16x32xf32>
    %cst_45 = arith.constant 0.000000e+00 : bf16
    %131 = vector.broadcast %cst_45 : bf16 to vector<18x1x32xbf16>
    %c0_46 = arith.constant 0 : index
    %c15_47 = arith.constant 15 : index
    %c0_48 = arith.constant 0 : index
    %132 = vector.load %arg11[%c0_46, %c15_47, %c0_48] : memref<18x33x32xbf16, #tpu.memory_space<vmem>>, vector<18x1x32xbf16>
    tpu.vector_store %arg11[%c0_46, %c15_47, %c0_48], %131 {strides = array<i32>} : memref<18x33x32xbf16, #tpu.memory_space<vmem>>, vector<18x1x32xbf16>,
    %c0_49 = arith.constant 0 : index
    %c32_50 = arith.constant 32 : index
    %c0_51 = arith.constant 0 : index
    %133 = vector.load %arg11[%c0_49, %c32_50, %c0_51] : memref<18x33x32xbf16, #tpu.memory_space<vmem>>, vector<18x1x32xbf16>
    tpu.vector_store %arg11[%c0_49, %c32_50, %c0_51], %131 {strides = array<i32>} : memref<18x33x32xbf16, #tpu.memory_space<vmem>>, vector<18x1x32xbf16>,
    %134 = arith.truncf %130 : vector<18x16x32xf32> to vector<18x16x32xbf16>
    %c0_52 = arith.constant 0 : index
    %c16_53 = arith.constant 16 : index
    %c0_54 = arith.constant 0 : index
    %135 = vector.load %arg11[%c0_52, %c16_53, %c0_54] : memref<18x33x32xbf16, #tpu.memory_space<vmem>>, vector<18x16x32xbf16>
    tpu.vector_store %arg11[%c0_52, %c16_53, %c0_54], %134 {strides = array<i32>} : memref<18x33x32xbf16, #tpu.memory_space<vmem>>, vector<18x16x32xbf16>,
    %c0_55 = arith.constant 0 : index
    %c0_56 = arith.constant 0 : index
    %c0_57 = arith.constant 0 : index
    %136 = vector.load %arg11[%c0_55, %c0_56, %c0_57] : memref<18x33x32xbf16, #tpu.memory_space<vmem>>, vector<18x33x32xbf16>
    %137 = vector.extract_strided_slice %136 {offsets = [0, 15, 0], sizes = [16, 16, 32], strides = [1, 1, 1]} : vector<18x33x32xbf16> to vector<16x16x32xbf16>
    %c0_58 = arith.constant 0 : index
    %c0_59 = arith.constant 0 : index
    %c0_60 = arith.constant 0 : index
    %138 = vector.load %arg7[%c0_58, %c0_59, %c0_60] : memref<9x1x32xf32, #tpu.memory_space<vmem>>, vector<1x1x32xf32>
    %139 = vector.shape_cast %138 : vector<1x1x32xf32> to vector<1x32xf32>
    %140 = arith.extf %137 : vector<16x16x32xbf16> to vector<16x16x32xf32>
    %141 = vector.shape_cast %139 : vector<1x32xf32> to vector<1x1x32xf32>
    %142 = vector.broadcast %141 : vector<1x1x32xf32> to vector<16x16x32xf32>
    %143 = arith.mulf %140, %142 : vector<16x16x32xf32>
    %144 = vector.extract_strided_slice %136 {offsets = [0, 16, 0], sizes = [16, 16, 32], strides = [1, 1, 1]} : vector<18x33x32xbf16> to vector<16x16x32xbf16>
    %c1_61 = arith.constant 1 : index
    %c0_62 = arith.constant 0 : index
    %c0_63 = arith.constant 0 : index
    %145 = vector.load %arg7[%c1_61, %c0_62, %c0_63] : memref<9x1x32xf32, #tpu.memory_space<vmem>>, vector<1x1x32xf32>
    %146 = vector.shape_cast %145 : vector<1x1x32xf32> to vector<1x32xf32>
    %147 = arith.extf %144 : vector<16x16x32xbf16> to vector<16x16x32xf32>
    %148 = vector.shape_cast %146 : vector<1x32xf32> to vector<1x1x32xf32>
    %149 = vector.broadcast %148 : vector<1x1x32xf32> to vector<16x16x32xf32>
    %150 = arith.mulf %147, %149 : vector<16x16x32xf32>
    %151 = arith.addf %143, %150 : vector<16x16x32xf32>
    %152 = vector.extract_strided_slice %136 {offsets = [0, 17, 0], sizes = [16, 16, 32], strides = [1, 1, 1]} : vector<18x33x32xbf16> to vector<16x16x32xbf16>
    %c2_64 = arith.constant 2 : index
    %c0_65 = arith.constant 0 : index
    %c0_66 = arith.constant 0 : index
    %153 = vector.load %arg7[%c2_64, %c0_65, %c0_66] : memref<9x1x32xf32, #tpu.memory_space<vmem>>, vector<1x1x32xf32>
    %154 = vector.shape_cast %153 : vector<1x1x32xf32> to vector<1x32xf32>
    %155 = arith.extf %152 : vector<16x16x32xbf16> to vector<16x16x32xf32>
    %156 = vector.shape_cast %154 : vector<1x32xf32> to vector<1x1x32xf32>
    %157 = vector.broadcast %156 : vector<1x1x32xf32> to vector<16x16x32xf32>
    %158 = arith.mulf %155, %157 : vector<16x16x32xf32>
    %159 = arith.addf %151, %158 : vector<16x16x32xf32>
    %160 = vector.extract_strided_slice %136 {offsets = [1, 15, 0], sizes = [16, 16, 32], strides = [1, 1, 1]} : vector<18x33x32xbf16> to vector<16x16x32xbf16>
    %c3_67 = arith.constant 3 : index
    %c0_68 = arith.constant 0 : index
    %c0_69 = arith.constant 0 : index
    %161 = vector.load %arg7[%c3_67, %c0_68, %c0_69] : memref<9x1x32xf32, #tpu.memory_space<vmem>>, vector<1x1x32xf32>
    %162 = vector.shape_cast %161 : vector<1x1x32xf32> to vector<1x32xf32>
    %163 = arith.extf %160 : vector<16x16x32xbf16> to vector<16x16x32xf32>
    %164 = vector.shape_cast %162 : vector<1x32xf32> to vector<1x1x32xf32>
    %165 = vector.broadcast %164 : vector<1x1x32xf32> to vector<16x16x32xf32>
    %166 = arith.mulf %163, %165 : vector<16x16x32xf32>
    %167 = arith.addf %159, %166 : vector<16x16x32xf32>
    %168 = vector.extract_strided_slice %136 {offsets = [1, 16, 0], sizes = [16, 16, 32], strides = [1, 1, 1]} : vector<18x33x32xbf16> to vector<16x16x32xbf16>
    %c4_70 = arith.constant 4 : index
    %c0_71 = arith.constant 0 : index
    %c0_72 = arith.constant 0 : index
    %169 = vector.load %arg7[%c4_70, %c0_71, %c0_72] : memref<9x1x32xf32, #tpu.memory_space<vmem>>, vector<1x1x32xf32>
    %170 = vector.shape_cast %169 : vector<1x1x32xf32> to vector<1x32xf32>
    %171 = arith.extf %168 : vector<16x16x32xbf16> to vector<16x16x32xf32>
    %172 = vector.shape_cast %170 : vector<1x32xf32> to vector<1x1x32xf32>
    %173 = vector.broadcast %172 : vector<1x1x32xf32> to vector<16x16x32xf32>
    %174 = arith.mulf %171, %173 : vector<16x16x32xf32>
    %175 = arith.addf %167, %174 : vector<16x16x32xf32>
    %176 = vector.extract_strided_slice %136 {offsets = [1, 17, 0], sizes = [16, 16, 32], strides = [1, 1, 1]} : vector<18x33x32xbf16> to vector<16x16x32xbf16>
    %c5_73 = arith.constant 5 : index
    %c0_74 = arith.constant 0 : index
    %c0_75 = arith.constant 0 : index
    %177 = vector.load %arg7[%c5_73, %c0_74, %c0_75] : memref<9x1x32xf32, #tpu.memory_space<vmem>>, vector<1x1x32xf32>
    %178 = vector.shape_cast %177 : vector<1x1x32xf32> to vector<1x32xf32>
    %179 = arith.extf %176 : vector<16x16x32xbf16> to vector<16x16x32xf32>
    %180 = vector.shape_cast %178 : vector<1x32xf32> to vector<1x1x32xf32>
    %181 = vector.broadcast %180 : vector<1x1x32xf32> to vector<16x16x32xf32>
    %182 = arith.mulf %179, %181 : vector<16x16x32xf32>
    %183 = arith.addf %175, %182 : vector<16x16x32xf32>
    %184 = vector.extract_strided_slice %136 {offsets = [2, 15, 0], sizes = [16, 16, 32], strides = [1, 1, 1]} : vector<18x33x32xbf16> to vector<16x16x32xbf16>
    %c6_76 = arith.constant 6 : index
    %c0_77 = arith.constant 0 : index
    %c0_78 = arith.constant 0 : index
    %185 = vector.load %arg7[%c6_76, %c0_77, %c0_78] : memref<9x1x32xf32, #tpu.memory_space<vmem>>, vector<1x1x32xf32>
    %186 = vector.shape_cast %185 : vector<1x1x32xf32> to vector<1x32xf32>
    %187 = arith.extf %184 : vector<16x16x32xbf16> to vector<16x16x32xf32>
    %188 = vector.shape_cast %186 : vector<1x32xf32> to vector<1x1x32xf32>
    %189 = vector.broadcast %188 : vector<1x1x32xf32> to vector<16x16x32xf32>
    %190 = arith.mulf %187, %189 : vector<16x16x32xf32>
    %191 = arith.addf %183, %190 : vector<16x16x32xf32>
    %192 = vector.extract_strided_slice %136 {offsets = [2, 16, 0], sizes = [16, 16, 32], strides = [1, 1, 1]} : vector<18x33x32xbf16> to vector<16x16x32xbf16>
    %c7_79 = arith.constant 7 : index
    %c0_80 = arith.constant 0 : index
    %c0_81 = arith.constant 0 : index
    %193 = vector.load %arg7[%c7_79, %c0_80, %c0_81] : memref<9x1x32xf32, #tpu.memory_space<vmem>>, vector<1x1x32xf32>
    %194 = vector.shape_cast %193 : vector<1x1x32xf32> to vector<1x32xf32>
    %195 = arith.extf %192 : vector<16x16x32xbf16> to vector<16x16x32xf32>
    %196 = vector.shape_cast %194 : vector<1x32xf32> to vector<1x1x32xf32>
    %197 = vector.broadcast %196 : vector<1x1x32xf32> to vector<16x16x32xf32>
    %198 = arith.mulf %195, %197 : vector<16x16x32xf32>
    %199 = arith.addf %191, %198 : vector<16x16x32xf32>
    %200 = vector.extract_strided_slice %136 {offsets = [2, 17, 0], sizes = [16, 16, 32], strides = [1, 1, 1]} : vector<18x33x32xbf16> to vector<16x16x32xbf16>
    %c8_82 = arith.constant 8 : index
    %c0_83 = arith.constant 0 : index
    %c0_84 = arith.constant 0 : index
    %201 = vector.load %arg7[%c8_82, %c0_83, %c0_84] : memref<9x1x32xf32, #tpu.memory_space<vmem>>, vector<1x1x32xf32>
    %202 = vector.shape_cast %201 : vector<1x1x32xf32> to vector<1x32xf32>
    %203 = arith.extf %200 : vector<16x16x32xbf16> to vector<16x16x32xf32>
    %204 = vector.shape_cast %202 : vector<1x32xf32> to vector<1x1x32xf32>
    %205 = vector.broadcast %204 : vector<1x1x32xf32> to vector<16x16x32xf32>
    %206 = arith.mulf %203, %205 : vector<16x16x32xf32>
    %207 = arith.addf %199, %206 : vector<16x16x32xf32>
    %cst_85 = arith.constant dense<0.000000e+00> : vector<16x16xf32>
    %208 = vector.multi_reduction <add>, %207, %cst_85 [2] : vector<16x16x32xf32> to vector<16x16xf32>
    %c0_86 = arith.constant 0 : index
    %c0_87 = arith.constant 0 : index
    %209 = memref.load %arg8[%c0_86, %c0_87] : memref<1x1xf32, #tpu.memory_space<smem>>
    %210 = vector.broadcast %209 : f32 to vector<16x16xf32>
    %211 = arith.addf %208, %210 : vector<16x16xf32>
    %212 = arith.truncf %211 : vector<16x16xf32> to vector<16x16xbf16>
    %c0_88 = arith.constant 0 : index
    %c0_89 = arith.constant 0 : index
    %c0_90 = arith.constant 0 : index
    %213 = vector.load %arg9[%c0_88, %c0_89, %c0_90] : memref<1x16x16xbf16, #tpu.memory_space<vmem>>, vector<1x16x16xbf16>
    %214 = vector.shape_cast %213 : vector<1x16x16xbf16> to vector<16x16xbf16>
    %215 = vector.shape_cast %212 : vector<16x16xbf16> to vector<1x16x16xbf16>
    tpu.vector_store %arg9[%c0_88, %c0_89, %c0_90], %215 {strides = array<i32>} : memref<1x16x16xbf16, #tpu.memory_space<vmem>>, vector<1x16x16xbf16>,
    return
  }
  func.func @transform_0(%arg0: i32, %arg1: i32) -> (i32, i32, i32, i32) {
    %c1_i32 = arith.constant 1 : i32
    %0 = arith.muli %arg0, %c1_i32 : i32
    %1 = arith.addi %0, %arg1 : i32
    %c0_i32 = arith.constant 0 : i32
    %c0_i32_0 = arith.constant 0 : i32
    %c0_i32_1 = arith.constant 0 : i32
    %c0_i32_2 = arith.constant 0 : i32
    return %1, %c0_i32, %c0_i32_0, %c0_i32_1 : i32, i32, i32, i32
  }
  func.func @transform_1(%arg0: i32, %arg1: i32) -> (i32, i32, i32) {
    %c0_i32 = arith.constant 0 : i32
    %c0_i32_0 = arith.constant 0 : i32
    %c0_i32_1 = arith.constant 0 : i32
    %c0_i32_2 = arith.constant 0 : i32
    return %c0_i32, %c0_i32_0, %c0_i32_1 : i32, i32, i32
  }
  func.func @transform_2(%arg0: i32, %arg1: i32) -> (i32, i32) {
    %c0_i32 = arith.constant 0 : i32
    %c0_i32_0 = arith.constant 0 : i32
    %c0_i32_1 = arith.constant 0 : i32
    return %c0_i32, %c0_i32_0 : i32, i32
  }
  func.func @transform_3(%arg0: i32, %arg1: i32) -> (i32, i32) {
    %c0_i32 = arith.constant 0 : i32
    %c0_i32_0 = arith.constant 0 : i32
    %c0_i32_1 = arith.constant 0 : i32
    return %c0_i32, %c0_i32_0 : i32, i32
  }
  func.func @transform_4(%arg0: i32, %arg1: i32) -> (i32, i32) {
    %c0_i32 = arith.constant 0 : i32
    %c0_i32_0 = arith.constant 0 : i32
    %c0_i32_1 = arith.constant 0 : i32
    return %c0_i32, %c0_i32_0 : i32, i32
  }
  func.func @transform_5(%arg0: i32, %arg1: i32) -> (i32, i32, i32) {
    %c0_i32 = arith.constant 0 : i32
    %c0_i32_0 = arith.constant 0 : i32
    %c0_i32_1 = arith.constant 0 : i32
    %c0_i32_2 = arith.constant 0 : i32
    return %c0_i32, %c0_i32_0, %c0_i32_1 : i32, i32, i32
  }
  func.func @transform_6(%arg0: i32, %arg1: i32) -> (i32, i32) {
    %c0_i32 = arith.constant 0 : i32
    %c0_i32_0 = arith.constant 0 : i32
    %c0_i32_1 = arith.constant 0 : i32
    return %c0_i32, %c0_i32_0 : i32, i32
  }
  func.func @transform_7(%arg0: i32, %arg1: i32) -> (i32, i32, i32) {
    %c1_i32 = arith.constant 1 : i32
    %0 = arith.muli %arg0, %c1_i32 : i32
    %1 = arith.addi %0, %arg1 : i32
    %c0_i32 = arith.constant 0 : i32
    %c0_i32_0 = arith.constant 0 : i32
    %c0_i32_1 = arith.constant 0 : i32
    return %1, %c0_i32, %c0_i32_0 : i32, i32, i32
  }
}

</mosaic_0001>

<llo_original>
// kernel: rmvpe_forward.1
$region0: #{rmvpe_forward.1}
  #allocation0 [shape = 'u32[]', space=smem, size = 0x4, offset = 0x4, fixed_abs, tag = 'smem constant byte address 0x4 - core index']
  #allocation1 [shape = 'u32[72,128]{1,0:T(1,128)}', space=vmem, size = 0x9000, scoped, tag = 'internal scratch']
  #allocation2 [shape = 'bf16[20,33,32]{2,1,0:T(8,128)(2,1)}', space=vmem, size = 0x32000, scoped, tag = 'scratch operand']
  #allocation3 [shape = 'bf16[18,33,32]{2,1,0:T(8,128)(2,1)}', space=vmem, size = 0x2d000, scoped, tag = 'scratch operand']
  #allocation4 [shape = 'f32[1,1]{1,0:T(1,128)S(6)}', space=smem, size = 0x200, scoped, tag = 'scoped memory for rmvpe_forward.1']
  %s0 = inlined_call_operand.vmem [shape: bf16[2,22,18,32], index: 0, kind: input, shape index: {}]
  %s1 = inlined_call_operand.vmem [shape: f32[9,1,32], index: 1, kind: input, shape index: {}]
  %s2 = inlined_call_operand.vmem [shape: f32[1,32], index: 2, kind: input, shape index: {}]
  %s3 = inlined_call_operand.vmem [shape: bf16[288,32], index: 3, kind: input, shape index: {}]
  %s4 = inlined_call_operand.vmem [shape: f32[1,32], index: 4, kind: input, shape index: {}]
  %s5 = inlined_call_operand.vmem [shape: f32[9,1,32], index: 5, kind: input, shape index: {}]
  %s6 = inlined_call_operand.<no memory space> [shape: f32[1,1], index: 6, kind: input, shape index: {}]
  %s7 = inlined_call_operand.hbm [shape: bf16[2,16,16], index: 7, kind: output, shape index: {}]
  %s8 = sld [smem:[#allocation0]]
  $region61: #{rmvpe_forward.1} parent=0
    _
  %s10 = ssub.s32 1, %s8
  %s11 = scalar_select 0, %s10, %s8
  %12 = sst [smem:[#allocation4]] %s6
  $region1: #{rmvpe_forward.1} parent=0
    #allocation5 [shape = 'u8[8192]{0}', space=vmem, size = 0x2000, scoped, tag = 'output window, operand 0']
    #allocation6 [shape = 's32[2]{0}', space=sflag, size = 0x8, scoped, tag = 'scoped memory for rmvpe_forward.1']
    %13 = vsyncpa [#allocation6], 0
    %s14 = scalar_lea.sflag [#allocation6], 1
    %15 = vsyncpa %s14, 0
    loop: start=0, step=1, limit=4
    $region2: #{rmvpe_forward.1} parent=1 // loop_pre_header
      _
    $region3: #{rmvpe_forward.1} parent=1 // loop_header
      %s17 = sphi 0, %s21
      %p18 = scmp.ge.s32.totalorder %s17, 4
      %s24 = sphi 0, %s36
      %s25 = sphi 0, %s32
      %s26 = sphi 0, %s24
      %s27 = sphi 0, %s25
      %s28 = sphi 0, %s26
      %s29 = sphi 0, %s27
      %s41 = sphi 0, %s43
      %s44 = sphi 0, %s41
      %s45 = sphi 0, %s44
      %s61 = sphi 0, %s45
      %s65 = sphi 0, %s65
      %s67 = sphi 0, %s65
      %s68 = sphi 0, %s67
      %s82 = sphi 0, %s68
      %s86 = sphi 0, %s86
      %s88 = sphi 0, %s86
      %s89 = sphi 0, %s88
      %s103 = sphi 0, %s89
      %s107 = sphi 0, %s107
      %s109 = sphi 0, %s107
      %s110 = sphi 0, %s109
      %s124 = sphi 0, %s110
      %s128 = sphi 0, %s128
      %s130 = sphi 0, %s128
      %s131 = sphi 0, %s130
      %s145 = sphi 0, %s131
      %s149 = sphi 0, %s149
      %s151 = sphi 0, %s149
      %s152 = sphi 0, %s151
      %s166 = sphi 0, %s152
      %s170 = sphi 0, %s170
      %s172 = sphi 0, %s170
      %s173 = sphi 0, %s172
      %s187 = sphi 0, %s173
      %s195 = sphi 0, %s197
      %s198 = sphi 0, %s195
      %s199 = sphi 0, %s198
      %s215 = sphi 0, %s199
    $region4: #{rmvpe_forward.1} parent=1 // loop_header_branch
      %20 = sbr.rel (%p18) target = $region8
    $region5: #{rmvpe_forward.1} parent=1 // loop_body
      %s22 = ssub.s32 %s17, 1
      %s23 = ssub.s32 %s17, 2
      %s30 = sadd.s32 1, %s25
      %p31 = scmp.ge.s32.totalorder %s30, 1
      %s32 = scalar_select %p31, 0, %s30
      %s33 = sadd.s32 1, %s24
      %s34 = scalar_select %p31, %s33, %s24
      %p35 = scmp.ge.s32.totalorder %s34, 2
      %s36 = scalar_select %p35, 0, %s34
      %s37 = sadd.s32 %s24, %s25
      %s38 = sadd.s32 %s36, %s32
      %s39 = ssub.s32 %s37, %s38
      %p40 = scmp.eq.s32.totalorder %s39, 0
      %s42 = sadd.s32 %s41, 1
      %s43 = scalar_select %p40, %s41, %s42
      %p46 = pneg %p40
      %p47 = scmp.eq.s32.totalorder %s17, 1
      %p48 = por %p46, %p47
      %p49 = scmp.ne.s32.totalorder %s41, %s44
      %p50 = scmp.eq.s32.totalorder %s17, 0
      %p51 = por %p49, %p50
      %p52 = scmp.ne.s32.totalorder %s41, %s44
      %p53 = scmp.eq.s32.totalorder %s22, 1
      %p54 = por %p52, %p53
      %p55 = scmp.ne.s32.totalorder %s44, %s45
      %p56 = scmp.eq.s32.totalorder %s22, 0
      %p57 = por %p55, %p56
      %p58 = scmp.ne.s32.totalorder %s44, %s45
      %p59 = scmp.eq.s32.totalorder %s23, 1
      %p60 = por %p58, %p59
      %p62 = scmp.ne.s32.totalorder %s45, %s61
      %p63 = scmp.eq.s32.totalorder %s23, 0
      %p64 = por %p62, %p63
      %s66 = sadd.s32 %s65, 1
      %p69 = scmp.eq.s32.totalorder %s17, 1
      %p70 = scmp.ne.s32.totalorder %s65, %s67
      %p71 = scmp.eq.s32.totalorder %s17, 0
      %p72 = por %p70, %p71
      %p73 = scmp.ne.s32.totalorder %s65, %s67
      %p74 = scmp.eq.s32.totalorder %s22, 1
      %p75 = por %p73, %p74
      %p76 = scmp.ne.s32.totalorder %s67, %s68
      %p77 = scmp.eq.s32.totalorder %s22, 0
      %p78 = por %p76, %p77
      %p79 = scmp.ne.s32.totalorder %s67, %s68
      %p80 = scmp.eq.s32.totalorder %s23, 1
      %p81 = por %p79, %p80
      %p83 = scmp.ne.s32.totalorder %s68, %s82
      %p84 = scmp.eq.s32.totalorder %s23, 0
      %p85 = por %p83, %p84
      %s87 = sadd.s32 %s86, 1
      %p90 = scmp.eq.s32.totalorder %s17, 1
      %p91 = scmp.ne.s32.totalorder %s86, %s88
      %p92 = scmp.eq.s32.totalorder %s17, 0
      %p93 = por %p91, %p92
      %p94 = scmp.ne.s32.totalorder %s86, %s88
      %p95 = scmp.eq.s32.totalorder %s22, 1
      %p96 = por %p94, %p95
      %p97 = scmp.ne.s32.totalorder %s88, %s89
      %p98 = scmp.eq.s32.totalorder %s22, 0
      %p99 = por %p97, %p98
      %p100 = scmp.ne.s32.totalorder %s88, %s89
      %p101 = scmp.eq.s32.totalorder %s23, 1
      %p102 = por %p100, %p101
      %p104 = scmp.ne.s32.totalorder %s89, %s103
      %p105 = scmp.eq.s32.totalorder %s23, 0
      %p106 = por %p104, %p105
      %s108 = sadd.s32 %s107, 1
      %p111 = scmp.eq.s32.totalorder %s17, 1
      %p112 = scmp.ne.s32.totalorder %s107, %s109
      %p113 = scmp.eq.s32.totalorder %s17, 0
      %p114 = por %p112, %p113
      %p115 = scmp.ne.s32.totalorder %s107, %s109
      %p116 = scmp.eq.s32.totalorder %s22, 1
      %p117 = por %p115, %p116
      %p118 = scmp.ne.s32.totalorder %s109, %s110
      %p119 = scmp.eq.s32.totalorder %s22, 0
      %p120 = por %p118, %p119
      %p121 = scmp.ne.s32.totalorder %s109, %s110
      %p122 = scmp.eq.s32.totalorder %s23, 1
      %p123 = por %p121, %p122
      %p125 = scmp.ne.s32.totalorder %s110, %s124
      %p126 = scmp.eq.s32.totalorder %s23, 0
      %p127 = por %p125, %p126
      %s129 = sadd.s32 %s128, 1
      %p132 = scmp.eq.s32.totalorder %s17, 1
      %p133 = scmp.ne.s32.totalorder %s128, %s130
      %p134 = scmp.eq.s32.totalorder %s17, 0
      %p135 = por %p133, %p134
      %p136 = scmp.ne.s32.totalorder %s128, %s130
      %p137 = scmp.eq.s32.totalorder %s22, 1
      %p138 = por %p136, %p137
      %p139 = scmp.ne.s32.totalorder %s130, %s131
      %p140 = scmp.eq.s32.totalorder %s22, 0
      %p141 = por %p139, %p140
      %p142 = scmp.ne.s32.totalorder %s130, %s131
      %p143 = scmp.eq.s32.totalorder %s23, 1
      %p144 = por %p142, %p143
      %p146 = scmp.ne.s32.totalorder %s131, %s145
      %p147 = scmp.eq.s32.totalorder %s23, 0
      %p148 = por %p146, %p147
      %s150 = sadd.s32 %s149, 1
      %p153 = scmp.eq.s32.totalorder %s17, 1
      %p154 = scmp.ne.s32.totalorder %s149, %s151
      %p155 = scmp.eq.s32.totalorder %s17, 0
      %p156 = por %p154, %p155
      %p157 = scmp.ne.s32.totalorder %s149, %s151
      %p158 = scmp.eq.s32.totalorder %s22, 1
      %p159 = por %p157, %p158
      %p160 = scmp.ne.s32.totalorder %s151, %s152
      %p161 = scmp.eq.s32.totalorder %s22, 0
      %p162 = por %p160, %p161
      %p163 = scmp.ne.s32.totalorder %s151, %s152
      %p164 = scmp.eq.s32.totalorder %s23, 1
      %p165 = por %p163, %p164
      %p167 = scmp.ne.s32.totalorder %s152, %s166
      %p168 = scmp.eq.s32.totalorder %s23, 0
      %p169 = por %p167, %p168
      %s171 = sadd.s32 %s170, 1
      %p174 = scmp.eq.s32.totalorder %s17, 1
      %p175 = scmp.ne.s32.totalorder %s170, %s172
      %p176 = scmp.eq.s32.totalorder %s17, 0
      %p177 = por %p175, %p176
      %p178 = scmp.ne.s32.totalorder %s170, %s172
      %p179 = scmp.eq.s32.totalorder %s22, 1
      %p180 = por %p178, %p179
      %p181 = scmp.ne.s32.totalorder %s172, %s173
      %p182 = scmp.eq.s32.totalorder %s22, 0
      %p183 = por %p181, %p182
      %p184 = scmp.ne.s32.totalorder %s172, %s173
      %p185 = scmp.eq.s32.totalorder %s23, 1
      %p186 = por %p184, %p185
      %p188 = scmp.ne.s32.totalorder %s173, %s187
      %p189 = scmp.eq.s32.totalorder %s23, 0
      %p190 = por %p188, %p189
      %s191 = sadd.s32 %s24, %s25
      %s192 = sadd.s32 %s36, %s32
      %s193 = ssub.s32 %s191, %s192
      %p194 = scmp.eq.s32.totalorder %s193, 0
      %s196 = sadd.s32 %s195, 1
      %s197 = scalar_select %p194, %s195, %s196
      %p200 = pneg %p194
      %p201 = scmp.eq.s32.totalorder %s17, 1
      %p202 = por %p200, %p201
      %p203 = scmp.ne.s32.totalorder %s195, %s198
      %p204 = scmp.eq.s32.totalorder %s17, 0
      %p205 = por %p203, %p204
      %p206 = scmp.ne.s32.totalorder %s195, %s198
      %p207 = scmp.eq.s32.totalorder %s22, 1
      %p208 = por %p206, %p207
      %p209 = scmp.ne.s32.totalorder %s198, %s199
      %p210 = scmp.eq.s32.totalorder %s22, 0
      %p211 = por %p209, %p210
      %p212 = scmp.ne.s32.totalorder %s198, %s199
      %p213 = scmp.eq.s32.totalorder %s23, 1
      %p214 = por %p212, %p213
      %p216 = scmp.ne.s32.totalorder %s199, %s215
      %p217 = scmp.eq.s32.totalorder %s23, 0
      %p218 = por %p216, %p217
      %p219 = scmp.le.s32.totalorder 1, %s17
      %p220 = scmp.lt.s32.totalorder %s17, 3
      %p221 = pnand %p219, %p220
      %p222 = pneg %p221
      // Predicated region
      $region9: #{rmvpe_forward.1} parent=5 // pred_check
        _
      $region10: #{rmvpe_forward.1} parent=5 // pred_check_branch
        %224 = sbr.rel (%p221) target = $region12
      $region11: #{rmvpe_forward.1} parent=5 // pred_region
        %s225 = ssub.s32 %s17, 1
        // Predicated region
        $region13: #{rmvpe_forward.1} parent=11 // pred_check
          %p226 = pneg %p78
        $region14: #{rmvpe_forward.1} parent=11 // pred_check_branch
          %228 = sbr.rel (%p226) target = $region16
        $region15: #{rmvpe_forward.1} parent=11 // pred_region
          _
        $region16: #{rmvpe_forward.1} parent=11 // pred_fallthru
          _
        // Predicated region
        $region17: #{rmvpe_forward.1} parent=11 // pred_check
          %p229 = pneg %p99
        $region18: #{rmvpe_forward.1} parent=11 // pred_check_branch
          %231 = sbr.rel (%p229) target = $region20
        $region19: #{rmvpe_forward.1} parent=11 // pred_region
          _
        $region20: #{rmvpe_forward.1} parent=11 // pred_fallthru
          _
        // Predicated region
        $region21: #{rmvpe_forward.1} parent=11 // pred_check
          %p232 = pneg %p120
        $region22: #{rmvpe_forward.1} parent=11 // pred_check_branch
          %234 = sbr.rel (%p232) target = $region24
        $region23: #{rmvpe_forward.1} parent=11 // pred_region
          _
        $region24: #{rmvpe_forward.1} parent=11 // pred_fallthru
          _
        // Predicated region
        $region25: #{rmvpe_forward.1} parent=11 // pred_check
          %p235 = pneg %p141
        $region26: #{rmvpe_forward.1} parent=11 // pred_check_branch
          %237 = sbr.rel (%p235) target = $region28
        $region27: #{rmvpe_forward.1} parent=11 // pred_region
          _
        $region28: #{rmvpe_forward.1} parent=11 // pred_fallthru
          _
        // Predicated region
        $region29: #{rmvpe_forward.1} parent=11 // pred_check
          %p238 = pneg %p162
        $region30: #{rmvpe_forward.1} parent=11 // pred_check_branch
          %240 = sbr.rel (%p238) target = $region32
        $region31: #{rmvpe_forward.1} parent=11 // pred_region
          _
        $region32: #{rmvpe_forward.1} parent=11 // pred_fallthru
          _
        // Predicated region
        $region33: #{rmvpe_forward.1} parent=11 // pred_check
          %p241 = pneg %p183
        $region34: #{rmvpe_forward.1} parent=11 // pred_check_branch
          %243 = sbr.rel (%p241) target = $region36
        $region35: #{rmvpe_forward.1} parent=11 // pred_region
          _
        $region36: #{rmvpe_forward.1} parent=11 // pred_fallthru
          _
      $region12: #{rmvpe_forward.1} parent=5 // pred_fallthru
        _
      %p244 = scmp.lt.s32.totalorder %s17, 2
      // Predicated region
      $region37: #{rmvpe_forward.1} parent=5 // pred_check
        %p245 = pneg %p244
      $region38: #{rmvpe_forward.1} parent=5 // pred_check_branch
        %247 = sbr.rel (%p245) target = $region40
      $region39: #{rmvpe_forward.1} parent=5 // pred_region
        // Predicated region
        $region41: #{rmvpe_forward.1} parent=39 // pred_check
          %p248 = pneg %p51
        $region42: #{rmvpe_forward.1} parent=39 // pred_check_branch
          %250 = sbr.rel (%p248) target = $region44
        $region43: #{rmvpe_forward.1} parent=39 // pred_region
          %s251 = sadd.s32 %s24, %s25
          %p252 = scmp.lt.s32.totalorder %s251, 1
          %s253 = scalar_select %p252, %s251, 1
          %s254 = smul.addr %s253, 66
          %s255 = smul.addr %s254, 4
          %s256 = scalar_lea.vmem %s0, %s255
          %s257 = sadd.s32 %s24, %s25
        $region44: #{rmvpe_forward.1} parent=39 // pred_fallthru
          _
      $region40: #{rmvpe_forward.1} parent=5 // pred_fallthru
        _
      %p258 = scmp.le.s32.totalorder 1, %s17
      %p259 = scmp.lt.s32.totalorder %s17, 3
      %p260 = pnand %p258, %p259
      %p261 = pneg %p260
      // Predicated region
      $region45: #{rmvpe_forward.1} parent=5 // pred_check
        _
      $region46: #{rmvpe_forward.1} parent=5 // pred_check_branch
        %263 = sbr.rel (%p260) target = $region48
      $region47: #{rmvpe_forward.1} parent=5 // pred_region
        %s264 = ssub.s32 %s17, 1
        %s265 = sadd.s32 %s26, %s27
        %p266 = scmp.lt.s32.totalorder %s265, 1
        %s267 = scalar_select %p266, %s265, 1
        %s268 = smul.addr %s267, 66
        %s269 = smul.addr %s268, 4
        %s270 = scalar_lea.vmem %s0, %s269
        %p271 = pneg %p57
        %p272 = pneg %p54
        %p273 = pneg %p78
        %p274 = pneg %p75
        %p275 = pneg %p99
        %p276 = pneg %p96
        %p277 = pneg %p120
        %p278 = pneg %p117
        %p279 = pneg %p141
        %p280 = pneg %p138
        %p281 = pneg %p162
        %p282 = pneg %p159
        %p283 = pneg %p183
        %p284 = pneg %p180
        %p285 = pneg %p211
        %p286 = pneg %p208
        %s287 = sand.u32 %s198, 1
        %s288 = scalar_lea.sflag [#allocation6], %s287
        %s289 = sand.u32 %s198, 1
        %s290 = smul.addr %s289, 8
        %s291 = scalar_lea.vmem [#allocation5], %s290
        %s292 = sadd.s32 %s26, %s27
        %p293 = scmp.lt.s32.totalorder %s292, 1
        %s294 = scalar_select %p293, %s292, 1
        %s295 = smul.addr %s294, 66
        %s296 = smul.addr %s295, 4
        %s297 = scalar_lea.vmem %s0, %s296
        %s298 = sadd.s32 %s26, %s27
        %s299 = sadd.s32 %s26, %s27
        %s301 = smul.u32 %s27, 16
        %v302 = vld [vmem:[%s297] sm:$0xf]
        %v303 = vld [vmem:[%s297 + $0x4] sm:$0xf]
        %v304 = vld [vmem:[%s297 + $0x8] sm:$0x1]
        %v305 = vld [vmem:[%s297 + $0xc] sm:$0xf]
        %v306 = vld [vmem:[%s297 + $0x10] sm:$0xf]
        %v307 = vld [vmem:[%s297 + $0x14] sm:$0x1]
        %v308 = vld [vmem:[%s297 + $0x18] sm:$0xf]
        %v309 = vld [vmem:[%s297 + $0x1c] sm:$0xf]
        %v310 = vld [vmem:[%s297 + $0x20] sm:$0x1]
        %v311 = vld [vmem:[%s297 + $0x24] sm:$0xf]
        %v312 = vld [vmem:[%s297 + $0x28] sm:$0xf]
        %v313 = vld [vmem:[%s297 + $0x2c] sm:$0x1]
        %v314 = vld [vmem:[%s297 + $0x30] sm:$0xf]
        %v315 = vld [vmem:[%s297 + $0x34] sm:$0xf]
        %v316 = vld [vmem:[%s297 + $0x38] sm:$0x1]
        %v317 = vld [vmem:[%s297 + $0x3c] sm:$0xf]
        %v318 = vld [vmem:[%s297 + $0x40] sm:$0xf]
        %v319 = vld [vmem:[%s297 + $0x44] sm:$0x1]
        %v320 = vld [vmem:[%s297 + $0x48] sm:$0xf]
        %v321 = vld [vmem:[%s297 + $0x4c] sm:$0xf]
        %v322 = vld [vmem:[%s297 + $0x50] sm:$0x1]
        %v323 = vld [vmem:[%s297 + $0x54] sm:$0xf]
        %v324 = vld [vmem:[%s297 + $0x58] sm:$0xf]
        %v325 = vld [vmem:[%s297 + $0x5c] sm:$0x1]
        %v326 = vld [vmem:[%s297 + $0x60] sm:$0xf]
        %v327 = vld [vmem:[%s297 + $0x64] sm:$0xf]
        %v328 = vld [vmem:[%s297 + $0x68] sm:$0x1]
        %v329 = vld [vmem:[%s297 + $0x6c] sm:$0xf]
        %v330 = vld [vmem:[%s297 + $0x70] sm:$0xf]
        %v331 = vld [vmem:[%s297 + $0x74] sm:$0x1]
        %v332 = vld [vmem:[%s297 + $0x78] sm:$0xf]
        %v333 = vld [vmem:[%s297 + $0x7c] sm:$0xf]
        %v334 = vld [vmem:[%s297 + $0x80] sm:$0x1]
        %v335 = vld [vmem:[%s297 + $0x84] sm:$0xf]
        %v336 = vld [vmem:[%s297 + $0x88] sm:$0xf]
        %v337 = vld [vmem:[%s297 + $0x8c] sm:$0x1]
        %v338 = vld [vmem:[%s297 + $0x90] sm:$0xf]
        %v339 = vld [vmem:[%s297 + $0x94] sm:$0xf]
        %v340 = vld [vmem:[%s297 + $0x98] sm:$0x1]
        %v341 = vld [vmem:[%s297 + $0x9c] sm:$0xf]
        %v342 = vld [vmem:[%s297 + $0xa0] sm:$0xf]
        %v343 = vld [vmem:[%s297 + $0xa4] sm:$0x1]
        %v344 = vld [vmem:[%s297 + $0xa8] sm:$0xf]
        %v345 = vld [vmem:[%s297 + $0xac] sm:$0xf]
        %v346 = vld [vmem:[%s297 + $0xb0] sm:$0x1]
        %v347 = vld [vmem:[%s297 + $0xb4] sm:$0xf]
        %v348 = vld [vmem:[%s297 + $0xb8] sm:$0xf]
        %v349 = vld [vmem:[%s297 + $0xbc] sm:$0x1]
        %v350 = vld [vmem:[%s297 + $0xc0] sm:$0xf]
        %v351 = vld [vmem:[%s297 + $0xc4] sm:$0xf]
        %v352 = vld [vmem:[%s297 + $0xc8] sm:$0x1]
        %v353 = vld [vmem:[%s297 + $0xcc] sm:$0xf]
        %v354 = vld [vmem:[%s297 + $0xd0] sm:$0xf]
        %v355 = vld [vmem:[%s297 + $0xd4] sm:$0x1]
        %v356 = vld [vmem:[%s297 + $0xd8] sm:$0xf]
        %v357 = vld [vmem:[%s297 + $0xdc] sm:$0xf]
        %v358 = vld [vmem:[%s297 + $0xe0] sm:$0x1]
        %v359 = vld [vmem:[%s297 + $0xe4] sm:$0xf]
        %v360 = vld [vmem:[%s297 + $0xe8] sm:$0xf]
        %v361 = vld [vmem:[%s297 + $0xec] sm:$0x1]
        %v362 = vld [vmem:[%s297 + $0xf0] sm:$0xf]
        %v363 = vld [vmem:[%s297 + $0xf4] sm:$0xf]
        %v364 = vld [vmem:[%s297 + $0xf8] sm:$0x1]
        %v365 = vld [vmem:[%s297 + $0xfc] sm:$0xf]
        %v366 = vld [vmem:[%s297 + $0x100] sm:$0xf]
        %v367 = vld [vmem:[%s297 + $0x104] sm:$0x1]
        %v368 = vld [vmem:[%s1] sm:$0x1]
        %v369 = vunpack.c.l.bf16 %v302
        %v370 = vunpack.c.l.bf16 %v303
        %v371 = vunpack.c.l.bf16 %v305
        %v372 = vunpack.c.l.bf16 %v306
        %v373 = vunpack.c.l.bf16 %v308
        %v374 = vunpack.c.l.bf16 %v309
        %v375 = vunpack.c.l.bf16 %v311
        %v376 = vunpack.c.l.bf16 %v312
        %v377 = vunpack.c.l.bf16 %v314
        %v378 = vunpack.c.l.bf16 %v315
        %v379 = vunpack.c.l.bf16 %v317
        %v380 = vunpack.c.l.bf16 %v318
        %v381 = vunpack.c.l.bf16 %v320
        %v382 = vunpack.c.l.bf16 %v321
        %v383 = vunpack.c.l.bf16 %v323
        %v384 = vunpack.c.l.bf16 %v324
        %v385 = vunpack.c.l.bf16 %v326
        %v386 = vunpack.c.l.bf16 %v327
        %v387 = vunpack.c.l.bf16 %v329
        %v388 = vunpack.c.l.bf16 %v330
        %v389 = vunpack.c.l.bf16 %v332
        %v390 = vunpack.c.l.bf16 %v333
        %v391 = vunpack.c.l.bf16 %v335
        %v392 = vunpack.c.l.bf16 %v336
        %v393 = vunpack.c.l.bf16 %v338
        %v394 = vunpack.c.l.bf16 %v339
        %v395 = vunpack.c.l.bf16 %v341
        %v396 = vunpack.c.l.bf16 %v342
        %v397 = vunpack.c.l.bf16 %v344
        %v398 = vunpack.c.l.bf16 %v345
        %v399 = vunpack.c.l.bf16 %v347
        %v400 = vunpack.c.l.bf16 %v348
        %v401 = vunpack.c.l.bf16 %v350
        %v402 = vunpack.c.l.bf16 %v351
        %v403 = vunpack.c.l.bf16 %v353
        %v404 = vunpack.c.l.bf16 %v354
        %v405 = vunpack.c.l.bf16 %v356
        %v406 = vunpack.c.l.bf16 %v357
        %v407 = vunpack.c.l.bf16 %v359
        %v408 = vunpack.c.l.bf16 %v360
        %v410 = vperm.slane %v368, 0
        %v412 = vmul.f32 %v369, %v410
        %v413 = vmul.f32 %v370, %v410
        %v414 = vmul.f32 %v371, %v410
        %v415 = vmul.f32 %v372, %v410
        %v416 = vmul.f32 %v373, %v410
        %v417 = vmul.f32 %v374, %v410
        %v418 = vmul.f32 %v375, %v410
        %v419 = vmul.f32 %v376, %v410
        %v420 = vmul.f32 %v377, %v410
        %v421 = vmul.f32 %v378, %v410
        %v422 = vmul.f32 %v379, %v410
        %v423 = vmul.f32 %v380, %v410
        %v424 = vmul.f32 %v381, %v410
        %v425 = vmul.f32 %v382, %v410
        %v426 = vmul.f32 %v383, %v410
        %v427 = vmul.f32 %v384, %v410
        %v428 = vmul.f32 %v385, %v410
        %v429 = vmul.f32 %v386, %v410
        %v430 = vmul.f32 %v387, %v410
        %v431 = vmul.f32 %v388, %v410
        %v432 = vmul.f32 %v389, %v410
        %v433 = vmul.f32 %v390, %v410
        %v434 = vmul.f32 %v391, %v410
        %v435 = vmul.f32 %v392, %v410
        %v436 = vmul.f32 %v393, %v410
        %v437 = vmul.f32 %v394, %v410
        %v438 = vmul.f32 %v395, %v410
        %v439 = vmul.f32 %v396, %v410
        %v440 = vmul.f32 %v397, %v410
        %v441 = vmul.f32 %v398, %v410
        %v442 = vmul.f32 %v399, %v410
        %v443 = vmul.f32 %v400, %v410
        %v444 = vmul.f32 %v401, %v410
        %v445 = vmul.f32 %v402, %v410
        %v446 = vmul.f32 %v403, %v410
        %v447 = vmul.f32 %v404, %v410
        %v448 = vmul.f32 %v405, %v410
        %v449 = vmul.f32 %v406, %v410
        %v450 = vmul.f32 %v407, %v410
        %v451 = vmul.f32 %v408, %v410
        %s452 = scalar_lea.vmem %s1, 1
        %v453 = vld [vmem:[%s452] sm:$0x1]
        %v454 = vunpack.c.l.bf16 %v304
        %v455 = vunpack.c.l.bf16 %v307
        %v456 = vunpack.c.l.bf16 %v310
        %v457 = vunpack.c.l.bf16 %v313
        %v458 = vunpack.c.l.bf16 %v316
        %v459 = vunpack.c.l.bf16 %v319
        %v460 = vunpack.c.l.bf16 %v322
        %v461 = vunpack.c.l.bf16 %v325
        %v462 = vunpack.c.l.bf16 %v328
        %v463 = vunpack.c.l.bf16 %v331
        %v464 = vunpack.c.l.bf16 %v334
        %v465 = vunpack.c.l.bf16 %v337
        %v466 = vunpack.c.l.bf16 %v340
        %v467 = vunpack.c.l.bf16 %v343
        %v468 = vunpack.c.l.bf16 %v346
        %v469 = vunpack.c.l.bf16 %v349
        %v470 = vunpack.c.l.bf16 %v352
        %v471 = vunpack.c.l.bf16 %v355
        %v472 = vunpack.c.l.bf16 %v358
        %v473 = vunpack.c.l.bf16 %v361
        %v475 = vperm.slane %v453, 0
        %v477 = vmul.f32 %v369, %v475
        %v478 = vmul.f32 %v370, %v475
        %v479 = vmul.f32 %v454, %v475
        %v480 = vmul.f32 %v371, %v475
        %v481 = vmul.f32 %v372, %v475
        %v482 = vmul.f32 %v455, %v475
        %v483 = vmul.f32 %v373, %v475
        %v484 = vmul.f32 %v374, %v475
        %v485 = vmul.f32 %v456, %v475
        %v486 = vmul.f32 %v375, %v475
        %v487 = vmul.f32 %v376, %v475
        %v488 = vmul.f32 %v457, %v475
        %v489 = vmul.f32 %v377, %v475
        %v490 = vmul.f32 %v378, %v475
        %v491 = vmul.f32 %v458, %v475
        %v492 = vmul.f32 %v379, %v475
        %v493 = vmul.f32 %v380, %v475
        %v494 = vmul.f32 %v459, %v475
        %v495 = vmul.f32 %v381, %v475
        %v496 = vmul.f32 %v382, %v475
        %v497 = vmul.f32 %v460, %v475
        %v498 = vmul.f32 %v383, %v475
        %v499 = vmul.f32 %v384, %v475
        %v500 = vmul.f32 %v461, %v475
        %v501 = vmul.f32 %v385, %v475
        %v502 = vmul.f32 %v386, %v475
        %v503 = vmul.f32 %v462, %v475
        %v504 = vmul.f32 %v387, %v475
        %v505 = vmul.f32 %v388, %v475
        %v506 = vmul.f32 %v463, %v475
        %v507 = vmul.f32 %v389, %v475
        %v508 = vmul.f32 %v390, %v475
        %v509 = vmul.f32 %v464, %v475
        %v510 = vmul.f32 %v391, %v475
        %v511 = vmul.f32 %v392, %v475
        %v512 = vmul.f32 %v465, %v475
        %v513 = vmul.f32 %v393, %v475
        %v514 = vmul.f32 %v394, %v475
        %v515 = vmul.f32 %v466, %v475
        %v516 = vmul.f32 %v395, %v475
        %v517 = vmul.f32 %v396, %v475
        %v518 = vmul.f32 %v467, %v475
        %v519 = vmul.f32 %v397, %v475
        %v520 = vmul.f32 %v398, %v475
        %v521 = vmul.f32 %v468, %v475
        %v522 = vmul.f32 %v399, %v475
        %v523 = vmul.f32 %v400, %v475
        %v524 = vmul.f32 %v469, %v475
        %v525 = vmul.f32 %v401, %v475
        %v526 = vmul.f32 %v402, %v475
        %v527 = vmul.f32 %v470, %v475
        %v528 = vmul.f32 %v403, %v475
        %v529 = vmul.f32 %v404, %v475
        %v530 = vmul.f32 %v471, %v475
        %v531 = vmul.f32 %v405, %v475
        %v532 = vmul.f32 %v406, %v475
        %v533 = vmul.f32 %v472, %v475
        %v534 = vmul.f32 %v407, %v475
        %v535 = vmul.f32 %v408, %v475
        %v536 = vmul.f32 %v473, %v475
        %vm597 = vcmask 1046528
        %v598 = vrot.slane %v477, 1
        %v599 = vrot.slane %v478, 1
        %v600 = vsel %vm597, %v598, %v599
        %v601 = vrot.slane %v479, 1
        %v602 = vsel %vm597, %v599, %v601
        %v603 = vrot.slane %v480, 1
        %v604 = vrot.slane %v481, 1
        %v605 = vsel %vm597, %v603, %v604
        %v606 = vrot.slane %v482, 1
        %v607 = vsel %vm597, %v604, %v606
        %v608 = vrot.slane %v483, 1
        %v609 = vrot.slane %v484, 1
        %v610 = vsel %vm597, %v608, %v609
        %v611 = vrot.slane %v485, 1
        %v612 = vsel %vm597, %v609, %v611
        %v613 = vrot.slane %v486, 1
        %v614 = vrot.slane %v487, 1
        %v615 = vsel %vm597, %v613, %v614
        %v616 = vrot.slane %v488, 1
        %v617 = vsel %vm597, %v614, %v616
        %v618 = vrot.slane %v489, 1
        %v619 = vrot.slane %v490, 1
        %v620 = vsel %vm597, %v618, %v619
        %v621 = vrot.slane %v491, 1
        %v622 = vsel %vm597, %v619, %v621
        %v623 = vrot.slane %v492, 1
        %v624 = vrot.slane %v493, 1
        %v625 = vsel %vm597, %v623, %v624
        %v626 = vrot.slane %v494, 1
        %v627 = vsel %vm597, %v624, %v626
        %v628 = vrot.slane %v495, 1
        %v629 = vrot.slane %v496, 1
        %v630 = vsel %vm597, %v628, %v629
        %v631 = vrot.slane %v497, 1
        %v632 = vsel %vm597, %v629, %v631
        %v633 = vrot.slane %v498, 1
        %v634 = vrot.slane %v499, 1
        %v635 = vsel %vm597, %v633, %v634
        %v636 = vrot.slane %v500, 1
        %v637 = vsel %vm597, %v634, %v636
        %v638 = vrot.slane %v501, 1
        %v639 = vrot.slane %v502, 1
        %v640 = vsel %vm597, %v638, %v639
        %v641 = vrot.slane %v503, 1
        %v642 = vsel %vm597, %v639, %v641
        %v643 = vrot.slane %v504, 1
        %v644 = vrot.slane %v505, 1
        %v645 = vsel %vm597, %v643, %v644
        %v646 = vrot.slane %v506, 1
        %v647 = vsel %vm597, %v644, %v646
        %v648 = vrot.slane %v507, 1
        %v649 = vrot.slane %v508, 1
        %v650 = vsel %vm597, %v648, %v649
        %v651 = vrot.slane %v509, 1
        %v652 = vsel %vm597, %v649, %v651
        %v653 = vrot.slane %v510, 1
        %v654 = vrot.slane %v511, 1
        %v655 = vsel %vm597, %v653, %v654
        %v656 = vrot.slane %v512, 1
        %v657 = vsel %vm597, %v654, %v656
        %v658 = vrot.slane %v513, 1
        %v659 = vrot.slane %v514, 1
        %v660 = vsel %vm597, %v658, %v659
        %v661 = vrot.slane %v515, 1
        %v662 = vsel %vm597, %v659, %v661
        %v663 = vrot.slane %v516, 1
        %v664 = vrot.slane %v517, 1
        %v665 = vsel %vm597, %v663, %v664
        %v666 = vrot.slane %v518, 1
        %v667 = vsel %vm597, %v664, %v666
        %v668 = vrot.slane %v519, 1
        %v669 = vrot.slane %v520, 1
        %v670 = vsel %vm597, %v668, %v669
        %v671 = vrot.slane %v521, 1
        %v672 = vsel %vm597, %v669, %v671
        %v673 = vrot.slane %v522, 1
        %v674 = vrot.slane %v523, 1
        %v675 = vsel %vm597, %v673, %v674
        %v676 = vrot.slane %v524, 1
        %v677 = vsel %vm597, %v674, %v676
        %v678 = vrot.slane %v525, 1
        %v679 = vrot.slane %v526, 1
        %v680 = vsel %vm597, %v678, %v679
        %v681 = vrot.slane %v527, 1
        %v682 = vsel %vm597, %v679, %v681
        %v683 = vrot.slane %v528, 1
        %v684 = vrot.slane %v529, 1
        %v685 = vsel %vm597, %v683, %v684
        %v686 = vrot.slane %v530, 1
        %v687 = vsel %vm597, %v684, %v686
        %v688 = vrot.slane %v531, 1
        %v689 = vrot.slane %v532, 1
        %v690 = vsel %vm597, %v688, %v689
        %v691 = vrot.slane %v533, 1
        %v692 = vsel %vm597, %v689, %v691
        %v693 = vrot.slane %v534, 1
        %v694 = vrot.slane %v535, 1
        %v695 = vsel %vm597, %v693, %v694
        %v696 = vrot.slane %v536, 1
        %v697 = vsel %vm597, %v694, %v696
        %v738 = vadd.f32 %v412, %v600
        %v739 = vadd.f32 %v413, %v602
        %v740 = vadd.f32 %v414, %v605
        %v741 = vadd.f32 %v415, %v607
        %v742 = vadd.f32 %v416, %v610
        %v743 = vadd.f32 %v417, %v612
        %v744 = vadd.f32 %v418, %v615
        %v745 = vadd.f32 %v419, %v617
        %v746 = vadd.f32 %v420, %v620
        %v747 = vadd.f32 %v421, %v622
        %v748 = vadd.f32 %v422, %v625
        %v749 = vadd.f32 %v423, %v627
        %v750 = vadd.f32 %v424, %v630
        %v751 = vadd.f32 %v425, %v632
        %v752 = vadd.f32 %v426, %v635
        %v753 = vadd.f32 %v427, %v637
        %v754 = vadd.f32 %v428, %v640
        %v755 = vadd.f32 %v429, %v642
        %v756 = vadd.f32 %v430, %v645
        %v757 = vadd.f32 %v431, %v647
        %v758 = vadd.f32 %v432, %v650
        %v759 = vadd.f32 %v433, %v652
        %v760 = vadd.f32 %v434, %v655
        %v761 = vadd.f32 %v435, %v657
        %v762 = vadd.f32 %v436, %v660
        %v763 = vadd.f32 %v437, %v662
        %v764 = vadd.f32 %v438, %v665
        %v765 = vadd.f32 %v439, %v667
        %v766 = vadd.f32 %v440, %v670
        %v767 = vadd.f32 %v441, %v672
        %v768 = vadd.f32 %v442, %v675
        %v769 = vadd.f32 %v443, %v677
        %v770 = vadd.f32 %v444, %v680
        %v771 = vadd.f32 %v445, %v682
        %v772 = vadd.f32 %v446, %v685
        %v773 = vadd.f32 %v447, %v687
        %v774 = vadd.f32 %v448, %v690
        %v775 = vadd.f32 %v449, %v692
        %v776 = vadd.f32 %v450, %v695
        %v777 = vadd.f32 %v451, %v697
        %s778 = scalar_lea.vmem %s1, 2
        %v779 = vld [vmem:[%s778] sm:$0x1]
        %v781 = vperm.slane %v779, 0
        %v783 = vmul.f32 %v369, %v781
        %v784 = vmul.f32 %v370, %v781
        %v785 = vmul.f32 %v454, %v781
        %v786 = vmul.f32 %v371, %v781
        %v787 = vmul.f32 %v372, %v781
        %v788 = vmul.f32 %v455, %v781
        %v789 = vmul.f32 %v373, %v781
        %v790 = vmul.f32 %v374, %v781
        %v791 = vmul.f32 %v456, %v781
        %v792 = vmul.f32 %v375, %v781
        %v793 = vmul.f32 %v376, %v781
        %v794 = vmul.f32 %v457, %v781
        %v795 = vmul.f32 %v377, %v781
        %v796 = vmul.f32 %v378, %v781
        %v797 = vmul.f32 %v458, %v781
        %v798 = vmul.f32 %v379, %v781
        %v799 = vmul.f32 %v380, %v781
        %v800 = vmul.f32 %v459, %v781
        %v801 = vmul.f32 %v381, %v781
        %v802 = vmul.f32 %v382, %v781
        %v803 = vmul.f32 %v460, %v781
        %v804 = vmul.f32 %v383, %v781
        %v805 = vmul.f32 %v384, %v781
        %v806 = vmul.f32 %v461, %v781
        %v807 = vmul.f32 %v385, %v781
        %v808 = vmul.f32 %v386, %v781
        %v809 = vmul.f32 %v462, %v781
        %v810 = vmul.f32 %v387, %v781
        %v811 = vmul.f32 %v388, %v781
        %v812 = vmul.f32 %v463, %v781
        %v813 = vmul.f32 %v389, %v781
        %v814 = vmul.f32 %v390, %v781
        %v815 = vmul.f32 %v464, %v781
        %v816 = vmul.f32 %v391, %v781
        %v817 = vmul.f32 %v392, %v781
        %v818 = vmul.f32 %v465, %v781
        %v819 = vmul.f32 %v393, %v781
        %v820 = vmul.f32 %v394, %v781
        %v821 = vmul.f32 %v466, %v781
        %v822 = vmul.f32 %v395, %v781
        %v823 = vmul.f32 %v396, %v781
        %v824 = vmul.f32 %v467, %v781
        %v825 = vmul.f32 %v397, %v781
        %v826 = vmul.f32 %v398, %v781
        %v827 = vmul.f32 %v468, %v781
        %v828 = vmul.f32 %v399, %v781
        %v829 = vmul.f32 %v400, %v781
        %v830 = vmul.f32 %v469, %v781
        %v831 = vmul.f32 %v401, %v781
        %v832 = vmul.f32 %v402, %v781
        %v833 = vmul.f32 %v470, %v781
        %v834 = vmul.f32 %v403, %v781
        %v835 = vmul.f32 %v404, %v781
        %v836 = vmul.f32 %v471, %v781
        %v837 = vmul.f32 %v405, %v781
        %v838 = vmul.f32 %v406, %v781
        %v839 = vmul.f32 %v472, %v781
        %v840 = vmul.f32 %v407, %v781
        %v841 = vmul.f32 %v408, %v781
        %v842 = vmul.f32 %v473, %v781
        %vm903 = vcmask 1045504
        %v904 = vrot.slane %v783, 2
        %v905 = vrot.slane %v784, 2
        %v906 = vsel %vm903, %v904, %v905
        %v907 = vrot.slane %v785, 2
        %v908 = vsel %vm903, %v905, %v907
        %v909 = vrot.slane %v786, 2
        %v910 = vrot.slane %v787, 2
        %v911 = vsel %vm903, %v909, %v910
        %v912 = vrot.slane %v788, 2
        %v913 = vsel %vm903, %v910, %v912
        %v914 = vrot.slane %v789, 2
        %v915 = vrot.slane %v790, 2
        %v916 = vsel %vm903, %v914, %v915
        %v917 = vrot.slane %v791, 2
        %v918 = vsel %vm903, %v915, %v917
        %v919 = vrot.slane %v792, 2
        %v920 = vrot.slane %v793, 2
        %v921 = vsel %vm903, %v919, %v920
        %v922 = vrot.slane %v794, 2
        %v923 = vsel %vm903, %v920, %v922
        %v924 = vrot.slane %v795, 2
        %v925 = vrot.slane %v796, 2
        %v926 = vsel %vm903, %v924, %v925
        %v927 = vrot.slane %v797, 2
        %v928 = vsel %vm903, %v925, %v927
        %v929 = vrot.slane %v798, 2
        %v930 = vrot.slane %v799, 2
        %v931 = vsel %vm903, %v929, %v930
        %v932 = vrot.slane %v800, 2
        %v933 = vsel %vm903, %v930, %v932
        %v934 = vrot.slane %v801, 2
        %v935 = vrot.slane %v802, 2
        %v936 = vsel %vm903, %v934, %v935
        %v937 = vrot.slane %v803, 2
        %v938 = vsel %vm903, %v935, %v937
        %v939 = vrot.slane %v804, 2
        %v940 = vrot.slane %v805, 2
        %v941 = vsel %vm903, %v939, %v940
        %v942 = vrot.slane %v806, 2
        %v943 = vsel %vm903, %v940, %v942
        %v944 = vrot.slane %v807, 2
        %v945 = vrot.slane %v808, 2
        %v946 = vsel %vm903, %v944, %v945
        %v947 = vrot.slane %v809, 2
        %v948 = vsel %vm903, %v945, %v947
        %v949 = vrot.slane %v810, 2
        %v950 = vrot.slane %v811, 2
        %v951 = vsel %vm903, %v949, %v950
        %v952 = vrot.slane %v812, 2
        %v953 = vsel %vm903, %v950, %v952
        %v954 = vrot.slane %v813, 2
        %v955 = vrot.slane %v814, 2
        %v956 = vsel %vm903, %v954, %v955
        %v957 = vrot.slane %v815, 2
        %v958 = vsel %vm903, %v955, %v957
        %v959 = vrot.slane %v816, 2
        %v960 = vrot.slane %v817, 2
        %v961 = vsel %vm903, %v959, %v960
        %v962 = vrot.slane %v818, 2
        %v963 = vsel %vm903, %v960, %v962
        %v964 = vrot.slane %v819, 2
        %v965 = vrot.slane %v820, 2
        %v966 = vsel %vm903, %v964, %v965
        %v967 = vrot.slane %v821, 2
        %v968 = vsel %vm903, %v965, %v967
        %v969 = vrot.slane %v822, 2
        %v970 = vrot.slane %v823, 2
        %v971 = vsel %vm903, %v969, %v970
        %v972 = vrot.slane %v824, 2
        %v973 = vsel %vm903, %v970, %v972
        %v974 = vrot.slane %v825, 2
        %v975 = vrot.slane %v826, 2
        %v976 = vsel %vm903, %v974, %v975
        %v977 = vrot.slane %v827, 2
        %v978 = vsel %vm903, %v975, %v977
        %v979 = vrot.slane %v828, 2
        %v980 = vrot.slane %v829, 2
        %v981 = vsel %vm903, %v979, %v980
        %v982 = vrot.slane %v830, 2
        %v983 = vsel %vm903, %v980, %v982
        %v984 = vrot.slane %v831, 2
        %v985 = vrot.slane %v832, 2
        %v986 = vsel %vm903, %v984, %v985
        %v987 = vrot.slane %v833, 2
        %v988 = vsel %vm903, %v985, %v987
        %v989 = vrot.slane %v834, 2
        %v990 = vrot.slane %v835, 2
        %v991 = vsel %vm903, %v989, %v990
        %v992 = vrot.slane %v836, 2
        %v993 = vsel %vm903, %v990, %v992
        %v994 = vrot.slane %v837, 2
        %v995 = vrot.slane %v838, 2
        %v996 = vsel %vm903, %v994, %v995
        %v997 = vrot.slane %v839, 2
        %v998 = vsel %vm903, %v995, %v997
        %v999 = vrot.slane %v840, 2
        %v1000 = vrot.slane %v841, 2
        %v1001 = vsel %vm903, %v999, %v1000
        %v1002 = vrot.slane %v842, 2
        %v1003 = vsel %vm903, %v1000, %v1002
        %v1044 = vadd.f32 %v738, %v906
        %v1045 = vadd.f32 %v739, %v908
        %v1046 = vadd.f32 %v740, %v911
        %v1047 = vadd.f32 %v741, %v913
        %v1048 = vadd.f32 %v742, %v916
        %v1049 = vadd.f32 %v743, %v918
        %v1050 = vadd.f32 %v744, %v921
        %v1051 = vadd.f32 %v745, %v923
        %v1052 = vadd.f32 %v746, %v926
        %v1053 = vadd.f32 %v747, %v928
        %v1054 = vadd.f32 %v748, %v931
        %v1055 = vadd.f32 %v749, %v933
        %v1056 = vadd.f32 %v750, %v936
        %v1057 = vadd.f32 %v751, %v938
        %v1058 = vadd.f32 %v752, %v941
        %v1059 = vadd.f32 %v753, %v943
        %v1060 = vadd.f32 %v754, %v946
        %v1061 = vadd.f32 %v755, %v948
        %v1062 = vadd.f32 %v756, %v951
        %v1063 = vadd.f32 %v757, %v953
        %v1064 = vadd.f32 %v758, %v956
        %v1065 = vadd.f32 %v759, %v958
        %v1066 = vadd.f32 %v760, %v961
        %v1067 = vadd.f32 %v761, %v963
        %v1068 = vadd.f32 %v762, %v966
        %v1069 = vadd.f32 %v763, %v968
        %v1070 = vadd.f32 %v764, %v971
        %v1071 = vadd.f32 %v765, %v973
        %v1072 = vadd.f32 %v766, %v976
        %v1073 = vadd.f32 %v767, %v978
        %v1074 = vadd.f32 %v768, %v981
        %v1075 = vadd.f32 %v769, %v983
        %v1076 = vadd.f32 %v770, %v986
        %v1077 = vadd.f32 %v771, %v988
        %v1078 = vadd.f32 %v772, %v991
        %v1079 = vadd.f32 %v773, %v993
        %v1080 = vadd.f32 %v774, %v996
        %v1081 = vadd.f32 %v775, %v998
        %v1082 = vadd.f32 %v776, %v1001
        %v1083 = vadd.f32 %v777, %v1003
        %s1084 = scalar_lea.vmem %s1, 3
        %v1085 = vld [vmem:[%s1084] sm:$0x1]
        %v1086 = vunpack.c.l.bf16 %v362
        %v1087 = vunpack.c.l.bf16 %v363
        %v1089 = vperm.slane %v1085, 0
        %v1091 = vmul.f32 %v371, %v1089
        %v1092 = vmul.f32 %v372, %v1089
        %v1093 = vmul.f32 %v373, %v1089
        %v1094 = vmul.f32 %v374, %v1089
        %v1095 = vmul.f32 %v375, %v1089
        %v1096 = vmul.f32 %v376, %v1089
        %v1097 = vmul.f32 %v377, %v1089
        %v1098 = vmul.f32 %v378, %v1089
        %v1099 = vmul.f32 %v379, %v1089
        %v1100 = vmul.f32 %v380, %v1089
        %v1101 = vmul.f32 %v381, %v1089
        %v1102 = vmul.f32 %v382, %v1089
        %v1103 = vmul.f32 %v383, %v1089
        %v1104 = vmul.f32 %v384, %v1089
        %v1105 = vmul.f32 %v385, %v1089
        %v1106 = vmul.f32 %v386, %v1089
        %v1107 = vmul.f32 %v387, %v1089
        %v1108 = vmul.f32 %v388, %v1089
        %v1109 = vmul.f32 %v389, %v1089
        %v1110 = vmul.f32 %v390, %v1089
        %v1111 = vmul.f32 %v391, %v1089
        %v1112 = vmul.f32 %v392, %v1089
        %v1113 = vmul.f32 %v393, %v1089
        %v1114 = vmul.f32 %v394, %v1089
        %v1115 = vmul.f32 %v395, %v1089
        %v1116 = vmul.f32 %v396, %v1089
        %v1117 = vmul.f32 %v397, %v1089
        %v1118 = vmul.f32 %v398, %v1089
        %v1119 = vmul.f32 %v399, %v1089
        %v1120 = vmul.f32 %v400, %v1089
        %v1121 = vmul.f32 %v401, %v1089
        %v1122 = vmul.f32 %v402, %v1089
        %v1123 = vmul.f32 %v403, %v1089
        %v1124 = vmul.f32 %v404, %v1089
        %v1125 = vmul.f32 %v405, %v1089
        %v1126 = vmul.f32 %v406, %v1089
        %v1127 = vmul.f32 %v407, %v1089
        %v1128 = vmul.f32 %v408, %v1089
        %v1129 = vmul.f32 %v1086, %v1089
        %v1130 = vmul.f32 %v1087, %v1089
        %v1131 = vadd.f32 %v1044, %v1091
        %v1132 = vadd.f32 %v1045, %v1092
        %v1133 = vadd.f32 %v1046, %v1093
        %v1134 = vadd.f32 %v1047, %v1094
        %v1135 = vadd.f32 %v1048, %v1095
        %v1136 = vadd.f32 %v1049, %v1096
        %v1137 = vadd.f32 %v1050, %v1097
        %v1138 = vadd.f32 %v1051, %v1098
        %v1139 = vadd.f32 %v1052, %v1099
        %v1140 = vadd.f32 %v1053, %v1100
        %v1141 = vadd.f32 %v1054, %v1101
        %v1142 = vadd.f32 %v1055, %v1102
        %v1143 = vadd.f32 %v1056, %v1103
        %v1144 = vadd.f32 %v1057, %v1104
        %v1145 = vadd.f32 %v1058, %v1105
        %v1146 = vadd.f32 %v1059, %v1106
        %v1147 = vadd.f32 %v1060, %v1107
        %v1148 = vadd.f32 %v1061, %v1108
        %v1149 = vadd.f32 %v1062, %v1109
        %v1150 = vadd.f32 %v1063, %v1110
        %v1151 = vadd.f32 %v1064, %v1111
        %v1152 = vadd.f32 %v1065, %v1112
        %v1153 = vadd.f32 %v1066, %v1113
        %v1154 = vadd.f32 %v1067, %v1114
        %v1155 = vadd.f32 %v1068, %v1115
        %v1156 = vadd.f32 %v1069, %v1116
        %v1157 = vadd.f32 %v1070, %v1117
        %v1158 = vadd.f32 %v1071, %v1118
        %v1159 = vadd.f32 %v1072, %v1119
        %v1160 = vadd.f32 %v1073, %v1120
        %v1161 = vadd.f32 %v1074, %v1121
        %v1162 = vadd.f32 %v1075, %v1122
        %v1163 = vadd.f32 %v1076, %v1123
        %v1164 = vadd.f32 %v1077, %v1124
        %v1165 = vadd.f32 %v1078, %v1125
        %v1166 = vadd.f32 %v1079, %v1126
        %v1167 = vadd.f32 %v1080, %v1127
        %v1168 = vadd.f32 %v1081, %v1128
        %v1169 = vadd.f32 %v1082, %v1129
        %v1170 = vadd.f32 %v1083, %v1130
        %s1171 = scalar_lea.vmem %s1, 4
        %v1172 = vld [vmem:[%s1171] sm:$0x1]
        %v1173 = vunpack.c.l.bf16 %v364
        %v1175 = vperm.slane %v1172, 0
        %v1177 = vmul.f32 %v371, %v1175
        %v1178 = vmul.f32 %v372, %v1175
        %v1179 = vmul.f32 %v455, %v1175
        %v1180 = vmul.f32 %v373, %v1175
        %v1181 = vmul.f32 %v374, %v1175
        %v1182 = vmul.f32 %v456, %v1175
        %v1183 = vmul.f32 %v375, %v1175
        %v1184 = vmul.f32 %v376, %v1175
        %v1185 = vmul.f32 %v457, %v1175
        %v1186 = vmul.f32 %v377, %v1175
        %v1187 = vmul.f32 %v378, %v1175
        %v1188 = vmul.f32 %v458, %v1175
        %v1189 = vmul.f32 %v379, %v1175
        %v1190 = vmul.f32 %v380, %v1175
        %v1191 = vmul.f32 %v459, %v1175
        %v1192 = vmul.f32 %v381, %v1175
        %v1193 = vmul.f32 %v382, %v1175
        %v1194 = vmul.f32 %v460, %v1175
        %v1195 = vmul.f32 %v383, %v1175
        %v1196 = vmul.f32 %v384, %v1175
        %v1197 = vmul.f32 %v461, %v1175
        %v1198 = vmul.f32 %v385, %v1175
        %v1199 = vmul.f32 %v386, %v1175
        %v1200 = vmul.f32 %v462, %v1175
        %v1201 = vmul.f32 %v387, %v1175
        %v1202 = vmul.f32 %v388, %v1175
        %v1203 = vmul.f32 %v463, %v1175
        %v1204 = vmul.f32 %v389, %v1175
        %v1205 = vmul.f32 %v390, %v1175
        %v1206 = vmul.f32 %v464, %v1175
        %v1207 = vmul.f32 %v391, %v1175
        %v1208 = vmul.f32 %v392, %v1175
        %v1209 = vmul.f32 %v465, %v1175
        %v1210 = vmul.f32 %v393, %v1175
        %v1211 = vmul.f32 %v394, %v1175
        %v1212 = vmul.f32 %v466, %v1175
        %v1213 = vmul.f32 %v395, %v1175
        %v1214 = vmul.f32 %v396, %v1175
        %v1215 = vmul.f32 %v467, %v1175
        %v1216 = vmul.f32 %v397, %v1175
        %v1217 = vmul.f32 %v398, %v1175
        %v1218 = vmul.f32 %v468, %v1175
        %v1219 = vmul.f32 %v399, %v1175
        %v1220 = vmul.f32 %v400, %v1175
        %v1221 = vmul.f32 %v469, %v1175
        %v1222 = vmul.f32 %v401, %v1175
        %v1223 = vmul.f32 %v402, %v1175
        %v1224 = vmul.f32 %v470, %v1175
        %v1225 = vmul.f32 %v403, %v1175
        %v1226 = vmul.f32 %v404, %v1175
        %v1227 = vmul.f32 %v471, %v1175
        %v1228 = vmul.f32 %v405, %v1175
        %v1229 = vmul.f32 %v406, %v1175
        %v1230 = vmul.f32 %v472, %v1175
        %v1231 = vmul.f32 %v407, %v1175
        %v1232 = vmul.f32 %v408, %v1175
        %v1233 = vmul.f32 %v473, %v1175
        %v1234 = vmul.f32 %v1086, %v1175
        %v1235 = vmul.f32 %v1087, %v1175
        %v1236 = vmul.f32 %v1173, %v1175
        %v1297 = vrot.slane %v1177, 1
        %v1298 = vrot.slane %v1178, 1
        %v1299 = vsel %vm597, %v1297, %v1298
        %v1300 = vrot.slane %v1179, 1
        %v1301 = vsel %vm597, %v1298, %v1300
        %v1302 = vrot.slane %v1180, 1
        %v1303 = vrot.slane %v1181, 1
        %v1304 = vsel %vm597, %v1302, %v1303
        %v1305 = vrot.slane %v1182, 1
        %v1306 = vsel %vm597, %v1303, %v1305
        %v1307 = vrot.slane %v1183, 1
        %v1308 = vrot.slane %v1184, 1
        %v1309 = vsel %vm597, %v1307, %v1308
        %v1310 = vrot.slane %v1185, 1
        %v1311 = vsel %vm597, %v1308, %v1310
        %v1312 = vrot.slane %v1186, 1
        %v1313 = vrot.slane %v1187, 1
        %v1314 = vsel %vm597, %v1312, %v1313
        %v1315 = vrot.slane %v1188, 1
        %v1316 = vsel %vm597, %v1313, %v1315
        %v1317 = vrot.slane %v1189, 1
        %v1318 = vrot.slane %v1190, 1
        %v1319 = vsel %vm597, %v1317, %v1318
        %v1320 = vrot.slane %v1191, 1
        %v1321 = vsel %vm597, %v1318, %v1320
        %v1322 = vrot.slane %v1192, 1
        %v1323 = vrot.slane %v1193, 1
        %v1324 = vsel %vm597, %v1322, %v1323
        %v1325 = vrot.slane %v1194, 1
        %v1326 = vsel %vm597, %v1323, %v1325
        %v1327 = vrot.slane %v1195, 1
        %v1328 = vrot.slane %v1196, 1
        %v1329 = vsel %vm597, %v1327, %v1328
        %v1330 = vrot.slane %v1197, 1
        %v1331 = vsel %vm597, %v1328, %v1330
        %v1332 = vrot.slane %v1198, 1
        %v1333 = vrot.slane %v1199, 1
        %v1334 = vsel %vm597, %v1332, %v1333
        %v1335 = vrot.slane %v1200, 1
        %v1336 = vsel %vm597, %v1333, %v1335
        %v1337 = vrot.slane %v1201, 1
        %v1338 = vrot.slane %v1202, 1
        %v1339 = vsel %vm597, %v1337, %v1338
        %v1340 = vrot.slane %v1203, 1
        %v1341 = vsel %vm597, %v1338, %v1340
        %v1342 = vrot.slane %v1204, 1
        %v1343 = vrot.slane %v1205, 1
        %v1344 = vsel %vm597, %v1342, %v1343
        %v1345 = vrot.slane %v1206, 1
        %v1346 = vsel %vm597, %v1343, %v1345
        %v1347 = vrot.slane %v1207, 1
        %v1348 = vrot.slane %v1208, 1
        %v1349 = vsel %vm597, %v1347, %v1348
        %v1350 = vrot.slane %v1209, 1
        %v1351 = vsel %vm597, %v1348, %v1350
        %v1352 = vrot.slane %v1210, 1
        %v1353 = vrot.slane %v1211, 1
        %v1354 = vsel %vm597, %v1352, %v1353
        %v1355 = vrot.slane %v1212, 1
        %v1356 = vsel %vm597, %v1353, %v1355
        %v1357 = vrot.slane %v1213, 1
        %v1358 = vrot.slane %v1214, 1
        %v1359 = vsel %vm597, %v1357, %v1358
        %v1360 = vrot.slane %v1215, 1
        %v1361 = vsel %vm597, %v1358, %v1360
        %v1362 = vrot.slane %v1216, 1
        %v1363 = vrot.slane %v1217, 1
        %v1364 = vsel %vm597, %v1362, %v1363
        %v1365 = vrot.slane %v1218, 1
        %v1366 = vsel %vm597, %v1363, %v1365
        %v1367 = vrot.slane %v1219, 1
        %v1368 = vrot.slane %v1220, 1
        %v1369 = vsel %vm597, %v1367, %v1368
        %v1370 = vrot.slane %v1221, 1
        %v1371 = vsel %vm597, %v1368, %v1370
        %v1372 = vrot.slane %v1222, 1
        %v1373 = vrot.slane %v1223, 1
        %v1374 = vsel %vm597, %v1372, %v1373
        %v1375 = vrot.slane %v1224, 1
        %v1376 = vsel %vm597, %v1373, %v1375
        %v1377 = vrot.slane %v1225, 1
        %v1378 = vrot.slane %v1226, 1
        %v1379 = vsel %vm597, %v1377, %v1378
        %v1380 = vrot.slane %v1227, 1
        %v1381 = vsel %vm597, %v1378, %v1380
        %v1382 = vrot.slane %v1228, 1
        %v1383 = vrot.slane %v1229, 1
        %v1384 = vsel %vm597, %v1382, %v1383
        %v1385 = vrot.slane %v1230, 1
        %v1386 = vsel %vm597, %v1383, %v1385
        %v1387 = vrot.slane %v1231, 1
        %v1388 = vrot.slane %v1232, 1
        %v1389 = vsel %vm597, %v1387, %v1388
        %v1390 = vrot.slane %v1233, 1
        %v1391 = vsel %vm597, %v1388, %v1390
        %v1392 = vrot.slane %v1234, 1
        %v1393 = vrot.slane %v1235, 1
        %v1394 = vsel %vm597, %v1392, %v1393
        %v1395 = vrot.slane %v1236, 1
        %v1396 = vsel %vm597, %v1393, %v1395
        %v1437 = vadd.f32 %v1131, %v1299
        %v1438 = vadd.f32 %v1132, %v1301
        %v1439 = vadd.f32 %v1133, %v1304
        %v1440 = vadd.f32 %v1134, %v1306
        %v1441 = vadd.f32 %v1135, %v1309
        %v1442 = vadd.f32 %v1136, %v1311
        %v1443 = vadd.f32 %v1137, %v1314
        %v1444 = vadd.f32 %v1138, %v1316
        %v1445 = vadd.f32 %v1139, %v1319
        %v1446 = vadd.f32 %v1140, %v1321
        %v1447 = vadd.f32 %v1141, %v1324
        %v1448 = vadd.f32 %v1142, %v1326
        %v1449 = vadd.f32 %v1143, %v1329
        %v1450 = vadd.f32 %v1144, %v1331
        %v1451 = vadd.f32 %v1145, %v1334
        %v1452 = vadd.f32 %v1146, %v1336
        %v1453 = vadd.f32 %v1147, %v1339
        %v1454 = vadd.f32 %v1148, %v1341
        %v1455 = vadd.f32 %v1149, %v1344
        %v1456 = vadd.f32 %v1150, %v1346
        %v1457 = vadd.f32 %v1151, %v1349
        %v1458 = vadd.f32 %v1152, %v1351
        %v1459 = vadd.f32 %v1153, %v1354
        %v1460 = vadd.f32 %v1154, %v1356
        %v1461 = vadd.f32 %v1155, %v1359
        %v1462 = vadd.f32 %v1156, %v1361
        %v1463 = vadd.f32 %v1157, %v1364
        %v1464 = vadd.f32 %v1158, %v1366
        %v1465 = vadd.f32 %v1159, %v1369
        %v1466 = vadd.f32 %v1160, %v1371
        %v1467 = vadd.f32 %v1161, %v1374
        %v1468 = vadd.f32 %v1162, %v1376
        %v1469 = vadd.f32 %v1163, %v1379
        %v1470 = vadd.f32 %v1164, %v1381
        %v1471 = vadd.f32 %v1165, %v1384
        %v1472 = vadd.f32 %v1166, %v1386
        %v1473 = vadd.f32 %v1167, %v1389
        %v1474 = vadd.f32 %v1168, %v1391
        %v1475 = vadd.f32 %v1169, %v1394
        %v1476 = vadd.f32 %v1170, %v1396
        %s1477 = scalar_lea.vmem %s1, 5
        %v1478 = vld [vmem:[%s1477] sm:$0x1]
        %v1480 = vperm.slane %v1478, 0
        %v1482 = vmul.f32 %v371, %v1480
        %v1483 = vmul.f32 %v372, %v1480
        %v1484 = vmul.f32 %v455, %v1480
        %v1485 = vmul.f32 %v373, %v1480
        %v1486 = vmul.f32 %v374, %v1480
        %v1487 = vmul.f32 %v456, %v1480
        %v1488 = vmul.f32 %v375, %v1480
        %v1489 = vmul.f32 %v376, %v1480
        %v1490 = vmul.f32 %v457, %v1480
        %v1491 = vmul.f32 %v377, %v1480
        %v1492 = vmul.f32 %v378, %v1480
        %v1493 = vmul.f32 %v458, %v1480
        %v1494 = vmul.f32 %v379, %v1480
        %v1495 = vmul.f32 %v380, %v1480
        %v1496 = vmul.f32 %v459, %v1480
        %v1497 = vmul.f32 %v381, %v1480
        %v1498 = vmul.f32 %v382, %v1480
        %v1499 = vmul.f32 %v460, %v1480
        %v1500 = vmul.f32 %v383, %v1480
        %v1501 = vmul.f32 %v384, %v1480
        %v1502 = vmul.f32 %v461, %v1480
        %v1503 = vmul.f32 %v385, %v1480
        %v1504 = vmul.f32 %v386, %v1480
        %v1505 = vmul.f32 %v462, %v1480
        %v1506 = vmul.f32 %v387, %v1480
        %v1507 = vmul.f32 %v388, %v1480
        %v1508 = vmul.f32 %v463, %v1480
        %v1509 = vmul.f32 %v389, %v1480
        %v1510 = vmul.f32 %v390, %v1480
        %v1511 = vmul.f32 %v464, %v1480
        %v1512 = vmul.f32 %v391, %v1480
        %v1513 = vmul.f32 %v392, %v1480
        %v1514 = vmul.f32 %v465, %v1480
        %v1515 = vmul.f32 %v393, %v1480
        %v1516 = vmul.f32 %v394, %v1480
        %v1517 = vmul.f32 %v466, %v1480
        %v1518 = vmul.f32 %v395, %v1480
        %v1519 = vmul.f32 %v396, %v1480
        %v1520 = vmul.f32 %v467, %v1480
        %v1521 = vmul.f32 %v397, %v1480
        %v1522 = vmul.f32 %v398, %v1480
        %v1523 = vmul.f32 %v468, %v1480
        %v1524 = vmul.f32 %v399, %v1480
        %v1525 = vmul.f32 %v400, %v1480
        %v1526 = vmul.f32 %v469, %v1480
        %v1527 = vmul.f32 %v401, %v1480
        %v1528 = vmul.f32 %v402, %v1480
        %v1529 = vmul.f32 %v470, %v1480
        %v1530 = vmul.f32 %v403, %v1480
        %v1531 = vmul.f32 %v404, %v1480
        %v1532 = vmul.f32 %v471, %v1480
        %v1533 = vmul.f32 %v405, %v1480
        %v1534 = vmul.f32 %v406, %v1480
        %v1535 = vmul.f32 %v472, %v1480
        %v1536 = vmul.f32 %v407, %v1480
        %v1537 = vmul.f32 %v408, %v1480
        %v1538 = vmul.f32 %v473, %v1480
        %v1539 = vmul.f32 %v1086, %v1480
        %v1540 = vmul.f32 %v1087, %v1480
        %v1541 = vmul.f32 %v1173, %v1480
        %v1602 = vrot.slane %v1482, 2
        %v1603 = vrot.slane %v1483, 2
        %v1604 = vsel %vm903, %v1602, %v1603
        %v1605 = vrot.slane %v1484, 2
        %v1606 = vsel %vm903, %v1603, %v1605
        %v1607 = vrot.slane %v1485, 2
        %v1608 = vrot.slane %v1486, 2
        %v1609 = vsel %vm903, %v1607, %v1608
        %v1610 = vrot.slane %v1487, 2
        %v1611 = vsel %vm903, %v1608, %v1610
        %v1612 = vrot.slane %v1488, 2
        %v1613 = vrot.slane %v1489, 2
        %v1614 = vsel %vm903, %v1612, %v1613
        %v1615 = vrot.slane %v1490, 2
        %v1616 = vsel %vm903, %v1613, %v1615
        %v1617 = vrot.slane %v1491, 2
        %v1618 = vrot.slane %v1492, 2
        %v1619 = vsel %vm903, %v1617, %v1618
        %v1620 = vrot.slane %v1493, 2
        %v1621 = vsel %vm903, %v1618, %v1620
        %v1622 = vrot.slane %v1494, 2
        %v1623 = vrot.slane %v1495, 2
        %v1624 = vsel %vm903, %v1622, %v1623
        %v1625 = vrot.slane %v1496, 2
        %v1626 = vsel %vm903, %v1623, %v1625
        %v1627 = vrot.slane %v1497, 2
        %v1628 = vrot.slane %v1498, 2
        %v1629 = vsel %vm903, %v1627, %v1628
        %v1630 = vrot.slane %v1499, 2
        %v1631 = vsel %vm903, %v1628, %v1630
        %v1632 = vrot.slane %v1500, 2
        %v1633 = vrot.slane %v1501, 2
        %v1634 = vsel %vm903, %v1632, %v1633
        %v1635 = vrot.slane %v1502, 2
        %v1636 = vsel %vm903, %v1633, %v1635
        %v1637 = vrot.slane %v1503, 2
        %v1638 = vrot.slane %v1504, 2
        %v1639 = vsel %vm903, %v1637, %v1638
        %v1640 = vrot.slane %v1505, 2
        %v1641 = vsel %vm903, %v1638, %v1640
        %v1642 = vrot.slane %v1506, 2
        %v1643 = vrot.slane %v1507, 2
        %v1644 = vsel %vm903, %v1642, %v1643
        %v1645 = vrot.slane %v1508, 2
        %v1646 = vsel %vm903, %v1643, %v1645
        %v1647 = vrot.slane %v1509, 2
        %v1648 = vrot.slane %v1510, 2
        %v1649 = vsel %vm903, %v1647, %v1648
        %v1650 = vrot.slane %v1511, 2
        %v1651 = vsel %vm903, %v1648, %v1650
        %v1652 = vrot.slane %v1512, 2
        %v1653 = vrot.slane %v1513, 2
        %v1654 = vsel %vm903, %v1652, %v1653
        %v1655 = vrot.slane %v1514, 2
        %v1656 = vsel %vm903, %v1653, %v1655
        %v1657 = vrot.slane %v1515, 2
        %v1658 = vrot.slane %v1516, 2
        %v1659 = vsel %vm903, %v1657, %v1658
        %v1660 = vrot.slane %v1517, 2
        %v1661 = vsel %vm903, %v1658, %v1660
        %v1662 = vrot.slane %v1518, 2
        %v1663 = vrot.slane %v1519, 2
        %v1664 = vsel %vm903, %v1662, %v1663
        %v1665 = vrot.slane %v1520, 2
        %v1666 = vsel %vm903, %v1663, %v1665
        %v1667 = vrot.slane %v1521, 2
        %v1668 = vrot.slane %v1522, 2
        %v1669 = vsel %vm903, %v1667, %v1668
        %v1670 = vrot.slane %v1523, 2
        %v1671 = vsel %vm903, %v1668, %v1670
        %v1672 = vrot.slane %v1524, 2
        %v1673 = vrot.slane %v1525, 2
        %v1674 = vsel %vm903, %v1672, %v1673
        %v1675 = vrot.slane %v1526, 2
        %v1676 = vsel %vm903, %v1673, %v1675
        %v1677 = vrot.slane %v1527, 2
        %v1678 = vrot.slane %v1528, 2
        %v1679 = vsel %vm903, %v1677, %v1678
        %v1680 = vrot.slane %v1529, 2
        %v1681 = vsel %vm903, %v1678, %v1680
        %v1682 = vrot.slane %v1530, 2
        %v1683 = vrot.slane %v1531, 2
        %v1684 = vsel %vm903, %v1682, %v1683
        %v1685 = vrot.slane %v1532, 2
        %v1686 = vsel %vm903, %v1683, %v1685
        %v1687 = vrot.slane %v1533, 2
        %v1688 = vrot.slane %v1534, 2
        %v1689 = vsel %vm903, %v1687, %v1688
        %v1690 = vrot.slane %v1535, 2
        %v1691 = vsel %vm903, %v1688, %v1690
        %v1692 = vrot.slane %v1536, 2
        %v1693 = vrot.slane %v1537, 2
        %v1694 = vsel %vm903, %v1692, %v1693
        %v1695 = vrot.slane %v1538, 2
        %v1696 = vsel %vm903, %v1693, %v1695
        %v1697 = vrot.slane %v1539, 2
        %v1698 = vrot.slane %v1540, 2
        %v1699 = vsel %vm903, %v1697, %v1698
        %v1700 = vrot.slane %v1541, 2
        %v1701 = vsel %vm903, %v1698, %v1700
        %v1742 = vadd.f32 %v1437, %v1604
        %v1743 = vadd.f32 %v1438, %v1606
        %v1744 = vadd.f32 %v1439, %v1609
        %v1745 = vadd.f32 %v1440, %v1611
        %v1746 = vadd.f32 %v1441, %v1614
        %v1747 = vadd.f32 %v1442, %v1616
        %v1748 = vadd.f32 %v1443, %v1619
        %v1749 = vadd.f32 %v1444, %v1621
        %v1750 = vadd.f32 %v1445, %v1624
        %v1751 = vadd.f32 %v1446, %v1626
        %v1752 = vadd.f32 %v1447, %v1629
        %v1753 = vadd.f32 %v1448, %v1631
        %v1754 = vadd.f32 %v1449, %v1634
        %v1755 = vadd.f32 %v1450, %v1636
        %v1756 = vadd.f32 %v1451, %v1639
        %v1757 = vadd.f32 %v1452, %v1641
        %v1758 = vadd.f32 %v1453, %v1644
        %v1759 = vadd.f32 %v1454, %v1646
        %v1760 = vadd.f32 %v1455, %v1649
        %v1761 = vadd.f32 %v1456, %v1651
        %v1762 = vadd.f32 %v1457, %v1654
        %v1763 = vadd.f32 %v1458, %v1656
        %v1764 = vadd.f32 %v1459, %v1659
        %v1765 = vadd.f32 %v1460, %v1661
        %v1766 = vadd.f32 %v1461, %v1664
        %v1767 = vadd.f32 %v1462, %v1666
        %v1768 = vadd.f32 %v1463, %v1669
        %v1769 = vadd.f32 %v1464, %v1671
        %v1770 = vadd.f32 %v1465, %v1674
        %v1771 = vadd.f32 %v1466, %v1676
        %v1772 = vadd.f32 %v1467, %v1679
        %v1773 = vadd.f32 %v1468, %v1681
        %v1774 = vadd.f32 %v1469, %v1684
        %v1775 = vadd.f32 %v1470, %v1686
        %v1776 = vadd.f32 %v1471, %v1689
        %v1777 = vadd.f32 %v1472, %v1691
        %v1778 = vadd.f32 %v1473, %v1694
        %v1779 = vadd.f32 %v1474, %v1696
        %v1780 = vadd.f32 %v1475, %v1699
        %v1781 = vadd.f32 %v1476, %v1701
        %s1782 = scalar_lea.vmem %s1, 6
        %v1783 = vld [vmem:[%s1782] sm:$0x1]
        %v1784 = vunpack.c.l.bf16 %v365
        %v1785 = vunpack.c.l.bf16 %v366
        %v1787 = vperm.slane %v1783, 0
        %v1789 = vmul.f32 %v373, %v1787
        %v1790 = vmul.f32 %v374, %v1787
        %v1791 = vmul.f32 %v375, %v1787
        %v1792 = vmul.f32 %v376, %v1787
        %v1793 = vmul.f32 %v377, %v1787
        %v1794 = vmul.f32 %v378, %v1787
        %v1795 = vmul.f32 %v379, %v1787
        %v1796 = vmul.f32 %v380, %v1787
        %v1797 = vmul.f32 %v381, %v1787
        %v1798 = vmul.f32 %v382, %v1787
        %v1799 = vmul.f32 %v383, %v1787
        %v1800 = vmul.f32 %v384, %v1787
        %v1801 = vmul.f32 %v385, %v1787
        %v1802 = vmul.f32 %v386, %v1787
        %v1803 = vmul.f32 %v387, %v1787
        %v1804 = vmul.f32 %v388, %v1787
        %v1805 = vmul.f32 %v389, %v1787
        %v1806 = vmul.f32 %v390, %v1787
        %v1807 = vmul.f32 %v391, %v1787
        %v1808 = vmul.f32 %v392, %v1787
        %v1809 = vmul.f32 %v393, %v1787
        %v1810 = vmul.f32 %v394, %v1787
        %v1811 = vmul.f32 %v395, %v1787
        %v1812 = vmul.f32 %v396, %v1787
        %v1813 = vmul.f32 %v397, %v1787
        %v1814 = vmul.f32 %v398, %v1787
        %v1815 = vmul.f32 %v399, %v1787
        %v1816 = vmul.f32 %v400, %v1787
        %v1817 = vmul.f32 %v401, %v1787
        %v1818 = vmul.f32 %v402, %v1787
        %v1819 = vmul.f32 %v403, %v1787
        %v1820 = vmul.f32 %v404, %v1787
        %v1821 = vmul.f32 %v405, %v1787
        %v1822 = vmul.f32 %v406, %v1787
        %v1823 = vmul.f32 %v407, %v1787
        %v1824 = vmul.f32 %v408, %v1787
        %v1825 = vmul.f32 %v1086, %v1787
        %v1826 = vmul.f32 %v1087, %v1787
        %v1827 = vmul.f32 %v1784, %v1787
        %v1828 = vmul.f32 %v1785, %v1787
        %v1829 = vadd.f32 %v1742, %v1789
        %v1830 = vadd.f32 %v1743, %v1790
        %v1831 = vadd.f32 %v1744, %v1791
        %v1832 = vadd.f32 %v1745, %v1792
        %v1833 = vadd.f32 %v1746, %v1793
        %v1834 = vadd.f32 %v1747, %v1794
        %v1835 = vadd.f32 %v1748, %v1795
        %v1836 = vadd.f32 %v1749, %v1796
        %v1837 = vadd.f32 %v1750, %v1797
        %v1838 = vadd.f32 %v1751, %v1798
        %v1839 = vadd.f32 %v1752, %v1799
        %v1840 = vadd.f32 %v1753, %v1800
        %v1841 = vadd.f32 %v1754, %v1801
        %v1842 = vadd.f32 %v1755, %v1802
        %v1843 = vadd.f32 %v1756, %v1803
        %v1844 = vadd.f32 %v1757, %v1804
        %v1845 = vadd.f32 %v1758, %v1805
        %v1846 = vadd.f32 %v1759, %v1806
        %v1847 = vadd.f32 %v1760, %v1807
        %v1848 = vadd.f32 %v1761, %v1808
        %v1849 = vadd.f32 %v1762, %v1809
        %v1850 = vadd.f32 %v1763, %v1810
        %v1851 = vadd.f32 %v1764, %v1811
        %v1852 = vadd.f32 %v1765, %v1812
        %v1853 = vadd.f32 %v1766, %v1813
        %v1854 = vadd.f32 %v1767, %v1814
        %v1855 = vadd.f32 %v1768, %v1815
        %v1856 = vadd.f32 %v1769, %v1816
        %v1857 = vadd.f32 %v1770, %v1817
        %v1858 = vadd.f32 %v1771, %v1818
        %v1859 = vadd.f32 %v1772, %v1819
        %v1860 = vadd.f32 %v1773, %v1820
        %v1861 = vadd.f32 %v1774, %v1821
        %v1862 = vadd.f32 %v1775, %v1822
        %v1863 = vadd.f32 %v1776, %v1823
        %v1864 = vadd.f32 %v1777, %v1824
        %v1865 = vadd.f32 %v1778, %v1825
        %v1866 = vadd.f32 %v1779, %v1826
        %v1867 = vadd.f32 %v1780, %v1827
        %v1868 = vadd.f32 %v1781, %v1828
        %s1869 = scalar_lea.vmem %s1, 7
        %v1870 = vld [vmem:[%s1869] sm:$0x1]
        %v1871 = vunpack.c.l.bf16 %v367
        %v1873 = vperm.slane %v1870, 0
        %v1875 = vmul.f32 %v373, %v1873
        %v1876 = vmul.f32 %v374, %v1873
        %v1877 = vmul.f32 %v456, %v1873
        %v1878 = vmul.f32 %v375, %v1873
        %v1879 = vmul.f32 %v376, %v1873
        %v1880 = vmul.f32 %v457, %v1873
        %v1881 = vmul.f32 %v377, %v1873
        %v1882 = vmul.f32 %v378, %v1873
        %v1883 = vmul.f32 %v458, %v1873
        %v1884 = vmul.f32 %v379, %v1873
        %v1885 = vmul.f32 %v380, %v1873
        %v1886 = vmul.f32 %v459, %v1873
        %v1887 = vmul.f32 %v381, %v1873
        %v1888 = vmul.f32 %v382, %v1873
        %v1889 = vmul.f32 %v460, %v1873
        %v1890 = vmul.f32 %v383, %v1873
        %v1891 = vmul.f32 %v384, %v1873
        %v1892 = vmul.f32 %v461, %v1873
        %v1893 = vmul.f32 %v385, %v1873
        %v1894 = vmul.f32 %v386, %v1873
        %v1895 = vmul.f32 %v462, %v1873
        %v1896 = vmul.f32 %v387, %v1873
        %v1897 = vmul.f32 %v388, %v1873
        %v1898 = vmul.f32 %v463, %v1873
        %v1899 = vmul.f32 %v389, %v1873
        %v1900 = vmul.f32 %v390, %v1873
        %v1901 = vmul.f32 %v464, %v1873
        %v1902 = vmul.f32 %v391, %v1873
        %v1903 = vmul.f32 %v392, %v1873
        %v1904 = vmul.f32 %v465, %v1873
        %v1905 = vmul.f32 %v393, %v1873
        %v1906 = vmul.f32 %v394, %v1873
        %v1907 = vmul.f32 %v466, %v1873
        %v1908 = vmul.f32 %v395, %v1873
        %v1909 = vmul.f32 %v396, %v1873
        %v1910 = vmul.f32 %v467, %v1873
        %v1911 = vmul.f32 %v397, %v1873
        %v1912 = vmul.f32 %v398, %v1873
        %v1913 = vmul.f32 %v468, %v1873
        %v1914 = vmul.f32 %v399, %v1873
        %v1915 = vmul.f32 %v400, %v1873
        %v1916 = vmul.f32 %v469, %v1873
        %v1917 = vmul.f32 %v401, %v1873
        %v1918 = vmul.f32 %v402, %v1873
        %v1919 = vmul.f32 %v470, %v1873
        %v1920 = vmul.f32 %v403, %v1873
        %v1921 = vmul.f32 %v404, %v1873
        %v1922 = vmul.f32 %v471, %v1873
        %v1923 = vmul.f32 %v405, %v1873
        %v1924 = vmul.f32 %v406, %v1873
        %v1925 = vmul.f32 %v472, %v1873
        %v1926 = vmul.f32 %v407, %v1873
        %v1927 = vmul.f32 %v408, %v1873
        %v1928 = vmul.f32 %v473, %v1873
        %v1929 = vmul.f32 %v1086, %v1873
        %v1930 = vmul.f32 %v1087, %v1873
        %v1931 = vmul.f32 %v1173, %v1873
        %v1932 = vmul.f32 %v1784, %v1873
        %v1933 = vmul.f32 %v1785, %v1873
        %v1934 = vmul.f32 %v1871, %v1873
        %v1995 = vrot.slane %v1875, 1
        %v1996 = vrot.slane %v1876, 1
        %v1997 = vsel %vm597, %v1995, %v1996
        %v1998 = vrot.slane %v1877, 1
        %v1999 = vsel %vm597, %v1996, %v1998
        %v2000 = vrot.slane %v1878, 1
        %v2001 = vrot.slane %v1879, 1
        %v2002 = vsel %vm597, %v2000, %v2001
        %v2003 = vrot.slane %v1880, 1
        %v2004 = vsel %vm597, %v2001, %v2003
        %v2005 = vrot.slane %v1881, 1
        %v2006 = vrot.slane %v1882, 1
        %v2007 = vsel %vm597, %v2005, %v2006
        %v2008 = vrot.slane %v1883, 1
        %v2009 = vsel %vm597, %v2006, %v2008
        %v2010 = vrot.slane %v1884, 1
        %v2011 = vrot.slane %v1885, 1
        %v2012 = vsel %vm597, %v2010, %v2011
        %v2013 = vrot.slane %v1886, 1
        %v2014 = vsel %vm597, %v2011, %v2013
        %v2015 = vrot.slane %v1887, 1
        %v2016 = vrot.slane %v1888, 1
        %v2017 = vsel %vm597, %v2015, %v2016
        %v2018 = vrot.slane %v1889, 1
        %v2019 = vsel %vm597, %v2016, %v2018
        %v2020 = vrot.slane %v1890, 1
        %v2021 = vrot.slane %v1891, 1
        %v2022 = vsel %vm597, %v2020, %v2021
        %v2023 = vrot.slane %v1892, 1
        %v2024 = vsel %vm597, %v2021, %v2023
        %v2025 = vrot.slane %v1893, 1
        %v2026 = vrot.slane %v1894, 1
        %v2027 = vsel %vm597, %v2025, %v2026
        %v2028 = vrot.slane %v1895, 1
        %v2029 = vsel %vm597, %v2026, %v2028
        %v2030 = vrot.slane %v1896, 1
        %v2031 = vrot.slane %v1897, 1
        %v2032 = vsel %vm597, %v2030, %v2031
        %v2033 = vrot.slane %v1898, 1
        %v2034 = vsel %vm597, %v2031, %v2033
        %v2035 = vrot.slane %v1899, 1
        %v2036 = vrot.slane %v1900, 1
        %v2037 = vsel %vm597, %v2035, %v2036
        %v2038 = vrot.slane %v1901, 1
        %v2039 = vsel %vm597, %v2036, %v2038
        %v2040 = vrot.slane %v1902, 1
        %v2041 = vrot.slane %v1903, 1
        %v2042 = vsel %vm597, %v2040, %v2041
        %v2043 = vrot.slane %v1904, 1
        %v2044 = vsel %vm597, %v2041, %v2043
        %v2045 = vrot.slane %v1905, 1
        %v2046 = vrot.slane %v1906, 1
        %v2047 = vsel %vm597, %v2045, %v2046
        %v2048 = vrot.slane %v1907, 1
        %v2049 = vsel %vm597, %v2046, %v2048
        %v2050 = vrot.slane %v1908, 1
        %v2051 = vrot.slane %v1909, 1
        %v2052 = vsel %vm597, %v2050, %v2051
        %v2053 = vrot.slane %v1910, 1
        %v2054 = vsel %vm597, %v2051, %v2053
        %v2055 = vrot.slane %v1911, 1
        %v2056 = vrot.slane %v1912, 1
        %v2057 = vsel %vm597, %v2055, %v2056
        %v2058 = vrot.slane %v1913, 1
        %v2059 = vsel %vm597, %v2056, %v2058
        %v2060 = vrot.slane %v1914, 1
        %v2061 = vrot.slane %v1915, 1
        %v2062 = vsel %vm597, %v2060, %v2061
        %v2063 = vrot.slane %v1916, 1
        %v2064 = vsel %vm597, %v2061, %v2063
        %v2065 = vrot.slane %v1917, 1
        %v2066 = vrot.slane %v1918, 1
        %v2067 = vsel %vm597, %v2065, %v2066
        %v2068 = vrot.slane %v1919, 1
        %v2069 = vsel %vm597, %v2066, %v2068
        %v2070 = vrot.slane %v1920, 1
        %v2071 = vrot.slane %v1921, 1
        %v2072 = vsel %vm597, %v2070, %v2071
        %v2073 = vrot.slane %v1922, 1
        %v2074 = vsel %vm597, %v2071, %v2073
        %v2075 = vrot.slane %v1923, 1
        %v2076 = vrot.slane %v1924, 1
        %v2077 = vsel %vm597, %v2075, %v2076
        %v2078 = vrot.slane %v1925, 1
        %v2079 = vsel %vm597, %v2076, %v2078
        %v2080 = vrot.slane %v1926, 1
        %v2081 = vrot.slane %v1927, 1
        %v2082 = vsel %vm597, %v2080, %v2081
        %v2083 = vrot.slane %v1928, 1
        %v2084 = vsel %vm597, %v2081, %v2083
        %v2085 = vrot.slane %v1929, 1
        %v2086 = vrot.slane %v1930, 1
        %v2087 = vsel %vm597, %v2085, %v2086
        %v2088 = vrot.slane %v1931, 1
        %v2089 = vsel %vm597, %v2086, %v2088
        %v2090 = vrot.slane %v1932, 1
        %v2091 = vrot.slane %v1933, 1
        %v2092 = vsel %vm597, %v2090, %v2091
        %v2093 = vrot.slane %v1934, 1
        %v2094 = vsel %vm597, %v2091, %v2093
        %v2135 = vadd.f32 %v1829, %v1997
        %v2136 = vadd.f32 %v1830, %v1999
        %v2137 = vadd.f32 %v1831, %v2002
        %v2138 = vadd.f32 %v1832, %v2004
        %v2139 = vadd.f32 %v1833, %v2007
        %v2140 = vadd.f32 %v1834, %v2009
        %v2141 = vadd.f32 %v1835, %v2012
        %v2142 = vadd.f32 %v1836, %v2014
        %v2143 = vadd.f32 %v1837, %v2017
        %v2144 = vadd.f32 %v1838, %v2019
        %v2145 = vadd.f32 %v1839, %v2022
        %v2146 = vadd.f32 %v1840, %v2024
        %v2147 = vadd.f32 %v1841, %v2027
        %v2148 = vadd.f32 %v1842, %v2029
        %v2149 = vadd.f32 %v1843, %v2032
        %v2150 = vadd.f32 %v1844, %v2034
        %v2151 = vadd.f32 %v1845, %v2037
        %v2152 = vadd.f32 %v1846, %v2039
        %v2153 = vadd.f32 %v1847, %v2042
        %v2154 = vadd.f32 %v1848, %v2044
        %v2155 = vadd.f32 %v1849, %v2047
        %v2156 = vadd.f32 %v1850, %v2049
        %v2157 = vadd.f32 %v1851, %v2052
        %v2158 = vadd.f32 %v1852, %v2054
        %v2159 = vadd.f32 %v1853, %v2057
        %v2160 = vadd.f32 %v1854, %v2059
        %v2161 = vadd.f32 %v1855, %v2062
        %v2162 = vadd.f32 %v1856, %v2064
        %v2163 = vadd.f32 %v1857, %v2067
        %v2164 = vadd.f32 %v1858, %v2069
        %v2165 = vadd.f32 %v1859, %v2072
        %v2166 = vadd.f32 %v1860, %v2074
        %v2167 = vadd.f32 %v1861, %v2077
        %v2168 = vadd.f32 %v1862, %v2079
        %v2169 = vadd.f32 %v1863, %v2082
        %v2170 = vadd.f32 %v1864, %v2084
        %v2171 = vadd.f32 %v1865, %v2087
        %v2172 = vadd.f32 %v1866, %v2089
        %v2173 = vadd.f32 %v1867, %v2092
        %v2174 = vadd.f32 %v1868, %v2094
        %s2175 = scalar_lea.vmem %s1, 8
        %v2176 = vld [vmem:[%s2175] sm:$0x1]
        %v2178 = vperm.slane %v2176, 0
        %v2180 = vmul.f32 %v373, %v2178
        %v2181 = vmul.f32 %v374, %v2178
        %v2182 = vmul.f32 %v456, %v2178
        %v2183 = vmul.f32 %v375, %v2178
        %v2184 = vmul.f32 %v376, %v2178
        %v2185 = vmul.f32 %v457, %v2178
        %v2186 = vmul.f32 %v377, %v2178
        %v2187 = vmul.f32 %v378, %v2178
        %v2188 = vmul.f32 %v458, %v2178
        %v2189 = vmul.f32 %v379, %v2178
        %v2190 = vmul.f32 %v380, %v2178
        %v2191 = vmul.f32 %v459, %v2178
        %v2192 = vmul.f32 %v381, %v2178
        %v2193 = vmul.f32 %v382, %v2178
        %v2194 = vmul.f32 %v460, %v2178
        %v2195 = vmul.f32 %v383, %v2178
        %v2196 = vmul.f32 %v384, %v2178
        %v2197 = vmul.f32 %v461, %v2178
        %v2198 = vmul.f32 %v385, %v2178
        %v2199 = vmul.f32 %v386, %v2178
        %v2200 = vmul.f32 %v462, %v2178
        %v2201 = vmul.f32 %v387, %v2178
        %v2202 = vmul.f32 %v388, %v2178
        %v2203 = vmul.f32 %v463, %v2178
        %v2204 = vmul.f32 %v389, %v2178
        %v2205 = vmul.f32 %v390, %v2178
        %v2206 = vmul.f32 %v464, %v2178
        %v2207 = vmul.f32 %v391, %v2178
        %v2208 = vmul.f32 %v392, %v2178
        %v2209 = vmul.f32 %v465, %v2178
        %v2210 = vmul.f32 %v393, %v2178
        %v2211 = vmul.f32 %v394, %v2178
        %v2212 = vmul.f32 %v466, %v2178
        %v2213 = vmul.f32 %v395, %v2178
        %v2214 = vmul.f32 %v396, %v2178
        %v2215 = vmul.f32 %v467, %v2178
        %v2216 = vmul.f32 %v397, %v2178
        %v2217 = vmul.f32 %v398, %v2178
        %v2218 = vmul.f32 %v468, %v2178
        %v2219 = vmul.f32 %v399, %v2178
        %v2220 = vmul.f32 %v400, %v2178
        %v2221 = vmul.f32 %v469, %v2178
        %v2222 = vmul.f32 %v401, %v2178
        %v2223 = vmul.f32 %v402, %v2178
        %v2224 = vmul.f32 %v470, %v2178
        %v2225 = vmul.f32 %v403, %v2178
        %v2226 = vmul.f32 %v404, %v2178
        %v2227 = vmul.f32 %v471, %v2178
        %v2228 = vmul.f32 %v405, %v2178
        %v2229 = vmul.f32 %v406, %v2178
        %v2230 = vmul.f32 %v472, %v2178
        %v2231 = vmul.f32 %v407, %v2178
        %v2232 = vmul.f32 %v408, %v2178
        %v2233 = vmul.f32 %v473, %v2178
        %v2234 = vmul.f32 %v1086, %v2178
        %v2235 = vmul.f32 %v1087, %v2178
        %v2236 = vmul.f32 %v1173, %v2178
        %v2237 = vmul.f32 %v1784, %v2178
        %v2238 = vmul.f32 %v1785, %v2178
        %v2239 = vmul.f32 %v1871, %v2178
        %v2300 = vrot.slane %v2180, 2
        %v2301 = vrot.slane %v2181, 2
        %v2302 = vsel %vm903, %v2300, %v2301
        %v2303 = vrot.slane %v2182, 2
        %v2304 = vsel %vm903, %v2301, %v2303
        %v2305 = vrot.slane %v2183, 2
        %v2306 = vrot.slane %v2184, 2
        %v2307 = vsel %vm903, %v2305, %v2306
        %v2308 = vrot.slane %v2185, 2
        %v2309 = vsel %vm903, %v2306, %v2308
        %v2310 = vrot.slane %v2186, 2
        %v2311 = vrot.slane %v2187, 2
        %v2312 = vsel %vm903, %v2310, %v2311
        %v2313 = vrot.slane %v2188, 2
        %v2314 = vsel %vm903, %v2311, %v2313
        %v2315 = vrot.slane %v2189, 2
        %v2316 = vrot.slane %v2190, 2
        %v2317 = vsel %vm903, %v2315, %v2316
        %v2318 = vrot.slane %v2191, 2
        %v2319 = vsel %vm903, %v2316, %v2318
        %v2320 = vrot.slane %v2192, 2
        %v2321 = vrot.slane %v2193, 2
        %v2322 = vsel %vm903, %v2320, %v2321
        %v2323 = vrot.slane %v2194, 2
        %v2324 = vsel %vm903, %v2321, %v2323
        %v2325 = vrot.slane %v2195, 2
        %v2326 = vrot.slane %v2196, 2
        %v2327 = vsel %vm903, %v2325, %v2326
        %v2328 = vrot.slane %v2197, 2
        %v2329 = vsel %vm903, %v2326, %v2328
        %v2330 = vrot.slane %v2198, 2
        %v2331 = vrot.slane %v2199, 2
        %v2332 = vsel %vm903, %v2330, %v2331
        %v2333 = vrot.slane %v2200, 2
        %v2334 = vsel %vm903, %v2331, %v2333
        %v2335 = vrot.slane %v2201, 2
        %v2336 = vrot.slane %v2202, 2
        %v2337 = vsel %vm903, %v2335, %v2336
        %v2338 = vrot.slane %v2203, 2
        %v2339 = vsel %vm903, %v2336, %v2338
        %v2340 = vrot.slane %v2204, 2
        %v2341 = vrot.slane %v2205, 2
        %v2342 = vsel %vm903, %v2340, %v2341
        %v2343 = vrot.slane %v2206, 2
        %v2344 = vsel %vm903, %v2341, %v2343
        %v2345 = vrot.slane %v2207, 2
        %v2346 = vrot.slane %v2208, 2
        %v2347 = vsel %vm903, %v2345, %v2346
        %v2348 = vrot.slane %v2209, 2
        %v2349 = vsel %vm903, %v2346, %v2348
        %v2350 = vrot.slane %v2210, 2
        %v2351 = vrot.slane %v2211, 2
        %v2352 = vsel %vm903, %v2350, %v2351
        %v2353 = vrot.slane %v2212, 2
        %v2354 = vsel %vm903, %v2351, %v2353
        %v2355 = vrot.slane %v2213, 2
        %v2356 = vrot.slane %v2214, 2
        %v2357 = vsel %vm903, %v2355, %v2356
        %v2358 = vrot.slane %v2215, 2
        %v2359 = vsel %vm903, %v2356, %v2358
        %v2360 = vrot.slane %v2216, 2
        %v2361 = vrot.slane %v2217, 2
        %v2362 = vsel %vm903, %v2360, %v2361
        %v2363 = vrot.slane %v2218, 2
        %v2364 = vsel %vm903, %v2361, %v2363
        %v2365 = vrot.slane %v2219, 2
        %v2366 = vrot.slane %v2220, 2
        %v2367 = vsel %vm903, %v2365, %v2366
        %v2368 = vrot.slane %v2221, 2
        %v2369 = vsel %vm903, %v2366, %v2368
        %v2370 = vrot.slane %v2222, 2
        %v2371 = vrot.slane %v2223, 2
        %v2372 = vsel %vm903, %v2370, %v2371
        %v2373 = vrot.slane %v2224, 2
        %v2374 = vsel %vm903, %v2371, %v2373
        %v2375 = vrot.slane %v2225, 2
        %v2376 = vrot.slane %v2226, 2
        %v2377 = vsel %vm903, %v2375, %v2376
        %v2378 = vrot.slane %v2227, 2
        %v2379 = vsel %vm903, %v2376, %v2378
        %v2380 = vrot.slane %v2228, 2
        %v2381 = vrot.slane %v2229, 2
        %v2382 = vsel %vm903, %v2380, %v2381
        %v2383 = vrot.slane %v2230, 2
        %v2384 = vsel %vm903, %v2381, %v2383
        %v2385 = vrot.slane %v2231, 2
        %v2386 = vrot.slane %v2232, 2
        %v2387 = vsel %vm903, %v2385, %v2386
        %v2388 = vrot.slane %v2233, 2
        %v2389 = vsel %vm903, %v2386, %v2388
        %v2390 = vrot.slane %v2234, 2
        %v2391 = vrot.slane %v2235, 2
        %v2392 = vsel %vm903, %v2390, %v2391
        %v2393 = vrot.slane %v2236, 2
        %v2394 = vsel %vm903, %v2391, %v2393
        %v2395 = vrot.slane %v2237, 2
        %v2396 = vrot.slane %v2238, 2
        %v2397 = vsel %vm903, %v2395, %v2396
        %v2398 = vrot.slane %v2239, 2
        %v2399 = vsel %vm903, %v2396, %v2398
        %v2440 = vadd.f32 %v2135, %v2302
        %v2441 = vadd.f32 %v2136, %v2304
        %v2442 = vadd.f32 %v2137, %v2307
        %v2443 = vadd.f32 %v2138, %v2309
        %v2444 = vadd.f32 %v2139, %v2312
        %v2445 = vadd.f32 %v2140, %v2314
        %v2446 = vadd.f32 %v2141, %v2317
        %v2447 = vadd.f32 %v2142, %v2319
        %v2448 = vadd.f32 %v2143, %v2322
        %v2449 = vadd.f32 %v2144, %v2324
        %v2450 = vadd.f32 %v2145, %v2327
        %v2451 = vadd.f32 %v2146, %v2329
        %v2452 = vadd.f32 %v2147, %v2332
        %v2453 = vadd.f32 %v2148, %v2334
        %v2454 = vadd.f32 %v2149, %v2337
        %v2455 = vadd.f32 %v2150, %v2339
        %v2456 = vadd.f32 %v2151, %v2342
        %v2457 = vadd.f32 %v2152, %v2344
        %v2458 = vadd.f32 %v2153, %v2347
        %v2459 = vadd.f32 %v2154, %v2349
        %v2460 = vadd.f32 %v2155, %v2352
        %v2461 = vadd.f32 %v2156, %v2354
        %v2462 = vadd.f32 %v2157, %v2357
        %v2463 = vadd.f32 %v2158, %v2359
        %v2464 = vadd.f32 %v2159, %v2362
        %v2465 = vadd.f32 %v2160, %v2364
        %v2466 = vadd.f32 %v2161, %v2367
        %v2467 = vadd.f32 %v2162, %v2369
        %v2468 = vadd.f32 %v2163, %v2372
        %v2469 = vadd.f32 %v2164, %v2374
        %v2470 = vadd.f32 %v2165, %v2377
        %v2471 = vadd.f32 %v2166, %v2379
        %v2472 = vadd.f32 %v2167, %v2382
        %v2473 = vadd.f32 %v2168, %v2384
        %v2474 = vadd.f32 %v2169, %v2387
        %v2475 = vadd.f32 %v2170, %v2389
        %v2476 = vadd.f32 %v2171, %v2392
        %v2477 = vadd.f32 %v2172, %v2394
        %v2478 = vadd.f32 %v2173, %v2397
        %v2479 = vadd.f32 %v2174, %v2399
        %v2480 = vld [vmem:[%s2] sm:$0x1]
        %v2482 = vperm.slane %v2480, 0
        %v2484 = vadd.f32 %v2440, %v2482
        %v2485 = vadd.f32 %v2441, %v2482
        %v2486 = vadd.f32 %v2442, %v2482
        %v2487 = vadd.f32 %v2443, %v2482
        %v2488 = vadd.f32 %v2444, %v2482
        %v2489 = vadd.f32 %v2445, %v2482
        %v2490 = vadd.f32 %v2446, %v2482
        %v2491 = vadd.f32 %v2447, %v2482
        %v2492 = vadd.f32 %v2448, %v2482
        %v2493 = vadd.f32 %v2449, %v2482
        %v2494 = vadd.f32 %v2450, %v2482
        %v2495 = vadd.f32 %v2451, %v2482
        %v2496 = vadd.f32 %v2452, %v2482
        %v2497 = vadd.f32 %v2453, %v2482
        %v2498 = vadd.f32 %v2454, %v2482
        %v2499 = vadd.f32 %v2455, %v2482
        %v2500 = vadd.f32 %v2456, %v2482
        %v2501 = vadd.f32 %v2457, %v2482
        %v2502 = vadd.f32 %v2458, %v2482
        %v2503 = vadd.f32 %v2459, %v2482
        %v2504 = vadd.f32 %v2460, %v2482
        %v2505 = vadd.f32 %v2461, %v2482
        %v2506 = vadd.f32 %v2462, %v2482
        %v2507 = vadd.f32 %v2463, %v2482
        %v2508 = vadd.f32 %v2464, %v2482
        %v2509 = vadd.f32 %v2465, %v2482
        %v2510 = vadd.f32 %v2466, %v2482
        %v2511 = vadd.f32 %v2467, %v2482
        %v2512 = vadd.f32 %v2468, %v2482
        %v2513 = vadd.f32 %v2469, %v2482
        %v2514 = vadd.f32 %v2470, %v2482
        %v2515 = vadd.f32 %v2471, %v2482
        %v2516 = vadd.f32 %v2472, %v2482
        %v2517 = vadd.f32 %v2473, %v2482
        %v2518 = vadd.f32 %v2474, %v2482
        %v2519 = vadd.f32 %v2475, %v2482
        %v2520 = vadd.f32 %v2476, %v2482
        %v2521 = vadd.f32 %v2477, %v2482
        %v2522 = vadd.f32 %v2478, %v2482
        %v2523 = vadd.f32 %v2479, %v2482
        %v2524 = vmax.f32 %v2484, 0.0
        %v2525 = vmax.f32 %v2485, 0.0
        %v2526 = vmax.f32 %v2486, 0.0
        %v2527 = vmax.f32 %v2487, 0.0
        %v2528 = vmax.f32 %v2488, 0.0
        %v2529 = vmax.f32 %v2489, 0.0
        %v2530 = vmax.f32 %v2490, 0.0
        %v2531 = vmax.f32 %v2491, 0.0
        %v2532 = vmax.f32 %v2492, 0.0
        %v2533 = vmax.f32 %v2493, 0.0
        %v2534 = vmax.f32 %v2494, 0.0
        %v2535 = vmax.f32 %v2495, 0.0
        %v2536 = vmax.f32 %v2496, 0.0
        %v2537 = vmax.f32 %v2497, 0.0
        %v2538 = vmax.f32 %v2498, 0.0
        %v2539 = vmax.f32 %v2499, 0.0
        %v2540 = vmax.f32 %v2500, 0.0
        %v2541 = vmax.f32 %v2501, 0.0
        %v2542 = vmax.f32 %v2502, 0.0
        %v2543 = vmax.f32 %v2503, 0.0
        %v2544 = vmax.f32 %v2504, 0.0
        %v2545 = vmax.f32 %v2505, 0.0
        %v2546 = vmax.f32 %v2506, 0.0
        %v2547 = vmax.f32 %v2507, 0.0
        %v2548 = vmax.f32 %v2508, 0.0
        %v2549 = vmax.f32 %v2509, 0.0
        %v2550 = vmax.f32 %v2510, 0.0
        %v2551 = vmax.f32 %v2511, 0.0
        %v2552 = vmax.f32 %v2512, 0.0
        %v2553 = vmax.f32 %v2513, 0.0
        %v2554 = vmax.f32 %v2514, 0.0
        %v2555 = vmax.f32 %v2515, 0.0
        %v2556 = vmax.f32 %v2516, 0.0
        %v2557 = vmax.f32 %v2517, 0.0
        %v2558 = vmax.f32 %v2518, 0.0
        %v2559 = vmax.f32 %v2519, 0.0
        %v2560 = vmax.f32 %v2520, 0.0
        %v2561 = vmax.f32 %v2521, 0.0
        %v2562 = vmax.f32 %v2522, 0.0
        %v2563 = vmax.f32 %v2523, 0.0
        %s2564 = ssub.s32 %s301, 2
        %v2565 = vstv %s2564
        %v2566 = vadd.s32 %v2565, 1
        %v2567 = vadd.s32 %v2565, 2
        %v2568 = vadd.s32 %v2565, 3
        %v2569 = vadd.s32 %v2565, 4
        %v2570 = vadd.s32 %v2565, 5
        %v2571 = vadd.s32 %v2565, 6
        %v2572 = vadd.s32 %v2565, 7
        %v2573 = vadd.s32 %v2565, 8
        %v2574 = vadd.s32 %v2565, 9
        %v2575 = vadd.s32 %v2565, 10
        %v2576 = vadd.s32 %v2565, 11
        %v2577 = vadd.s32 %v2565, 12
        %v2578 = vadd.s32 %v2565, 13
        %v2579 = vadd.s32 %v2565, 14
        %v2580 = vadd.s32 %v2565, 15
        %v2581 = vadd.s32 %v2565, 16
        %v2582 = vadd.s32 %v2565, 17
        %v2583 = vadd.s32 %v2565, 18
        %v2584 = vadd.s32 %v2565, 19
        %vm2585 = vcmp.ge.s32.totalorder %v2565, 0
        %vm2586 = vcmp.ge.s32.totalorder %v2566, 0
        %vm2587 = vcmp.ge.s32.totalorder %v2567, 0
        %vm2588 = vcmp.ge.s32.totalorder %v2568, 0
        %vm2589 = vcmp.ge.s32.totalorder %v2569, 0
        %vm2590 = vcmp.ge.s32.totalorder %v2570, 0
        %vm2591 = vcmp.ge.s32.totalorder %v2571, 0
        %vm2592 = vcmp.ge.s32.totalorder %v2572, 0
        %vm2593 = vcmp.ge.s32.totalorder %v2573, 0
        %vm2594 = vcmp.ge.s32.totalorder %v2574, 0
        %vm2595 = vcmp.ge.s32.totalorder %v2575, 0
        %vm2596 = vcmp.ge.s32.totalorder %v2576, 0
        %vm2597 = vcmp.ge.s32.totalorder %v2577, 0
        %vm2598 = vcmp.ge.s32.totalorder %v2578, 0
        %vm2599 = vcmp.ge.s32.totalorder %v2579, 0
        %vm2600 = vcmp.ge.s32.totalorder %v2580, 0
        %vm2601 = vcmp.ge.s32.totalorder %v2581, 0
        %vm2602 = vcmp.ge.s32.totalorder %v2582, 0
        %vm2603 = vcmp.ge.s32.totalorder %v2583, 0
        %vm2604 = vcmp.ge.s32.totalorder %v2584, 0
        %vm2605 = vcmp.lt.s32.totalorder %v2565, 16
        %vm2606 = vcmp.lt.s32.totalorder %v2566, 16
        %vm2607 = vcmp.lt.s32.totalorder %v2567, 16
        %vm2608 = vcmp.lt.s32.totalorder %v2568, 16
        %vm2609 = vcmp.lt.s32.totalorder %v2569, 16
        %vm2610 = vcmp.lt.s32.totalorder %v2570, 16
        %vm2611 = vcmp.lt.s32.totalorder %v2571, 16
        %vm2612 = vcmp.lt.s32.totalorder %v2572, 16
        %vm2613 = vcmp.lt.s32.totalorder %v2573, 16
        %vm2614 = vcmp.lt.s32.totalorder %v2574, 16
        %vm2615 = vcmp.lt.s32.totalorder %v2575, 16
        %vm2616 = vcmp.lt.s32.totalorder %v2576, 16
        %vm2617 = vcmp.lt.s32.totalorder %v2577, 16
        %vm2618 = vcmp.lt.s32.totalorder %v2578, 16
        %vm2619 = vcmp.lt.s32.totalorder %v2579, 16
        %vm2620 = vcmp.lt.s32.totalorder %v2580, 16
        %vm2621 = vcmp.lt.s32.totalorder %v2581, 16
        %vm2622 = vcmp.lt.s32.totalorder %v2582, 16
        %vm2623 = vcmp.lt.s32.totalorder %v2583, 16
        %vm2624 = vcmp.lt.s32.totalorder %v2584, 16
        %vm2625 = vmand %vm2585, %vm2605
        %vm2626 = vmand %vm2586, %vm2606
        %vm2627 = vmand %vm2587, %vm2607
        %vm2628 = vmand %vm2588, %vm2608
        %vm2629 = vmand %vm2589, %vm2609
        %vm2630 = vmand %vm2590, %vm2610
        %vm2631 = vmand %vm2591, %vm2611
        %vm2632 = vmand %vm2592, %vm2612
        %vm2633 = vmand %vm2593, %vm2613
        %vm2634 = vmand %vm2594, %vm2614
        %vm2635 = vmand %vm2595, %vm2615
        %vm2636 = vmand %vm2596, %vm2616
        %vm2637 = vmand %vm2597, %vm2617
        %vm2638 = vmand %vm2598, %vm2618
        %vm2639 = vmand %vm2599, %vm2619
        %vm2640 = vmand %vm2600, %vm2620
        %vm2641 = vmand %vm2601, %vm2621
        %vm2642 = vmand %vm2602, %vm2622
        %vm2643 = vmand %vm2603, %vm2623
        %vm2644 = vmand %vm2604, %vm2624
        %v2645 = vsel %vm2625, 1, 0
        %v2646 = vsel %vm2626, 1, 0
        %v2647 = vsel %vm2627, 1, 0
        %v2648 = vsel %vm2628, 1, 0
        %v2649 = vsel %vm2629, 1, 0
        %v2650 = vsel %vm2630, 1, 0
        %v2651 = vsel %vm2631, 1, 0
        %v2652 = vsel %vm2632, 1, 0
        %v2653 = vsel %vm2633, 1, 0
        %v2654 = vsel %vm2634, 1, 0
        %v2655 = vsel %vm2635, 1, 0
        %v2656 = vsel %vm2636, 1, 0
        %v2657 = vsel %vm2637, 1, 0
        %v2658 = vsel %vm2638, 1, 0
        %v2659 = vsel %vm2639, 1, 0
        %v2660 = vsel %vm2640, 1, 0
        %v2661 = vsel %vm2641, 1, 0
        %v2662 = vsel %vm2642, 1, 0
        %v2663 = vsel %vm2643, 1, 0
        %v2664 = vsel %vm2644, 1, 0
        %vm2665 = vcmp.eq.s32.totalorder %v2645, 1
        %vm2666 = vcmp.eq.s32.totalorder %v2646, 1
        %vm2667 = vcmp.eq.s32.totalorder %v2647, 1
        %vm2668 = vcmp.eq.s32.totalorder %v2648, 1
        %vm2669 = vcmp.eq.s32.totalorder %v2649, 1
        %vm2670 = vcmp.eq.s32.totalorder %v2650, 1
        %vm2671 = vcmp.eq.s32.totalorder %v2651, 1
        %vm2672 = vcmp.eq.s32.totalorder %v2652, 1
        %vm2673 = vcmp.eq.s32.totalorder %v2653, 1
        %vm2674 = vcmp.eq.s32.totalorder %v2654, 1
        %vm2675 = vcmp.eq.s32.totalorder %v2655, 1
        %vm2676 = vcmp.eq.s32.totalorder %v2656, 1
        %vm2677 = vcmp.eq.s32.totalorder %v2657, 1
        %vm2678 = vcmp.eq.s32.totalorder %v2658, 1
        %vm2679 = vcmp.eq.s32.totalorder %v2659, 1
        %vm2680 = vcmp.eq.s32.totalorder %v2660, 1
        %vm2681 = vcmp.eq.s32.totalorder %v2661, 1
        %vm2682 = vcmp.eq.s32.totalorder %v2662, 1
        %vm2683 = vcmp.eq.s32.totalorder %v2663, 1
        %vm2684 = vcmp.eq.s32.totalorder %v2664, 1
        %v2685 = vsel %vm2665, %v2524, 0.0
        %v2686 = vsel %vm2665, %v2525, 0.0
        %v2687 = vsel %vm2666, %v2526, 0.0
        %v2688 = vsel %vm2666, %v2527, 0.0
        %v2689 = vsel %vm2667, %v2528, 0.0
        %v2690 = vsel %vm2667, %v2529, 0.0
        %v2691 = vsel %vm2668, %v2530, 0.0
        %v2692 = vsel %vm2668, %v2531, 0.0
        %v2693 = vsel %vm2669, %v2532, 0.0
        %v2694 = vsel %vm2669, %v2533, 0.0
        %v2695 = vsel %vm2670, %v2534, 0.0
        %v2696 = vsel %vm2670, %v2535, 0.0
        %v2697 = vsel %vm2671, %v2536, 0.0
        %v2698 = vsel %vm2671, %v2537, 0.0
        %v2699 = vsel %vm2672, %v2538, 0.0
        %v2700 = vsel %vm2672, %v2539, 0.0
        %v2701 = vsel %vm2673, %v2540, 0.0
        %v2702 = vsel %vm2673, %v2541, 0.0
        %v2703 = vsel %vm2674, %v2542, 0.0
        %v2704 = vsel %vm2674, %v2543, 0.0
        %v2705 = vsel %vm2675, %v2544, 0.0
        %v2706 = vsel %vm2675, %v2545, 0.0
        %v2707 = vsel %vm2676, %v2546, 0.0
        %v2708 = vsel %vm2676, %v2547, 0.0
        %v2709 = vsel %vm2677, %v2548, 0.0
        %v2710 = vsel %vm2677, %v2549, 0.0
        %v2711 = vsel %vm2678, %v2550, 0.0
        %v2712 = vsel %vm2678, %v2551, 0.0
        %v2713 = vsel %vm2679, %v2552, 0.0
        %v2714 = vsel %vm2679, %v2553, 0.0
        %v2715 = vsel %vm2680, %v2554, 0.0
        %v2716 = vsel %vm2680, %v2555, 0.0
        %v2717 = vsel %vm2681, %v2556, 0.0
        %v2718 = vsel %vm2681, %v2557, 0.0
        %v2719 = vsel %vm2682, %v2558, 0.0
        %v2720 = vsel %vm2682, %v2559, 0.0
        %v2721 = vsel %vm2683, %v2560, 0.0
        %v2722 = vsel %vm2683, %v2561, 0.0
        %v2723 = vsel %vm2684, %v2562, 0.0
        %v2724 = vsel %vm2684, %v2563, 0.0
        %vm2725 = vcmask 257027
        %vm2726 = vsmask.f32 7950
        %vm2727 = vmand %vm2725, %vm2726
        %v2728 = vld [vmem:[#allocation2 + $0x4] sm:$0x8]
        %v2729 = vsel %vm2727, 0, %v2728
        %2730 = vst [vmem:[#allocation2 + $0x4] sm:$0x8] %v2729
        %v2731 = vld [vmem:[#allocation2 + $0x18] sm:$0x8]
        %v2732 = vsel %vm2727, 0, %v2731
        %2733 = vst [vmem:[#allocation2 + $0x18] sm:$0x8] %v2732
        %v2734 = vld [vmem:[#allocation2 + $0x2c] sm:$0x8]
        %v2735 = vsel %vm2727, 0, %v2734
        %2736 = vst [vmem:[#allocation2 + $0x2c] sm:$0x8] %v2735
        %v2737 = vld [vmem:[#allocation2 + $0x40] sm:$0x8]
        %v2738 = vsel %vm2727, 0, %v2737
        %2739 = vst [vmem:[#allocation2 + $0x40] sm:$0x8] %v2738
        %v2740 = vld [vmem:[#allocation2 + $0x54] sm:$0x8]
        %v2741 = vsel %vm2727, 0, %v2740
        %2742 = vst [vmem:[#allocation2 + $0x54] sm:$0x8] %v2741
        %v2743 = vld [vmem:[#allocation2 + $0x68] sm:$0x8]
        %v2744 = vsel %vm2727, 0, %v2743
        %2745 = vst [vmem:[#allocation2 + $0x68] sm:$0x8] %v2744
        %v2746 = vld [vmem:[#allocation2 + $0x7c] sm:$0x8]
        %v2747 = vsel %vm2727, 0, %v2746
        %2748 = vst [vmem:[#allocation2 + $0x7c] sm:$0x8] %v2747
        %v2749 = vld [vmem:[#allocation2 + $0x90] sm:$0x8]
        %v2750 = vsel %vm2727, 0, %v2749
        %2751 = vst [vmem:[#allocation2 + $0x90] sm:$0x8] %v2750
        %v2752 = vld [vmem:[#allocation2 + $0xa4] sm:$0x8]
        %v2753 = vsel %vm2727, 0, %v2752
        %2754 = vst [vmem:[#allocation2 + $0xa4] sm:$0x8] %v2753
        %v2755 = vld [vmem:[#allocation2 + $0xb8] sm:$0x8]
        %v2756 = vsel %vm2727, 0, %v2755
        %2757 = vst [vmem:[#allocation2 + $0xb8] sm:$0x8] %v2756
        %v2758 = vld [vmem:[#allocation2 + $0xcc] sm:$0x8]
        %v2759 = vsel %vm2727, 0, %v2758
        %2760 = vst [vmem:[#allocation2 + $0xcc] sm:$0x8] %v2759
        %v2761 = vld [vmem:[#allocation2 + $0xe0] sm:$0x8]
        %v2762 = vsel %vm2727, 0, %v2761
        %2763 = vst [vmem:[#allocation2 + $0xe0] sm:$0x8] %v2762
        %v2764 = vld [vmem:[#allocation2 + $0xf4] sm:$0x8]
        %v2765 = vsel %vm2727, 0, %v2764
        %2766 = vst [vmem:[#allocation2 + $0xf4] sm:$0x8] %v2765
        %v2767 = vld [vmem:[#allocation2 + $0x108] sm:$0x8]
        %v2768 = vsel %vm2727, 0, %v2767
        %2769 = vst [vmem:[#allocation2 + $0x108] sm:$0x8] %v2768
        %v2770 = vld [vmem:[#allocation2 + $0x11c] sm:$0x8]
        %v2771 = vsel %vm2727, 0, %v2770
        %2772 = vst [vmem:[#allocation2 + $0x11c] sm:$0x8] %v2771
        %v2773 = vld [vmem:[#allocation2 + $0x130] sm:$0x8]
        %v2774 = vsel %vm2727, 0, %v2773
        %2775 = vst [vmem:[#allocation2 + $0x130] sm:$0x8] %v2774
        %v2776 = vld [vmem:[#allocation2 + $0x144] sm:$0x8]
        %v2777 = vsel %vm2727, 0, %v2776
        %2778 = vst [vmem:[#allocation2 + $0x144] sm:$0x8] %v2777
        %v2779 = vld [vmem:[#allocation2 + $0x158] sm:$0x8]
        %v2780 = vsel %vm2727, 0, %v2779
        %2781 = vst [vmem:[#allocation2 + $0x158] sm:$0x8] %v2780
        %v2782 = vld [vmem:[#allocation2 + $0x16c] sm:$0x8]
        %v2783 = vsel %vm2727, 0, %v2782
        %2784 = vst [vmem:[#allocation2 + $0x16c] sm:$0x8] %v2783
        %v2785 = vld [vmem:[#allocation2 + $0x180] sm:$0x8]
        %v2786 = vsel %vm2727, 0, %v2785
        %2787 = vst [vmem:[#allocation2 + $0x180] sm:$0x8] %v2786
        %vm2788 = vcmask 253952
        %vm2789 = vsmask.f32 256
        %vm2790 = vmand %vm2788, %vm2789
        %v2791 = vld [vmem:[#allocation2 + $0x10] sm:$0x1]
        %v2792 = vsel %vm2790, 0, %v2791
        %2793 = vst [vmem:[#allocation2 + $0x10] sm:$0x1] %v2792
        %v2794 = vld [vmem:[#allocation2 + $0x24] sm:$0x1]
        %v2795 = vsel %vm2790, 0, %v2794
        %2796 = vst [vmem:[#allocation2 + $0x24] sm:$0x1] %v2795
        %v2797 = vld [vmem:[#allocation2 + $0x38] sm:$0x1]
        %v2798 = vsel %vm2790, 0, %v2797
        %2799 = vst [vmem:[#allocation2 + $0x38] sm:$0x1] %v2798
        %v2800 = vld [vmem:[#allocation2 + $0x4c] sm:$0x1]
        %v2801 = vsel %vm2790, 0, %v2800
        %2802 = vst [vmem:[#allocation2 + $0x4c] sm:$0x1] %v2801
        %v2803 = vld [vmem:[#allocation2 + $0x60] sm:$0x1]
        %v2804 = vsel %vm2790, 0, %v2803
        %2805 = vst [vmem:[#allocation2 + $0x60] sm:$0x1] %v2804
        %v2806 = vld [vmem:[#allocation2 + $0x74] sm:$0x1]
        %v2807 = vsel %vm2790, 0, %v2806
        %2808 = vst [vmem:[#allocation2 + $0x74] sm:$0x1] %v2807
        %v2809 = vld [vmem:[#allocation2 + $0x88] sm:$0x1]
        %v2810 = vsel %vm2790, 0, %v2809
        %2811 = vst [vmem:[#allocation2 + $0x88] sm:$0x1] %v2810
        %v2812 = vld [vmem:[#allocation2 + $0x9c] sm:$0x1]
        %v2813 = vsel %vm2790, 0, %v2812
        %2814 = vst [vmem:[#allocation2 + $0x9c] sm:$0x1] %v2813
        %v2815 = vld [vmem:[#allocation2 + $0xb0] sm:$0x1]
        %v2816 = vsel %vm2790, 0, %v2815
        %2817 = vst [vmem:[#allocation2 + $0xb0] sm:$0x1] %v2816
        %v2818 = vld [vmem:[#allocation2 + $0xc4] sm:$0x1]
        %v2819 = vsel %vm2790, 0, %v2818
        %2820 = vst [vmem:[#allocation2 + $0xc4] sm:$0x1] %v2819
        %v2821 = vld [vmem:[#allocation2 + $0xd8] sm:$0x1]
        %v2822 = vsel %vm2790, 0, %v2821
        %2823 = vst [vmem:[#allocation2 + $0xd8] sm:$0x1] %v2822
        %v2824 = vld [vmem:[#allocation2 + $0xec] sm:$0x1]
        %v2825 = vsel %vm2790, 0, %v2824
        %2826 = vst [vmem:[#allocation2 + $0xec] sm:$0x1] %v2825
        %v2827 = vld [vmem:[#allocation2 + $0x100] sm:$0x1]
        %v2828 = vsel %vm2790, 0, %v2827
        %2829 = vst [vmem:[#allocation2 + $0x100] sm:$0x1] %v2828
        %v2830 = vld [vmem:[#allocation2 + $0x114] sm:$0x1]
        %v2831 = vsel %vm2790, 0, %v2830
        %2832 = vst [vmem:[#allocation2 + $0x114] sm:$0x1] %v2831
        %v2833 = vld [vmem:[#allocation2 + $0x128] sm:$0x1]
        %v2834 = vsel %vm2790, 0, %v2833
        %2835 = vst [vmem:[#allocation2 + $0x128] sm:$0x1] %v2834
        %v2836 = vld [vmem:[#allocation2 + $0x13c] sm:$0x1]
        %v2837 = vsel %vm2790, 0, %v2836
        %2838 = vst [vmem:[#allocation2 + $0x13c] sm:$0x1] %v2837
        %v2839 = vld [vmem:[#allocation2 + $0x150] sm:$0x1]
        %v2840 = vsel %vm2790, 0, %v2839
        %2841 = vst [vmem:[#allocation2 + $0x150] sm:$0x1] %v2840
        %v2842 = vld [vmem:[#allocation2 + $0x164] sm:$0x1]
        %v2843 = vsel %vm2790, 0, %v2842
        %2844 = vst [vmem:[#allocation2 + $0x164] sm:$0x1] %v2843
        %v2845 = vld [vmem:[#allocation2 + $0x178] sm:$0x1]
        %v2846 = vsel %vm2790, 0, %v2845
        %2847 = vst [vmem:[#allocation2 + $0x178] sm:$0x1] %v2846
        %v2848 = vld [vmem:[#allocation2 + $0x18c] sm:$0x1]
        %v2849 = vsel %vm2790, 0, %v2848
        %2850 = vst [vmem:[#allocation2 + $0x18c] sm:$0x1] %v2849
        %v2851 = vpack.c.bf16 %v2685, %v2685
        %v2852 = vpack.c.bf16 %v2686, %v2686
        %v2853 = vpack.c.bf16 %v2687, %v2687
        %v2854 = vpack.c.bf16 %v2688, %v2688
        %v2855 = vpack.c.bf16 %v2689, %v2689
        %v2856 = vpack.c.bf16 %v2690, %v2690
        %v2857 = vpack.c.bf16 %v2691, %v2691
        %v2858 = vpack.c.bf16 %v2692, %v2692
        %v2859 = vpack.c.bf16 %v2693, %v2693
        %v2860 = vpack.c.bf16 %v2694, %v2694
        %v2861 = vpack.c.bf16 %v2695, %v2695
        %v2862 = vpack.c.bf16 %v2696, %v2696
        %v2863 = vpack.c.bf16 %v2697, %v2697
        %v2864 = vpack.c.bf16 %v2698, %v2698
        %v2865 = vpack.c.bf16 %v2699, %v2699
        %v2866 = vpack.c.bf16 %v2700, %v2700
        %v2867 = vpack.c.bf16 %v2701, %v2701
        %v2868 = vpack.c.bf16 %v2702, %v2702
        %v2869 = vpack.c.bf16 %v2703, %v2703
        %v2870 = vpack.c.bf16 %v2704, %v2704
        %v2871 = vpack.c.bf16 %v2705, %v2705
        %v2872 = vpack.c.bf16 %v2706, %v2706
        %v2873 = vpack.c.bf16 %v2707, %v2707
        %v2874 = vpack.c.bf16 %v2708, %v2708
        %v2875 = vpack.c.bf16 %v2709, %v2709
        %v2876 = vpack.c.bf16 %v2710, %v2710
        %v2877 = vpack.c.bf16 %v2711, %v2711
        %v2878 = vpack.c.bf16 %v2712, %v2712
        %v2879 = vpack.c.bf16 %v2713, %v2713
        %v2880 = vpack.c.bf16 %v2714, %v2714
        %v2881 = vpack.c.bf16 %v2715, %v2715
        %v2882 = vpack.c.bf16 %v2716, %v2716
        %v2883 = vpack.c.bf16 %v2717, %v2717
        %v2884 = vpack.c.bf16 %v2718, %v2718
        %v2885 = vpack.c.bf16 %v2719, %v2719
        %v2886 = vpack.c.bf16 %v2720, %v2720
        %v2887 = vpack.c.bf16 %v2721, %v2721
        %v2888 = vpack.c.bf16 %v2722, %v2722
        %v2889 = vpack.c.bf16 %v2723, %v2723
        %v2890 = vpack.c.bf16 %v2724, %v2724
        %vm2891 = vcmask 257024
        %2892 = vst.msk [vmem:[#allocation2 + $0x8] sm:$0xf] %vm2891, %v2851
        %2893 = vst.msk [vmem:[#allocation2 + $0xc] sm:$0xf] %vm2891, %v2852
        %2894 = vst.msk [vmem:[#allocation2 + $0x1c] sm:$0xf] %vm2891, %v2853
        %2895 = vst.msk [vmem:[#allocation2 + $0x20] sm:$0xf] %vm2891, %v2854
        %2896 = vst.msk [vmem:[#allocation2 + $0x30] sm:$0xf] %vm2891, %v2855
        %2897 = vst.msk [vmem:[#allocation2 + $0x34] sm:$0xf] %vm2891, %v2856
        %2898 = vst.msk [vmem:[#allocation2 + $0x44] sm:$0xf] %vm2891, %v2857
        %2899 = vst.msk [vmem:[#allocation2 + $0x48] sm:$0xf] %vm2891, %v2858
        %2900 = vst.msk [vmem:[#allocation2 + $0x58] sm:$0xf] %vm2891, %v2859
        %2901 = vst.msk [vmem:[#allocation2 + $0x5c] sm:$0xf] %vm2891, %v2860
        %2902 = vst.msk [vmem:[#allocation2 + $0x6c] sm:$0xf] %vm2891, %v2861
        %2903 = vst.msk [vmem:[#allocation2 + $0x70] sm:$0xf] %vm2891, %v2862
        %2904 = vst.msk [vmem:[#allocation2 + $0x80] sm:$0xf] %vm2891, %v2863
        %2905 = vst.msk [vmem:[#allocation2 + $0x84] sm:$0xf] %vm2891, %v2864
        %2906 = vst.msk [vmem:[#allocation2 + $0x94] sm:$0xf] %vm2891, %v2865
        %2907 = vst.msk [vmem:[#allocation2 + $0x98] sm:$0xf] %vm2891, %v2866
        %2908 = vst.msk [vmem:[#allocation2 + $0xa8] sm:$0xf] %vm2891, %v2867
        %2909 = vst.msk [vmem:[#allocation2 + $0xac] sm:$0xf] %vm2891, %v2868
        %2910 = vst.msk [vmem:[#allocation2 + $0xbc] sm:$0xf] %vm2891, %v2869
        %2911 = vst.msk [vmem:[#allocation2 + $0xc0] sm:$0xf] %vm2891, %v2870
        %2912 = vst.msk [vmem:[#allocation2 + $0xd0] sm:$0xf] %vm2891, %v2871
        %2913 = vst.msk [vmem:[#allocation2 + $0xd4] sm:$0xf] %vm2891, %v2872
        %2914 = vst.msk [vmem:[#allocation2 + $0xe4] sm:$0xf] %vm2891, %v2873
        %2915 = vst.msk [vmem:[#allocation2 + $0xe8] sm:$0xf] %vm2891, %v2874
        %2916 = vst.msk [vmem:[#allocation2 + $0xf8] sm:$0xf] %vm2891, %v2875
        %2917 = vst.msk [vmem:[#allocation2 + $0xfc] sm:$0xf] %vm2891, %v2876
        %2918 = vst.msk [vmem:[#allocation2 + $0x10c] sm:$0xf] %vm2891, %v2877
        %2919 = vst.msk [vmem:[#allocation2 + $0x110] sm:$0xf] %vm2891, %v2878
        %2920 = vst.msk [vmem:[#allocation2 + $0x120] sm:$0xf] %vm2891, %v2879
        %2921 = vst.msk [vmem:[#allocation2 + $0x124] sm:$0xf] %vm2891, %v2880
        %2922 = vst.msk [vmem:[#allocation2 + $0x134] sm:$0xf] %vm2891, %v2881
        %2923 = vst.msk [vmem:[#allocation2 + $0x138] sm:$0xf] %vm2891, %v2882
        %2924 = vst.msk [vmem:[#allocation2 + $0x148] sm:$0xf] %vm2891, %v2883
        %2925 = vst.msk [vmem:[#allocation2 + $0x14c] sm:$0xf] %vm2891, %v2884
        %2926 = vst.msk [vmem:[#allocation2 + $0x15c] sm:$0xf] %vm2891, %v2885
        %2927 = vst.msk [vmem:[#allocation2 + $0x160] sm:$0xf] %vm2891, %v2886
        %2928 = vst.msk [vmem:[#allocation2 + $0x170] sm:$0xf] %vm2891, %v2887
        %2929 = vst.msk [vmem:[#allocation2 + $0x174] sm:$0xf] %vm2891, %v2888
        %2930 = vst.msk [vmem:[#allocation2 + $0x184] sm:$0xf] %vm2891, %v2889
        %2931 = vst.msk [vmem:[#allocation2 + $0x188] sm:$0xf] %vm2891, %v2890
        %v2932 = vld [vmem:[#allocation2 + $0x4] sm:$0xf]
        %v2933 = vld [vmem:[#allocation2 + $0x8] sm:$0xf]
        %v2934 = vld [vmem:[#allocation2 + $0xc] sm:$0xf]
        %v2935 = vld [vmem:[#allocation2 + $0x10] sm:$0x1]
        %v2936 = vld [vmem:[#allocation2 + $0x18] sm:$0xf]
        %v2937 = vld [vmem:[#allocation2 + $0x1c] sm:$0xf]
        %v2938 = vld [vmem:[#allocation2 + $0x20] sm:$0xf]
        %v2939 = vld [vmem:[#allocation2 + $0x24] sm:$0x1]
        %v2940 = vld [vmem:[#allocation2 + $0x2c] sm:$0xf]
        %v2941 = vld [vmem:[#allocation2 + $0x30] sm:$0xf]
        %v2942 = vld [vmem:[#allocation2 + $0x34] sm:$0xf]
        %v2943 = vld [vmem:[#allocation2 + $0x38] sm:$0x1]
        %v2944 = vld [vmem:[#allocation2 + $0x40] sm:$0xf]
        %v2945 = vld [vmem:[#allocation2 + $0x44] sm:$0xf]
        %v2946 = vld [vmem:[#allocation2 + $0x48] sm:$0xf]
        %v2947 = vld [vmem:[#allocation2 + $0x4c] sm:$0x1]
        %v2948 = vld [vmem:[#allocation2 + $0x54] sm:$0xf]
        %v2949 = vld [vmem:[#allocation2 + $0x58] sm:$0xf]
        %v2950 = vld [vmem:[#allocation2 + $0x5c] sm:$0xf]
        %v2951 = vld [vmem:[#allocation2 + $0x60] sm:$0x1]
        %v2952 = vld [vmem:[#allocation2 + $0x68] sm:$0xf]
        %v2953 = vld [vmem:[#allocation2 + $0x6c] sm:$0xf]
        %v2954 = vld [vmem:[#allocation2 + $0x70] sm:$0xf]
        %v2955 = vld [vmem:[#allocation2 + $0x74] sm:$0x1]
        %v2956 = vld [vmem:[#allocation2 + $0x7c] sm:$0xf]
        %v2957 = vld [vmem:[#allocation2 + $0x80] sm:$0xf]
        %v2958 = vld [vmem:[#allocation2 + $0x84] sm:$0xf]
        %v2959 = vld [vmem:[#allocation2 + $0x88] sm:$0x1]
        %v2960 = vld [vmem:[#allocation2 + $0x90] sm:$0xf]
        %v2961 = vld [vmem:[#allocation2 + $0x94] sm:$0xf]
        %v2962 = vld [vmem:[#allocation2 + $0x98] sm:$0xf]
        %v2963 = vld [vmem:[#allocation2 + $0x9c] sm:$0x1]
        %v2964 = vld [vmem:[#allocation2 + $0xa4] sm:$0xf]
        %v2965 = vld [vmem:[#allocation2 + $0xa8] sm:$0xf]
        %v2966 = vld [vmem:[#allocation2 + $0xac] sm:$0xf]
        %v2967 = vld [vmem:[#allocation2 + $0xb0] sm:$0x1]
        %v2968 = vld [vmem:[#allocation2 + $0xb8] sm:$0xf]
        %v2969 = vld [vmem:[#allocation2 + $0xbc] sm:$0xf]
        %v2970 = vld [vmem:[#allocation2 + $0xc0] sm:$0xf]
        %v2971 = vld [vmem:[#allocation2 + $0xc4] sm:$0x1]
        %v2972 = vld [vmem:[#allocation2 + $0xcc] sm:$0xf]
        %v2973 = vld [vmem:[#allocation2 + $0xd0] sm:$0xf]
        %v2974 = vld [vmem:[#allocation2 + $0xd4] sm:$0xf]
        %v2975 = vld [vmem:[#allocation2 + $0xd8] sm:$0x1]
        %v2976 = vld [vmem:[#allocation2 + $0xe0] sm:$0xf]
        %v2977 = vld [vmem:[#allocation2 + $0xe4] sm:$0xf]
        %v2978 = vld [vmem:[#allocation2 + $0xe8] sm:$0xf]
        %v2979 = vld [vmem:[#allocation2 + $0xec] sm:$0x1]
        %v2980 = vld [vmem:[#allocation2 + $0xf4] sm:$0xf]
        %v2981 = vld [vmem:[#allocation2 + $0xf8] sm:$0xf]
        %v2982 = vld [vmem:[#allocation2 + $0xfc] sm:$0xf]
        %v2983 = vld [vmem:[#allocation2 + $0x100] sm:$0x1]
        %v2984 = vld [vmem:[#allocation2 + $0x108] sm:$0xf]
        %v2985 = vld [vmem:[#allocation2 + $0x10c] sm:$0xf]
        %v2986 = vld [vmem:[#allocation2 + $0x110] sm:$0xf]
        %v2987 = vld [vmem:[#allocation2 + $0x114] sm:$0x1]
        %v2988 = vld [vmem:[#allocation2 + $0x11c] sm:$0xf]
        %v2989 = vld [vmem:[#allocation2 + $0x120] sm:$0xf]
        %v2990 = vld [vmem:[#allocation2 + $0x124] sm:$0xf]
        %v2991 = vld [vmem:[#allocation2 + $0x128] sm:$0x1]
        %v2992 = vld [vmem:[#allocation2 + $0x130] sm:$0xf]
        %v2993 = vld [vmem:[#allocation2 + $0x134] sm:$0xf]
        %v2994 = vld [vmem:[#allocation2 + $0x138] sm:$0xf]
        %v2995 = vld [vmem:[#allocation2 + $0x13c] sm:$0x1]
        %v2996 = vld [vmem:[#allocation2 + $0x144] sm:$0xf]
        %v2997 = vld [vmem:[#allocation2 + $0x148] sm:$0xf]
        %v2998 = vld [vmem:[#allocation2 + $0x14c] sm:$0xf]
        %v2999 = vld [vmem:[#allocation2 + $0x150] sm:$0x1]
        %v3000 = vld [vmem:[#allocation2 + $0x158] sm:$0xf]
        %v3001 = vld [vmem:[#allocation2 + $0x15c] sm:$0xf]
        %v3002 = vld [vmem:[#allocation2 + $0x160] sm:$0xf]
        %v3003 = vld [vmem:[#allocation2 + $0x164] sm:$0x1]
        %v3004 = vld [vmem:[#allocation2 + $0x16c] sm:$0xf]
        %v3005 = vld [vmem:[#allocation2 + $0x170] sm:$0xf]
        %v3006 = vld [vmem:[#allocation2 + $0x174] sm:$0xf]
        %v3007 = vld [vmem:[#allocation2 + $0x178] sm:$0x1]
        %v3008 = vld [vmem:[#allocation2 + $0x180] sm:$0xf]
        %v3009 = vld [vmem:[#allocation2 + $0x184] sm:$0xf]
        %v3010 = vld [vmem:[#allocation2 + $0x188] sm:$0xf]
        %v3011 = vld [vmem:[#allocation2 + $0x18c] sm:$0x1]
        %v3066 = vunpack.c.l.b16 %v2932
        %v3067 = vunpack.c.l.b16 %v2933
        %v3068 = vunpack.c.l.b16 %v2934
        %v3069 = vunpack.c.l.b16 %v2936
        %v3070 = vunpack.c.l.b16 %v2937
        %v3071 = vunpack.c.l.b16 %v2938
        %v3072 = vunpack.c.l.b16 %v2940
        %v3073 = vunpack.c.l.b16 %v2941
        %v3074 = vunpack.c.l.b16 %v2942
        %v3075 = vunpack.c.l.b16 %v2944
        %v3076 = vunpack.c.l.b16 %v2945
        %v3077 = vunpack.c.l.b16 %v2946
        %v3078 = vunpack.c.l.b16 %v2948
        %v3079 = vunpack.c.l.b16 %v2949
        %v3080 = vunpack.c.l.b16 %v2950
        %v3081 = vunpack.c.l.b16 %v2952
        %v3082 = vunpack.c.l.b16 %v2953
        %v3083 = vunpack.c.l.b16 %v2954
        %v3084 = vunpack.c.l.b16 %v2956
        %v3085 = vunpack.c.l.b16 %v2957
        %v3086 = vunpack.c.l.b16 %v2958
        %v3087 = vunpack.c.l.b16 %v2960
        %v3088 = vunpack.c.l.b16 %v2961
        %v3089 = vunpack.c.l.b16 %v2962
        %v3090 = vunpack.c.l.b16 %v2964
        %v3091 = vunpack.c.l.b16 %v2965
        %v3092 = vunpack.c.l.b16 %v2966
        %v3093 = vunpack.c.l.b16 %v2968
        %v3094 = vunpack.c.l.b16 %v2969
        %v3095 = vunpack.c.l.b16 %v2970
        %v3096 = vunpack.c.l.b16 %v2972
        %v3097 = vunpack.c.l.b16 %v2973
        %v3098 = vunpack.c.l.b16 %v2974
        %v3099 = vunpack.c.l.b16 %v2976
        %v3100 = vunpack.c.l.b16 %v2977
        %v3101 = vunpack.c.l.b16 %v2978
        %v3102 = vunpack.c.l.b16 %v2980
        %v3103 = vunpack.c.l.b16 %v2981
        %v3104 = vunpack.c.l.b16 %v2982
        %v3105 = vunpack.c.l.b16 %v2984
        %v3106 = vunpack.c.l.b16 %v2985
        %v3107 = vunpack.c.l.b16 %v2986
        %v3108 = vunpack.c.l.b16 %v2988
        %v3109 = vunpack.c.l.b16 %v2989
        %v3110 = vunpack.c.l.b16 %v2990
        %v3111 = vunpack.c.l.b16 %v2992
        %v3112 = vunpack.c.l.b16 %v2993
        %v3113 = vunpack.c.l.b16 %v2994
        %v3114 = vunpack.c.l.b16 %v2996
        %v3115 = vunpack.c.l.b16 %v2997
        %v3116 = vunpack.c.l.b16 %v2998
        %v3117 = vunpack.c.l.b16 %v3000
        %v3118 = vunpack.c.l.b16 %v3001
        %v3119 = vunpack.c.l.b16 %v3002
        %v3120 = vpack.c.b16 %v3067, %v3066
        %v3121 = vpack.c.b16 %v3068, %v3068
        %v3122 = vpack.c.b16 %v3070, %v3069
        %v3123 = vpack.c.b16 %v3071, %v3071
        %v3124 = vpack.c.b16 %v3073, %v3072
        %v3125 = vpack.c.b16 %v3074, %v3074
        %v3126 = vpack.c.b16 %v3076, %v3075
        %v3127 = vpack.c.b16 %v3077, %v3077
        %v3128 = vpack.c.b16 %v3079, %v3078
        %v3129 = vpack.c.b16 %v3080, %v3080
        %v3130 = vpack.c.b16 %v3082, %v3081
        %v3131 = vpack.c.b16 %v3083, %v3083
        %v3132 = vpack.c.b16 %v3085, %v3084
        %v3133 = vpack.c.b16 %v3086, %v3086
        %v3134 = vpack.c.b16 %v3088, %v3087
        %v3135 = vpack.c.b16 %v3089, %v3089
        %v3136 = vpack.c.b16 %v3091, %v3090
        %v3137 = vpack.c.b16 %v3092, %v3092
        %v3138 = vpack.c.b16 %v3094, %v3093
        %v3139 = vpack.c.b16 %v3095, %v3095
        %v3140 = vpack.c.b16 %v3097, %v3096
        %v3141 = vpack.c.b16 %v3098, %v3098
        %v3142 = vpack.c.b16 %v3100, %v3099
        %v3143 = vpack.c.b16 %v3101, %v3101
        %v3144 = vpack.c.b16 %v3103, %v3102
        %v3145 = vpack.c.b16 %v3104, %v3104
        %v3146 = vpack.c.b16 %v3106, %v3105
        %v3147 = vpack.c.b16 %v3107, %v3107
        %v3148 = vpack.c.b16 %v3109, %v3108
        %v3149 = vpack.c.b16 %v3110, %v3110
        %v3150 = vpack.c.b16 %v3112, %v3111
        %v3151 = vpack.c.b16 %v3113, %v3113
        %v3152 = vpack.c.b16 %v3115, %v3114
        %v3153 = vpack.c.b16 %v3116, %v3116
        %v3154 = vpack.c.b16 %v3118, %v3117
        %v3155 = vpack.c.b16 %v3119, %v3119
        %v3156 = vpack.c.b16 %v3068, %v3067
        %v3157 = vpack.c.b16 %v3071, %v3070
        %v3158 = vpack.c.b16 %v3074, %v3073
        %v3159 = vpack.c.b16 %v3077, %v3076
        %v3160 = vpack.c.b16 %v3080, %v3079
        %v3161 = vpack.c.b16 %v3083, %v3082
        %v3162 = vpack.c.b16 %v3086, %v3085
        %v3163 = vpack.c.b16 %v3089, %v3088
        %v3164 = vpack.c.b16 %v3092, %v3091
        %v3165 = vpack.c.b16 %v3095, %v3094
        %v3166 = vpack.c.b16 %v3098, %v3097
        %v3167 = vpack.c.b16 %v3101, %v3100
        %v3168 = vpack.c.b16 %v3104, %v3103
        %v3169 = vpack.c.b16 %v3107, %v3106
        %v3170 = vpack.c.b16 %v3110, %v3109
        %v3171 = vpack.c.b16 %v3113, %v3112
        %v3172 = vpack.c.b16 %v3116, %v3115
        %v3173 = vpack.c.b16 %v3119, %v3118
        %v3175 = vshrl.u32 %v3156, 16
        %v3177 = vrot.slane %v3175, 4
        %v3178 = vshll.u32 %v3156, 16
        %v3180 = vrot.slane %v3178, 5
        %v3181 = vor.u32 %v3177, %v3180
        %v3183 = vshrl.u32 %v3157, 16
        %v3185 = vrot.slane %v3183, 4
        %v3186 = vshll.u32 %v3157, 16
        %v3188 = vrot.slane %v3186, 5
        %v3189 = vor.u32 %v3185, %v3188
        %v3191 = vshrl.u32 %v3158, 16
        %v3193 = vrot.slane %v3191, 4
        %v3194 = vshll.u32 %v3158, 16
        %v3196 = vrot.slane %v3194, 5
        %v3197 = vor.u32 %v3193, %v3196
        %v3199 = vshrl.u32 %v3159, 16
        %v3201 = vrot.slane %v3199, 4
        %v3202 = vshll.u32 %v3159, 16
        %v3204 = vrot.slane %v3202, 5
        %v3205 = vor.u32 %v3201, %v3204
        %v3207 = vshrl.u32 %v3160, 16
        %v3209 = vrot.slane %v3207, 4
        %v3210 = vshll.u32 %v3160, 16
        %v3212 = vrot.slane %v3210, 5
        %v3213 = vor.u32 %v3209, %v3212
        %v3215 = vshrl.u32 %v3161, 16
        %v3217 = vrot.slane %v3215, 4
        %v3218 = vshll.u32 %v3161, 16
        %v3220 = vrot.slane %v3218, 5
        %v3221 = vor.u32 %v3217, %v3220
        %v3223 = vshrl.u32 %v3162, 16
        %v3225 = vrot.slane %v3223, 4
        %v3226 = vshll.u32 %v3162, 16
        %v3228 = vrot.slane %v3226, 5
        %v3229 = vor.u32 %v3225, %v3228
        %v3231 = vshrl.u32 %v3163, 16
        %v3233 = vrot.slane %v3231, 4
        %v3234 = vshll.u32 %v3163, 16
        %v3236 = vrot.slane %v3234, 5
        %v3237 = vor.u32 %v3233, %v3236
        %v3239 = vshrl.u32 %v3164, 16
        %v3241 = vrot.slane %v3239, 4
        %v3242 = vshll.u32 %v3164, 16
        %v3244 = vrot.slane %v3242, 5
        %v3245 = vor.u32 %v3241, %v3244
        %v3247 = vshrl.u32 %v3165, 16
        %v3249 = vrot.slane %v3247, 4
        %v3250 = vshll.u32 %v3165, 16
        %v3252 = vrot.slane %v3250, 5
        %v3253 = vor.u32 %v3249, %v3252
        %v3255 = vshrl.u32 %v3166, 16
        %v3257 = vrot.slane %v3255, 4
        %v3258 = vshll.u32 %v3166, 16
        %v3260 = vrot.slane %v3258, 5
        %v3261 = vor.u32 %v3257, %v3260
        %v3263 = vshrl.u32 %v3167, 16
        %v3265 = vrot.slane %v3263, 4
        %v3266 = vshll.u32 %v3167, 16
        %v3268 = vrot.slane %v3266, 5
        %v3269 = vor.u32 %v3265, %v3268
        %v3271 = vshrl.u32 %v3168, 16
        %v3273 = vrot.slane %v3271, 4
        %v3274 = vshll.u32 %v3168, 16
        %v3276 = vrot.slane %v3274, 5
        %v3277 = vor.u32 %v3273, %v3276
        %v3279 = vshrl.u32 %v3169, 16
        %v3281 = vrot.slane %v3279, 4
        %v3282 = vshll.u32 %v3169, 16
        %v3284 = vrot.slane %v3282, 5
        %v3285 = vor.u32 %v3281, %v3284
        %v3287 = vshrl.u32 %v3170, 16
        %v3289 = vrot.slane %v3287, 4
        %v3290 = vshll.u32 %v3170, 16
        %v3292 = vrot.slane %v3290, 5
        %v3293 = vor.u32 %v3289, %v3292
        %v3295 = vshrl.u32 %v3171, 16
        %v3297 = vrot.slane %v3295, 4
        %v3298 = vshll.u32 %v3171, 16
        %v3300 = vrot.slane %v3298, 5
        %v3301 = vor.u32 %v3297, %v3300
        %v3303 = vshrl.u32 %v3172, 16
        %v3305 = vrot.slane %v3303, 4
        %v3306 = vshll.u32 %v3172, 16
        %v3308 = vrot.slane %v3306, 5
        %v3309 = vor.u32 %v3305, %v3308
        %v3311 = vshrl.u32 %v3173, 16
        %v3313 = vrot.slane %v3311, 4
        %v3314 = vshll.u32 %v3173, 16
        %v3316 = vrot.slane %v3314, 5
        %v3317 = vor.u32 %v3313, %v3316
        %3318 = vrot.lane.b32.xlu0 %v3181, 32
        %v3319 = vpop.permute.xlu0 %3318
        %3320 = vrot.lane.b32.xlu0 %v3189, 32
        %v3321 = vpop.permute.xlu0 %3320
        %3322 = vrot.lane.b32.xlu0 %v3197, 32
        %v3323 = vpop.permute.xlu0 %3322
        %3324 = vrot.lane.b32.xlu0 %v3205, 32
        %v3325 = vpop.permute.xlu0 %3324
        %3326 = vrot.lane.b32.xlu0 %v3213, 32
        %v3327 = vpop.permute.xlu0 %3326
        %3328 = vrot.lane.b32.xlu0 %v3221, 32
        %v3329 = vpop.permute.xlu0 %3328
        %3330 = vrot.lane.b32.xlu0 %v3229, 32
        %v3331 = vpop.permute.xlu0 %3330
        %3332 = vrot.lane.b32.xlu0 %v3237, 32
        %v3333 = vpop.permute.xlu0 %3332
        %3334 = vrot.lane.b32.xlu0 %v3245, 32
        %v3335 = vpop.permute.xlu0 %3334
        %3336 = vrot.lane.b32.xlu0 %v3253, 32
        %v3337 = vpop.permute.xlu0 %3336
        %3338 = vrot.lane.b32.xlu0 %v3261, 32
        %v3339 = vpop.permute.xlu0 %3338
        %3340 = vrot.lane.b32.xlu0 %v3269, 32
        %v3341 = vpop.permute.xlu0 %3340
        %3342 = vrot.lane.b32.xlu0 %v3277, 32
        %v3343 = vpop.permute.xlu0 %3342
        %3344 = vrot.lane.b32.xlu0 %v3285, 32
        %v3345 = vpop.permute.xlu0 %3344
        %3346 = vrot.lane.b32.xlu0 %v3293, 32
        %v3347 = vpop.permute.xlu0 %3346
        %3348 = vrot.lane.b32.xlu0 %v3301, 32
        %v3349 = vpop.permute.xlu0 %3348
        %3350 = vrot.lane.b32.xlu0 %v3309, 32
        %v3351 = vpop.permute.xlu0 %3350
        %3352 = vrot.lane.b32.xlu0 %v3317, 32
        %v3353 = vpop.permute.xlu0 %3352
        %v3372 = vunpack.c.l.b16 %v2935
        %v3373 = vunpack.c.l.b16 %v2939
        %v3374 = vunpack.c.l.b16 %v2943
        %v3375 = vunpack.c.l.b16 %v2947
        %v3376 = vunpack.c.l.b16 %v2951
        %v3377 = vunpack.c.l.b16 %v2955
        %v3378 = vunpack.c.l.b16 %v2959
        %v3379 = vunpack.c.l.b16 %v2963
        %v3380 = vunpack.c.l.b16 %v2967
        %v3381 = vunpack.c.l.b16 %v2971
        %v3382 = vunpack.c.l.b16 %v2975
        %v3383 = vunpack.c.l.b16 %v2979
        %v3384 = vunpack.c.l.b16 %v2983
        %v3385 = vunpack.c.l.b16 %v2987
        %v3386 = vunpack.c.l.b16 %v2991
        %v3387 = vunpack.c.l.b16 %v2995
        %v3388 = vunpack.c.l.b16 %v2999
        %v3389 = vunpack.c.l.b16 %v3003
        %v3390 = vpack.c.b16 %v3372, %v3372
        %v3391 = vpack.c.b16 %v3373, %v3373
        %v3392 = vpack.c.b16 %v3374, %v3374
        %v3393 = vpack.c.b16 %v3375, %v3375
        %v3394 = vpack.c.b16 %v3376, %v3376
        %v3395 = vpack.c.b16 %v3377, %v3377
        %v3396 = vpack.c.b16 %v3378, %v3378
        %v3397 = vpack.c.b16 %v3379, %v3379
        %v3398 = vpack.c.b16 %v3380, %v3380
        %v3399 = vpack.c.b16 %v3381, %v3381
        %v3400 = vpack.c.b16 %v3382, %v3382
        %v3401 = vpack.c.b16 %v3383, %v3383
        %v3402 = vpack.c.b16 %v3384, %v3384
        %v3403 = vpack.c.b16 %v3385, %v3385
        %v3404 = vpack.c.b16 %v3386, %v3386
        %v3405 = vpack.c.b16 %v3387, %v3387
        %v3406 = vpack.c.b16 %v3388, %v3388
        %v3407 = vpack.c.b16 %v3389, %v3389
        %vm3408 = vcmask 1042432
        %v3409 = vrot.slane %v3156, 5
        %v3410 = vrot.slane %v3390, 5
        %v3411 = vsel %vm3408, %v3409, %v3410
        %v3412 = vrot.slane %v3157, 5
        %v3413 = vrot.slane %v3391, 5
        %v3414 = vsel %vm3408, %v3412, %v3413
        %v3415 = vrot.slane %v3158, 5
        %v3416 = vrot.slane %v3392, 5
        %v3417 = vsel %vm3408, %v3415, %v3416
        %v3418 = vrot.slane %v3159, 5
        %v3419 = vrot.slane %v3393, 5
        %v3420 = vsel %vm3408, %v3418, %v3419
        %v3421 = vrot.slane %v3160, 5
        %v3422 = vrot.slane %v3394, 5
        %v3423 = vsel %vm3408, %v3421, %v3422
        %v3424 = vrot.slane %v3161, 5
        %v3425 = vrot.slane %v3395, 5
        %v3426 = vsel %vm3408, %v3424, %v3425
        %v3427 = vrot.slane %v3162, 5
        %v3428 = vrot.slane %v3396, 5
        %v3429 = vsel %vm3408, %v3427, %v3428
        %v3430 = vrot.slane %v3163, 5
        %v3431 = vrot.slane %v3397, 5
        %v3432 = vsel %vm3408, %v3430, %v3431
        %v3433 = vrot.slane %v3164, 5
        %v3434 = vrot.slane %v3398, 5
        %v3435 = vsel %vm3408, %v3433, %v3434
        %v3436 = vrot.slane %v3165, 5
        %v3437 = vrot.slane %v3399, 5
        %v3438 = vsel %vm3408, %v3436, %v3437
        %v3439 = vrot.slane %v3166, 5
        %v3440 = vrot.slane %v3400, 5
        %v3441 = vsel %vm3408, %v3439, %v3440
        %v3442 = vrot.slane %v3167, 5
        %v3443 = vrot.slane %v3401, 5
        %v3444 = vsel %vm3408, %v3442, %v3443
        %v3445 = vrot.slane %v3168, 5
        %v3446 = vrot.slane %v3402, 5
        %v3447 = vsel %vm3408, %v3445, %v3446
        %v3448 = vrot.slane %v3169, 5
        %v3449 = vrot.slane %v3403, 5
        %v3450 = vsel %vm3408, %v3448, %v3449
        %v3451 = vrot.slane %v3170, 5
        %v3452 = vrot.slane %v3404, 5
        %v3453 = vsel %vm3408, %v3451, %v3452
        %v3454 = vrot.slane %v3171, 5
        %v3455 = vrot.slane %v3405, 5
        %v3456 = vsel %vm3408, %v3454, %v3455
        %v3457 = vrot.slane %v3172, 5
        %v3458 = vrot.slane %v3406, 5
        %v3459 = vsel %vm3408, %v3457, %v3458
        %v3460 = vrot.slane %v3173, 5
        %v3461 = vrot.slane %v3407, 5
        %v3462 = vsel %vm3408, %v3460, %v3461
        %3463 = vrot.lane.b32.xlu0 %v3409, 64
        %v3464 = vpop.permute.xlu0 %3463
        %3465 = vrot.lane.b32.xlu0 %v3411, 64
        %v3466 = vpop.permute.xlu0 %3465
        %3467 = vrot.lane.b32.xlu0 %v3412, 64
        %v3468 = vpop.permute.xlu0 %3467
        %3469 = vrot.lane.b32.xlu0 %v3414, 64
        %v3470 = vpop.permute.xlu0 %3469
        %3471 = vrot.lane.b32.xlu0 %v3415, 64
        %v3472 = vpop.permute.xlu0 %3471
        %3473 = vrot.lane.b32.xlu0 %v3417, 64
        %v3474 = vpop.permute.xlu0 %3473
        %3475 = vrot.lane.b32.xlu0 %v3418, 64
        %v3476 = vpop.permute.xlu0 %3475
        %3477 = vrot.lane.b32.xlu0 %v3420, 64
        %v3478 = vpop.permute.xlu0 %3477
        %3479 = vrot.lane.b32.xlu0 %v3421, 64
        %v3480 = vpop.permute.xlu0 %3479
        %3481 = vrot.lane.b32.xlu0 %v3423, 64
        %v3482 = vpop.permute.xlu0 %3481
        %3483 = vrot.lane.b32.xlu0 %v3424, 64
        %v3484 = vpop.permute.xlu0 %3483
        %3485 = vrot.lane.b32.xlu0 %v3426, 64
        %v3486 = vpop.permute.xlu0 %3485
        %3487 = vrot.lane.b32.xlu0 %v3427, 64
        %v3488 = vpop.permute.xlu0 %3487
        %3489 = vrot.lane.b32.xlu0 %v3429, 64
        %v3490 = vpop.permute.xlu0 %3489
        %3491 = vrot.lane.b32.xlu0 %v3430, 64
        %v3492 = vpop.permute.xlu0 %3491
        %3493 = vrot.lane.b32.xlu0 %v3432, 64
        %v3494 = vpop.permute.xlu0 %3493
        %3495 = vrot.lane.b32.xlu0 %v3433, 64
        %v3496 = vpop.permute.xlu0 %3495
        %3497 = vrot.lane.b32.xlu0 %v3435, 64
        %v3498 = vpop.permute.xlu0 %3497
        %3499 = vrot.lane.b32.xlu0 %v3436, 64
        %v3500 = vpop.permute.xlu0 %3499
        %3501 = vrot.lane.b32.xlu0 %v3438, 64
        %v3502 = vpop.permute.xlu0 %3501
        %3503 = vrot.lane.b32.xlu0 %v3439, 64
        %v3504 = vpop.permute.xlu0 %3503
        %3505 = vrot.lane.b32.xlu0 %v3441, 64
        %v3506 = vpop.permute.xlu0 %3505
        %3507 = vrot.lane.b32.xlu0 %v3442, 64
        %v3508 = vpop.permute.xlu0 %3507
        %3509 = vrot.lane.b32.xlu0 %v3444, 64
        %v3510 = vpop.permute.xlu0 %3509
        %3511 = vrot.lane.b32.xlu0 %v3445, 64
        %v3512 = vpop.permute.xlu0 %3511
        %3513 = vrot.lane.b32.xlu0 %v3447, 64
        %v3514 = vpop.permute.xlu0 %3513
        %3515 = vrot.lane.b32.xlu0 %v3448, 64
        %v3516 = vpop.permute.xlu0 %3515
        %3517 = vrot.lane.b32.xlu0 %v3450, 64
        %v3518 = vpop.permute.xlu0 %3517
        %3519 = vrot.lane.b32.xlu0 %v3451, 64
        %v3520 = vpop.permute.xlu0 %3519
        %3521 = vrot.lane.b32.xlu0 %v3453, 64
        %v3522 = vpop.permute.xlu0 %3521
        %3523 = vrot.lane.b32.xlu0 %v3454, 64
        %v3524 = vpop.permute.xlu0 %3523
        %3525 = vrot.lane.b32.xlu0 %v3456, 64
        %v3526 = vpop.permute.xlu0 %3525
        %3527 = vrot.lane.b32.xlu0 %v3457, 64
        %v3528 = vpop.permute.xlu0 %3527
        %3529 = vrot.lane.b32.xlu0 %v3459, 64
        %v3530 = vpop.permute.xlu0 %3529
        %3531 = vrot.lane.b32.xlu0 %v3460, 64
        %v3532 = vpop.permute.xlu0 %3531
        %3533 = vrot.lane.b32.xlu0 %v3462, 64
        %v3534 = vpop.permute.xlu0 %3533
        %v3538 = vunpack.c.l.b16 %v3004
        %v3539 = vunpack.c.l.b16 %v3005
        %v3540 = vunpack.c.l.b16 %v3006
        %v3541 = vpack.c.b16 %v3539, %v3538
        %v3542 = vpack.c.b16 %v3540, %v3540
        %3543 = vrot.lane.b32.xlu0 %v3122, 96
        %v3544 = vpop.permute.xlu0 %3543
        %3545 = vrot.lane.b32.xlu0 %v3123, 96
        %v3546 = vpop.permute.xlu0 %3545
        %3547 = vrot.lane.b32.xlu0 %v3124, 96
        %v3548 = vpop.permute.xlu0 %3547
        %3549 = vrot.lane.b32.xlu0 %v3125, 96
        %v3550 = vpop.permute.xlu0 %3549
        %3551 = vrot.lane.b32.xlu0 %v3126, 96
        %v3552 = vpop.permute.xlu0 %3551
        %3553 = vrot.lane.b32.xlu0 %v3127, 96
        %v3554 = vpop.permute.xlu0 %3553
        %3555 = vrot.lane.b32.xlu0 %v3128, 96
        %v3556 = vpop.permute.xlu0 %3555
        %3557 = vrot.lane.b32.xlu0 %v3129, 96
        %v3558 = vpop.permute.xlu0 %3557
        %3559 = vrot.lane.b32.xlu0 %v3130, 96
        %v3560 = vpop.permute.xlu0 %3559
        %3561 = vrot.lane.b32.xlu0 %v3131, 96
        %v3562 = vpop.permute.xlu0 %3561
        %3563 = vrot.lane.b32.xlu0 %v3132, 96
        %v3564 = vpop.permute.xlu0 %3563
        %3565 = vrot.lane.b32.xlu0 %v3133, 96
        %v3566 = vpop.permute.xlu0 %3565
        %3567 = vrot.lane.b32.xlu0 %v3134, 96
        %v3568 = vpop.permute.xlu0 %3567
        %3569 = vrot.lane.b32.xlu0 %v3135, 96
        %v3570 = vpop.permute.xlu0 %3569
        %3571 = vrot.lane.b32.xlu0 %v3136, 96
        %v3572 = vpop.permute.xlu0 %3571
        %3573 = vrot.lane.b32.xlu0 %v3137, 96
        %v3574 = vpop.permute.xlu0 %3573
        %3575 = vrot.lane.b32.xlu0 %v3138, 96
        %v3576 = vpop.permute.xlu0 %3575
        %3577 = vrot.lane.b32.xlu0 %v3139, 96
        %v3578 = vpop.permute.xlu0 %3577
        %3579 = vrot.lane.b32.xlu0 %v3140, 96
        %v3580 = vpop.permute.xlu0 %3579
        %3581 = vrot.lane.b32.xlu0 %v3141, 96
        %v3582 = vpop.permute.xlu0 %3581
        %3583 = vrot.lane.b32.xlu0 %v3142, 96
        %v3584 = vpop.permute.xlu0 %3583
        %3585 = vrot.lane.b32.xlu0 %v3143, 96
        %v3586 = vpop.permute.xlu0 %3585
        %3587 = vrot.lane.b32.xlu0 %v3144, 96
        %v3588 = vpop.permute.xlu0 %3587
        %3589 = vrot.lane.b32.xlu0 %v3145, 96
        %v3590 = vpop.permute.xlu0 %3589
        %3591 = vrot.lane.b32.xlu0 %v3146, 96
        %v3592 = vpop.permute.xlu0 %3591
        %3593 = vrot.lane.b32.xlu0 %v3147, 96
        %v3594 = vpop.permute.xlu0 %3593
        %3595 = vrot.lane.b32.xlu0 %v3148, 96
        %v3596 = vpop.permute.xlu0 %3595
        %3597 = vrot.lane.b32.xlu0 %v3149, 96
        %v3598 = vpop.permute.xlu0 %3597
        %3599 = vrot.lane.b32.xlu0 %v3150, 96
        %v3600 = vpop.permute.xlu0 %3599
        %3601 = vrot.lane.b32.xlu0 %v3151, 96
        %v3602 = vpop.permute.xlu0 %3601
        %3603 = vrot.lane.b32.xlu0 %v3152, 96
        %v3604 = vpop.permute.xlu0 %3603
        %3605 = vrot.lane.b32.xlu0 %v3153, 96
        %v3606 = vpop.permute.xlu0 %3605
        %3607 = vrot.lane.b32.xlu0 %v3154, 96
        %v3608 = vpop.permute.xlu0 %3607
        %3609 = vrot.lane.b32.xlu0 %v3155, 96
        %v3610 = vpop.permute.xlu0 %3609
        %3611 = vrot.lane.b32.xlu0 %v3541, 96
        %v3612 = vpop.permute.xlu0 %3611
        %3613 = vrot.lane.b32.xlu0 %v3542, 96
        %v3614 = vpop.permute.xlu0 %3613
        %v3615 = vpack.c.b16 %v3540, %v3539
        %v3617 = vshrl.u32 %v3615, 16
        %v3619 = vrot.slane %v3617, 4
        %v3620 = vshll.u32 %v3615, 16
        %v3622 = vrot.slane %v3620, 5
        %v3623 = vor.u32 %v3619, %v3622
        %v3625 = vunpack.c.l.b16 %v3007
        %v3626 = vpack.c.b16 %v3625, %v3625
        %v3627 = vrot.slane %v3615, 5
        %v3628 = vrot.slane %v3626, 5
        %v3629 = vsel %vm3408, %v3627, %v3628
        %3630 = vrot.lane.b32.xlu0 %v3412, 32
        %v3631 = vpop.permute.xlu0 %3630
        %3632 = vrot.lane.b32.xlu0 %v3414, 32
        %v3633 = vpop.permute.xlu0 %3632
        %3634 = vrot.lane.b32.xlu0 %v3415, 32
        %v3635 = vpop.permute.xlu0 %3634
        %3636 = vrot.lane.b32.xlu0 %v3417, 32
        %v3637 = vpop.permute.xlu0 %3636
        %3638 = vrot.lane.b32.xlu0 %v3418, 32
        %v3639 = vpop.permute.xlu0 %3638
        %3640 = vrot.lane.b32.xlu0 %v3420, 32
        %v3641 = vpop.permute.xlu0 %3640
        %3642 = vrot.lane.b32.xlu0 %v3421, 32
        %v3643 = vpop.permute.xlu0 %3642
        %3644 = vrot.lane.b32.xlu0 %v3423, 32
        %v3645 = vpop.permute.xlu0 %3644
        %3646 = vrot.lane.b32.xlu0 %v3424, 32
        %v3647 = vpop.permute.xlu0 %3646
        %3648 = vrot.lane.b32.xlu0 %v3426, 32
        %v3649 = vpop.permute.xlu0 %3648
        %3650 = vrot.lane.b32.xlu0 %v3427, 32
        %v3651 = vpop.permute.xlu0 %3650
        %3652 = vrot.lane.b32.xlu0 %v3429, 32
        %v3653 = vpop.permute.xlu0 %3652
        %3654 = vrot.lane.b32.xlu0 %v3430, 32
        %v3655 = vpop.permute.xlu0 %3654
        %3656 = vrot.lane.b32.xlu0 %v3432, 32
        %v3657 = vpop.permute.xlu0 %3656
        %3658 = vrot.lane.b32.xlu0 %v3433, 32
        %v3659 = vpop.permute.xlu0 %3658
        %3660 = vrot.lane.b32.xlu0 %v3435, 32
        %v3661 = vpop.permute.xlu0 %3660
        %3662 = vrot.lane.b32.xlu0 %v3436, 32
        %v3663 = vpop.permute.xlu0 %3662
        %3664 = vrot.lane.b32.xlu0 %v3438, 32
        %v3665 = vpop.permute.xlu0 %3664
        %3666 = vrot.lane.b32.xlu0 %v3439, 32
        %v3667 = vpop.permute.xlu0 %3666
        %3668 = vrot.lane.b32.xlu0 %v3441, 32
        %v3669 = vpop.permute.xlu0 %3668
        %3670 = vrot.lane.b32.xlu0 %v3442, 32
        %v3671 = vpop.permute.xlu0 %3670
        %3672 = vrot.lane.b32.xlu0 %v3444, 32
        %v3673 = vpop.permute.xlu0 %3672
        %3674 = vrot.lane.b32.xlu0 %v3445, 32
        %v3675 = vpop.permute.xlu0 %3674
        %3676 = vrot.lane.b32.xlu0 %v3447, 32
        %v3677 = vpop.permute.xlu0 %3676
        %3678 = vrot.lane.b32.xlu0 %v3448, 32
        %v3679 = vpop.permute.xlu0 %3678
        %3680 = vrot.lane.b32.xlu0 %v3450, 32
        %v3681 = vpop.permute.xlu0 %3680
        %3682 = vrot.lane.b32.xlu0 %v3451, 32
        %v3683 = vpop.permute.xlu0 %3682
        %3684 = vrot.lane.b32.xlu0 %v3453, 32
        %v3685 = vpop.permute.xlu0 %3684
        %3686 = vrot.lane.b32.xlu0 %v3454, 32
        %v3687 = vpop.permute.xlu0 %3686
        %3688 = vrot.lane.b32.xlu0 %v3456, 32
        %v3689 = vpop.permute.xlu0 %3688
        %3690 = vrot.lane.b32.xlu0 %v3457, 32
        %v3691 = vpop.permute.xlu0 %3690
        %3692 = vrot.lane.b32.xlu0 %v3459, 32
        %v3693 = vpop.permute.xlu0 %3692
        %3694 = vrot.lane.b32.xlu0 %v3460, 32
        %v3695 = vpop.permute.xlu0 %3694
        %3696 = vrot.lane.b32.xlu0 %v3462, 32
        %v3697 = vpop.permute.xlu0 %3696
        %3698 = vrot.lane.b32.xlu0 %v3627, 32
        %v3699 = vpop.permute.xlu0 %3698
        %3700 = vrot.lane.b32.xlu0 %v3629, 32
        %v3701 = vpop.permute.xlu0 %3700
        %v3705 = vunpack.c.l.b16 %v3008
        %v3706 = vunpack.c.l.b16 %v3009
        %v3707 = vunpack.c.l.b16 %v3010
        %v3708 = vpack.c.b16 %v3706, %v3705
        %v3709 = vpack.c.b16 %v3707, %v3707
        %3710 = vrot.lane.b32.xlu0 %v3124, 64
        %v3711 = vpop.permute.xlu0 %3710
        %3712 = vrot.lane.b32.xlu0 %v3125, 64
        %v3713 = vpop.permute.xlu0 %3712
        %3714 = vrot.lane.b32.xlu0 %v3126, 64
        %v3715 = vpop.permute.xlu0 %3714
        %3716 = vrot.lane.b32.xlu0 %v3127, 64
        %v3717 = vpop.permute.xlu0 %3716
        %3718 = vrot.lane.b32.xlu0 %v3128, 64
        %v3719 = vpop.permute.xlu0 %3718
        %3720 = vrot.lane.b32.xlu0 %v3129, 64
        %v3721 = vpop.permute.xlu0 %3720
        %3722 = vrot.lane.b32.xlu0 %v3130, 64
        %v3723 = vpop.permute.xlu0 %3722
        %3724 = vrot.lane.b32.xlu0 %v3131, 64
        %v3725 = vpop.permute.xlu0 %3724
        %3726 = vrot.lane.b32.xlu0 %v3132, 64
        %v3727 = vpop.permute.xlu0 %3726
        %3728 = vrot.lane.b32.xlu0 %v3133, 64
        %v3729 = vpop.permute.xlu0 %3728
        %3730 = vrot.lane.b32.xlu0 %v3134, 64
        %v3731 = vpop.permute.xlu0 %3730
        %3732 = vrot.lane.b32.xlu0 %v3135, 64
        %v3733 = vpop.permute.xlu0 %3732
        %3734 = vrot.lane.b32.xlu0 %v3136, 64
        %v3735 = vpop.permute.xlu0 %3734
        %3736 = vrot.lane.b32.xlu0 %v3137, 64
        %v3737 = vpop.permute.xlu0 %3736
        %3738 = vrot.lane.b32.xlu0 %v3138, 64
        %v3739 = vpop.permute.xlu0 %3738
        %3740 = vrot.lane.b32.xlu0 %v3139, 64
        %v3741 = vpop.permute.xlu0 %3740
        %3742 = vrot.lane.b32.xlu0 %v3140, 64
        %v3743 = vpop.permute.xlu0 %3742
        %3744 = vrot.lane.b32.xlu0 %v3141, 64
        %v3745 = vpop.permute.xlu0 %3744
        %3746 = vrot.lane.b32.xlu0 %v3142, 64
        %v3747 = vpop.permute.xlu0 %3746
        %3748 = vrot.lane.b32.xlu0 %v3143, 64
        %v3749 = vpop.permute.xlu0 %3748
        %3750 = vrot.lane.b32.xlu0 %v3144, 64
        %v3751 = vpop.permute.xlu0 %3750
        %3752 = vrot.lane.b32.xlu0 %v3145, 64
        %v3753 = vpop.permute.xlu0 %3752
        %3754 = vrot.lane.b32.xlu0 %v3146, 64
        %v3755 = vpop.permute.xlu0 %3754
        %3756 = vrot.lane.b32.xlu0 %v3147, 64
        %v3757 = vpop.permute.xlu0 %3756
        %3758 = vrot.lane.b32.xlu0 %v3148, 64
        %v3759 = vpop.permute.xlu0 %3758
        %3760 = vrot.lane.b32.xlu0 %v3149, 64
        %v3761 = vpop.permute.xlu0 %3760
        %3762 = vrot.lane.b32.xlu0 %v3150, 64
        %v3763 = vpop.permute.xlu0 %3762
        %3764 = vrot.lane.b32.xlu0 %v3151, 64
        %v3765 = vpop.permute.xlu0 %3764
        %3766 = vrot.lane.b32.xlu0 %v3152, 64
        %v3767 = vpop.permute.xlu0 %3766
        %3768 = vrot.lane.b32.xlu0 %v3153, 64
        %v3769 = vpop.permute.xlu0 %3768
        %3770 = vrot.lane.b32.xlu0 %v3154, 64
        %v3771 = vpop.permute.xlu0 %3770
        %3772 = vrot.lane.b32.xlu0 %v3155, 64
        %v3773 = vpop.permute.xlu0 %3772
        %3774 = vrot.lane.b32.xlu0 %v3541, 64
        %v3775 = vpop.permute.xlu0 %3774
        %3776 = vrot.lane.b32.xlu0 %v3542, 64
        %v3777 = vpop.permute.xlu0 %3776
        %3778 = vrot.lane.b32.xlu0 %v3708, 64
        %v3779 = vpop.permute.xlu0 %3778
        %3780 = vrot.lane.b32.xlu0 %v3709, 64
        %v3781 = vpop.permute.xlu0 %3780
        %v3782 = vpack.c.b16 %v3707, %v3706
        %v3784 = vshrl.u32 %v3782, 16
        %v3786 = vrot.slane %v3784, 4
        %v3787 = vshll.u32 %v3782, 16
        %v3789 = vrot.slane %v3787, 5
        %v3790 = vor.u32 %v3786, %v3789
        %3791 = vrot.lane.b32.xlu0 %v3197, 96
        %v3792 = vpop.permute.xlu0 %3791
        %3793 = vrot.lane.b32.xlu0 %v3205, 96
        %v3794 = vpop.permute.xlu0 %3793
        %3795 = vrot.lane.b32.xlu0 %v3213, 96
        %v3796 = vpop.permute.xlu0 %3795
        %3797 = vrot.lane.b32.xlu0 %v3221, 96
        %v3798 = vpop.permute.xlu0 %3797
        %3799 = vrot.lane.b32.xlu0 %v3229, 96
        %v3800 = vpop.permute.xlu0 %3799
        %3801 = vrot.lane.b32.xlu0 %v3237, 96
        %v3802 = vpop.permute.xlu0 %3801
        %3803 = vrot.lane.b32.xlu0 %v3245, 96
        %v3804 = vpop.permute.xlu0 %3803
        %3805 = vrot.lane.b32.xlu0 %v3253, 96
        %v3806 = vpop.permute.xlu0 %3805
        %3807 = vrot.lane.b32.xlu0 %v3261, 96
        %v3808 = vpop.permute.xlu0 %3807
        %3809 = vrot.lane.b32.xlu0 %v3269, 96
        %v3810 = vpop.permute.xlu0 %3809
        %3811 = vrot.lane.b32.xlu0 %v3277, 96
        %v3812 = vpop.permute.xlu0 %3811
        %3813 = vrot.lane.b32.xlu0 %v3285, 96
        %v3814 = vpop.permute.xlu0 %3813
        %3815 = vrot.lane.b32.xlu0 %v3293, 96
        %v3816 = vpop.permute.xlu0 %3815
        %3817 = vrot.lane.b32.xlu0 %v3301, 96
        %v3818 = vpop.permute.xlu0 %3817
        %3819 = vrot.lane.b32.xlu0 %v3309, 96
        %v3820 = vpop.permute.xlu0 %3819
        %3821 = vrot.lane.b32.xlu0 %v3317, 96
        %v3822 = vpop.permute.xlu0 %3821
        %3823 = vrot.lane.b32.xlu0 %v3623, 96
        %v3824 = vpop.permute.xlu0 %3823
        %3825 = vrot.lane.b32.xlu0 %v3790, 96
        %v3826 = vpop.permute.xlu0 %3825
        %v3828 = vunpack.c.l.b16 %v3011
        %v3829 = vpack.c.b16 %v3828, %v3828
        %v3830 = vrot.slane %v3782, 5
        %v3831 = vrot.slane %v3829, 5
        %v3832 = vsel %vm3408, %v3830, %v3831
        %vm3833 = vcmask 261120
        %v3836 = vsel %vm3833, %v3120, %v3319
        %v3838 = vsel %vm3833, %v3121, %v3319
        %v3841 = vsel %vm3833, %v3122, %v3321
        %v3843 = vsel %vm3833, %v3123, %v3321
        %v3846 = vsel %vm3833, %v3124, %v3323
        %v3848 = vsel %vm3833, %v3125, %v3323
        %v3851 = vsel %vm3833, %v3126, %v3325
        %v3853 = vsel %vm3833, %v3127, %v3325
        %v3856 = vsel %vm3833, %v3128, %v3327
        %v3858 = vsel %vm3833, %v3129, %v3327
        %v3861 = vsel %vm3833, %v3130, %v3329
        %v3863 = vsel %vm3833, %v3131, %v3329
        %v3866 = vsel %vm3833, %v3132, %v3331
        %v3868 = vsel %vm3833, %v3133, %v3331
        %v3871 = vsel %vm3833, %v3134, %v3333
        %v3873 = vsel %vm3833, %v3135, %v3333
        %v3876 = vsel %vm3833, %v3136, %v3335
        %v3878 = vsel %vm3833, %v3137, %v3335
        %v3881 = vsel %vm3833, %v3138, %v3337
        %v3883 = vsel %vm3833, %v3139, %v3337
        %v3886 = vsel %vm3833, %v3140, %v3339
        %v3888 = vsel %vm3833, %v3141, %v3339
        %v3891 = vsel %vm3833, %v3142, %v3341
        %v3893 = vsel %vm3833, %v3143, %v3341
        %v3896 = vsel %vm3833, %v3144, %v3343
        %v3898 = vsel %vm3833, %v3145, %v3343
        %v3901 = vsel %vm3833, %v3146, %v3345
        %v3903 = vsel %vm3833, %v3147, %v3345
        %v3906 = vsel %vm3833, %v3148, %v3347
        %v3908 = vsel %vm3833, %v3149, %v3347
        %v3911 = vsel %vm3833, %v3150, %v3349
        %v3913 = vsel %vm3833, %v3151, %v3349
        %v3916 = vsel %vm3833, %v3152, %v3351
        %v3918 = vsel %vm3833, %v3153, %v3351
        %v3921 = vsel %vm3833, %v3154, %v3353
        %v3923 = vsel %vm3833, %v3155, %v3353
        %vm3924 = vcmask 523264
        %v3926 = vsel %vm3924, %v3836, %v3464
        %v3928 = vsel %vm3924, %v3838, %v3466
        %v3930 = vsel %vm3924, %v3841, %v3468
        %v3932 = vsel %vm3924, %v3843, %v3470
        %v3934 = vsel %vm3924, %v3846, %v3472
        %v3936 = vsel %vm3924, %v3848, %v3474
        %v3938 = vsel %vm3924, %v3851, %v3476
        %v3940 = vsel %vm3924, %v3853, %v3478
        %v3942 = vsel %vm3924, %v3856, %v3480
        %v3944 = vsel %vm3924, %v3858, %v3482
        %v3946 = vsel %vm3924, %v3861, %v3484
        %v3948 = vsel %vm3924, %v3863, %v3486
        %v3950 = vsel %vm3924, %v3866, %v3488
        %v3952 = vsel %vm3924, %v3868, %v3490
        %v3954 = vsel %vm3924, %v3871, %v3492
        %v3956 = vsel %vm3924, %v3873, %v3494
        %v3958 = vsel %vm3924, %v3876, %v3496
        %v3960 = vsel %vm3924, %v3878, %v3498
        %v3962 = vsel %vm3924, %v3881, %v3500
        %v3964 = vsel %vm3924, %v3883, %v3502
        %v3966 = vsel %vm3924, %v3886, %v3504
        %v3968 = vsel %vm3924, %v3888, %v3506
        %v3970 = vsel %vm3924, %v3891, %v3508
        %v3972 = vsel %vm3924, %v3893, %v3510
        %v3974 = vsel %vm3924, %v3896, %v3512
        %v3976 = vsel %vm3924, %v3898, %v3514
        %v3978 = vsel %vm3924, %v3901, %v3516
        %v3980 = vsel %vm3924, %v3903, %v3518
        %v3982 = vsel %vm3924, %v3906, %v3520
        %v3984 = vsel %vm3924, %v3908, %v3522
        %v3986 = vsel %vm3924, %v3911, %v3524
        %v3988 = vsel %vm3924, %v3913, %v3526
        %v3990 = vsel %vm3924, %v3916, %v3528
        %v3992 = vsel %vm3924, %v3918, %v3530
        %v3994 = vsel %vm3924, %v3921, %v3532
        %v3996 = vsel %vm3924, %v3923, %v3534
        %vm3997 = vcmask 785408
        %v3999 = vsel %vm3997, %v3926, %v3544
        %v4001 = vsel %vm3997, %v3928, %v3546
        %v4003 = vsel %vm3997, %v3930, %v3548
        %v4005 = vsel %vm3997, %v3932, %v3550
        %v4007 = vsel %vm3997, %v3934, %v3552
        %v4009 = vsel %vm3997, %v3936, %v3554
        %v4011 = vsel %vm3997, %v3938, %v3556
        %v4013 = vsel %vm3997, %v3940, %v3558
        %v4015 = vsel %vm3997, %v3942, %v3560
        %v4017 = vsel %vm3997, %v3944, %v3562
        %v4019 = vsel %vm3997, %v3946, %v3564
        %v4021 = vsel %vm3997, %v3948, %v3566
        %v4023 = vsel %vm3997, %v3950, %v3568
        %v4025 = vsel %vm3997, %v3952, %v3570
        %v4027 = vsel %vm3997, %v3954, %v3572
        %v4029 = vsel %vm3997, %v3956, %v3574
        %v4031 = vsel %vm3997, %v3958, %v3576
        %v4033 = vsel %vm3997, %v3960, %v3578
        %v4035 = vsel %vm3997, %v3962, %v3580
        %v4037 = vsel %vm3997, %v3964, %v3582
        %v4039 = vsel %vm3997, %v3966, %v3584
        %v4041 = vsel %vm3997, %v3968, %v3586
        %v4043 = vsel %vm3997, %v3970, %v3588
        %v4045 = vsel %vm3997, %v3972, %v3590
        %v4047 = vsel %vm3997, %v3974, %v3592
        %v4049 = vsel %vm3997, %v3976, %v3594
        %v4051 = vsel %vm3997, %v3978, %v3596
        %v4053 = vsel %vm3997, %v3980, %v3598
        %v4055 = vsel %vm3997, %v3982, %v3600
        %v4057 = vsel %vm3997, %v3984, %v3602
        %v4059 = vsel %vm3997, %v3986, %v3604
        %v4061 = vsel %vm3997, %v3988, %v3606
        %v4063 = vsel %vm3997, %v3990, %v3608
        %v4065 = vsel %vm3997, %v3992, %v3610
        %v4067 = vsel %vm3997, %v3994, %v3612
        %v4069 = vsel %vm3997, %v3996, %v3614
        %v4072 = vsel %vm3833, %v3189, %v3631
        %v4074 = vsel %vm3833, %v3189, %v3633
        %v4077 = vsel %vm3833, %v3197, %v3635
        %v4079 = vsel %vm3833, %v3197, %v3637
        %v4082 = vsel %vm3833, %v3205, %v3639
        %v4084 = vsel %vm3833, %v3205, %v3641
        %v4087 = vsel %vm3833, %v3213, %v3643
        %v4089 = vsel %vm3833, %v3213, %v3645
        %v4092 = vsel %vm3833, %v3221, %v3647
        %v4094 = vsel %vm3833, %v3221, %v3649
        %v4097 = vsel %vm3833, %v3229, %v3651
        %v4099 = vsel %vm3833, %v3229, %v3653
        %v4102 = vsel %vm3833, %v3237, %v3655
        %v4104 = vsel %vm3833, %v3237, %v3657
        %v4107 = vsel %vm3833, %v3245, %v3659
        %v4109 = vsel %vm3833, %v3245, %v3661
        %v4112 = vsel %vm3833, %v3253, %v3663
        %v4114 = vsel %vm3833, %v3253, %v3665
        %v4117 = vsel %vm3833, %v3261, %v3667
        %v4119 = vsel %vm3833, %v3261, %v3669
        %v4122 = vsel %vm3833, %v3269, %v3671
        %v4124 = vsel %vm3833, %v3269, %v3673
        %v4127 = vsel %vm3833, %v3277, %v3675
        %v4129 = vsel %vm3833, %v3277, %v3677
        %v4132 = vsel %vm3833, %v3285, %v3679
        %v4134 = vsel %vm3833, %v3285, %v3681
        %v4137 = vsel %vm3833, %v3293, %v3683
        %v4139 = vsel %vm3833, %v3293, %v3685
        %v4142 = vsel %vm3833, %v3301, %v3687
        %v4144 = vsel %vm3833, %v3301, %v3689
        %v4147 = vsel %vm3833, %v3309, %v3691
        %v4149 = vsel %vm3833, %v3309, %v3693
        %v4152 = vsel %vm3833, %v3317, %v3695
        %v4154 = vsel %vm3833, %v3317, %v3697
        %v4157 = vsel %vm3833, %v3623, %v3699
        %v4159 = vsel %vm3833, %v3623, %v3701
        %v4161 = vsel %vm3924, %v4072, %v3711
        %v4163 = vsel %vm3924, %v4074, %v3713
        %v4165 = vsel %vm3924, %v4077, %v3715
        %v4167 = vsel %vm3924, %v4079, %v3717
        %v4169 = vsel %vm3924, %v4082, %v3719
        %v4171 = vsel %vm3924, %v4084, %v3721
        %v4173 = vsel %vm3924, %v4087, %v3723
        %v4175 = vsel %vm3924, %v4089, %v3725
        %v4177 = vsel %vm3924, %v4092, %v3727
        %v4179 = vsel %vm3924, %v4094, %v3729
        %v4181 = vsel %vm3924, %v4097, %v3731
        %v4183 = vsel %vm3924, %v4099, %v3733
        %v4185 = vsel %vm3924, %v4102, %v3735
        %v4187 = vsel %vm3924, %v4104, %v3737
        %v4189 = vsel %vm3924, %v4107, %v3739
        %v4191 = vsel %vm3924, %v4109, %v3741
        %v4193 = vsel %vm3924, %v4112, %v3743
        %v4195 = vsel %vm3924, %v4114, %v3745
        %v4197 = vsel %vm3924, %v4117, %v3747
        %v4199 = vsel %vm3924, %v4119, %v3749
        %v4201 = vsel %vm3924, %v4122, %v3751
        %v4203 = vsel %vm3924, %v4124, %v3753
        %v4205 = vsel %vm3924, %v4127, %v3755
        %v4207 = vsel %vm3924, %v4129, %v3757
        %v4209 = vsel %vm3924, %v4132, %v3759
        %v4211 = vsel %vm3924, %v4134, %v3761
        %v4213 = vsel %vm3924, %v4137, %v3763
        %v4215 = vsel %vm3924, %v4139, %v3765
        %v4217 = vsel %vm3924, %v4142, %v3767
        %v4219 = vsel %vm3924, %v4144, %v3769
        %v4221 = vsel %vm3924, %v4147, %v3771
        %v4223 = vsel %vm3924, %v4149, %v3773
        %v4225 = vsel %vm3924, %v4152, %v3775
        %v4227 = vsel %vm3924, %v4154, %v3777
        %v4229 = vsel %vm3924, %v4157, %v3779
        %v4231 = vsel %vm3924, %v4159, %v3781
        %v4233 = vsel %vm3997, %v4161, %v3792
        %v4234 = vsel %vm3997, %v4163, %v3792
        %v4236 = vsel %vm3997, %v4165, %v3794
        %v4237 = vsel %vm3997, %v4167, %v3794
        %v4239 = vsel %vm3997, %v4169, %v3796
        %v4240 = vsel %vm3997, %v4171, %v3796
        %v4242 = vsel %vm3997, %v4173, %v3798
        %v4243 = vsel %vm3997, %v4175, %v3798
        %v4245 = vsel %vm3997, %v4177, %v3800
        %v4246 = vsel %vm3997, %v4179, %v3800
        %v4248 = vsel %vm3997, %v4181, %v3802
        %v4249 = vsel %vm3997, %v4183, %v3802
        %v4251 = vsel %vm3997, %v4185, %v3804
        %v4252 = vsel %vm3997, %v4187, %v3804
        %v4254 = vsel %vm3997, %v4189, %v3806
        %v4255 = vsel %vm3997, %v4191, %v3806
        %v4257 = vsel %vm3997, %v4193, %v3808
        %v4258 = vsel %vm3997, %v4195, %v3808
        %v4260 = vsel %vm3997, %v4197, %v3810
        %v4261 = vsel %vm3997, %v4199, %v3810
        %v4263 = vsel %vm3997, %v4201, %v3812
        %v4264 = vsel %vm3997, %v4203, %v3812
        %v4266 = vsel %vm3997, %v4205, %v3814
        %v4267 = vsel %vm3997, %v4207, %v3814
        %v4269 = vsel %vm3997, %v4209, %v3816
        %v4270 = vsel %vm3997, %v4211, %v3816
        %v4272 = vsel %vm3997, %v4213, %v3818
        %v4273 = vsel %vm3997, %v4215, %v3818
        %v4275 = vsel %vm3997, %v4217, %v3820
        %v4276 = vsel %vm3997, %v4219, %v3820
        %v4278 = vsel %vm3997, %v4221, %v3822
        %v4279 = vsel %vm3997, %v4223, %v3822
        %v4281 = vsel %vm3997, %v4225, %v3824
        %v4282 = vsel %vm3997, %v4227, %v3824
        %v4284 = vsel %vm3997, %v4229, %v3826
        %v4285 = vsel %vm3997, %v4231, %v3826
        %vm4286 = vsmask.f32 4352
        %v4287 = vshrl.u32 %v3999, 16
        %v4289 = vrot.slane %v4287, 3
        %v4290 = vshll.u32 %v3999, 16
        %v4292 = vrot.slane %v4290, 4
        %v4293 = vor.u32 %v4289, %v4292
        %v4294 = vshrl.u32 %v4001, 16
        %v4296 = vrot.slane %v4294, 3
        %v4297 = vshll.u32 %v4001, 16
        %v4299 = vrot.slane %v4297, 4
        %v4300 = vor.u32 %v4296, %v4299
        %v4301 = vsel %vm4286, %v4293, %v4300
        %v4302 = vshrl.u32 %v4233, 16
        %v4304 = vrot.slane %v4302, 3
        %v4305 = vshll.u32 %v4233, 16
        %v4307 = vrot.slane %v4305, 4
        %v4308 = vor.u32 %v4304, %v4307
        %v4309 = vshrl.u32 %v4234, 16
        %v4311 = vrot.slane %v4309, 3
        %v4312 = vshll.u32 %v4234, 16
        %v4314 = vrot.slane %v4312, 4
        %v4315 = vor.u32 %v4311, %v4314
        %v4316 = vsel %vm4286, %v4308, %v4315
        %v4318 = vshrl.u32 %v3415, 16
        %v4320 = vrot.slane %v4318, 3
        %v4321 = vshll.u32 %v3415, 16
        %v4323 = vrot.slane %v4321, 4
        %v4324 = vor.u32 %v4320, %v4323
        %v4326 = vshrl.u32 %v3417, 16
        %v4328 = vrot.slane %v4326, 3
        %v4329 = vshll.u32 %v3417, 16
        %v4331 = vrot.slane %v4329, 4
        %v4332 = vor.u32 %v4328, %v4331
        %v4333 = vsel %vm4286, %v4324, %v4332
        %v4334 = vshrl.u32 %v4003, 16
        %v4336 = vrot.slane %v4334, 3
        %v4337 = vshll.u32 %v4003, 16
        %v4339 = vrot.slane %v4337, 4
        %v4340 = vor.u32 %v4336, %v4339
        %v4341 = vshrl.u32 %v4005, 16
        %v4343 = vrot.slane %v4341, 3
        %v4344 = vshll.u32 %v4005, 16
        %v4346 = vrot.slane %v4344, 4
        %v4347 = vor.u32 %v4343, %v4346
        %v4348 = vsel %vm4286, %v4340, %v4347
        %v4349 = vshrl.u32 %v4236, 16
        %v4351 = vrot.slane %v4349, 3
        %v4352 = vshll.u32 %v4236, 16
        %v4354 = vrot.slane %v4352, 4
        %v4355 = vor.u32 %v4351, %v4354
        %v4356 = vshrl.u32 %v4237, 16
        %v4358 = vrot.slane %v4356, 3
        %v4359 = vshll.u32 %v4237, 16
        %v4361 = vrot.slane %v4359, 4
        %v4362 = vor.u32 %v4358, %v4361
        %v4363 = vsel %vm4286, %v4355, %v4362
        %v4365 = vshrl.u32 %v3418, 16
        %v4367 = vrot.slane %v4365, 3
        %v4368 = vshll.u32 %v3418, 16
        %v4370 = vrot.slane %v4368, 4
        %v4371 = vor.u32 %v4367, %v4370
        %v4373 = vshrl.u32 %v3420, 16
        %v4375 = vrot.slane %v4373, 3
        %v4376 = vshll.u32 %v3420, 16
        %v4378 = vrot.slane %v4376, 4
        %v4379 = vor.u32 %v4375, %v4378
        %v4380 = vsel %vm4286, %v4371, %v4379
        %v4381 = vshrl.u32 %v4007, 16
        %v4383 = vrot.slane %v4381, 3
        %v4384 = vshll.u32 %v4007, 16
        %v4386 = vrot.slane %v4384, 4
        %v4387 = vor.u32 %v4383, %v4386
        %v4388 = vshrl.u32 %v4009, 16
        %v4390 = vrot.slane %v4388, 3
        %v4391 = vshll.u32 %v4009, 16
        %v4393 = vrot.slane %v4391, 4
        %v4394 = vor.u32 %v4390, %v4393
        %v4395 = vsel %vm4286, %v4387, %v4394
        %v4396 = vshrl.u32 %v4239, 16
        %v4398 = vrot.slane %v4396, 3
        %v4399 = vshll.u32 %v4239, 16
        %v4401 = vrot.slane %v4399, 4
        %v4402 = vor.u32 %v4398, %v4401
        %v4403 = vshrl.u32 %v4240, 16
        %v4405 = vrot.slane %v4403, 3
        %v4406 = vshll.u32 %v4240, 16
        %v4408 = vrot.slane %v4406, 4
        %v4409 = vor.u32 %v4405, %v4408
        %v4410 = vsel %vm4286, %v4402, %v4409
        %v4412 = vshrl.u32 %v3421, 16
        %v4414 = vrot.slane %v4412, 3
        %v4415 = vshll.u32 %v3421, 16
        %v4417 = vrot.slane %v4415, 4
        %v4418 = vor.u32 %v4414, %v4417
        %v4420 = vshrl.u32 %v3423, 16
        %v4422 = vrot.slane %v4420, 3
        %v4423 = vshll.u32 %v3423, 16
        %v4425 = vrot.slane %v4423, 4
        %v4426 = vor.u32 %v4422, %v4425
        %v4427 = vsel %vm4286, %v4418, %v4426
        %v4428 = vshrl.u32 %v4011, 16
        %v4430 = vrot.slane %v4428, 3
        %v4431 = vshll.u32 %v4011, 16
        %v4433 = vrot.slane %v4431, 4
        %v4434 = vor.u32 %v4430, %v4433
        %v4435 = vshrl.u32 %v4013, 16
        %v4437 = vrot.slane %v4435, 3
        %v4438 = vshll.u32 %v4013, 16
        %v4440 = vrot.slane %v4438, 4
        %v4441 = vor.u32 %v4437, %v4440
        %v4442 = vsel %vm4286, %v4434, %v4441
        %v4443 = vshrl.u32 %v4242, 16
        %v4445 = vrot.slane %v4443, 3
        %v4446 = vshll.u32 %v4242, 16
        %v4448 = vrot.slane %v4446, 4
        %v4449 = vor.u32 %v4445, %v4448
        %v4450 = vshrl.u32 %v4243, 16
        %v4452 = vrot.slane %v4450, 3
        %v4453 = vshll.u32 %v4243, 16
        %v4455 = vrot.slane %v4453, 4
        %v4456 = vor.u32 %v4452, %v4455
        %v4457 = vsel %vm4286, %v4449, %v4456
        %v4459 = vshrl.u32 %v3424, 16
        %v4461 = vrot.slane %v4459, 3
        %v4462 = vshll.u32 %v3424, 16
        %v4464 = vrot.slane %v4462, 4
        %v4465 = vor.u32 %v4461, %v4464
        %v4467 = vshrl.u32 %v3426, 16
        %v4469 = vrot.slane %v4467, 3
        %v4470 = vshll.u32 %v3426, 16
        %v4472 = vrot.slane %v4470, 4
        %v4473 = vor.u32 %v4469, %v4472
        %v4474 = vsel %vm4286, %v4465, %v4473
        %v4475 = vshrl.u32 %v4015, 16
        %v4477 = vrot.slane %v4475, 3
        %v4478 = vshll.u32 %v4015, 16
        %v4480 = vrot.slane %v4478, 4
        %v4481 = vor.u32 %v4477, %v4480
        %v4482 = vshrl.u32 %v4017, 16
        %v4484 = vrot.slane %v4482, 3
        %v4485 = vshll.u32 %v4017, 16
        %v4487 = vrot.slane %v4485, 4
        %v4488 = vor.u32 %v4484, %v4487
        %v4489 = vsel %vm4286, %v4481, %v4488
        %v4490 = vshrl.u32 %v4245, 16
        %v4492 = vrot.slane %v4490, 3
        %v4493 = vshll.u32 %v4245, 16
        %v4495 = vrot.slane %v4493, 4
        %v4496 = vor.u32 %v4492, %v4495
        %v4497 = vshrl.u32 %v4246, 16
        %v4499 = vrot.slane %v4497, 3
        %v4500 = vshll.u32 %v4246, 16
        %v4502 = vrot.slane %v4500, 4
        %v4503 = vor.u32 %v4499, %v4502
        %v4504 = vsel %vm4286, %v4496, %v4503
        %v4506 = vshrl.u32 %v3427, 16
        %v4508 = vrot.slane %v4506, 3
        %v4509 = vshll.u32 %v3427, 16
        %v4511 = vrot.slane %v4509, 4
        %v4512 = vor.u32 %v4508, %v4511
        %v4514 = vshrl.u32 %v3429, 16
        %v4516 = vrot.slane %v4514, 3
        %v4517 = vshll.u32 %v3429, 16
        %v4519 = vrot.slane %v4517, 4
        %v4520 = vor.u32 %v4516, %v4519
        %v4521 = vsel %vm4286, %v4512, %v4520
        %v4522 = vshrl.u32 %v4019, 16
        %v4524 = vrot.slane %v4522, 3
        %v4525 = vshll.u32 %v4019, 16
        %v4527 = vrot.slane %v4525, 4
        %v4528 = vor.u32 %v4524, %v4527
        %v4529 = vshrl.u32 %v4021, 16
        %v4531 = vrot.slane %v4529, 3
        %v4532 = vshll.u32 %v4021, 16
        %v4534 = vrot.slane %v4532, 4
        %v4535 = vor.u32 %v4531, %v4534
        %v4536 = vsel %vm4286, %v4528, %v4535
        %v4537 = vshrl.u32 %v4248, 16
        %v4539 = vrot.slane %v4537, 3
        %v4540 = vshll.u32 %v4248, 16
        %v4542 = vrot.slane %v4540, 4
        %v4543 = vor.u32 %v4539, %v4542
        %v4544 = vshrl.u32 %v4249, 16
        %v4546 = vrot.slane %v4544, 3
        %v4547 = vshll.u32 %v4249, 16
        %v4549 = vrot.slane %v4547, 4
        %v4550 = vor.u32 %v4546, %v4549
        %v4551 = vsel %vm4286, %v4543, %v4550
        %v4553 = vshrl.u32 %v3430, 16
        %v4555 = vrot.slane %v4553, 3
        %v4556 = vshll.u32 %v3430, 16
        %v4558 = vrot.slane %v4556, 4
        %v4559 = vor.u32 %v4555, %v4558
        %v4561 = vshrl.u32 %v3432, 16
        %v4563 = vrot.slane %v4561, 3
        %v4564 = vshll.u32 %v3432, 16
        %v4566 = vrot.slane %v4564, 4
        %v4567 = vor.u32 %v4563, %v4566
        %v4568 = vsel %vm4286, %v4559, %v4567
        %v4569 = vshrl.u32 %v4023, 16
        %v4571 = vrot.slane %v4569, 3
        %v4572 = vshll.u32 %v4023, 16
        %v4574 = vrot.slane %v4572, 4
        %v4575 = vor.u32 %v4571, %v4574
        %v4576 = vshrl.u32 %v4025, 16
        %v4578 = vrot.slane %v4576, 3
        %v4579 = vshll.u32 %v4025, 16
        %v4581 = vrot.slane %v4579, 4
        %v4582 = vor.u32 %v4578, %v4581
        %v4583 = vsel %vm4286, %v4575, %v4582
        %v4584 = vshrl.u32 %v4251, 16
        %v4586 = vrot.slane %v4584, 3
        %v4587 = vshll.u32 %v4251, 16
        %v4589 = vrot.slane %v4587, 4
        %v4590 = vor.u32 %v4586, %v4589
        %v4591 = vshrl.u32 %v4252, 16
        %v4593 = vrot.slane %v4591, 3
        %v4594 = vshll.u32 %v4252, 16
        %v4596 = vrot.slane %v4594, 4
        %v4597 = vor.u32 %v4593, %v4596
        %v4598 = vsel %vm4286, %v4590, %v4597
        %v4600 = vshrl.u32 %v3433, 16
        %v4602 = vrot.slane %v4600, 3
        %v4603 = vshll.u32 %v3433, 16
        %v4605 = vrot.slane %v4603, 4
        %v4606 = vor.u32 %v4602, %v4605
        %v4608 = vshrl.u32 %v3435, 16
        %v4610 = vrot.slane %v4608, 3
        %v4611 = vshll.u32 %v3435, 16
        %v4613 = vrot.slane %v4611, 4
        %v4614 = vor.u32 %v4610, %v4613
        %v4615 = vsel %vm4286, %v4606, %v4614
        %v4616 = vshrl.u32 %v4027, 16
        %v4618 = vrot.slane %v4616, 3
        %v4619 = vshll.u32 %v4027, 16
        %v4621 = vrot.slane %v4619, 4
        %v4622 = vor.u32 %v4618, %v4621
        %v4623 = vshrl.u32 %v4029, 16
        %v4625 = vrot.slane %v4623, 3
        %v4626 = vshll.u32 %v4029, 16
        %v4628 = vrot.slane %v4626, 4
        %v4629 = vor.u32 %v4625, %v4628
        %v4630 = vsel %vm4286, %v4622, %v4629
        %v4631 = vshrl.u32 %v4254, 16
        %v4633 = vrot.slane %v4631, 3
        %v4634 = vshll.u32 %v4254, 16
        %v4636 = vrot.slane %v4634, 4
        %v4637 = vor.u32 %v4633, %v4636
        %v4638 = vshrl.u32 %v4255, 16
        %v4640 = vrot.slane %v4638, 3
        %v4641 = vshll.u32 %v4255, 16
        %v4643 = vrot.slane %v4641, 4
        %v4644 = vor.u32 %v4640, %v4643
        %v4645 = vsel %vm4286, %v4637, %v4644
        %v4647 = vshrl.u32 %v3436, 16
        %v4649 = vrot.slane %v4647, 3
        %v4650 = vshll.u32 %v3436, 16
        %v4652 = vrot.slane %v4650, 4
        %v4653 = vor.u32 %v4649, %v4652
        %v4655 = vshrl.u32 %v3438, 16
        %v4657 = vrot.slane %v4655, 3
        %v4658 = vshll.u32 %v3438, 16
        %v4660 = vrot.slane %v4658, 4
        %v4661 = vor.u32 %v4657, %v4660
        %v4662 = vsel %vm4286, %v4653, %v4661
        %v4663 = vshrl.u32 %v4031, 16
        %v4665 = vrot.slane %v4663, 3
        %v4666 = vshll.u32 %v4031, 16
        %v4668 = vrot.slane %v4666, 4
        %v4669 = vor.u32 %v4665, %v4668
        %v4670 = vshrl.u32 %v4033, 16
        %v4672 = vrot.slane %v4670, 3
        %v4673 = vshll.u32 %v4033, 16
        %v4675 = vrot.slane %v4673, 4
        %v4676 = vor.u32 %v4672, %v4675
        %v4677 = vsel %vm4286, %v4669, %v4676
        %v4678 = vshrl.u32 %v4257, 16
        %v4680 = vrot.slane %v4678, 3
        %v4681 = vshll.u32 %v4257, 16
        %v4683 = vrot.slane %v4681, 4
        %v4684 = vor.u32 %v4680, %v4683
        %v4685 = vshrl.u32 %v4258, 16
        %v4687 = vrot.slane %v4685, 3
        %v4688 = vshll.u32 %v4258, 16
        %v4690 = vrot.slane %v4688, 4
        %v4691 = vor.u32 %v4687, %v4690
        %v4692 = vsel %vm4286, %v4684, %v4691
        %v4694 = vshrl.u32 %v3439, 16
        %v4696 = vrot.slane %v4694, 3
        %v4697 = vshll.u32 %v3439, 16
        %v4699 = vrot.slane %v4697, 4
        %v4700 = vor.u32 %v4696, %v4699
        %v4702 = vshrl.u32 %v3441, 16
        %v4704 = vrot.slane %v4702, 3
        %v4705 = vshll.u32 %v3441, 16
        %v4707 = vrot.slane %v4705, 4
        %v4708 = vor.u32 %v4704, %v4707
        %v4709 = vsel %vm4286, %v4700, %v4708
        %v4710 = vshrl.u32 %v4035, 16
        %v4712 = vrot.slane %v4710, 3
        %v4713 = vshll.u32 %v4035, 16
        %v4715 = vrot.slane %v4713, 4
        %v4716 = vor.u32 %v4712, %v4715
        %v4717 = vshrl.u32 %v4037, 16
        %v4719 = vrot.slane %v4717, 3
        %v4720 = vshll.u32 %v4037, 16
        %v4722 = vrot.slane %v4720, 4
        %v4723 = vor.u32 %v4719, %v4722
        %v4724 = vsel %vm4286, %v4716, %v4723
        %v4725 = vshrl.u32 %v4260, 16
        %v4727 = vrot.slane %v4725, 3
        %v4728 = vshll.u32 %v4260, 16
        %v4730 = vrot.slane %v4728, 4
        %v4731 = vor.u32 %v4727, %v4730
        %v4732 = vshrl.u32 %v4261, 16
        %v4734 = vrot.slane %v4732, 3
        %v4735 = vshll.u32 %v4261, 16
        %v4737 = vrot.slane %v4735, 4
        %v4738 = vor.u32 %v4734, %v4737
        %v4739 = vsel %vm4286, %v4731, %v4738
        %v4741 = vshrl.u32 %v3442, 16
        %v4743 = vrot.slane %v4741, 3
        %v4744 = vshll.u32 %v3442, 16
        %v4746 = vrot.slane %v4744, 4
        %v4747 = vor.u32 %v4743, %v4746
        %v4749 = vshrl.u32 %v3444, 16
        %v4751 = vrot.slane %v4749, 3
        %v4752 = vshll.u32 %v3444, 16
        %v4754 = vrot.slane %v4752, 4
        %v4755 = vor.u32 %v4751, %v4754
        %v4756 = vsel %vm4286, %v4747, %v4755
        %v4757 = vshrl.u32 %v4039, 16
        %v4759 = vrot.slane %v4757, 3
        %v4760 = vshll.u32 %v4039, 16
        %v4762 = vrot.slane %v4760, 4
        %v4763 = vor.u32 %v4759, %v4762
        %v4764 = vshrl.u32 %v4041, 16
        %v4766 = vrot.slane %v4764, 3
        %v4767 = vshll.u32 %v4041, 16
        %v4769 = vrot.slane %v4767, 4
        %v4770 = vor.u32 %v4766, %v4769
        %v4771 = vsel %vm4286, %v4763, %v4770
        %v4772 = vshrl.u32 %v4263, 16
        %v4774 = vrot.slane %v4772, 3
        %v4775 = vshll.u32 %v4263, 16
        %v4777 = vrot.slane %v4775, 4
        %v4778 = vor.u32 %v4774, %v4777
        %v4779 = vshrl.u32 %v4264, 16
        %v4781 = vrot.slane %v4779, 3
        %v4782 = vshll.u32 %v4264, 16
        %v4784 = vrot.slane %v4782, 4
        %v4785 = vor.u32 %v4781, %v4784
        %v4786 = vsel %vm4286, %v4778, %v4785
        %v4788 = vshrl.u32 %v3445, 16
        %v4790 = vrot.slane %v4788, 3
        %v4791 = vshll.u32 %v3445, 16
        %v4793 = vrot.slane %v4791, 4
        %v4794 = vor.u32 %v4790, %v4793
        %v4796 = vshrl.u32 %v3447, 16
        %v4798 = vrot.slane %v4796, 3
        %v4799 = vshll.u32 %v3447, 16
        %v4801 = vrot.slane %v4799, 4
        %v4802 = vor.u32 %v4798, %v4801
        %v4803 = vsel %vm4286, %v4794, %v4802
        %v4804 = vshrl.u32 %v4043, 16
        %v4806 = vrot.slane %v4804, 3
        %v4807 = vshll.u32 %v4043, 16
        %v4809 = vrot.slane %v4807, 4
        %v4810 = vor.u32 %v4806, %v4809
        %v4811 = vshrl.u32 %v4045, 16
        %v4813 = vrot.slane %v4811, 3
        %v4814 = vshll.u32 %v4045, 16
        %v4816 = vrot.slane %v4814, 4
        %v4817 = vor.u32 %v4813, %v4816
        %v4818 = vsel %vm4286, %v4810, %v4817
        %v4819 = vshrl.u32 %v4266, 16
        %v4821 = vrot.slane %v4819, 3
        %v4822 = vshll.u32 %v4266, 16
        %v4824 = vrot.slane %v4822, 4
        %v4825 = vor.u32 %v4821, %v4824
        %v4826 = vshrl.u32 %v4267, 16
        %v4828 = vrot.slane %v4826, 3
        %v4829 = vshll.u32 %v4267, 16
        %v4831 = vrot.slane %v4829, 4
        %v4832 = vor.u32 %v4828, %v4831
        %v4833 = vsel %vm4286, %v4825, %v4832
        %v4835 = vshrl.u32 %v3448, 16
        %v4837 = vrot.slane %v4835, 3
        %v4838 = vshll.u32 %v3448, 16
        %v4840 = vrot.slane %v4838, 4
        %v4841 = vor.u32 %v4837, %v4840
        %v4843 = vshrl.u32 %v3450, 16
        %v4845 = vrot.slane %v4843, 3
        %v4846 = vshll.u32 %v3450, 16
        %v4848 = vrot.slane %v4846, 4
        %v4849 = vor.u32 %v4845, %v4848
        %v4850 = vsel %vm4286, %v4841, %v4849
        %v4851 = vshrl.u32 %v4047, 16
        %v4853 = vrot.slane %v4851, 3
        %v4854 = vshll.u32 %v4047, 16
        %v4856 = vrot.slane %v4854, 4
        %v4857 = vor.u32 %v4853, %v4856
        %v4858 = vshrl.u32 %v4049, 16
        %v4860 = vrot.slane %v4858, 3
        %v4861 = vshll.u32 %v4049, 16
        %v4863 = vrot.slane %v4861, 4
        %v4864 = vor.u32 %v4860, %v4863
        %v4865 = vsel %vm4286, %v4857, %v4864
        %v4866 = vshrl.u32 %v4269, 16
        %v4868 = vrot.slane %v4866, 3
        %v4869 = vshll.u32 %v4269, 16
        %v4871 = vrot.slane %v4869, 4
        %v4872 = vor.u32 %v4868, %v4871
        %v4873 = vshrl.u32 %v4270, 16
        %v4875 = vrot.slane %v4873, 3
        %v4876 = vshll.u32 %v4270, 16
        %v4878 = vrot.slane %v4876, 4
        %v4879 = vor.u32 %v4875, %v4878
        %v4880 = vsel %vm4286, %v4872, %v4879
        %v4882 = vshrl.u32 %v3451, 16
        %v4884 = vrot.slane %v4882, 3
        %v4885 = vshll.u32 %v3451, 16
        %v4887 = vrot.slane %v4885, 4
        %v4888 = vor.u32 %v4884, %v4887
        %v4890 = vshrl.u32 %v3453, 16
        %v4892 = vrot.slane %v4890, 3
        %v4893 = vshll.u32 %v3453, 16
        %v4895 = vrot.slane %v4893, 4
        %v4896 = vor.u32 %v4892, %v4895
        %v4897 = vsel %vm4286, %v4888, %v4896
        %v4898 = vshrl.u32 %v4051, 16
        %v4900 = vrot.slane %v4898, 3
        %v4901 = vshll.u32 %v4051, 16
        %v4903 = vrot.slane %v4901, 4
        %v4904 = vor.u32 %v4900, %v4903
        %v4905 = vshrl.u32 %v4053, 16
        %v4907 = vrot.slane %v4905, 3
        %v4908 = vshll.u32 %v4053, 16
        %v4910 = vrot.slane %v4908, 4
        %v4911 = vor.u32 %v4907, %v4910
        %v4912 = vsel %vm4286, %v4904, %v4911
        %v4913 = vshrl.u32 %v4272, 16
        %v4915 = vrot.slane %v4913, 3
        %v4916 = vshll.u32 %v4272, 16
        %v4918 = vrot.slane %v4916, 4
        %v4919 = vor.u32 %v4915, %v4918
        %v4920 = vshrl.u32 %v4273, 16
        %v4922 = vrot.slane %v4920, 3
        %v4923 = vshll.u32 %v4273, 16
        %v4925 = vrot.slane %v4923, 4
        %v4926 = vor.u32 %v4922, %v4925
        %v4927 = vsel %vm4286, %v4919, %v4926
        %v4929 = vshrl.u32 %v3454, 16
        %v4931 = vrot.slane %v4929, 3
        %v4932 = vshll.u32 %v3454, 16
        %v4934 = vrot.slane %v4932, 4
        %v4935 = vor.u32 %v4931, %v4934
        %v4937 = vshrl.u32 %v3456, 16
        %v4939 = vrot.slane %v4937, 3
        %v4940 = vshll.u32 %v3456, 16
        %v4942 = vrot.slane %v4940, 4
        %v4943 = vor.u32 %v4939, %v4942
        %v4944 = vsel %vm4286, %v4935, %v4943
        %v4945 = vshrl.u32 %v4055, 16
        %v4947 = vrot.slane %v4945, 3
        %v4948 = vshll.u32 %v4055, 16
        %v4950 = vrot.slane %v4948, 4
        %v4951 = vor.u32 %v4947, %v4950
        %v4952 = vshrl.u32 %v4057, 16
        %v4954 = vrot.slane %v4952, 3
        %v4955 = vshll.u32 %v4057, 16
        %v4957 = vrot.slane %v4955, 4
        %v4958 = vor.u32 %v4954, %v4957
        %v4959 = vsel %vm4286, %v4951, %v4958
        %v4960 = vshrl.u32 %v4275, 16
        %v4962 = vrot.slane %v4960, 3
        %v4963 = vshll.u32 %v4275, 16
        %v4965 = vrot.slane %v4963, 4
        %v4966 = vor.u32 %v4962, %v4965
        %v4967 = vshrl.u32 %v4276, 16
        %v4969 = vrot.slane %v4967, 3
        %v4970 = vshll.u32 %v4276, 16
        %v4972 = vrot.slane %v4970, 4
        %v4973 = vor.u32 %v4969, %v4972
        %v4974 = vsel %vm4286, %v4966, %v4973
        %v4976 = vshrl.u32 %v3457, 16
        %v4978 = vrot.slane %v4976, 3
        %v4979 = vshll.u32 %v3457, 16
        %v4981 = vrot.slane %v4979, 4
        %v4982 = vor.u32 %v4978, %v4981
        %v4984 = vshrl.u32 %v3459, 16
        %v4986 = vrot.slane %v4984, 3
        %v4987 = vshll.u32 %v3459, 16
        %v4989 = vrot.slane %v4987, 4
        %v4990 = vor.u32 %v4986, %v4989
        %v4991 = vsel %vm4286, %v4982, %v4990
        %v4992 = vshrl.u32 %v4059, 16
        %v4994 = vrot.slane %v4992, 3
        %v4995 = vshll.u32 %v4059, 16
        %v4997 = vrot.slane %v4995, 4
        %v4998 = vor.u32 %v4994, %v4997
        %v4999 = vshrl.u32 %v4061, 16
        %v5001 = vrot.slane %v4999, 3
        %v5002 = vshll.u32 %v4061, 16
        %v5004 = vrot.slane %v5002, 4
        %v5005 = vor.u32 %v5001, %v5004
        %v5006 = vsel %vm4286, %v4998, %v5005
        %v5007 = vshrl.u32 %v4278, 16
        %v5009 = vrot.slane %v5007, 3
        %v5010 = vshll.u32 %v4278, 16
        %v5012 = vrot.slane %v5010, 4
        %v5013 = vor.u32 %v5009, %v5012
        %v5014 = vshrl.u32 %v4279, 16
        %v5016 = vrot.slane %v5014, 3
        %v5017 = vshll.u32 %v4279, 16
        %v5019 = vrot.slane %v5017, 4
        %v5020 = vor.u32 %v5016, %v5019
        %v5021 = vsel %vm4286, %v5013, %v5020
        %v5023 = vshrl.u32 %v3460, 16
        %v5025 = vrot.slane %v5023, 3
        %v5026 = vshll.u32 %v3460, 16
        %v5028 = vrot.slane %v5026, 4
        %v5029 = vor.u32 %v5025, %v5028
        %v5031 = vshrl.u32 %v3462, 16
        %v5033 = vrot.slane %v5031, 3
        %v5034 = vshll.u32 %v3462, 16
        %v5036 = vrot.slane %v5034, 4
        %v5037 = vor.u32 %v5033, %v5036
        %v5038 = vsel %vm4286, %v5029, %v5037
        %v5039 = vshrl.u32 %v4063, 16
        %v5041 = vrot.slane %v5039, 3
        %v5042 = vshll.u32 %v4063, 16
        %v5044 = vrot.slane %v5042, 4
        %v5045 = vor.u32 %v5041, %v5044
        %v5046 = vshrl.u32 %v4065, 16
        %v5048 = vrot.slane %v5046, 3
        %v5049 = vshll.u32 %v4065, 16
        %v5051 = vrot.slane %v5049, 4
        %v5052 = vor.u32 %v5048, %v5051
        %v5053 = vsel %vm4286, %v5045, %v5052
        %v5054 = vshrl.u32 %v4281, 16
        %v5056 = vrot.slane %v5054, 3
        %v5057 = vshll.u32 %v4281, 16
        %v5059 = vrot.slane %v5057, 4
        %v5060 = vor.u32 %v5056, %v5059
        %v5061 = vshrl.u32 %v4282, 16
        %v5063 = vrot.slane %v5061, 3
        %v5064 = vshll.u32 %v4282, 16
        %v5066 = vrot.slane %v5064, 4
        %v5067 = vor.u32 %v5063, %v5066
        %v5068 = vsel %vm4286, %v5060, %v5067
        %v5070 = vshrl.u32 %v3627, 16
        %v5072 = vrot.slane %v5070, 3
        %v5073 = vshll.u32 %v3627, 16
        %v5075 = vrot.slane %v5073, 4
        %v5076 = vor.u32 %v5072, %v5075
        %v5078 = vshrl.u32 %v3629, 16
        %v5080 = vrot.slane %v5078, 3
        %v5081 = vshll.u32 %v3629, 16
        %v5083 = vrot.slane %v5081, 4
        %v5084 = vor.u32 %v5080, %v5083
        %v5085 = vsel %vm4286, %v5076, %v5084
        %v5086 = vshrl.u32 %v4067, 16
        %v5088 = vrot.slane %v5086, 3
        %v5089 = vshll.u32 %v4067, 16
        %v5091 = vrot.slane %v5089, 4
        %v5092 = vor.u32 %v5088, %v5091
        %v5093 = vshrl.u32 %v4069, 16
        %v5095 = vrot.slane %v5093, 3
        %v5096 = vshll.u32 %v4069, 16
        %v5098 = vrot.slane %v5096, 4
        %v5099 = vor.u32 %v5095, %v5098
        %v5100 = vsel %vm4286, %v5092, %v5099
        %v5101 = vshrl.u32 %v4284, 16
        %v5103 = vrot.slane %v5101, 3
        %v5104 = vshll.u32 %v4284, 16
        %v5106 = vrot.slane %v5104, 4
        %v5107 = vor.u32 %v5103, %v5106
        %v5108 = vshrl.u32 %v4285, 16
        %v5110 = vrot.slane %v5108, 3
        %v5111 = vshll.u32 %v4285, 16
        %v5113 = vrot.slane %v5111, 4
        %v5114 = vor.u32 %v5110, %v5113
        %v5115 = vsel %vm4286, %v5107, %v5114
        %v5117 = vshrl.u32 %v3830, 16
        %v5119 = vrot.slane %v5117, 3
        %v5120 = vshll.u32 %v3830, 16
        %v5122 = vrot.slane %v5120, 4
        %v5123 = vor.u32 %v5119, %v5122
        %v5125 = vshrl.u32 %v3832, 16
        %v5127 = vrot.slane %v5125, 3
        %v5128 = vshll.u32 %v3832, 16
        %v5130 = vrot.slane %v5128, 4
        %v5131 = vor.u32 %v5127, %v5130
        %v5132 = vsel %vm4286, %v5123, %v5131
        %v5169 = vld [vmem:[%s3] sm:$0xf]
        %v5170 = vld [vmem:[%s3 + $0x4] sm:$0xf]
        %v5171 = vld [vmem:[%s3 + $0x8] sm:$0xf]
        %v5172 = vld [vmem:[%s3 + $0xc] sm:$0xf]
        %v5173 = vld [vmem:[%s3 + $0x10] sm:$0xf]
        %v5174 = vld [vmem:[%s3 + $0x14] sm:$0xf]
        %v5175 = vld [vmem:[%s3 + $0x18] sm:$0xf]
        %v5176 = vld [vmem:[%s3 + $0x1c] sm:$0xf]
        %v5177 = vld [vmem:[%s3 + $0x20] sm:$0xf]
        %v5178 = vld [vmem:[%s3 + $0x24] sm:$0xf]
        %v5179 = vld [vmem:[%s3 + $0x28] sm:$0xf]
        %v5180 = vld [vmem:[%s3 + $0x2c] sm:$0xf]
        %v5181 = vld [vmem:[%s3 + $0x30] sm:$0xf]
        %v5182 = vld [vmem:[%s3 + $0x34] sm:$0xf]
        %v5183 = vld [vmem:[%s3 + $0x38] sm:$0xf]
        %v5184 = vld [vmem:[%s3 + $0x3c] sm:$0xf]
        %v5185 = vld [vmem:[%s3 + $0x40] sm:$0xf]
        %v5186 = vld [vmem:[%s3 + $0x44] sm:$0xf]
        %v5187 = vld [vmem:[%s3 + $0x48] sm:$0xf]
        %v5188 = vld [vmem:[%s3 + $0x4c] sm:$0xf]
        %v5189 = vld [vmem:[%s3 + $0x50] sm:$0xf]
        %v5190 = vld [vmem:[%s3 + $0x54] sm:$0xf]
        %v5191 = vld [vmem:[%s3 + $0x58] sm:$0xf]
        %v5192 = vld [vmem:[%s3 + $0x5c] sm:$0xf]
        %v5193 = vld [vmem:[%s3 + $0x60] sm:$0xf]
        %v5194 = vld [vmem:[%s3 + $0x64] sm:$0xf]
        %v5195 = vld [vmem:[%s3 + $0x68] sm:$0xf]
        %v5196 = vld [vmem:[%s3 + $0x6c] sm:$0xf]
        %v5197 = vld [vmem:[%s3 + $0x70] sm:$0xf]
        %v5198 = vld [vmem:[%s3 + $0x74] sm:$0xf]
        %v5199 = vld [vmem:[%s3 + $0x78] sm:$0xf]
        %v5200 = vld [vmem:[%s3 + $0x7c] sm:$0xf]
        %v5201 = vld [vmem:[%s3 + $0x80] sm:$0xf]
        %v5202 = vld [vmem:[%s3 + $0x84] sm:$0xf]
        %v5203 = vld [vmem:[%s3 + $0x88] sm:$0xf]
        %v5204 = vld [vmem:[%s3 + $0x8c] sm:$0xf]
        %v5205 = vld [vmem:[%s4] sm:$0x1]
        %v5207 = vperm.slane %v5205, 0
        %v5245 = vunpack.c.l.b16 %v5169
        %v5246 = vunpack.c.l.b16 %v5170
        %v5247 = vunpack.c.l.b16 %v5171
        %v5248 = vunpack.c.l.b16 %v5172
        %v5249 = vunpack.c.l.b16 %v5173
        %v5250 = vunpack.c.l.b16 %v5174
        %v5251 = vunpack.c.l.b16 %v5175
        %v5252 = vunpack.c.l.b16 %v5176
        %v5253 = vunpack.c.l.b16 %v5177
        %v5254 = vunpack.c.l.b16 %v5178
        %v5255 = vunpack.c.l.b16 %v5179
        %v5256 = vunpack.c.l.b16 %v5180
        %v5257 = vunpack.c.l.b16 %v5181
        %v5258 = vunpack.c.l.b16 %v5182
        %v5259 = vunpack.c.l.b16 %v5183
        %v5260 = vunpack.c.l.b16 %v5184
        %v5261 = vunpack.c.l.b16 %v5185
        %v5262 = vunpack.c.l.b16 %v5186
        %v5263 = vunpack.c.l.b16 %v5187
        %v5264 = vunpack.c.l.b16 %v5188
        %v5265 = vunpack.c.l.b16 %v5189
        %v5266 = vunpack.c.l.b16 %v5190
        %v5267 = vunpack.c.l.b16 %v5191
        %v5268 = vunpack.c.l.b16 %v5192
        %v5269 = vunpack.c.l.b16 %v5193
        %v5270 = vunpack.c.l.b16 %v5194
        %v5271 = vunpack.c.l.b16 %v5195
        %v5272 = vunpack.c.l.b16 %v5196
        %v5273 = vunpack.c.l.b16 %v5197
        %v5274 = vunpack.c.l.b16 %v5198
        %v5275 = vunpack.c.l.b16 %v5199
        %v5276 = vunpack.c.l.b16 %v5200
        %v5277 = vunpack.c.l.b16 %v5201
        %v5278 = vunpack.c.l.b16 %v5202
        %v5279 = vunpack.c.l.b16 %v5203
        %v5280 = vunpack.c.l.b16 %v5204
        %v5281 = vpack.c.b16 %v5246, %v5245
        %v5282 = vpack.c.b16 %v5248, %v5247
        %v5283 = vpack.c.b16 %v5250, %v5249
        %v5284 = vpack.c.b16 %v5252, %v5251
        %v5285 = vpack.c.b16 %v5254, %v5253
        %v5286 = vpack.c.b16 %v5256, %v5255
        %v5287 = vpack.c.b16 %v5258, %v5257
        %v5288 = vpack.c.b16 %v5260, %v5259
        %v5289 = vpack.c.b16 %v5262, %v5261
        %v5290 = vpack.c.b16 %v5264, %v5263
        %v5291 = vpack.c.b16 %v5266, %v5265
        %v5292 = vpack.c.b16 %v5268, %v5267
        %v5293 = vpack.c.b16 %v5270, %v5269
        %v5294 = vpack.c.b16 %v5272, %v5271
        %v5295 = vpack.c.b16 %v5274, %v5273
        %v5296 = vpack.c.b16 %v5276, %v5275
        %v5297 = vpack.c.b16 %v5278, %v5277
        %v5298 = vpack.c.b16 %v5280, %v5279
        %v5318 = vsel %vm3833, %v4333, 0
        %v5321 = vsel %vm3833, %v4380, 0
        %v5324 = vsel %vm3833, %v4427, 0
        %v5327 = vsel %vm3833, %v4474, 0
        %v5330 = vsel %vm3833, %v4521, 0
        %v5333 = vsel %vm3833, %v4568, 0
        %v5336 = vsel %vm3833, %v4615, 0
        %v5339 = vsel %vm3833, %v4662, 0
        %v5342 = vsel %vm3833, %v4709, 0
        %v5345 = vsel %vm3833, %v4756, 0
        %v5348 = vsel %vm3833, %v4803, 0
        %v5351 = vsel %vm3833, %v4850, 0
        %v5354 = vsel %vm3833, %v4897, 0
        %v5357 = vsel %vm3833, %v4944, 0
        %v5360 = vsel %vm3833, %v4991, 0
        %v5363 = vsel %vm3833, %v5038, 0
        %v5366 = vsel %vm3833, %v5085, 0
        %v5369 = vsel %vm3833, %v5132, 0
        %5371 = vmatpush.bf16.msra.mxu0 %v5288
        %5372 = vmatpush.bf16.msra.mxu0 %v5287
        %5373 = vmatpush.bf16.msra.mxu0 %v5286
        %5374 = vmatpush.bf16.msra.mxu0 %v5285
        %5375 = vmatpush.bf16.msra.mxu0 %v5284
        %5376 = vmatpush.bf16.msra.mxu0 %v5283
        %5377 = vmatpush.bf16.msra.mxu0 %v5282
        %5378 = vmatpush.bf16.msra.mxu0 %v5281
        %5379 = vmatmul.bf16.gmra.mxu0 %v4301
        %v5380 = vpop.f32.mrf.mxu0
        %v5381 = vadd.f32 %v5207, %v5380
        %v5382 = vpop.f32.mrf.mxu0
        %v5383 = vadd.f32 %v5207, %v5382
        %5384 = vmatmul.bf16.gmra.mxu0 %v4348
        %v5385 = vpop.f32.mrf.mxu0
        %v5386 = vadd.f32 %v5207, %v5385
        %v5387 = vpop.f32.mrf.mxu0
        %v5388 = vadd.f32 %v5207, %v5387
        %5389 = vmatmul.bf16.gmra.mxu0 %v4395
        %v5390 = vpop.f32.mrf.mxu0
        %v5391 = vadd.f32 %v5207, %v5390
        %v5392 = vpop.f32.mrf.mxu0
        %v5393 = vadd.f32 %v5207, %v5392
        %5394 = vmatmul.bf16.gmra.mxu0 %v4442
        %v5395 = vpop.f32.mrf.mxu0
        %v5396 = vadd.f32 %v5207, %v5395
        %v5397 = vpop.f32.mrf.mxu0
        %v5398 = vadd.f32 %v5207, %v5397
        %5399 = vmatmul.bf16.gmra.mxu0 %v4489
        %v5400 = vpop.f32.mrf.mxu0
        %v5401 = vadd.f32 %v5207, %v5400
        %v5402 = vpop.f32.mrf.mxu0
        %v5403 = vadd.f32 %v5207, %v5402
        %5404 = vmatmul.bf16.gmra.mxu0 %v4536
        %v5405 = vpop.f32.mrf.mxu0
        %v5406 = vadd.f32 %v5207, %v5405
        %v5407 = vpop.f32.mrf.mxu0
        %v5408 = vadd.f32 %v5207, %v5407
        %5409 = vmatmul.bf16.gmra.mxu0 %v4583
        %v5410 = vpop.f32.mrf.mxu0
        %v5411 = vadd.f32 %v5207, %v5410
        %v5412 = vpop.f32.mrf.mxu0
        %v5413 = vadd.f32 %v5207, %v5412
        %5414 = vmatmul.bf16.gmra.mxu0 %v4630
        %v5415 = vpop.f32.mrf.mxu0
        %v5416 = vadd.f32 %v5207, %v5415
        %v5417 = vpop.f32.mrf.mxu0
        %v5418 = vadd.f32 %v5207, %v5417
        %5419 = vmatmul.bf16.gmra.mxu0 %v4677
        %v5420 = vpop.f32.mrf.mxu0
        %v5421 = vadd.f32 %v5207, %v5420
        %v5422 = vpop.f32.mrf.mxu0
        %v5423 = vadd.f32 %v5207, %v5422
        %5424 = vmatmul.bf16.gmra.mxu0 %v4724
        %v5425 = vpop.f32.mrf.mxu0
        %v5426 = vadd.f32 %v5207, %v5425
        %v5427 = vpop.f32.mrf.mxu0
        %v5428 = vadd.f32 %v5207, %v5427
        %5429 = vmatmul.bf16.gmra.mxu0 %v4771
        %v5430 = vpop.f32.mrf.mxu0
        %v5431 = vadd.f32 %v5207, %v5430
        %v5432 = vpop.f32.mrf.mxu0
        %v5433 = vadd.f32 %v5207, %v5432
        %5434 = vmatmul.bf16.gmra.mxu0 %v4818
        %v5435 = vpop.f32.mrf.mxu0
        %v5436 = vadd.f32 %v5207, %v5435
        %v5437 = vpop.f32.mrf.mxu0
        %v5438 = vadd.f32 %v5207, %v5437
        %5439 = vmatmul.bf16.gmra.mxu0 %v4865
        %v5440 = vpop.f32.mrf.mxu0
        %v5441 = vadd.f32 %v5207, %v5440
        %v5442 = vpop.f32.mrf.mxu0
        %v5443 = vadd.f32 %v5207, %v5442
        %5444 = vmatmul.bf16.gmra.mxu0 %v4912
        %v5445 = vpop.f32.mrf.mxu0
        %v5446 = vadd.f32 %v5207, %v5445
        %v5447 = vpop.f32.mrf.mxu0
        %v5448 = vadd.f32 %v5207, %v5447
        %5449 = vmatmul.bf16.gmra.mxu0 %v4959
        %v5450 = vpop.f32.mrf.mxu0
        %v5451 = vadd.f32 %v5207, %v5450
        %v5452 = vpop.f32.mrf.mxu0
        %v5453 = vadd.f32 %v5207, %v5452
        %5454 = vmatmul.bf16.gmra.mxu0 %v5006
        %v5455 = vpop.f32.mrf.mxu0
        %v5456 = vadd.f32 %v5207, %v5455
        %v5457 = vpop.f32.mrf.mxu0
        %v5458 = vadd.f32 %v5207, %v5457
        %5459 = vmatmul.bf16.gmra.mxu0 %v5053
        %v5460 = vpop.f32.mrf.mxu0
        %v5461 = vadd.f32 %v5207, %v5460
        %v5462 = vpop.f32.mrf.mxu0
        %v5463 = vadd.f32 %v5207, %v5462
        %5464 = vmatmul.bf16.gmra.mxu0 %v5100
        %v5465 = vpop.f32.mrf.mxu0
        %v5466 = vadd.f32 %v5207, %v5465
        %v5467 = vpop.f32.mrf.mxu0
        %v5468 = vadd.f32 %v5207, %v5467
        %5469 = vdwg.mxu0
        %5470 = vmatpush.bf16.msra.mxu0 %v5296
        %5471 = vmatpush.bf16.msra.mxu0 %v5295
        %5472 = vmatpush.bf16.msra.mxu0 %v5294
        %5473 = vmatpush.bf16.msra.mxu0 %v5293
        %5474 = vmatpush.bf16.msra.mxu0 %v5292
        %5475 = vmatpush.bf16.msra.mxu0 %v5291
        %5476 = vmatpush.bf16.msra.mxu0 %v5290
        %5477 = vmatpush.bf16.msra.mxu0 %v5289
        %5478 = vmatmul.bf16.gmra.mxu0 %v4316
        %v5479 = vpop.f32.mrf.mxu0
        %v5480 = vadd.f32 %v5381, %v5479
        %v5481 = vpop.f32.mrf.mxu0
        %v5482 = vadd.f32 %v5383, %v5481
        %5483 = vmatmul.bf16.gmra.mxu0 %v4363
        %v5484 = vpop.f32.mrf.mxu0
        %v5485 = vadd.f32 %v5386, %v5484
        %v5486 = vpop.f32.mrf.mxu0
        %v5487 = vadd.f32 %v5388, %v5486
        %5488 = vmatmul.bf16.gmra.mxu0 %v4410
        %v5489 = vpop.f32.mrf.mxu0
        %v5490 = vadd.f32 %v5391, %v5489
        %v5491 = vpop.f32.mrf.mxu0
        %v5492 = vadd.f32 %v5393, %v5491
        %5493 = vmatmul.bf16.gmra.mxu0 %v4457
        %v5494 = vpop.f32.mrf.mxu0
        %v5495 = vadd.f32 %v5396, %v5494
        %v5496 = vpop.f32.mrf.mxu0
        %v5497 = vadd.f32 %v5398, %v5496
        %5498 = vmatmul.bf16.gmra.mxu0 %v4504
        %v5499 = vpop.f32.mrf.mxu0
        %v5500 = vadd.f32 %v5401, %v5499
        %v5501 = vpop.f32.mrf.mxu0
        %v5502 = vadd.f32 %v5403, %v5501
        %5503 = vmatmul.bf16.gmra.mxu0 %v4551
        %v5504 = vpop.f32.mrf.mxu0
        %v5505 = vadd.f32 %v5406, %v5504
        %v5506 = vpop.f32.mrf.mxu0
        %v5507 = vadd.f32 %v5408, %v5506
        %5508 = vmatmul.bf16.gmra.mxu0 %v4598
        %v5509 = vpop.f32.mrf.mxu0
        %v5510 = vadd.f32 %v5411, %v5509
        %v5511 = vpop.f32.mrf.mxu0
        %v5512 = vadd.f32 %v5413, %v5511
        %5513 = vmatmul.bf16.gmra.mxu0 %v4645
        %v5514 = vpop.f32.mrf.mxu0
        %v5515 = vadd.f32 %v5416, %v5514
        %v5516 = vpop.f32.mrf.mxu0
        %v5517 = vadd.f32 %v5418, %v5516
        %5518 = vmatmul.bf16.gmra.mxu0 %v4692
        %v5519 = vpop.f32.mrf.mxu0
        %v5520 = vadd.f32 %v5421, %v5519
        %v5521 = vpop.f32.mrf.mxu0
        %v5522 = vadd.f32 %v5423, %v5521
        %5523 = vmatmul.bf16.gmra.mxu0 %v4739
        %v5524 = vpop.f32.mrf.mxu0
        %v5525 = vadd.f32 %v5426, %v5524
        %v5526 = vpop.f32.mrf.mxu0
        %v5527 = vadd.f32 %v5428, %v5526
        %5528 = vmatmul.bf16.gmra.mxu0 %v4786
        %v5529 = vpop.f32.mrf.mxu0
        %v5530 = vadd.f32 %v5431, %v5529
        %v5531 = vpop.f32.mrf.mxu0
        %v5532 = vadd.f32 %v5433, %v5531
        %5533 = vmatmul.bf16.gmra.mxu0 %v4833
        %v5534 = vpop.f32.mrf.mxu0
        %v5535 = vadd.f32 %v5436, %v5534
        %v5536 = vpop.f32.mrf.mxu0
        %v5537 = vadd.f32 %v5438, %v5536
        %5538 = vmatmul.bf16.gmra.mxu0 %v4880
        %v5539 = vpop.f32.mrf.mxu0
        %v5540 = vadd.f32 %v5441, %v5539
        %v5541 = vpop.f32.mrf.mxu0
        %v5542 = vadd.f32 %v5443, %v5541
        %5543 = vmatmul.bf16.gmra.mxu0 %v4927
        %v5544 = vpop.f32.mrf.mxu0
        %v5545 = vadd.f32 %v5446, %v5544
        %v5546 = vpop.f32.mrf.mxu0
        %v5547 = vadd.f32 %v5448, %v5546
        %5548 = vmatmul.bf16.gmra.mxu0 %v4974
        %v5549 = vpop.f32.mrf.mxu0
        %v5550 = vadd.f32 %v5451, %v5549
        %v5551 = vpop.f32.mrf.mxu0
        %v5552 = vadd.f32 %v5453, %v5551
        %5553 = vmatmul.bf16.gmra.mxu0 %v5021
        %v5554 = vpop.f32.mrf.mxu0
        %v5555 = vadd.f32 %v5456, %v5554
        %v5556 = vpop.f32.mrf.mxu0
        %v5557 = vadd.f32 %v5458, %v5556
        %5558 = vmatmul.bf16.gmra.mxu0 %v5068
        %v5559 = vpop.f32.mrf.mxu0
        %v5560 = vadd.f32 %v5461, %v5559
        %v5561 = vpop.f32.mrf.mxu0
        %v5562 = vadd.f32 %v5463, %v5561
        %5563 = vmatmul.bf16.gmra.mxu0 %v5115
        %v5564 = vpop.f32.mrf.mxu0
        %v5565 = vadd.f32 %v5466, %v5564
        %v5566 = vpop.f32.mrf.mxu0
        %v5567 = vadd.f32 %v5468, %v5566
        %5568 = vdwg.mxu0
        %5569 = vmatpush.bf16.msra.mxu0 0
        %5570 = vmatpush.bf16.msra.mxu0 0
        %5571 = vmatpush.bf16.msra.mxu0 0
        %5572 = vmatpush.bf16.msra.mxu0 0
        %5573 = vmatpush.bf16.msra.mxu0 0
        %5574 = vmatpush.bf16.msra.mxu0 0
        %5575 = vmatpush.bf16.msra.mxu0 %v5298
        %5576 = vmatpush.bf16.msra.mxu0 %v5297
        %5577 = vmatmul.bf16.gmra.mxu0 %v5318
        %v5578 = vpop.f32.mrf.mxu0
        %v5579 = vadd.f32 %v5480, %v5578
        %v5580 = vpop.f32.mrf.mxu0
        %v5581 = vadd.f32 %v5482, %v5580
        %5582 = vmatmul.bf16.gmra.mxu0 %v5321
        %v5583 = vpop.f32.mrf.mxu0
        %v5584 = vadd.f32 %v5485, %v5583
        %v5585 = vpop.f32.mrf.mxu0
        %v5586 = vadd.f32 %v5487, %v5585
        %5587 = vmatmul.bf16.gmra.mxu0 %v5324
        %v5588 = vpop.f32.mrf.mxu0
        %v5589 = vadd.f32 %v5490, %v5588
        %v5590 = vpop.f32.mrf.mxu0
        %v5591 = vadd.f32 %v5492, %v5590
        %5592 = vmatmul.bf16.gmra.mxu0 %v5327
        %v5593 = vpop.f32.mrf.mxu0
        %v5594 = vadd.f32 %v5495, %v5593
        %v5595 = vpop.f32.mrf.mxu0
        %v5596 = vadd.f32 %v5497, %v5595
        %5597 = vmatmul.bf16.gmra.mxu0 %v5330
        %v5598 = vpop.f32.mrf.mxu0
        %v5599 = vadd.f32 %v5500, %v5598
        %v5600 = vpop.f32.mrf.mxu0
        %v5601 = vadd.f32 %v5502, %v5600
        %5602 = vmatmul.bf16.gmra.mxu0 %v5333
        %v5603 = vpop.f32.mrf.mxu0
        %v5604 = vadd.f32 %v5505, %v5603
        %v5605 = vpop.f32.mrf.mxu0
        %v5606 = vadd.f32 %v5507, %v5605
        %5607 = vmatmul.bf16.gmra.mxu0 %v5336
        %v5608 = vpop.f32.mrf.mxu0
        %v5609 = vadd.f32 %v5510, %v5608
        %v5610 = vpop.f32.mrf.mxu0
        %v5611 = vadd.f32 %v5512, %v5610
        %5612 = vmatmul.bf16.gmra.mxu0 %v5339
        %v5613 = vpop.f32.mrf.mxu0
        %v5614 = vadd.f32 %v5515, %v5613
        %v5615 = vpop.f32.mrf.mxu0
        %v5616 = vadd.f32 %v5517, %v5615
        %5617 = vmatmul.bf16.gmra.mxu0 %v5342
        %v5618 = vpop.f32.mrf.mxu0
        %v5619 = vadd.f32 %v5520, %v5618
        %v5620 = vpop.f32.mrf.mxu0
        %v5621 = vadd.f32 %v5522, %v5620
        %5622 = vmatmul.bf16.gmra.mxu0 %v5345
        %v5623 = vpop.f32.mrf.mxu0
        %v5624 = vadd.f32 %v5525, %v5623
        %v5625 = vpop.f32.mrf.mxu0
        %v5626 = vadd.f32 %v5527, %v5625
        %5627 = vmatmul.bf16.gmra.mxu0 %v5348
        %v5628 = vpop.f32.mrf.mxu0
        %v5629 = vadd.f32 %v5530, %v5628
        %v5630 = vpop.f32.mrf.mxu0
        %v5631 = vadd.f32 %v5532, %v5630
        %5632 = vmatmul.bf16.gmra.mxu0 %v5351
        %v5633 = vpop.f32.mrf.mxu0
        %v5634 = vadd.f32 %v5535, %v5633
        %v5635 = vpop.f32.mrf.mxu0
        %v5636 = vadd.f32 %v5537, %v5635
        %5637 = vmatmul.bf16.gmra.mxu0 %v5354
        %v5638 = vpop.f32.mrf.mxu0
        %v5639 = vadd.f32 %v5540, %v5638
        %v5640 = vpop.f32.mrf.mxu0
        %v5641 = vadd.f32 %v5542, %v5640
        %5642 = vmatmul.bf16.gmra.mxu0 %v5357
        %v5643 = vpop.f32.mrf.mxu0
        %v5644 = vadd.f32 %v5545, %v5643
        %v5645 = vpop.f32.mrf.mxu0
        %v5646 = vadd.f32 %v5547, %v5645
        %5647 = vmatmul.bf16.gmra.mxu0 %v5360
        %v5648 = vpop.f32.mrf.mxu0
        %v5649 = vadd.f32 %v5550, %v5648
        %v5650 = vpop.f32.mrf.mxu0
        %v5651 = vadd.f32 %v5552, %v5650
        %5652 = vmatmul.bf16.gmra.mxu0 %v5363
        %v5653 = vpop.f32.mrf.mxu0
        %v5654 = vadd.f32 %v5555, %v5653
        %v5655 = vpop.f32.mrf.mxu0
        %v5656 = vadd.f32 %v5557, %v5655
        %5657 = vmatmul.bf16.gmra.mxu0 %v5366
        %v5658 = vpop.f32.mrf.mxu0
        %v5659 = vadd.f32 %v5560, %v5658
        %v5660 = vpop.f32.mrf.mxu0
        %v5661 = vadd.f32 %v5562, %v5660
        %5662 = vmatmul.bf16.gmra.mxu0 %v5369
        %v5663 = vpop.f32.mrf.mxu0
        %v5664 = vadd.f32 %v5565, %v5663
        %v5665 = vpop.f32.mrf.mxu0
        %v5666 = vadd.f32 %v5567, %v5665
        %5667 = vdwg.mxu0
        %v5668 = vmax.f32 %v5579, 0.0
        %v5669 = vmax.f32 %v5581, 0.0
        %v5670 = vmax.f32 %v5584, 0.0
        %v5671 = vmax.f32 %v5586, 0.0
        %v5672 = vmax.f32 %v5589, 0.0
        %v5673 = vmax.f32 %v5591, 0.0
        %v5674 = vmax.f32 %v5594, 0.0
        %v5675 = vmax.f32 %v5596, 0.0
        %v5676 = vmax.f32 %v5599, 0.0
        %v5677 = vmax.f32 %v5601, 0.0
        %v5678 = vmax.f32 %v5604, 0.0
        %v5679 = vmax.f32 %v5606, 0.0
        %v5680 = vmax.f32 %v5609, 0.0
        %v5681 = vmax.f32 %v5611, 0.0
        %v5682 = vmax.f32 %v5614, 0.0
        %v5683 = vmax.f32 %v5616, 0.0
        %v5684 = vmax.f32 %v5619, 0.0
        %v5685 = vmax.f32 %v5621, 0.0
        %v5686 = vmax.f32 %v5624, 0.0
        %v5687 = vmax.f32 %v5626, 0.0
        %v5688 = vmax.f32 %v5629, 0.0
        %v5689 = vmax.f32 %v5631, 0.0
        %v5690 = vmax.f32 %v5634, 0.0
        %v5691 = vmax.f32 %v5636, 0.0
        %v5692 = vmax.f32 %v5639, 0.0
        %v5693 = vmax.f32 %v5641, 0.0
        %v5694 = vmax.f32 %v5644, 0.0
        %v5695 = vmax.f32 %v5646, 0.0
        %v5696 = vmax.f32 %v5649, 0.0
        %v5697 = vmax.f32 %v5651, 0.0
        %v5698 = vmax.f32 %v5654, 0.0
        %v5699 = vmax.f32 %v5656, 0.0
        %v5700 = vmax.f32 %v5659, 0.0
        %v5701 = vmax.f32 %v5661, 0.0
        %v5702 = vmax.f32 %v5664, 0.0
        %v5703 = vmax.f32 %v5666, 0.0
        %s5704 = ssub.s32 %s301, 1
        %v5705 = vstv %s5704
        %v5706 = vadd.s32 %v5705, 1
        %v5707 = vadd.s32 %v5705, 2
        %v5708 = vadd.s32 %v5705, 3
        %v5709 = vadd.s32 %v5705, 4
        %v5710 = vadd.s32 %v5705, 5
        %v5711 = vadd.s32 %v5705, 6
        %v5712 = vadd.s32 %v5705, 7
        %v5713 = vadd.s32 %v5705, 8
        %v5714 = vadd.s32 %v5705, 9
        %v5715 = vadd.s32 %v5705, 10
        %v5716 = vadd.s32 %v5705, 11
        %v5717 = vadd.s32 %v5705, 12
        %v5718 = vadd.s32 %v5705, 13
        %v5719 = vadd.s32 %v5705, 14
        %v5720 = vadd.s32 %v5705, 15
        %v5721 = vadd.s32 %v5705, 16
        %v5722 = vadd.s32 %v5705, 17
        %vm5723 = vcmp.ge.s32.totalorder %v5705, 0
        %vm5724 = vcmp.ge.s32.totalorder %v5706, 0
        %vm5725 = vcmp.ge.s32.totalorder %v5707, 0
        %vm5726 = vcmp.ge.s32.totalorder %v5708, 0
        %vm5727 = vcmp.ge.s32.totalorder %v5709, 0
        %vm5728 = vcmp.ge.s32.totalorder %v5710, 0
        %vm5729 = vcmp.ge.s32.totalorder %v5711, 0
        %vm5730 = vcmp.ge.s32.totalorder %v5712, 0
        %vm5731 = vcmp.ge.s32.totalorder %v5713, 0
        %vm5732 = vcmp.ge.s32.totalorder %v5714, 0
        %vm5733 = vcmp.ge.s32.totalorder %v5715, 0
        %vm5734 = vcmp.ge.s32.totalorder %v5716, 0
        %vm5735 = vcmp.ge.s32.totalorder %v5717, 0
        %vm5736 = vcmp.ge.s32.totalorder %v5718, 0
        %vm5737 = vcmp.ge.s32.totalorder %v5719, 0
        %vm5738 = vcmp.ge.s32.totalorder %v5720, 0
        %vm5739 = vcmp.ge.s32.totalorder %v5721, 0
        %vm5740 = vcmp.ge.s32.totalorder %v5722, 0
        %vm5741 = vcmp.lt.s32.totalorder %v5705, 16
        %vm5742 = vcmp.lt.s32.totalorder %v5706, 16
        %vm5743 = vcmp.lt.s32.totalorder %v5707, 16
        %vm5744 = vcmp.lt.s32.totalorder %v5708, 16
        %vm5745 = vcmp.lt.s32.totalorder %v5709, 16
        %vm5746 = vcmp.lt.s32.totalorder %v5710, 16
        %vm5747 = vcmp.lt.s32.totalorder %v5711, 16
        %vm5748 = vcmp.lt.s32.totalorder %v5712, 16
        %vm5749 = vcmp.lt.s32.totalorder %v5713, 16
        %vm5750 = vcmp.lt.s32.totalorder %v5714, 16
        %vm5751 = vcmp.lt.s32.totalorder %v5715, 16
        %vm5752 = vcmp.lt.s32.totalorder %v5716, 16
        %vm5753 = vcmp.lt.s32.totalorder %v5717, 16
        %vm5754 = vcmp.lt.s32.totalorder %v5718, 16
        %vm5755 = vcmp.lt.s32.totalorder %v5719, 16
        %vm5756 = vcmp.lt.s32.totalorder %v5720, 16
        %vm5757 = vcmp.lt.s32.totalorder %v5721, 16
        %vm5758 = vcmp.lt.s32.totalorder %v5722, 16
        %vm5759 = vmand %vm5723, %vm5741
        %vm5760 = vmand %vm5724, %vm5742
        %vm5761 = vmand %vm5725, %vm5743
        %vm5762 = vmand %vm5726, %vm5744
        %vm5763 = vmand %vm5727, %vm5745
        %vm5764 = vmand %vm5728, %vm5746
        %vm5765 = vmand %vm5729, %vm5747
        %vm5766 = vmand %vm5730, %vm5748
        %vm5767 = vmand %vm5731, %vm5749
        %vm5768 = vmand %vm5732, %vm5750
        %vm5769 = vmand %vm5733, %vm5751
        %vm5770 = vmand %vm5734, %vm5752
        %vm5771 = vmand %vm5735, %vm5753
        %vm5772 = vmand %vm5736, %vm5754
        %vm5773 = vmand %vm5737, %vm5755
        %vm5774 = vmand %vm5738, %vm5756
        %vm5775 = vmand %vm5739, %vm5757
        %vm5776 = vmand %vm5740, %vm5758
        %v5777 = vsel %vm5759, 1, 0
        %v5778 = vsel %vm5760, 1, 0
        %v5779 = vsel %vm5761, 1, 0
        %v5780 = vsel %vm5762, 1, 0
        %v5781 = vsel %vm5763, 1, 0
        %v5782 = vsel %vm5764, 1, 0
        %v5783 = vsel %vm5765, 1, 0
        %v5784 = vsel %vm5766, 1, 0
        %v5785 = vsel %vm5767, 1, 0
        %v5786 = vsel %vm5768, 1, 0
        %v5787 = vsel %vm5769, 1, 0
        %v5788 = vsel %vm5770, 1, 0
        %v5789 = vsel %vm5771, 1, 0
        %v5790 = vsel %vm5772, 1, 0
        %v5791 = vsel %vm5773, 1, 0
        %v5792 = vsel %vm5774, 1, 0
        %v5793 = vsel %vm5775, 1, 0
        %v5794 = vsel %vm5776, 1, 0
        %vm5795 = vcmp.eq.s32.totalorder %v5777, 1
        %vm5796 = vcmp.eq.s32.totalorder %v5778, 1
        %vm5797 = vcmp.eq.s32.totalorder %v5779, 1
        %vm5798 = vcmp.eq.s32.totalorder %v5780, 1
        %vm5799 = vcmp.eq.s32.totalorder %v5781, 1
        %vm5800 = vcmp.eq.s32.totalorder %v5782, 1
        %vm5801 = vcmp.eq.s32.totalorder %v5783, 1
        %vm5802 = vcmp.eq.s32.totalorder %v5784, 1
        %vm5803 = vcmp.eq.s32.totalorder %v5785, 1
        %vm5804 = vcmp.eq.s32.totalorder %v5786, 1
        %vm5805 = vcmp.eq.s32.totalorder %v5787, 1
        %vm5806 = vcmp.eq.s32.totalorder %v5788, 1
        %vm5807 = vcmp.eq.s32.totalorder %v5789, 1
        %vm5808 = vcmp.eq.s32.totalorder %v5790, 1
        %vm5809 = vcmp.eq.s32.totalorder %v5791, 1
        %vm5810 = vcmp.eq.s32.totalorder %v5792, 1
        %vm5811 = vcmp.eq.s32.totalorder %v5793, 1
        %vm5812 = vcmp.eq.s32.totalorder %v5794, 1
        %v5813 = vsel %vm5795, %v5668, 0.0
        %v5814 = vsel %vm5795, %v5669, 0.0
        %v5815 = vsel %vm5796, %v5670, 0.0
        %v5816 = vsel %vm5796, %v5671, 0.0
        %v5817 = vsel %vm5797, %v5672, 0.0
        %v5818 = vsel %vm5797, %v5673, 0.0
        %v5819 = vsel %vm5798, %v5674, 0.0
        %v5820 = vsel %vm5798, %v5675, 0.0
        %v5821 = vsel %vm5799, %v5676, 0.0
        %v5822 = vsel %vm5799, %v5677, 0.0
        %v5823 = vsel %vm5800, %v5678, 0.0
        %v5824 = vsel %vm5800, %v5679, 0.0
        %v5825 = vsel %vm5801, %v5680, 0.0
        %v5826 = vsel %vm5801, %v5681, 0.0
        %v5827 = vsel %vm5802, %v5682, 0.0
        %v5828 = vsel %vm5802, %v5683, 0.0
        %v5829 = vsel %vm5803, %v5684, 0.0
        %v5830 = vsel %vm5803, %v5685, 0.0
        %v5831 = vsel %vm5804, %v5686, 0.0
        %v5832 = vsel %vm5804, %v5687, 0.0
        %v5833 = vsel %vm5805, %v5688, 0.0
        %v5834 = vsel %vm5805, %v5689, 0.0
        %v5835 = vsel %vm5806, %v5690, 0.0
        %v5836 = vsel %vm5806, %v5691, 0.0
        %v5837 = vsel %vm5807, %v5692, 0.0
        %v5838 = vsel %vm5807, %v5693, 0.0
        %v5839 = vsel %vm5808, %v5694, 0.0
        %v5840 = vsel %vm5808, %v5695, 0.0
        %v5841 = vsel %vm5809, %v5696, 0.0
        %v5842 = vsel %vm5809, %v5697, 0.0
        %v5843 = vsel %vm5810, %v5698, 0.0
        %v5844 = vsel %vm5810, %v5699, 0.0
        %v5845 = vsel %vm5811, %v5700, 0.0
        %v5846 = vsel %vm5811, %v5701, 0.0
        %v5847 = vsel %vm5812, %v5702, 0.0
        %v5848 = vsel %vm5812, %v5703, 0.0
        %v5849 = vld [vmem:[#allocation3 + $0x4] sm:$0x8]
        %v5850 = vsel %vm2727, 0, %v5849
        %5851 = vst [vmem:[#allocation3 + $0x4] sm:$0x8] %v5850
        %v5852 = vld [vmem:[#allocation3 + $0x18] sm:$0x8]
        %v5853 = vsel %vm2727, 0, %v5852
        %5854 = vst [vmem:[#allocation3 + $0x18] sm:$0x8] %v5853
        %v5855 = vld [vmem:[#allocation3 + $0x2c] sm:$0x8]
        %v5856 = vsel %vm2727, 0, %v5855
        %5857 = vst [vmem:[#allocation3 + $0x2c] sm:$0x8] %v5856
        %v5858 = vld [vmem:[#allocation3 + $0x40] sm:$0x8]
        %v5859 = vsel %vm2727, 0, %v5858
        %5860 = vst [vmem:[#allocation3 + $0x40] sm:$0x8] %v5859
        %v5861 = vld [vmem:[#allocation3 + $0x54] sm:$0x8]
        %v5862 = vsel %vm2727, 0, %v5861
        %5863 = vst [vmem:[#allocation3 + $0x54] sm:$0x8] %v5862
        %v5864 = vld [vmem:[#allocation3 + $0x68] sm:$0x8]
        %v5865 = vsel %vm2727, 0, %v5864
        %5866 = vst [vmem:[#allocation3 + $0x68] sm:$0x8] %v5865
        %v5867 = vld [vmem:[#allocation3 + $0x7c] sm:$0x8]
        %v5868 = vsel %vm2727, 0, %v5867
        %5869 = vst [vmem:[#allocation3 + $0x7c] sm:$0x8] %v5868
        %v5870 = vld [vmem:[#allocation3 + $0x90] sm:$0x8]
        %v5871 = vsel %vm2727, 0, %v5870
        %5872 = vst [vmem:[#allocation3 + $0x90] sm:$0x8] %v5871
        %v5873 = vld [vmem:[#allocation3 + $0xa4] sm:$0x8]
        %v5874 = vsel %vm2727, 0, %v5873
        %5875 = vst [vmem:[#allocation3 + $0xa4] sm:$0x8] %v5874
        %v5876 = vld [vmem:[#allocation3 + $0xb8] sm:$0x8]
        %v5877 = vsel %vm2727, 0, %v5876
        %5878 = vst [vmem:[#allocation3 + $0xb8] sm:$0x8] %v5877
        %v5879 = vld [vmem:[#allocation3 + $0xcc] sm:$0x8]
        %v5880 = vsel %vm2727, 0, %v5879
        %5881 = vst [vmem:[#allocation3 + $0xcc] sm:$0x8] %v5880
        %v5882 = vld [vmem:[#allocation3 + $0xe0] sm:$0x8]
        %v5883 = vsel %vm2727, 0, %v5882
        %5884 = vst [vmem:[#allocation3 + $0xe0] sm:$0x8] %v5883
        %v5885 = vld [vmem:[#allocation3 + $0xf4] sm:$0x8]
        %v5886 = vsel %vm2727, 0, %v5885
        %5887 = vst [vmem:[#allocation3 + $0xf4] sm:$0x8] %v5886
        %v5888 = vld [vmem:[#allocation3 + $0x108] sm:$0x8]
        %v5889 = vsel %vm2727, 0, %v5888
        %5890 = vst [vmem:[#allocation3 + $0x108] sm:$0x8] %v5889
        %v5891 = vld [vmem:[#allocation3 + $0x11c] sm:$0x8]
        %v5892 = vsel %vm2727, 0, %v5891
        %5893 = vst [vmem:[#allocation3 + $0x11c] sm:$0x8] %v5892
        %v5894 = vld [vmem:[#allocation3 + $0x130] sm:$0x8]
        %v5895 = vsel %vm2727, 0, %v5894
        %5896 = vst [vmem:[#allocation3 + $0x130] sm:$0x8] %v5895
        %v5897 = vld [vmem:[#allocation3 + $0x144] sm:$0x8]
        %v5898 = vsel %vm2727, 0, %v5897
        %5899 = vst [vmem:[#allocation3 + $0x144] sm:$0x8] %v5898
        %v5900 = vld [vmem:[#allocation3 + $0x158] sm:$0x8]
        %v5901 = vsel %vm2727, 0, %v5900
        %5902 = vst [vmem:[#allocation3 + $0x158] sm:$0x8] %v5901
        %v5903 = vld [vmem:[#allocation3 + $0x10] sm:$0x1]
        %v5904 = vsel %vm2790, 0, %v5903
        %5905 = vst [vmem:[#allocation3 + $0x10] sm:$0x1] %v5904
        %v5906 = vld [vmem:[#allocation3 + $0x24] sm:$0x1]
        %v5907 = vsel %vm2790, 0, %v5906
        %5908 = vst [vmem:[#allocation3 + $0x24] sm:$0x1] %v5907
        %v5909 = vld [vmem:[#allocation3 + $0x38] sm:$0x1]
        %v5910 = vsel %vm2790, 0, %v5909
        %5911 = vst [vmem:[#allocation3 + $0x38] sm:$0x1] %v5910
        %v5912 = vld [vmem:[#allocation3 + $0x4c] sm:$0x1]
        %v5913 = vsel %vm2790, 0, %v5912
        %5914 = vst [vmem:[#allocation3 + $0x4c] sm:$0x1] %v5913
        %v5915 = vld [vmem:[#allocation3 + $0x60] sm:$0x1]
        %v5916 = vsel %vm2790, 0, %v5915
        %5917 = vst [vmem:[#allocation3 + $0x60] sm:$0x1] %v5916
        %v5918 = vld [vmem:[#allocation3 + $0x74] sm:$0x1]
        %v5919 = vsel %vm2790, 0, %v5918
        %5920 = vst [vmem:[#allocation3 + $0x74] sm:$0x1] %v5919
        %v5921 = vld [vmem:[#allocation3 + $0x88] sm:$0x1]
        %v5922 = vsel %vm2790, 0, %v5921
        %5923 = vst [vmem:[#allocation3 + $0x88] sm:$0x1] %v5922
        %v5924 = vld [vmem:[#allocation3 + $0x9c] sm:$0x1]
        %v5925 = vsel %vm2790, 0, %v5924
        %5926 = vst [vmem:[#allocation3 + $0x9c] sm:$0x1] %v5925
        %v5927 = vld [vmem:[#allocation3 + $0xb0] sm:$0x1]
        %v5928 = vsel %vm2790, 0, %v5927
        %5929 = vst [vmem:[#allocation3 + $0xb0] sm:$0x1] %v5928
        %v5930 = vld [vmem:[#allocation3 + $0xc4] sm:$0x1]
        %v5931 = vsel %vm2790, 0, %v5930
        %5932 = vst [vmem:[#allocation3 + $0xc4] sm:$0x1] %v5931
        %v5933 = vld [vmem:[#allocation3 + $0xd8] sm:$0x1]
        %v5934 = vsel %vm2790, 0, %v5933
        %5935 = vst [vmem:[#allocation3 + $0xd8] sm:$0x1] %v5934
        %v5936 = vld [vmem:[#allocation3 + $0xec] sm:$0x1]
        %v5937 = vsel %vm2790, 0, %v5936
        %5938 = vst [vmem:[#allocation3 + $0xec] sm:$0x1] %v5937
        %v5939 = vld [vmem:[#allocation3 + $0x100] sm:$0x1]
        %v5940 = vsel %vm2790, 0, %v5939
        %5941 = vst [vmem:[#allocation3 + $0x100] sm:$0x1] %v5940
        %v5942 = vld [vmem:[#allocation3 + $0x114] sm:$0x1]
        %v5943 = vsel %vm2790, 0, %v5942
        %5944 = vst [vmem:[#allocation3 + $0x114] sm:$0x1] %v5943
        %v5945 = vld [vmem:[#allocation3 + $0x128] sm:$0x1]
        %v5946 = vsel %vm2790, 0, %v5945
        %5947 = vst [vmem:[#allocation3 + $0x128] sm:$0x1] %v5946
        %v5948 = vld [vmem:[#allocation3 + $0x13c] sm:$0x1]
        %v5949 = vsel %vm2790, 0, %v5948
        %5950 = vst [vmem:[#allocation3 + $0x13c] sm:$0x1] %v5949
        %v5951 = vld [vmem:[#allocation3 + $0x150] sm:$0x1]
        %v5952 = vsel %vm2790, 0, %v5951
        %5953 = vst [vmem:[#allocation3 + $0x150] sm:$0x1] %v5952
        %v5954 = vld [vmem:[#allocation3 + $0x164] sm:$0x1]
        %v5955 = vsel %vm2790, 0, %v5954
        %5956 = vst [vmem:[#allocation3 + $0x164] sm:$0x1] %v5955
        %v5957 = vpack.c.bf16 %v5813, %v5813
        %v5958 = vpack.c.bf16 %v5814, %v5814
        %v5959 = vpack.c.bf16 %v5815, %v5815
        %v5960 = vpack.c.bf16 %v5816, %v5816
        %v5961 = vpack.c.bf16 %v5817, %v5817
        %v5962 = vpack.c.bf16 %v5818, %v5818
        %v5963 = vpack.c.bf16 %v5819, %v5819
        %v5964 = vpack.c.bf16 %v5820, %v5820
        %v5965 = vpack.c.bf16 %v5821, %v5821
        %v5966 = vpack.c.bf16 %v5822, %v5822
        %v5967 = vpack.c.bf16 %v5823, %v5823
        %v5968 = vpack.c.bf16 %v5824, %v5824
        %v5969 = vpack.c.bf16 %v5825, %v5825
        %v5970 = vpack.c.bf16 %v5826, %v5826
        %v5971 = vpack.c.bf16 %v5827, %v5827
        %v5972 = vpack.c.bf16 %v5828, %v5828
        %v5973 = vpack.c.bf16 %v5829, %v5829
        %v5974 = vpack.c.bf16 %v5830, %v5830
        %v5975 = vpack.c.bf16 %v5831, %v5831
        %v5976 = vpack.c.bf16 %v5832, %v5832
        %v5977 = vpack.c.bf16 %v5833, %v5833
        %v5978 = vpack.c.bf16 %v5834, %v5834
        %v5979 = vpack.c.bf16 %v5835, %v5835
        %v5980 = vpack.c.bf16 %v5836, %v5836
        %v5981 = vpack.c.bf16 %v5837, %v5837
        %v5982 = vpack.c.bf16 %v5838, %v5838
        %v5983 = vpack.c.bf16 %v5839, %v5839
        %v5984 = vpack.c.bf16 %v5840, %v5840
        %v5985 = vpack.c.bf16 %v5841, %v5841
        %v5986 = vpack.c.bf16 %v5842, %v5842
        %v5987 = vpack.c.bf16 %v5843, %v5843
        %v5988 = vpack.c.bf16 %v5844, %v5844
        %v5989 = vpack.c.bf16 %v5845, %v5845
        %v5990 = vpack.c.bf16 %v5846, %v5846
        %v5991 = vpack.c.bf16 %v5847, %v5847
        %v5992 = vpack.c.bf16 %v5848, %v5848
        %5993 = vst.msk [vmem:[#allocation3 + $0x8] sm:$0xf] %vm2891, %v5957
        %5994 = vst.msk [vmem:[#allocation3 + $0xc] sm:$0xf] %vm2891, %v5958
        %5995 = vst.msk [vmem:[#allocation3 + $0x1c] sm:$0xf] %vm2891, %v5959
        %5996 = vst.msk [vmem:[#allocation3 + $0x20] sm:$0xf] %vm2891, %v5960
        %5997 = vst.msk [vmem:[#allocation3 + $0x30] sm:$0xf] %vm2891, %v5961
        %5998 = vst.msk [vmem:[#allocation3 + $0x34] sm:$0xf] %vm2891, %v5962
        %5999 = vst.msk [vmem:[#allocation3 + $0x44] sm:$0xf] %vm2891, %v5963
        %6000 = vst.msk [vmem:[#allocation3 + $0x48] sm:$0xf] %vm2891, %v5964
        %6001 = vst.msk [vmem:[#allocation3 + $0x58] sm:$0xf] %vm2891, %v5965
        %6002 = vst.msk [vmem:[#allocation3 + $0x5c] sm:$0xf] %vm2891, %v5966
        %6003 = vst.msk [vmem:[#allocation3 + $0x6c] sm:$0xf] %vm2891, %v5967
        %6004 = vst.msk [vmem:[#allocation3 + $0x70] sm:$0xf] %vm2891, %v5968
        %6005 = vst.msk [vmem:[#allocation3 + $0x80] sm:$0xf] %vm2891, %v5969
        %6006 = vst.msk [vmem:[#allocation3 + $0x84] sm:$0xf] %vm2891, %v5970
        %6007 = vst.msk [vmem:[#allocation3 + $0x94] sm:$0xf] %vm2891, %v5971
        %6008 = vst.msk [vmem:[#allocation3 + $0x98] sm:$0xf] %vm2891, %v5972
        %6009 = vst.msk [vmem:[#allocation3 + $0xa8] sm:$0xf] %vm2891, %v5973
        %6010 = vst.msk [vmem:[#allocation3 + $0xac] sm:$0xf] %vm2891, %v5974
        %6011 = vst.msk [vmem:[#allocation3 + $0xbc] sm:$0xf] %vm2891, %v5975
        %6012 = vst.msk [vmem:[#allocation3 + $0xc0] sm:$0xf] %vm2891, %v5976
        %6013 = vst.msk [vmem:[#allocation3 + $0xd0] sm:$0xf] %vm2891, %v5977
        %6014 = vst.msk [vmem:[#allocation3 + $0xd4] sm:$0xf] %vm2891, %v5978
        %6015 = vst.msk [vmem:[#allocation3 + $0xe4] sm:$0xf] %vm2891, %v5979
        %6016 = vst.msk [vmem:[#allocation3 + $0xe8] sm:$0xf] %vm2891, %v5980
        %6017 = vst.msk [vmem:[#allocation3 + $0xf8] sm:$0xf] %vm2891, %v5981
        %6018 = vst.msk [vmem:[#allocation3 + $0xfc] sm:$0xf] %vm2891, %v5982
        %6019 = vst.msk [vmem:[#allocation3 + $0x10c] sm:$0xf] %vm2891, %v5983
        %6020 = vst.msk [vmem:[#allocation3 + $0x110] sm:$0xf] %vm2891, %v5984
        %6021 = vst.msk [vmem:[#allocation3 + $0x120] sm:$0xf] %vm2891, %v5985
        %6022 = vst.msk [vmem:[#allocation3 + $0x124] sm:$0xf] %vm2891, %v5986
        %6023 = vst.msk [vmem:[#allocation3 + $0x134] sm:$0xf] %vm2891, %v5987
        %6024 = vst.msk [vmem:[#allocation3 + $0x138] sm:$0xf] %vm2891, %v5988
        %6025 = vst.msk [vmem:[#allocation3 + $0x148] sm:$0xf] %vm2891, %v5989
        %6026 = vst.msk [vmem:[#allocation3 + $0x14c] sm:$0xf] %vm2891, %v5990
        %6027 = vst.msk [vmem:[#allocation3 + $0x15c] sm:$0xf] %vm2891, %v5991
        %6028 = vst.msk [vmem:[#allocation3 + $0x160] sm:$0xf] %vm2891, %v5992
        %v6029 = vld [vmem:[#allocation3 + $0x4] sm:$0xf]
        %v6030 = vld [vmem:[#allocation3 + $0x8] sm:$0xf]
        %v6031 = vld [vmem:[#allocation3 + $0xc] sm:$0xf]
        %v6032 = vld [vmem:[#allocation3 + $0x10] sm:$0x1]
        %v6033 = vld [vmem:[#allocation3 + $0x18] sm:$0xf]
        %v6034 = vld [vmem:[#allocation3 + $0x1c] sm:$0xf]
        %v6035 = vld [vmem:[#allocation3 + $0x20] sm:$0xf]
        %v6036 = vld [vmem:[#allocation3 + $0x24] sm:$0x1]
        %v6037 = vld [vmem:[#allocation3 + $0x2c] sm:$0xf]
        %v6038 = vld [vmem:[#allocation3 + $0x30] sm:$0xf]
        %v6039 = vld [vmem:[#allocation3 + $0x34] sm:$0xf]
        %v6040 = vld [vmem:[#allocation3 + $0x38] sm:$0x1]
        %v6041 = vld [vmem:[#allocation3 + $0x40] sm:$0xf]
        %v6042 = vld [vmem:[#allocation3 + $0x44] sm:$0xf]
        %v6043 = vld [vmem:[#allocation3 + $0x48] sm:$0xf]
        %v6044 = vld [vmem:[#allocation3 + $0x4c] sm:$0x1]
        %v6045 = vld [vmem:[#allocation3 + $0x54] sm:$0xf]
        %v6046 = vld [vmem:[#allocation3 + $0x58] sm:$0xf]
        %v6047 = vld [vmem:[#allocation3 + $0x5c] sm:$0xf]
        %v6048 = vld [vmem:[#allocation3 + $0x60] sm:$0x1]
        %v6049 = vld [vmem:[#allocation3 + $0x68] sm:$0xf]
        %v6050 = vld [vmem:[#allocation3 + $0x6c] sm:$0xf]
        %v6051 = vld [vmem:[#allocation3 + $0x70] sm:$0xf]
        %v6052 = vld [vmem:[#allocation3 + $0x74] sm:$0x1]
        %v6053 = vld [vmem:[#allocation3 + $0x7c] sm:$0xf]
        %v6054 = vld [vmem:[#allocation3 + $0x80] sm:$0xf]
        %v6055 = vld [vmem:[#allocation3 + $0x84] sm:$0xf]
        %v6056 = vld [vmem:[#allocation3 + $0x88] sm:$0x1]
        %v6057 = vld [vmem:[#allocation3 + $0x90] sm:$0xf]
        %v6058 = vld [vmem:[#allocation3 + $0x94] sm:$0xf]
        %v6059 = vld [vmem:[#allocation3 + $0x98] sm:$0xf]
        %v6060 = vld [vmem:[#allocation3 + $0x9c] sm:$0x1]
        %v6061 = vld [vmem:[#allocation3 + $0xa4] sm:$0xf]
        %v6062 = vld [vmem:[#allocation3 + $0xa8] sm:$0xf]
        %v6063 = vld [vmem:[#allocation3 + $0xac] sm:$0xf]
        %v6064 = vld [vmem:[#allocation3 + $0xb0] sm:$0x1]
        %v6065 = vld [vmem:[#allocation3 + $0xb8] sm:$0xf]
        %v6066 = vld [vmem:[#allocation3 + $0xbc] sm:$0xf]
        %v6067 = vld [vmem:[#allocation3 + $0xc0] sm:$0xf]
        %v6068 = vld [vmem:[#allocation3 + $0xc4] sm:$0x1]
        %v6069 = vld [vmem:[#allocation3 + $0xcc] sm:$0xf]
        %v6070 = vld [vmem:[#allocation3 + $0xd0] sm:$0xf]
        %v6071 = vld [vmem:[#allocation3 + $0xd4] sm:$0xf]
        %v6072 = vld [vmem:[#allocation3 + $0xd8] sm:$0x1]
        %v6073 = vld [vmem:[#allocation3 + $0xe0] sm:$0xf]
        %v6074 = vld [vmem:[#allocation3 + $0xe4] sm:$0xf]
        %v6075 = vld [vmem:[#allocation3 + $0xe8] sm:$0xf]
        %v6076 = vld [vmem:[#allocation3 + $0xec] sm:$0x1]
        %v6077 = vld [vmem:[#allocation3 + $0xf4] sm:$0xf]
        %v6078 = vld [vmem:[#allocation3 + $0xf8] sm:$0xf]
        %v6079 = vld [vmem:[#allocation3 + $0xfc] sm:$0xf]
        %v6080 = vld [vmem:[#allocation3 + $0x100] sm:$0x1]
        %v6081 = vld [vmem:[#allocation3 + $0x108] sm:$0xf]
        %v6082 = vld [vmem:[#allocation3 + $0x10c] sm:$0xf]
        %v6083 = vld [vmem:[#allocation3 + $0x110] sm:$0xf]
        %v6084 = vld [vmem:[#allocation3 + $0x114] sm:$0x1]
        %v6085 = vld [vmem:[#allocation3 + $0x11c] sm:$0xf]
        %v6086 = vld [vmem:[#allocation3 + $0x120] sm:$0xf]
        %v6087 = vld [vmem:[#allocation3 + $0x124] sm:$0xf]
        %v6088 = vld [vmem:[#allocation3 + $0x128] sm:$0x1]
        %v6089 = vld [vmem:[#allocation3 + $0x130] sm:$0xf]
        %v6090 = vld [vmem:[#allocation3 + $0x134] sm:$0xf]
        %v6091 = vld [vmem:[#allocation3 + $0x138] sm:$0xf]
        %v6092 = vld [vmem:[#allocation3 + $0x13c] sm:$0x1]
        %v6093 = vld [vmem:[#allocation3 + $0x144] sm:$0xf]
        %v6094 = vld [vmem:[#allocation3 + $0x148] sm:$0xf]
        %v6095 = vld [vmem:[#allocation3 + $0x14c] sm:$0xf]
        %v6096 = vld [vmem:[#allocation3 + $0x150] sm:$0x1]
        %v6097 = vld [vmem:[#allocation3 + $0x158] sm:$0xf]
        %v6098 = vld [vmem:[#allocation3 + $0x15c] sm:$0xf]
        %v6099 = vld [vmem:[#allocation3 + $0x160] sm:$0xf]
        %v6100 = vld [vmem:[#allocation3 + $0x164] sm:$0x1]
        %v6101 = vld [vmem:[%s5] sm:$0x1]
        %v6102 = vunpack.c.l.bf16 %v6029
        %v6103 = vunpack.c.l.bf16 %v6030
        %v6104 = vunpack.c.l.bf16 %v6031
        %v6105 = vunpack.c.l.bf16 %v6033
        %v6106 = vunpack.c.l.bf16 %v6034
        %v6107 = vunpack.c.l.bf16 %v6035
        %v6108 = vunpack.c.l.bf16 %v6037
        %v6109 = vunpack.c.l.bf16 %v6038
        %v6110 = vunpack.c.l.bf16 %v6039
        %v6111 = vunpack.c.l.bf16 %v6041
        %v6112 = vunpack.c.l.bf16 %v6042
        %v6113 = vunpack.c.l.bf16 %v6043
        %v6114 = vunpack.c.l.bf16 %v6045
        %v6115 = vunpack.c.l.bf16 %v6046
        %v6116 = vunpack.c.l.bf16 %v6047
        %v6117 = vunpack.c.l.bf16 %v6049
        %v6118 = vunpack.c.l.bf16 %v6050
        %v6119 = vunpack.c.l.bf16 %v6051
        %v6120 = vunpack.c.l.bf16 %v6053
        %v6121 = vunpack.c.l.bf16 %v6054
        %v6122 = vunpack.c.l.bf16 %v6055
        %v6123 = vunpack.c.l.bf16 %v6057
        %v6124 = vunpack.c.l.bf16 %v6058
        %v6125 = vunpack.c.l.bf16 %v6059
        %v6126 = vunpack.c.l.bf16 %v6061
        %v6127 = vunpack.c.l.bf16 %v6062
        %v6128 = vunpack.c.l.bf16 %v6063
        %v6129 = vunpack.c.l.bf16 %v6065
        %v6130 = vunpack.c.l.bf16 %v6066
        %v6131 = vunpack.c.l.bf16 %v6067
        %v6132 = vunpack.c.l.bf16 %v6069
        %v6133 = vunpack.c.l.bf16 %v6070
        %v6134 = vunpack.c.l.bf16 %v6071
        %v6135 = vunpack.c.l.bf16 %v6073
        %v6136 = vunpack.c.l.bf16 %v6074
        %v6137 = vunpack.c.l.bf16 %v6075
        %v6138 = vunpack.c.l.bf16 %v6077
        %v6139 = vunpack.c.l.bf16 %v6078
        %v6140 = vunpack.c.l.bf16 %v6079
        %v6141 = vunpack.c.l.bf16 %v6081
        %v6142 = vunpack.c.l.bf16 %v6082
        %v6143 = vunpack.c.l.bf16 %v6083
        %v6144 = vunpack.c.l.bf16 %v6085
        %v6145 = vunpack.c.l.bf16 %v6086
        %v6146 = vunpack.c.l.bf16 %v6087
        %v6147 = vunpack.c.l.bf16 %v6089
        %v6148 = vunpack.c.l.bf16 %v6090
        %v6149 = vunpack.c.l.bf16 %v6091
        %v6151 = vperm.slane %v6101, 0
        %v6153 = vmul.f32 %v6102, %v6151
        %v6154 = vmul.f32 %v6103, %v6151
        %v6155 = vmul.f32 %v6104, %v6151
        %v6156 = vmul.f32 %v6105, %v6151
        %v6157 = vmul.f32 %v6106, %v6151
        %v6158 = vmul.f32 %v6107, %v6151
        %v6159 = vmul.f32 %v6108, %v6151
        %v6160 = vmul.f32 %v6109, %v6151
        %v6161 = vmul.f32 %v6110, %v6151
        %v6162 = vmul.f32 %v6111, %v6151
        %v6163 = vmul.f32 %v6112, %v6151
        %v6164 = vmul.f32 %v6113, %v6151
        %v6165 = vmul.f32 %v6114, %v6151
        %v6166 = vmul.f32 %v6115, %v6151
        %v6167 = vmul.f32 %v6116, %v6151
        %v6168 = vmul.f32 %v6117, %v6151
        %v6169 = vmul.f32 %v6118, %v6151
        %v6170 = vmul.f32 %v6119, %v6151
        %v6171 = vmul.f32 %v6120, %v6151
        %v6172 = vmul.f32 %v6121, %v6151
        %v6173 = vmul.f32 %v6122, %v6151
        %v6174 = vmul.f32 %v6123, %v6151
        %v6175 = vmul.f32 %v6124, %v6151
        %v6176 = vmul.f32 %v6125, %v6151
        %v6177 = vmul.f32 %v6126, %v6151
        %v6178 = vmul.f32 %v6127, %v6151
        %v6179 = vmul.f32 %v6128, %v6151
        %v6180 = vmul.f32 %v6129, %v6151
        %v6181 = vmul.f32 %v6130, %v6151
        %v6182 = vmul.f32 %v6131, %v6151
        %v6183 = vmul.f32 %v6132, %v6151
        %v6184 = vmul.f32 %v6133, %v6151
        %v6185 = vmul.f32 %v6134, %v6151
        %v6186 = vmul.f32 %v6135, %v6151
        %v6187 = vmul.f32 %v6136, %v6151
        %v6188 = vmul.f32 %v6137, %v6151
        %v6189 = vmul.f32 %v6138, %v6151
        %v6190 = vmul.f32 %v6139, %v6151
        %v6191 = vmul.f32 %v6140, %v6151
        %v6192 = vmul.f32 %v6141, %v6151
        %v6193 = vmul.f32 %v6142, %v6151
        %v6194 = vmul.f32 %v6143, %v6151
        %v6195 = vmul.f32 %v6144, %v6151
        %v6196 = vmul.f32 %v6145, %v6151
        %v6197 = vmul.f32 %v6146, %v6151
        %v6198 = vmul.f32 %v6147, %v6151
        %v6199 = vmul.f32 %v6148, %v6151
        %v6200 = vmul.f32 %v6149, %v6151
        %s6201 = scalar_lea.vmem %s5, 1
        %v6202 = vld [vmem:[%s6201] sm:$0x1]
        %v6204 = vperm.slane %v6202, 0
        %v6206 = vmul.f32 %v6103, %v6204
        %v6207 = vmul.f32 %v6104, %v6204
        %v6208 = vmul.f32 %v6106, %v6204
        %v6209 = vmul.f32 %v6107, %v6204
        %v6210 = vmul.f32 %v6109, %v6204
        %v6211 = vmul.f32 %v6110, %v6204
        %v6212 = vmul.f32 %v6112, %v6204
        %v6213 = vmul.f32 %v6113, %v6204
        %v6214 = vmul.f32 %v6115, %v6204
        %v6215 = vmul.f32 %v6116, %v6204
        %v6216 = vmul.f32 %v6118, %v6204
        %v6217 = vmul.f32 %v6119, %v6204
        %v6218 = vmul.f32 %v6121, %v6204
        %v6219 = vmul.f32 %v6122, %v6204
        %v6220 = vmul.f32 %v6124, %v6204
        %v6221 = vmul.f32 %v6125, %v6204
        %v6222 = vmul.f32 %v6127, %v6204
        %v6223 = vmul.f32 %v6128, %v6204
        %v6224 = vmul.f32 %v6130, %v6204
        %v6225 = vmul.f32 %v6131, %v6204
        %v6226 = vmul.f32 %v6133, %v6204
        %v6227 = vmul.f32 %v6134, %v6204
        %v6228 = vmul.f32 %v6136, %v6204
        %v6229 = vmul.f32 %v6137, %v6204
        %v6230 = vmul.f32 %v6139, %v6204
        %v6231 = vmul.f32 %v6140, %v6204
        %v6232 = vmul.f32 %v6142, %v6204
        %v6233 = vmul.f32 %v6143, %v6204
        %v6234 = vmul.f32 %v6145, %v6204
        %v6235 = vmul.f32 %v6146, %v6204
        %v6236 = vmul.f32 %v6148, %v6204
        %v6237 = vmul.f32 %v6149, %v6204
        %v6270 = vrot.slane %v6206, 1
        %v6271 = vrot.slane %v6207, 1
        %v6272 = vsel %vm597, %v6270, %v6271
        %v6273 = vrot.slane %v6208, 1
        %v6274 = vrot.slane %v6209, 1
        %v6275 = vsel %vm597, %v6273, %v6274
        %v6276 = vrot.slane %v6210, 1
        %v6277 = vrot.slane %v6211, 1
        %v6278 = vsel %vm597, %v6276, %v6277
        %v6279 = vrot.slane %v6212, 1
        %v6280 = vrot.slane %v6213, 1
        %v6281 = vsel %vm597, %v6279, %v6280
        %v6282 = vrot.slane %v6214, 1
        %v6283 = vrot.slane %v6215, 1
        %v6284 = vsel %vm597, %v6282, %v6283
        %v6285 = vrot.slane %v6216, 1
        %v6286 = vrot.slane %v6217, 1
        %v6287 = vsel %vm597, %v6285, %v6286
        %v6288 = vrot.slane %v6218, 1
        %v6289 = vrot.slane %v6219, 1
        %v6290 = vsel %vm597, %v6288, %v6289
        %v6291 = vrot.slane %v6220, 1
        %v6292 = vrot.slane %v6221, 1
        %v6293 = vsel %vm597, %v6291, %v6292
        %v6294 = vrot.slane %v6222, 1
        %v6295 = vrot.slane %v6223, 1
        %v6296 = vsel %vm597, %v6294, %v6295
        %v6297 = vrot.slane %v6224, 1
        %v6298 = vrot.slane %v6225, 1
        %v6299 = vsel %vm597, %v6297, %v6298
        %v6300 = vrot.slane %v6226, 1
        %v6301 = vrot.slane %v6227, 1
        %v6302 = vsel %vm597, %v6300, %v6301
        %v6303 = vrot.slane %v6228, 1
        %v6304 = vrot.slane %v6229, 1
        %v6305 = vsel %vm597, %v6303, %v6304
        %v6306 = vrot.slane %v6230, 1
        %v6307 = vrot.slane %v6231, 1
        %v6308 = vsel %vm597, %v6306, %v6307
        %v6309 = vrot.slane %v6232, 1
        %v6310 = vrot.slane %v6233, 1
        %v6311 = vsel %vm597, %v6309, %v6310
        %v6312 = vrot.slane %v6234, 1
        %v6313 = vrot.slane %v6235, 1
        %v6314 = vsel %vm597, %v6312, %v6313
        %v6315 = vrot.slane %v6236, 1
        %v6316 = vrot.slane %v6237, 1
        %v6317 = vsel %vm597, %v6315, %v6316
        %v6366 = vadd.f32 %v6153, %v6270
        %v6367 = vadd.f32 %v6154, %v6272
        %v6368 = vadd.f32 %v6155, %v6271
        %v6369 = vadd.f32 %v6156, %v6273
        %v6370 = vadd.f32 %v6157, %v6275
        %v6371 = vadd.f32 %v6158, %v6274
        %v6372 = vadd.f32 %v6159, %v6276
        %v6373 = vadd.f32 %v6160, %v6278
        %v6374 = vadd.f32 %v6161, %v6277
        %v6375 = vadd.f32 %v6162, %v6279
        %v6376 = vadd.f32 %v6163, %v6281
        %v6377 = vadd.f32 %v6164, %v6280
        %v6378 = vadd.f32 %v6165, %v6282
        %v6379 = vadd.f32 %v6166, %v6284
        %v6380 = vadd.f32 %v6167, %v6283
        %v6381 = vadd.f32 %v6168, %v6285
        %v6382 = vadd.f32 %v6169, %v6287
        %v6383 = vadd.f32 %v6170, %v6286
        %v6384 = vadd.f32 %v6171, %v6288
        %v6385 = vadd.f32 %v6172, %v6290
        %v6386 = vadd.f32 %v6173, %v6289
        %v6387 = vadd.f32 %v6174, %v6291
        %v6388 = vadd.f32 %v6175, %v6293
        %v6389 = vadd.f32 %v6176, %v6292
        %v6390 = vadd.f32 %v6177, %v6294
        %v6391 = vadd.f32 %v6178, %v6296
        %v6392 = vadd.f32 %v6179, %v6295
        %v6393 = vadd.f32 %v6180, %v6297
        %v6394 = vadd.f32 %v6181, %v6299
        %v6395 = vadd.f32 %v6182, %v6298
        %v6396 = vadd.f32 %v6183, %v6300
        %v6397 = vadd.f32 %v6184, %v6302
        %v6398 = vadd.f32 %v6185, %v6301
        %v6399 = vadd.f32 %v6186, %v6303
        %v6400 = vadd.f32 %v6187, %v6305
        %v6401 = vadd.f32 %v6188, %v6304
        %v6402 = vadd.f32 %v6189, %v6306
        %v6403 = vadd.f32 %v6190, %v6308
        %v6404 = vadd.f32 %v6191, %v6307
        %v6405 = vadd.f32 %v6192, %v6309
        %v6406 = vadd.f32 %v6193, %v6311
        %v6407 = vadd.f32 %v6194, %v6310
        %v6408 = vadd.f32 %v6195, %v6312
        %v6409 = vadd.f32 %v6196, %v6314
        %v6410 = vadd.f32 %v6197, %v6313
        %v6411 = vadd.f32 %v6198, %v6315
        %v6412 = vadd.f32 %v6199, %v6317
        %v6413 = vadd.f32 %v6200, %v6316
        %s6414 = scalar_lea.vmem %s5, 2
        %v6415 = vld [vmem:[%s6414] sm:$0x1]
        %v6416 = vunpack.c.l.bf16 %v6032
        %v6417 = vunpack.c.l.bf16 %v6036
        %v6418 = vunpack.c.l.bf16 %v6040
        %v6419 = vunpack.c.l.bf16 %v6044
        %v6420 = vunpack.c.l.bf16 %v6048
        %v6421 = vunpack.c.l.bf16 %v6052
        %v6422 = vunpack.c.l.bf16 %v6056
        %v6423 = vunpack.c.l.bf16 %v6060
        %v6424 = vunpack.c.l.bf16 %v6064
        %v6425 = vunpack.c.l.bf16 %v6068
        %v6426 = vunpack.c.l.bf16 %v6072
        %v6427 = vunpack.c.l.bf16 %v6076
        %v6428 = vunpack.c.l.bf16 %v6080
        %v6429 = vunpack.c.l.bf16 %v6084
        %v6430 = vunpack.c.l.bf16 %v6088
        %v6431 = vunpack.c.l.bf16 %v6092
        %v6433 = vperm.slane %v6415, 0
        %v6435 = vmul.f32 %v6103, %v6433
        %v6436 = vmul.f32 %v6104, %v6433
        %v6437 = vmul.f32 %v6416, %v6433
        %v6438 = vmul.f32 %v6106, %v6433
        %v6439 = vmul.f32 %v6107, %v6433
        %v6440 = vmul.f32 %v6417, %v6433
        %v6441 = vmul.f32 %v6109, %v6433
        %v6442 = vmul.f32 %v6110, %v6433
        %v6443 = vmul.f32 %v6418, %v6433
        %v6444 = vmul.f32 %v6112, %v6433
        %v6445 = vmul.f32 %v6113, %v6433
        %v6446 = vmul.f32 %v6419, %v6433
        %v6447 = vmul.f32 %v6115, %v6433
        %v6448 = vmul.f32 %v6116, %v6433
        %v6449 = vmul.f32 %v6420, %v6433
        %v6450 = vmul.f32 %v6118, %v6433
        %v6451 = vmul.f32 %v6119, %v6433
        %v6452 = vmul.f32 %v6421, %v6433
        %v6453 = vmul.f32 %v6121, %v6433
        %v6454 = vmul.f32 %v6122, %v6433
        %v6455 = vmul.f32 %v6422, %v6433
        %v6456 = vmul.f32 %v6124, %v6433
        %v6457 = vmul.f32 %v6125, %v6433
        %v6458 = vmul.f32 %v6423, %v6433
        %v6459 = vmul.f32 %v6127, %v6433
        %v6460 = vmul.f32 %v6128, %v6433
        %v6461 = vmul.f32 %v6424, %v6433
        %v6462 = vmul.f32 %v6130, %v6433
        %v6463 = vmul.f32 %v6131, %v6433
        %v6464 = vmul.f32 %v6425, %v6433
        %v6465 = vmul.f32 %v6133, %v6433
        %v6466 = vmul.f32 %v6134, %v6433
        %v6467 = vmul.f32 %v6426, %v6433
        %v6468 = vmul.f32 %v6136, %v6433
        %v6469 = vmul.f32 %v6137, %v6433
        %v6470 = vmul.f32 %v6427, %v6433
        %v6471 = vmul.f32 %v6139, %v6433
        %v6472 = vmul.f32 %v6140, %v6433
        %v6473 = vmul.f32 %v6428, %v6433
        %v6474 = vmul.f32 %v6142, %v6433
        %v6475 = vmul.f32 %v6143, %v6433
        %v6476 = vmul.f32 %v6429, %v6433
        %v6477 = vmul.f32 %v6145, %v6433
        %v6478 = vmul.f32 %v6146, %v6433
        %v6479 = vmul.f32 %v6430, %v6433
        %v6480 = vmul.f32 %v6148, %v6433
        %v6481 = vmul.f32 %v6149, %v6433
        %v6482 = vmul.f32 %v6431, %v6433
        %v6531 = vrot.slane %v6435, 2
        %v6532 = vrot.slane %v6436, 2
        %v6533 = vsel %vm903, %v6531, %v6532
        %v6534 = vrot.slane %v6437, 2
        %v6535 = vsel %vm903, %v6532, %v6534
        %v6536 = vrot.slane %v6438, 2
        %v6537 = vrot.slane %v6439, 2
        %v6538 = vsel %vm903, %v6536, %v6537
        %v6539 = vrot.slane %v6440, 2
        %v6540 = vsel %vm903, %v6537, %v6539
        %v6541 = vrot.slane %v6441, 2
        %v6542 = vrot.slane %v6442, 2
        %v6543 = vsel %vm903, %v6541, %v6542
        %v6544 = vrot.slane %v6443, 2
        %v6545 = vsel %vm903, %v6542, %v6544
        %v6546 = vrot.slane %v6444, 2
        %v6547 = vrot.slane %v6445, 2
        %v6548 = vsel %vm903, %v6546, %v6547
        %v6549 = vrot.slane %v6446, 2
        %v6550 = vsel %vm903, %v6547, %v6549
        %v6551 = vrot.slane %v6447, 2
        %v6552 = vrot.slane %v6448, 2
        %v6553 = vsel %vm903, %v6551, %v6552
        %v6554 = vrot.slane %v6449, 2
        %v6555 = vsel %vm903, %v6552, %v6554
        %v6556 = vrot.slane %v6450, 2
        %v6557 = vrot.slane %v6451, 2
        %v6558 = vsel %vm903, %v6556, %v6557
        %v6559 = vrot.slane %v6452, 2
        %v6560 = vsel %vm903, %v6557, %v6559
        %v6561 = vrot.slane %v6453, 2
        %v6562 = vrot.slane %v6454, 2
        %v6563 = vsel %vm903, %v6561, %v6562
        %v6564 = vrot.slane %v6455, 2
        %v6565 = vsel %vm903, %v6562, %v6564
        %v6566 = vrot.slane %v6456, 2
        %v6567 = vrot.slane %v6457, 2
        %v6568 = vsel %vm903, %v6566, %v6567
        %v6569 = vrot.slane %v6458, 2
        %v6570 = vsel %vm903, %v6567, %v6569
        %v6571 = vrot.slane %v6459, 2
        %v6572 = vrot.slane %v6460, 2
        %v6573 = vsel %vm903, %v6571, %v6572
        %v6574 = vrot.slane %v6461, 2
        %v6575 = vsel %vm903, %v6572, %v6574
        %v6576 = vrot.slane %v6462, 2
        %v6577 = vrot.slane %v6463, 2
        %v6578 = vsel %vm903, %v6576, %v6577
        %v6579 = vrot.slane %v6464, 2
        %v6580 = vsel %vm903, %v6577, %v6579
        %v6581 = vrot.slane %v6465, 2
        %v6582 = vrot.slane %v6466, 2
        %v6583 = vsel %vm903, %v6581, %v6582
        %v6584 = vrot.slane %v6467, 2
        %v6585 = vsel %vm903, %v6582, %v6584
        %v6586 = vrot.slane %v6468, 2
        %v6587 = vrot.slane %v6469, 2
        %v6588 = vsel %vm903, %v6586, %v6587
        %v6589 = vrot.slane %v6470, 2
        %v6590 = vsel %vm903, %v6587, %v6589
        %v6591 = vrot.slane %v6471, 2
        %v6592 = vrot.slane %v6472, 2
        %v6593 = vsel %vm903, %v6591, %v6592
        %v6594 = vrot.slane %v6473, 2
        %v6595 = vsel %vm903, %v6592, %v6594
        %v6596 = vrot.slane %v6474, 2
        %v6597 = vrot.slane %v6475, 2
        %v6598 = vsel %vm903, %v6596, %v6597
        %v6599 = vrot.slane %v6476, 2
        %v6600 = vsel %vm903, %v6597, %v6599
        %v6601 = vrot.slane %v6477, 2
        %v6602 = vrot.slane %v6478, 2
        %v6603 = vsel %vm903, %v6601, %v6602
        %v6604 = vrot.slane %v6479, 2
        %v6605 = vsel %vm903, %v6602, %v6604
        %v6606 = vrot.slane %v6480, 2
        %v6607 = vrot.slane %v6481, 2
        %v6608 = vsel %vm903, %v6606, %v6607
        %v6609 = vrot.slane %v6482, 2
        %v6610 = vsel %vm903, %v6607, %v6609
        %v6659 = vadd.f32 %v6366, %v6531
        %v6660 = vadd.f32 %v6367, %v6533
        %v6661 = vadd.f32 %v6368, %v6535
        %v6662 = vadd.f32 %v6369, %v6536
        %v6663 = vadd.f32 %v6370, %v6538
        %v6664 = vadd.f32 %v6371, %v6540
        %v6665 = vadd.f32 %v6372, %v6541
        %v6666 = vadd.f32 %v6373, %v6543
        %v6667 = vadd.f32 %v6374, %v6545
        %v6668 = vadd.f32 %v6375, %v6546
        %v6669 = vadd.f32 %v6376, %v6548
        %v6670 = vadd.f32 %v6377, %v6550
        %v6671 = vadd.f32 %v6378, %v6551
        %v6672 = vadd.f32 %v6379, %v6553
        %v6673 = vadd.f32 %v6380, %v6555
        %v6674 = vadd.f32 %v6381, %v6556
        %v6675 = vadd.f32 %v6382, %v6558
        %v6676 = vadd.f32 %v6383, %v6560
        %v6677 = vadd.f32 %v6384, %v6561
        %v6678 = vadd.f32 %v6385, %v6563
        %v6679 = vadd.f32 %v6386, %v6565
        %v6680 = vadd.f32 %v6387, %v6566
        %v6681 = vadd.f32 %v6388, %v6568
        %v6682 = vadd.f32 %v6389, %v6570
        %v6683 = vadd.f32 %v6390, %v6571
        %v6684 = vadd.f32 %v6391, %v6573
        %v6685 = vadd.f32 %v6392, %v6575
        %v6686 = vadd.f32 %v6393, %v6576
        %v6687 = vadd.f32 %v6394, %v6578
        %v6688 = vadd.f32 %v6395, %v6580
        %v6689 = vadd.f32 %v6396, %v6581
        %v6690 = vadd.f32 %v6397, %v6583
        %v6691 = vadd.f32 %v6398, %v6585
        %v6692 = vadd.f32 %v6399, %v6586
        %v6693 = vadd.f32 %v6400, %v6588
        %v6694 = vadd.f32 %v6401, %v6590
        %v6695 = vadd.f32 %v6402, %v6591
        %v6696 = vadd.f32 %v6403, %v6593
        %v6697 = vadd.f32 %v6404, %v6595
        %v6698 = vadd.f32 %v6405, %v6596
        %v6699 = vadd.f32 %v6406, %v6598
        %v6700 = vadd.f32 %v6407, %v6600
        %v6701 = vadd.f32 %v6408, %v6601
        %v6702 = vadd.f32 %v6409, %v6603
        %v6703 = vadd.f32 %v6410, %v6605
        %v6704 = vadd.f32 %v6411, %v6606
        %v6705 = vadd.f32 %v6412, %v6608
        %v6706 = vadd.f32 %v6413, %v6610
        %s6707 = scalar_lea.vmem %s5, 3
        %v6708 = vld [vmem:[%s6707] sm:$0x1]
        %v6709 = vunpack.c.l.bf16 %v6093
        %v6710 = vunpack.c.l.bf16 %v6094
        %v6711 = vunpack.c.l.bf16 %v6095
        %v6713 = vperm.slane %v6708, 0
        %v6715 = vmul.f32 %v6105, %v6713
        %v6716 = vmul.f32 %v6106, %v6713
        %v6717 = vmul.f32 %v6107, %v6713
        %v6718 = vmul.f32 %v6108, %v6713
        %v6719 = vmul.f32 %v6109, %v6713
        %v6720 = vmul.f32 %v6110, %v6713
        %v6721 = vmul.f32 %v6111, %v6713
        %v6722 = vmul.f32 %v6112, %v6713
        %v6723 = vmul.f32 %v6113, %v6713
        %v6724 = vmul.f32 %v6114, %v6713
        %v6725 = vmul.f32 %v6115, %v6713
        %v6726 = vmul.f32 %v6116, %v6713
        %v6727 = vmul.f32 %v6117, %v6713
        %v6728 = vmul.f32 %v6118, %v6713
        %v6729 = vmul.f32 %v6119, %v6713
        %v6730 = vmul.f32 %v6120, %v6713
        %v6731 = vmul.f32 %v6121, %v6713
        %v6732 = vmul.f32 %v6122, %v6713
        %v6733 = vmul.f32 %v6123, %v6713
        %v6734 = vmul.f32 %v6124, %v6713
        %v6735 = vmul.f32 %v6125, %v6713
        %v6736 = vmul.f32 %v6126, %v6713
        %v6737 = vmul.f32 %v6127, %v6713
        %v6738 = vmul.f32 %v6128, %v6713
        %v6739 = vmul.f32 %v6129, %v6713
        %v6740 = vmul.f32 %v6130, %v6713
        %v6741 = vmul.f32 %v6131, %v6713
        %v6742 = vmul.f32 %v6132, %v6713
        %v6743 = vmul.f32 %v6133, %v6713
        %v6744 = vmul.f32 %v6134, %v6713
        %v6745 = vmul.f32 %v6135, %v6713
        %v6746 = vmul.f32 %v6136, %v6713
        %v6747 = vmul.f32 %v6137, %v6713
        %v6748 = vmul.f32 %v6138, %v6713
        %v6749 = vmul.f32 %v6139, %v6713
        %v6750 = vmul.f32 %v6140, %v6713
        %v6751 = vmul.f32 %v6141, %v6713
        %v6752 = vmul.f32 %v6142, %v6713
        %v6753 = vmul.f32 %v6143, %v6713
        %v6754 = vmul.f32 %v6144, %v6713
        %v6755 = vmul.f32 %v6145, %v6713
        %v6756 = vmul.f32 %v6146, %v6713
        %v6757 = vmul.f32 %v6147, %v6713
        %v6758 = vmul.f32 %v6148, %v6713
        %v6759 = vmul.f32 %v6149, %v6713
        %v6760 = vmul.f32 %v6709, %v6713
        %v6761 = vmul.f32 %v6710, %v6713
        %v6762 = vmul.f32 %v6711, %v6713
        %v6763 = vadd.f32 %v6659, %v6715
        %v6764 = vadd.f32 %v6660, %v6716
        %v6765 = vadd.f32 %v6661, %v6717
        %v6766 = vadd.f32 %v6662, %v6718
        %v6767 = vadd.f32 %v6663, %v6719
        %v6768 = vadd.f32 %v6664, %v6720
        %v6769 = vadd.f32 %v6665, %v6721
        %v6770 = vadd.f32 %v6666, %v6722
        %v6771 = vadd.f32 %v6667, %v6723
        %v6772 = vadd.f32 %v6668, %v6724
        %v6773 = vadd.f32 %v6669, %v6725
        %v6774 = vadd.f32 %v6670, %v6726
        %v6775 = vadd.f32 %v6671, %v6727
        %v6776 = vadd.f32 %v6672, %v6728
        %v6777 = vadd.f32 %v6673, %v6729
        %v6778 = vadd.f32 %v6674, %v6730
        %v6779 = vadd.f32 %v6675, %v6731
        %v6780 = vadd.f32 %v6676, %v6732
        %v6781 = vadd.f32 %v6677, %v6733
        %v6782 = vadd.f32 %v6678, %v6734
        %v6783 = vadd.f32 %v6679, %v6735
        %v6784 = vadd.f32 %v6680, %v6736
        %v6785 = vadd.f32 %v6681, %v6737
        %v6786 = vadd.f32 %v6682, %v6738
        %v6787 = vadd.f32 %v6683, %v6739
        %v6788 = vadd.f32 %v6684, %v6740
        %v6789 = vadd.f32 %v6685, %v6741
        %v6790 = vadd.f32 %v6686, %v6742
        %v6791 = vadd.f32 %v6687, %v6743
        %v6792 = vadd.f32 %v6688, %v6744
        %v6793 = vadd.f32 %v6689, %v6745
        %v6794 = vadd.f32 %v6690, %v6746
        %v6795 = vadd.f32 %v6691, %v6747
        %v6796 = vadd.f32 %v6692, %v6748
        %v6797 = vadd.f32 %v6693, %v6749
        %v6798 = vadd.f32 %v6694, %v6750
        %v6799 = vadd.f32 %v6695, %v6751
        %v6800 = vadd.f32 %v6696, %v6752
        %v6801 = vadd.f32 %v6697, %v6753
        %v6802 = vadd.f32 %v6698, %v6754
        %v6803 = vadd.f32 %v6699, %v6755
        %v6804 = vadd.f32 %v6700, %v6756
        %v6805 = vadd.f32 %v6701, %v6757
        %v6806 = vadd.f32 %v6702, %v6758
        %v6807 = vadd.f32 %v6703, %v6759
        %v6808 = vadd.f32 %v6704, %v6760
        %v6809 = vadd.f32 %v6705, %v6761
        %v6810 = vadd.f32 %v6706, %v6762
        %s6811 = scalar_lea.vmem %s5, 4
        %v6812 = vld [vmem:[%s6811] sm:$0x1]
        %v6814 = vperm.slane %v6812, 0
        %v6816 = vmul.f32 %v6106, %v6814
        %v6817 = vmul.f32 %v6107, %v6814
        %v6818 = vmul.f32 %v6109, %v6814
        %v6819 = vmul.f32 %v6110, %v6814
        %v6820 = vmul.f32 %v6112, %v6814
        %v6821 = vmul.f32 %v6113, %v6814
        %v6822 = vmul.f32 %v6115, %v6814
        %v6823 = vmul.f32 %v6116, %v6814
        %v6824 = vmul.f32 %v6118, %v6814
        %v6825 = vmul.f32 %v6119, %v6814
        %v6826 = vmul.f32 %v6121, %v6814
        %v6827 = vmul.f32 %v6122, %v6814
        %v6828 = vmul.f32 %v6124, %v6814
        %v6829 = vmul.f32 %v6125, %v6814
        %v6830 = vmul.f32 %v6127, %v6814
        %v6831 = vmul.f32 %v6128, %v6814
        %v6832 = vmul.f32 %v6130, %v6814
        %v6833 = vmul.f32 %v6131, %v6814
        %v6834 = vmul.f32 %v6133, %v6814
        %v6835 = vmul.f32 %v6134, %v6814
        %v6836 = vmul.f32 %v6136, %v6814
        %v6837 = vmul.f32 %v6137, %v6814
        %v6838 = vmul.f32 %v6139, %v6814
        %v6839 = vmul.f32 %v6140, %v6814
        %v6840 = vmul.f32 %v6142, %v6814
        %v6841 = vmul.f32 %v6143, %v6814
        %v6842 = vmul.f32 %v6145, %v6814
        %v6843 = vmul.f32 %v6146, %v6814
        %v6844 = vmul.f32 %v6148, %v6814
        %v6845 = vmul.f32 %v6149, %v6814
        %v6846 = vmul.f32 %v6710, %v6814
        %v6847 = vmul.f32 %v6711, %v6814
        %v6880 = vrot.slane %v6816, 1
        %v6881 = vrot.slane %v6817, 1
        %v6882 = vsel %vm597, %v6880, %v6881
        %v6883 = vrot.slane %v6818, 1
        %v6884 = vrot.slane %v6819, 1
        %v6885 = vsel %vm597, %v6883, %v6884
        %v6886 = vrot.slane %v6820, 1
        %v6887 = vrot.slane %v6821, 1
        %v6888 = vsel %vm597, %v6886, %v6887
        %v6889 = vrot.slane %v6822, 1
        %v6890 = vrot.slane %v6823, 1
        %v6891 = vsel %vm597, %v6889, %v6890
        %v6892 = vrot.slane %v6824, 1
        %v6893 = vrot.slane %v6825, 1
        %v6894 = vsel %vm597, %v6892, %v6893
        %v6895 = vrot.slane %v6826, 1
        %v6896 = vrot.slane %v6827, 1
        %v6897 = vsel %vm597, %v6895, %v6896
        %v6898 = vrot.slane %v6828, 1
        %v6899 = vrot.slane %v6829, 1
        %v6900 = vsel %vm597, %v6898, %v6899
        %v6901 = vrot.slane %v6830, 1
        %v6902 = vrot.slane %v6831, 1
        %v6903 = vsel %vm597, %v6901, %v6902
        %v6904 = vrot.slane %v6832, 1
        %v6905 = vrot.slane %v6833, 1
        %v6906 = vsel %vm597, %v6904, %v6905
        %v6907 = vrot.slane %v6834, 1
        %v6908 = vrot.slane %v6835, 1
        %v6909 = vsel %vm597, %v6907, %v6908
        %v6910 = vrot.slane %v6836, 1
        %v6911 = vrot.slane %v6837, 1
        %v6912 = vsel %vm597, %v6910, %v6911
        %v6913 = vrot.slane %v6838, 1
        %v6914 = vrot.slane %v6839, 1
        %v6915 = vsel %vm597, %v6913, %v6914
        %v6916 = vrot.slane %v6840, 1
        %v6917 = vrot.slane %v6841, 1
        %v6918 = vsel %vm597, %v6916, %v6917
        %v6919 = vrot.slane %v6842, 1
        %v6920 = vrot.slane %v6843, 1
        %v6921 = vsel %vm597, %v6919, %v6920
        %v6922 = vrot.slane %v6844, 1
        %v6923 = vrot.slane %v6845, 1
        %v6924 = vsel %vm597, %v6922, %v6923
        %v6925 = vrot.slane %v6846, 1
        %v6926 = vrot.slane %v6847, 1
        %v6927 = vsel %vm597, %v6925, %v6926
        %v6976 = vadd.f32 %v6763, %v6880
        %v6977 = vadd.f32 %v6764, %v6882
        %v6978 = vadd.f32 %v6765, %v6881
        %v6979 = vadd.f32 %v6766, %v6883
        %v6980 = vadd.f32 %v6767, %v6885
        %v6981 = vadd.f32 %v6768, %v6884
        %v6982 = vadd.f32 %v6769, %v6886
        %v6983 = vadd.f32 %v6770, %v6888
        %v6984 = vadd.f32 %v6771, %v6887
        %v6985 = vadd.f32 %v6772, %v6889
        %v6986 = vadd.f32 %v6773, %v6891
        %v6987 = vadd.f32 %v6774, %v6890
        %v6988 = vadd.f32 %v6775, %v6892
        %v6989 = vadd.f32 %v6776, %v6894
        %v6990 = vadd.f32 %v6777, %v6893
        %v6991 = vadd.f32 %v6778, %v6895
        %v6992 = vadd.f32 %v6779, %v6897
        %v6993 = vadd.f32 %v6780, %v6896
        %v6994 = vadd.f32 %v6781, %v6898
        %v6995 = vadd.f32 %v6782, %v6900
        %v6996 = vadd.f32 %v6783, %v6899
        %v6997 = vadd.f32 %v6784, %v6901
        %v6998 = vadd.f32 %v6785, %v6903
        %v6999 = vadd.f32 %v6786, %v6902
        %v7000 = vadd.f32 %v6787, %v6904
        %v7001 = vadd.f32 %v6788, %v6906
        %v7002 = vadd.f32 %v6789, %v6905
        %v7003 = vadd.f32 %v6790, %v6907
        %v7004 = vadd.f32 %v6791, %v6909
        %v7005 = vadd.f32 %v6792, %v6908
        %v7006 = vadd.f32 %v6793, %v6910
        %v7007 = vadd.f32 %v6794, %v6912
        %v7008 = vadd.f32 %v6795, %v6911
        %v7009 = vadd.f32 %v6796, %v6913
        %v7010 = vadd.f32 %v6797, %v6915
        %v7011 = vadd.f32 %v6798, %v6914
        %v7012 = vadd.f32 %v6799, %v6916
        %v7013 = vadd.f32 %v6800, %v6918
        %v7014 = vadd.f32 %v6801, %v6917
        %v7015 = vadd.f32 %v6802, %v6919
        %v7016 = vadd.f32 %v6803, %v6921
        %v7017 = vadd.f32 %v6804, %v6920
        %v7018 = vadd.f32 %v6805, %v6922
        %v7019 = vadd.f32 %v6806, %v6924
        %v7020 = vadd.f32 %v6807, %v6923
        %v7021 = vadd.f32 %v6808, %v6925
        %v7022 = vadd.f32 %v6809, %v6927
        %v7023 = vadd.f32 %v6810, %v6926
        %s7024 = scalar_lea.vmem %s5, 5
        %v7025 = vld [vmem:[%s7024] sm:$0x1]
        %v7026 = vunpack.c.l.bf16 %v6096
        %v7028 = vperm.slane %v7025, 0
        %v7030 = vmul.f32 %v6106, %v7028
        %v7031 = vmul.f32 %v6107, %v7028
        %v7032 = vmul.f32 %v6417, %v7028
        %v7033 = vmul.f32 %v6109, %v7028
        %v7034 = vmul.f32 %v6110, %v7028
        %v7035 = vmul.f32 %v6418, %v7028
        %v7036 = vmul.f32 %v6112, %v7028
        %v7037 = vmul.f32 %v6113, %v7028
        %v7038 = vmul.f32 %v6419, %v7028
        %v7039 = vmul.f32 %v6115, %v7028
        %v7040 = vmul.f32 %v6116, %v7028
        %v7041 = vmul.f32 %v6420, %v7028
        %v7042 = vmul.f32 %v6118, %v7028
        %v7043 = vmul.f32 %v6119, %v7028
        %v7044 = vmul.f32 %v6421, %v7028
        %v7045 = vmul.f32 %v6121, %v7028
        %v7046 = vmul.f32 %v6122, %v7028
        %v7047 = vmul.f32 %v6422, %v7028
        %v7048 = vmul.f32 %v6124, %v7028
        %v7049 = vmul.f32 %v6125, %v7028
        %v7050 = vmul.f32 %v6423, %v7028
        %v7051 = vmul.f32 %v6127, %v7028
        %v7052 = vmul.f32 %v6128, %v7028
        %v7053 = vmul.f32 %v6424, %v7028
        %v7054 = vmul.f32 %v6130, %v7028
        %v7055 = vmul.f32 %v6131, %v7028
        %v7056 = vmul.f32 %v6425, %v7028
        %v7057 = vmul.f32 %v6133, %v7028
        %v7058 = vmul.f32 %v6134, %v7028
        %v7059 = vmul.f32 %v6426, %v7028
        %v7060 = vmul.f32 %v6136, %v7028
        %v7061 = vmul.f32 %v6137, %v7028
        %v7062 = vmul.f32 %v6427, %v7028
        %v7063 = vmul.f32 %v6139, %v7028
        %v7064 = vmul.f32 %v6140, %v7028
        %v7065 = vmul.f32 %v6428, %v7028
        %v7066 = vmul.f32 %v6142, %v7028
        %v7067 = vmul.f32 %v6143, %v7028
        %v7068 = vmul.f32 %v6429, %v7028
        %v7069 = vmul.f32 %v6145, %v7028
        %v7070 = vmul.f32 %v6146, %v7028
        %v7071 = vmul.f32 %v6430, %v7028
        %v7072 = vmul.f32 %v6148, %v7028
        %v7073 = vmul.f32 %v6149, %v7028
        %v7074 = vmul.f32 %v6431, %v7028
        %v7075 = vmul.f32 %v6710, %v7028
        %v7076 = vmul.f32 %v6711, %v7028
        %v7077 = vmul.f32 %v7026, %v7028
        %v7126 = vrot.slane %v7030, 2
        %v7127 = vrot.slane %v7031, 2
        %v7128 = vsel %vm903, %v7126, %v7127
        %v7129 = vrot.slane %v7032, 2
        %v7130 = vsel %vm903, %v7127, %v7129
        %v7131 = vrot.slane %v7033, 2
        %v7132 = vrot.slane %v7034, 2
        %v7133 = vsel %vm903, %v7131, %v7132
        %v7134 = vrot.slane %v7035, 2
        %v7135 = vsel %vm903, %v7132, %v7134
        %v7136 = vrot.slane %v7036, 2
        %v7137 = vrot.slane %v7037, 2
        %v7138 = vsel %vm903, %v7136, %v7137
        %v7139 = vrot.slane %v7038, 2
        %v7140 = vsel %vm903, %v7137, %v7139
        %v7141 = vrot.slane %v7039, 2
        %v7142 = vrot.slane %v7040, 2
        %v7143 = vsel %vm903, %v7141, %v7142
        %v7144 = vrot.slane %v7041, 2
        %v7145 = vsel %vm903, %v7142, %v7144
        %v7146 = vrot.slane %v7042, 2
        %v7147 = vrot.slane %v7043, 2
        %v7148 = vsel %vm903, %v7146, %v7147
        %v7149 = vrot.slane %v7044, 2
        %v7150 = vsel %vm903, %v7147, %v7149
        %v7151 = vrot.slane %v7045, 2
        %v7152 = vrot.slane %v7046, 2
        %v7153 = vsel %vm903, %v7151, %v7152
        %v7154 = vrot.slane %v7047, 2
        %v7155 = vsel %vm903, %v7152, %v7154
        %v7156 = vrot.slane %v7048, 2
        %v7157 = vrot.slane %v7049, 2
        %v7158 = vsel %vm903, %v7156, %v7157
        %v7159 = vrot.slane %v7050, 2
        %v7160 = vsel %vm903, %v7157, %v7159
        %v7161 = vrot.slane %v7051, 2
        %v7162 = vrot.slane %v7052, 2
        %v7163 = vsel %vm903, %v7161, %v7162
        %v7164 = vrot.slane %v7053, 2
        %v7165 = vsel %vm903, %v7162, %v7164
        %v7166 = vrot.slane %v7054, 2
        %v7167 = vrot.slane %v7055, 2
        %v7168 = vsel %vm903, %v7166, %v7167
        %v7169 = vrot.slane %v7056, 2
        %v7170 = vsel %vm903, %v7167, %v7169
        %v7171 = vrot.slane %v7057, 2
        %v7172 = vrot.slane %v7058, 2
        %v7173 = vsel %vm903, %v7171, %v7172
        %v7174 = vrot.slane %v7059, 2
        %v7175 = vsel %vm903, %v7172, %v7174
        %v7176 = vrot.slane %v7060, 2
        %v7177 = vrot.slane %v7061, 2
        %v7178 = vsel %vm903, %v7176, %v7177
        %v7179 = vrot.slane %v7062, 2
        %v7180 = vsel %vm903, %v7177, %v7179
        %v7181 = vrot.slane %v7063, 2
        %v7182 = vrot.slane %v7064, 2
        %v7183 = vsel %vm903, %v7181, %v7182
        %v7184 = vrot.slane %v7065, 2
        %v7185 = vsel %vm903, %v7182, %v7184
        %v7186 = vrot.slane %v7066, 2
        %v7187 = vrot.slane %v7067, 2
        %v7188 = vsel %vm903, %v7186, %v7187
        %v7189 = vrot.slane %v7068, 2
        %v7190 = vsel %vm903, %v7187, %v7189
        %v7191 = vrot.slane %v7069, 2
        %v7192 = vrot.slane %v7070, 2
        %v7193 = vsel %vm903, %v7191, %v7192
        %v7194 = vrot.slane %v7071, 2
        %v7195 = vsel %vm903, %v7192, %v7194
        %v7196 = vrot.slane %v7072, 2
        %v7197 = vrot.slane %v7073, 2
        %v7198 = vsel %vm903, %v7196, %v7197
        %v7199 = vrot.slane %v7074, 2
        %v7200 = vsel %vm903, %v7197, %v7199
        %v7201 = vrot.slane %v7075, 2
        %v7202 = vrot.slane %v7076, 2
        %v7203 = vsel %vm903, %v7201, %v7202
        %v7204 = vrot.slane %v7077, 2
        %v7205 = vsel %vm903, %v7202, %v7204
        %v7254 = vadd.f32 %v6976, %v7126
        %v7255 = vadd.f32 %v6977, %v7128
        %v7256 = vadd.f32 %v6978, %v7130
        %v7257 = vadd.f32 %v6979, %v7131
        %v7258 = vadd.f32 %v6980, %v7133
        %v7259 = vadd.f32 %v6981, %v7135
        %v7260 = vadd.f32 %v6982, %v7136
        %v7261 = vadd.f32 %v6983, %v7138
        %v7262 = vadd.f32 %v6984, %v7140
        %v7263 = vadd.f32 %v6985, %v7141
        %v7264 = vadd.f32 %v6986, %v7143
        %v7265 = vadd.f32 %v6987, %v7145
        %v7266 = vadd.f32 %v6988, %v7146
        %v7267 = vadd.f32 %v6989, %v7148
        %v7268 = vadd.f32 %v6990, %v7150
        %v7269 = vadd.f32 %v6991, %v7151
        %v7270 = vadd.f32 %v6992, %v7153
        %v7271 = vadd.f32 %v6993, %v7155
        %v7272 = vadd.f32 %v6994, %v7156
        %v7273 = vadd.f32 %v6995, %v7158
        %v7274 = vadd.f32 %v6996, %v7160
        %v7275 = vadd.f32 %v6997, %v7161
        %v7276 = vadd.f32 %v6998, %v7163
        %v7277 = vadd.f32 %v6999, %v7165
        %v7278 = vadd.f32 %v7000, %v7166
        %v7279 = vadd.f32 %v7001, %v7168
        %v7280 = vadd.f32 %v7002, %v7170
        %v7281 = vadd.f32 %v7003, %v7171
        %v7282 = vadd.f32 %v7004, %v7173
        %v7283 = vadd.f32 %v7005, %v7175
        %v7284 = vadd.f32 %v7006, %v7176
        %v7285 = vadd.f32 %v7007, %v7178
        %v7286 = vadd.f32 %v7008, %v7180
        %v7287 = vadd.f32 %v7009, %v7181
        %v7288 = vadd.f32 %v7010, %v7183
        %v7289 = vadd.f32 %v7011, %v7185
        %v7290 = vadd.f32 %v7012, %v7186
        %v7291 = vadd.f32 %v7013, %v7188
        %v7292 = vadd.f32 %v7014, %v7190
        %v7293 = vadd.f32 %v7015, %v7191
        %v7294 = vadd.f32 %v7016, %v7193
        %v7295 = vadd.f32 %v7017, %v7195
        %v7296 = vadd.f32 %v7018, %v7196
        %v7297 = vadd.f32 %v7019, %v7198
        %v7298 = vadd.f32 %v7020, %v7200
        %v7299 = vadd.f32 %v7021, %v7201
        %v7300 = vadd.f32 %v7022, %v7203
        %v7301 = vadd.f32 %v7023, %v7205
        %s7302 = scalar_lea.vmem %s5, 6
        %v7303 = vld [vmem:[%s7302] sm:$0x1]
        %v7304 = vunpack.c.l.bf16 %v6097
        %v7305 = vunpack.c.l.bf16 %v6098
        %v7306 = vunpack.c.l.bf16 %v6099
        %v7308 = vperm.slane %v7303, 0
        %v7310 = vmul.f32 %v6108, %v7308
        %v7311 = vmul.f32 %v6109, %v7308
        %v7312 = vmul.f32 %v6110, %v7308
        %v7313 = vmul.f32 %v6111, %v7308
        %v7314 = vmul.f32 %v6112, %v7308
        %v7315 = vmul.f32 %v6113, %v7308
        %v7316 = vmul.f32 %v6114, %v7308
        %v7317 = vmul.f32 %v6115, %v7308
        %v7318 = vmul.f32 %v6116, %v7308
        %v7319 = vmul.f32 %v6117, %v7308
        %v7320 = vmul.f32 %v6118, %v7308
        %v7321 = vmul.f32 %v6119, %v7308
        %v7322 = vmul.f32 %v6120, %v7308
        %v7323 = vmul.f32 %v6121, %v7308
        %v7324 = vmul.f32 %v6122, %v7308
        %v7325 = vmul.f32 %v6123, %v7308
        %v7326 = vmul.f32 %v6124, %v7308
        %v7327 = vmul.f32 %v6125, %v7308
        %v7328 = vmul.f32 %v6126, %v7308
        %v7329 = vmul.f32 %v6127, %v7308
        %v7330 = vmul.f32 %v6128, %v7308
        %v7331 = vmul.f32 %v6129, %v7308
        %v7332 = vmul.f32 %v6130, %v7308
        %v7333 = vmul.f32 %v6131, %v7308
        %v7334 = vmul.f32 %v6132, %v7308
        %v7335 = vmul.f32 %v6133, %v7308
        %v7336 = vmul.f32 %v6134, %v7308
        %v7337 = vmul.f32 %v6135, %v7308
        %v7338 = vmul.f32 %v6136, %v7308
        %v7339 = vmul.f32 %v6137, %v7308
        %v7340 = vmul.f32 %v6138, %v7308
        %v7341 = vmul.f32 %v6139, %v7308
        %v7342 = vmul.f32 %v6140, %v7308
        %v7343 = vmul.f32 %v6141, %v7308
        %v7344 = vmul.f32 %v6142, %v7308
        %v7345 = vmul.f32 %v6143, %v7308
        %v7346 = vmul.f32 %v6144, %v7308
        %v7347 = vmul.f32 %v6145, %v7308
        %v7348 = vmul.f32 %v6146, %v7308
        %v7349 = vmul.f32 %v6147, %v7308
        %v7350 = vmul.f32 %v6148, %v7308
        %v7351 = vmul.f32 %v6149, %v7308
        %v7352 = vmul.f32 %v6709, %v7308
        %v7353 = vmul.f32 %v6710, %v7308
        %v7354 = vmul.f32 %v6711, %v7308
        %v7355 = vmul.f32 %v7304, %v7308
        %v7356 = vmul.f32 %v7305, %v7308
        %v7357 = vmul.f32 %v7306, %v7308
        %v7358 = vadd.f32 %v7254, %v7310
        %v7359 = vadd.f32 %v7255, %v7311
        %v7360 = vadd.f32 %v7256, %v7312
        %v7361 = vadd.f32 %v7257, %v7313
        %v7362 = vadd.f32 %v7258, %v7314
        %v7363 = vadd.f32 %v7259, %v7315
        %v7364 = vadd.f32 %v7260, %v7316
        %v7365 = vadd.f32 %v7261, %v7317
        %v7366 = vadd.f32 %v7262, %v7318
        %v7367 = vadd.f32 %v7263, %v7319
        %v7368 = vadd.f32 %v7264, %v7320
        %v7369 = vadd.f32 %v7265, %v7321
        %v7370 = vadd.f32 %v7266, %v7322
        %v7371 = vadd.f32 %v7267, %v7323
        %v7372 = vadd.f32 %v7268, %v7324
        %v7373 = vadd.f32 %v7269, %v7325
        %v7374 = vadd.f32 %v7270, %v7326
        %v7375 = vadd.f32 %v7271, %v7327
        %v7376 = vadd.f32 %v7272, %v7328
        %v7377 = vadd.f32 %v7273, %v7329
        %v7378 = vadd.f32 %v7274, %v7330
        %v7379 = vadd.f32 %v7275, %v7331
        %v7380 = vadd.f32 %v7276, %v7332
        %v7381 = vadd.f32 %v7277, %v7333
        %v7382 = vadd.f32 %v7278, %v7334
        %v7383 = vadd.f32 %v7279, %v7335
        %v7384 = vadd.f32 %v7280, %v7336
        %v7385 = vadd.f32 %v7281, %v7337
        %v7386 = vadd.f32 %v7282, %v7338
        %v7387 = vadd.f32 %v7283, %v7339
        %v7388 = vadd.f32 %v7284, %v7340
        %v7389 = vadd.f32 %v7285, %v7341
        %v7390 = vadd.f32 %v7286, %v7342
        %v7391 = vadd.f32 %v7287, %v7343
        %v7392 = vadd.f32 %v7288, %v7344
        %v7393 = vadd.f32 %v7289, %v7345
        %v7394 = vadd.f32 %v7290, %v7346
        %v7395 = vadd.f32 %v7291, %v7347
        %v7396 = vadd.f32 %v7292, %v7348
        %v7397 = vadd.f32 %v7293, %v7349
        %v7398 = vadd.f32 %v7294, %v7350
        %v7399 = vadd.f32 %v7295, %v7351
        %v7400 = vadd.f32 %v7296, %v7352
        %v7401 = vadd.f32 %v7297, %v7353
        %v7402 = vadd.f32 %v7298, %v7354
        %v7403 = vadd.f32 %v7299, %v7355
        %v7404 = vadd.f32 %v7300, %v7356
        %v7405 = vadd.f32 %v7301, %v7357
        %s7406 = scalar_lea.vmem %s5, 7
        %v7407 = vld [vmem:[%s7406] sm:$0x1]
        %v7409 = vperm.slane %v7407, 0
        %v7411 = vmul.f32 %v6109, %v7409
        %v7412 = vmul.f32 %v6110, %v7409
        %v7413 = vmul.f32 %v6112, %v7409
        %v7414 = vmul.f32 %v6113, %v7409
        %v7415 = vmul.f32 %v6115, %v7409
        %v7416 = vmul.f32 %v6116, %v7409
        %v7417 = vmul.f32 %v6118, %v7409
        %v7418 = vmul.f32 %v6119, %v7409
        %v7419 = vmul.f32 %v6121, %v7409
        %v7420 = vmul.f32 %v6122, %v7409
        %v7421 = vmul.f32 %v6124, %v7409
        %v7422 = vmul.f32 %v6125, %v7409
        %v7423 = vmul.f32 %v6127, %v7409
        %v7424 = vmul.f32 %v6128, %v7409
        %v7425 = vmul.f32 %v6130, %v7409
        %v7426 = vmul.f32 %v6131, %v7409
        %v7427 = vmul.f32 %v6133, %v7409
        %v7428 = vmul.f32 %v6134, %v7409
        %v7429 = vmul.f32 %v6136, %v7409
        %v7430 = vmul.f32 %v6137, %v7409
        %v7431 = vmul.f32 %v6139, %v7409
        %v7432 = vmul.f32 %v6140, %v7409
        %v7433 = vmul.f32 %v6142, %v7409
        %v7434 = vmul.f32 %v6143, %v7409
        %v7435 = vmul.f32 %v6145, %v7409
        %v7436 = vmul.f32 %v6146, %v7409
        %v7437 = vmul.f32 %v6148, %v7409
        %v7438 = vmul.f32 %v6149, %v7409
        %v7439 = vmul.f32 %v6710, %v7409
        %v7440 = vmul.f32 %v6711, %v7409
        %v7441 = vmul.f32 %v7305, %v7409
        %v7442 = vmul.f32 %v7306, %v7409
        %v7475 = vrot.slane %v7411, 1
        %v7476 = vrot.slane %v7412, 1
        %v7477 = vsel %vm597, %v7475, %v7476
        %v7478 = vrot.slane %v7413, 1
        %v7479 = vrot.slane %v7414, 1
        %v7480 = vsel %vm597, %v7478, %v7479
        %v7481 = vrot.slane %v7415, 1
        %v7482 = vrot.slane %v7416, 1
        %v7483 = vsel %vm597, %v7481, %v7482
        %v7484 = vrot.slane %v7417, 1
        %v7485 = vrot.slane %v7418, 1
        %v7486 = vsel %vm597, %v7484, %v7485
        %v7487 = vrot.slane %v7419, 1
        %v7488 = vrot.slane %v7420, 1
        %v7489 = vsel %vm597, %v7487, %v7488
        %v7490 = vrot.slane %v7421, 1
        %v7491 = vrot.slane %v7422, 1
        %v7492 = vsel %vm597, %v7490, %v7491
        %v7493 = vrot.slane %v7423, 1
        %v7494 = vrot.slane %v7424, 1
        %v7495 = vsel %vm597, %v7493, %v7494
        %v7496 = vrot.slane %v7425, 1
        %v7497 = vrot.slane %v7426, 1
        %v7498 = vsel %vm597, %v7496, %v7497
        %v7499 = vrot.slane %v7427, 1
        %v7500 = vrot.slane %v7428, 1
        %v7501 = vsel %vm597, %v7499, %v7500
        %v7502 = vrot.slane %v7429, 1
        %v7503 = vrot.slane %v7430, 1
        %v7504 = vsel %vm597, %v7502, %v7503
        %v7505 = vrot.slane %v7431, 1
        %v7506 = vrot.slane %v7432, 1
        %v7507 = vsel %vm597, %v7505, %v7506
        %v7508 = vrot.slane %v7433, 1
        %v7509 = vrot.slane %v7434, 1
        %v7510 = vsel %vm597, %v7508, %v7509
        %v7511 = vrot.slane %v7435, 1
        %v7512 = vrot.slane %v7436, 1
        %v7513 = vsel %vm597, %v7511, %v7512
        %v7514 = vrot.slane %v7437, 1
        %v7515 = vrot.slane %v7438, 1
        %v7516 = vsel %vm597, %v7514, %v7515
        %v7517 = vrot.slane %v7439, 1
        %v7518 = vrot.slane %v7440, 1
        %v7519 = vsel %vm597, %v7517, %v7518
        %v7520 = vrot.slane %v7441, 1
        %v7521 = vrot.slane %v7442, 1
        %v7522 = vsel %vm597, %v7520, %v7521
        %v7571 = vadd.f32 %v7358, %v7475
        %v7572 = vadd.f32 %v7359, %v7477
        %v7573 = vadd.f32 %v7360, %v7476
        %v7574 = vadd.f32 %v7361, %v7478
        %v7575 = vadd.f32 %v7362, %v7480
        %v7576 = vadd.f32 %v7363, %v7479
        %v7577 = vadd.f32 %v7364, %v7481
        %v7578 = vadd.f32 %v7365, %v7483
        %v7579 = vadd.f32 %v7366, %v7482
        %v7580 = vadd.f32 %v7367, %v7484
        %v7581 = vadd.f32 %v7368, %v7486
        %v7582 = vadd.f32 %v7369, %v7485
        %v7583 = vadd.f32 %v7370, %v7487
        %v7584 = vadd.f32 %v7371, %v7489
        %v7585 = vadd.f32 %v7372, %v7488
        %v7586 = vadd.f32 %v7373, %v7490
        %v7587 = vadd.f32 %v7374, %v7492
        %v7588 = vadd.f32 %v7375, %v7491
        %v7589 = vadd.f32 %v7376, %v7493
        %v7590 = vadd.f32 %v7377, %v7495
        %v7591 = vadd.f32 %v7378, %v7494
        %v7592 = vadd.f32 %v7379, %v7496
        %v7593 = vadd.f32 %v7380, %v7498
        %v7594 = vadd.f32 %v7381, %v7497
        %v7595 = vadd.f32 %v7382, %v7499
        %v7596 = vadd.f32 %v7383, %v7501
        %v7597 = vadd.f32 %v7384, %v7500
        %v7598 = vadd.f32 %v7385, %v7502
        %v7599 = vadd.f32 %v7386, %v7504
        %v7600 = vadd.f32 %v7387, %v7503
        %v7601 = vadd.f32 %v7388, %v7505
        %v7602 = vadd.f32 %v7389, %v7507
        %v7603 = vadd.f32 %v7390, %v7506
        %v7604 = vadd.f32 %v7391, %v7508
        %v7605 = vadd.f32 %v7392, %v7510
        %v7606 = vadd.f32 %v7393, %v7509
        %v7607 = vadd.f32 %v7394, %v7511
        %v7608 = vadd.f32 %v7395, %v7513
        %v7609 = vadd.f32 %v7396, %v7512
        %v7610 = vadd.f32 %v7397, %v7514
        %v7611 = vadd.f32 %v7398, %v7516
        %v7612 = vadd.f32 %v7399, %v7515
        %v7613 = vadd.f32 %v7400, %v7517
        %v7614 = vadd.f32 %v7401, %v7519
        %v7615 = vadd.f32 %v7402, %v7518
        %v7616 = vadd.f32 %v7403, %v7520
        %v7617 = vadd.f32 %v7404, %v7522
        %v7618 = vadd.f32 %v7405, %v7521
        %s7619 = scalar_lea.vmem %s5, 8
        %v7620 = vld [vmem:[%s7619] sm:$0x1]
        %v7621 = vunpack.c.l.bf16 %v6100
        %v7623 = vperm.slane %v7620, 0
        %v7625 = vmul.f32 %v6109, %v7623
        %v7626 = vmul.f32 %v6110, %v7623
        %v7627 = vmul.f32 %v6418, %v7623
        %v7628 = vmul.f32 %v6112, %v7623
        %v7629 = vmul.f32 %v6113, %v7623
        %v7630 = vmul.f32 %v6419, %v7623
        %v7631 = vmul.f32 %v6115, %v7623
        %v7632 = vmul.f32 %v6116, %v7623
        %v7633 = vmul.f32 %v6420, %v7623
        %v7634 = vmul.f32 %v6118, %v7623
        %v7635 = vmul.f32 %v6119, %v7623
        %v7636 = vmul.f32 %v6421, %v7623
        %v7637 = vmul.f32 %v6121, %v7623
        %v7638 = vmul.f32 %v6122, %v7623
        %v7639 = vmul.f32 %v6422, %v7623
        %v7640 = vmul.f32 %v6124, %v7623
        %v7641 = vmul.f32 %v6125, %v7623
        %v7642 = vmul.f32 %v6423, %v7623
        %v7643 = vmul.f32 %v6127, %v7623
        %v7644 = vmul.f32 %v6128, %v7623
        %v7645 = vmul.f32 %v6424, %v7623
        %v7646 = vmul.f32 %v6130, %v7623
        %v7647 = vmul.f32 %v6131, %v7623
        %v7648 = vmul.f32 %v6425, %v7623
        %v7649 = vmul.f32 %v6133, %v7623
        %v7650 = vmul.f32 %v6134, %v7623
        %v7651 = vmul.f32 %v6426, %v7623
        %v7652 = vmul.f32 %v6136, %v7623
        %v7653 = vmul.f32 %v6137, %v7623
        %v7654 = vmul.f32 %v6427, %v7623
        %v7655 = vmul.f32 %v6139, %v7623
        %v7656 = vmul.f32 %v6140, %v7623
        %v7657 = vmul.f32 %v6428, %v7623
        %v7658 = vmul.f32 %v6142, %v7623
        %v7659 = vmul.f32 %v6143, %v7623
        %v7660 = vmul.f32 %v6429, %v7623
        %v7661 = vmul.f32 %v6145, %v7623
        %v7662 = vmul.f32 %v6146, %v7623
        %v7663 = vmul.f32 %v6430, %v7623
        %v7664 = vmul.f32 %v6148, %v7623
        %v7665 = vmul.f32 %v6149, %v7623
        %v7666 = vmul.f32 %v6431, %v7623
        %v7667 = vmul.f32 %v6710, %v7623
        %v7668 = vmul.f32 %v6711, %v7623
        %v7669 = vmul.f32 %v7026, %v7623
        %v7670 = vmul.f32 %v7305, %v7623
        %v7671 = vmul.f32 %v7306, %v7623
        %v7672 = vmul.f32 %v7621, %v7623
        %v7721 = vrot.slane %v7625, 2
        %v7722 = vrot.slane %v7626, 2
        %v7723 = vsel %vm903, %v7721, %v7722
        %v7724 = vrot.slane %v7627, 2
        %v7725 = vsel %vm903, %v7722, %v7724
        %v7726 = vrot.slane %v7628, 2
        %v7727 = vrot.slane %v7629, 2
        %v7728 = vsel %vm903, %v7726, %v7727
        %v7729 = vrot.slane %v7630, 2
        %v7730 = vsel %vm903, %v7727, %v7729
        %v7731 = vrot.slane %v7631, 2
        %v7732 = vrot.slane %v7632, 2
        %v7733 = vsel %vm903, %v7731, %v7732
        %v7734 = vrot.slane %v7633, 2
        %v7735 = vsel %vm903, %v7732, %v7734
        %v7736 = vrot.slane %v7634, 2
        %v7737 = vrot.slane %v7635, 2
        %v7738 = vsel %vm903, %v7736, %v7737
        %v7739 = vrot.slane %v7636, 2
        %v7740 = vsel %vm903, %v7737, %v7739
        %v7741 = vrot.slane %v7637, 2
        %v7742 = vrot.slane %v7638, 2
        %v7743 = vsel %vm903, %v7741, %v7742
        %v7744 = vrot.slane %v7639, 2
        %v7745 = vsel %vm903, %v7742, %v7744
        %v7746 = vrot.slane %v7640, 2
        %v7747 = vrot.slane %v7641, 2
        %v7748 = vsel %vm903, %v7746, %v7747
        %v7749 = vrot.slane %v7642, 2
        %v7750 = vsel %vm903, %v7747, %v7749
        %v7751 = vrot.slane %v7643, 2
        %v7752 = vrot.slane %v7644, 2
        %v7753 = vsel %vm903, %v7751, %v7752
        %v7754 = vrot.slane %v7645, 2
        %v7755 = vsel %vm903, %v7752, %v7754
        %v7756 = vrot.slane %v7646, 2
        %v7757 = vrot.slane %v7647, 2
        %v7758 = vsel %vm903, %v7756, %v7757
        %v7759 = vrot.slane %v7648, 2
        %v7760 = vsel %vm903, %v7757, %v7759
        %v7761 = vrot.slane %v7649, 2
        %v7762 = vrot.slane %v7650, 2
        %v7763 = vsel %vm903, %v7761, %v7762
        %v7764 = vrot.slane %v7651, 2
        %v7765 = vsel %vm903, %v7762, %v7764
        %v7766 = vrot.slane %v7652, 2
        %v7767 = vrot.slane %v7653, 2
        %v7768 = vsel %vm903, %v7766, %v7767
        %v7769 = vrot.slane %v7654, 2
        %v7770 = vsel %vm903, %v7767, %v7769
        %v7771 = vrot.slane %v7655, 2
        %v7772 = vrot.slane %v7656, 2
        %v7773 = vsel %vm903, %v7771, %v7772
        %v7774 = vrot.slane %v7657, 2
        %v7775 = vsel %vm903, %v7772, %v7774
        %v7776 = vrot.slane %v7658, 2
        %v7777 = vrot.slane %v7659, 2
        %v7778 = vsel %vm903, %v7776, %v7777
        %v7779 = vrot.slane %v7660, 2
        %v7780 = vsel %vm903, %v7777, %v7779
        %v7781 = vrot.slane %v7661, 2
        %v7782 = vrot.slane %v7662, 2
        %v7783 = vsel %vm903, %v7781, %v7782
        %v7784 = vrot.slane %v7663, 2
        %v7785 = vsel %vm903, %v7782, %v7784
        %v7786 = vrot.slane %v7664, 2
        %v7787 = vrot.slane %v7665, 2
        %v7788 = vsel %vm903, %v7786, %v7787
        %v7789 = vrot.slane %v7666, 2
        %v7790 = vsel %vm903, %v7787, %v7789
        %v7791 = vrot.slane %v7667, 2
        %v7792 = vrot.slane %v7668, 2
        %v7793 = vsel %vm903, %v7791, %v7792
        %v7794 = vrot.slane %v7669, 2
        %v7795 = vsel %vm903, %v7792, %v7794
        %v7796 = vrot.slane %v7670, 2
        %v7797 = vrot.slane %v7671, 2
        %v7798 = vsel %vm903, %v7796, %v7797
        %v7799 = vrot.slane %v7672, 2
        %v7800 = vsel %vm903, %v7797, %v7799
        %v7849 = vadd.f32 %v7571, %v7721
        %v7850 = vadd.f32 %v7572, %v7723
        %v7851 = vadd.f32 %v7573, %v7725
        %v7852 = vadd.f32 %v7574, %v7726
        %v7853 = vadd.f32 %v7575, %v7728
        %v7854 = vadd.f32 %v7576, %v7730
        %v7855 = vadd.f32 %v7577, %v7731
        %v7856 = vadd.f32 %v7578, %v7733
        %v7857 = vadd.f32 %v7579, %v7735
        %v7858 = vadd.f32 %v7580, %v7736
        %v7859 = vadd.f32 %v7581, %v7738
        %v7860 = vadd.f32 %v7582, %v7740
        %v7861 = vadd.f32 %v7583, %v7741
        %v7862 = vadd.f32 %v7584, %v7743
        %v7863 = vadd.f32 %v7585, %v7745
        %v7864 = vadd.f32 %v7586, %v7746
        %v7865 = vadd.f32 %v7587, %v7748
        %v7866 = vadd.f32 %v7588, %v7750
        %v7867 = vadd.f32 %v7589, %v7751
        %v7868 = vadd.f32 %v7590, %v7753
        %v7869 = vadd.f32 %v7591, %v7755
        %v7870 = vadd.f32 %v7592, %v7756
        %v7871 = vadd.f32 %v7593, %v7758
        %v7872 = vadd.f32 %v7594, %v7760
        %v7873 = vadd.f32 %v7595, %v7761
        %v7874 = vadd.f32 %v7596, %v7763
        %v7875 = vadd.f32 %v7597, %v7765
        %v7876 = vadd.f32 %v7598, %v7766
        %v7877 = vadd.f32 %v7599, %v7768
        %v7878 = vadd.f32 %v7600, %v7770
        %v7879 = vadd.f32 %v7601, %v7771
        %v7880 = vadd.f32 %v7602, %v7773
        %v7881 = vadd.f32 %v7603, %v7775
        %v7882 = vadd.f32 %v7604, %v7776
        %v7883 = vadd.f32 %v7605, %v7778
        %v7884 = vadd.f32 %v7606, %v7780
        %v7885 = vadd.f32 %v7607, %v7781
        %v7886 = vadd.f32 %v7608, %v7783
        %v7887 = vadd.f32 %v7609, %v7785
        %v7888 = vadd.f32 %v7610, %v7786
        %v7889 = vadd.f32 %v7611, %v7788
        %v7890 = vadd.f32 %v7612, %v7790
        %v7891 = vadd.f32 %v7613, %v7791
        %v7892 = vadd.f32 %v7614, %v7793
        %v7893 = vadd.f32 %v7615, %v7795
        %v7894 = vadd.f32 %v7616, %v7796
        %v7895 = vadd.f32 %v7617, %v7798
        %v7896 = vadd.f32 %v7618, %v7800
        %vm7897 = vcmask 261127
        %v7898 = vsel %vm7897, %v7849, 0.0
        %7899 = vadd.xlane.f32.xlu0 %v7898
        %v7900 = vpop.xlane.xlu0 %7899
        %v7901 = vsel %vm3833, %v7850, 0.0
        %7902 = vadd.xlane.f32.xlu0 %v7901
        %v7903 = vpop.xlane.xlu0 %7902
        %vm7904 = vcmask 260096
        %v7905 = vsel %vm7904, %v7851, 0.0
        %7906 = vadd.xlane.f32.xlu0 %v7905
        %v7907 = vpop.xlane.xlu0 %7906
        %v7908 = vsel %vm7897, %v7852, 0.0
        %7909 = vadd.xlane.f32.xlu0 %v7908
        %v7910 = vpop.xlane.xlu0 %7909
        %v7911 = vsel %vm3833, %v7853, 0.0
        %7912 = vadd.xlane.f32.xlu0 %v7911
        %v7913 = vpop.xlane.xlu0 %7912
        %v7914 = vsel %vm7904, %v7854, 0.0
        %7915 = vadd.xlane.f32.xlu0 %v7914
        %v7916 = vpop.xlane.xlu0 %7915
        %v7917 = vsel %vm7897, %v7855, 0.0
        %7918 = vadd.xlane.f32.xlu0 %v7917
        %v7919 = vpop.xlane.xlu0 %7918
        %v7920 = vsel %vm3833, %v7856, 0.0
        %7921 = vadd.xlane.f32.xlu0 %v7920
        %v7922 = vpop.xlane.xlu0 %7921
        %v7923 = vsel %vm7904, %v7857, 0.0
        %7924 = vadd.xlane.f32.xlu0 %v7923
        %v7925 = vpop.xlane.xlu0 %7924
        %v7926 = vsel %vm7897, %v7858, 0.0
        %7927 = vadd.xlane.f32.xlu0 %v7926
        %v7928 = vpop.xlane.xlu0 %7927
        %v7929 = vsel %vm3833, %v7859, 0.0
        %7930 = vadd.xlane.f32.xlu0 %v7929
        %v7931 = vpop.xlane.xlu0 %7930
        %v7932 = vsel %vm7904, %v7860, 0.0
        %7933 = vadd.xlane.f32.xlu0 %v7932
        %v7934 = vpop.xlane.xlu0 %7933
        %v7935 = vsel %vm7897, %v7861, 0.0
        %7936 = vadd.xlane.f32.xlu0 %v7935
        %v7937 = vpop.xlane.xlu0 %7936
        %v7938 = vsel %vm3833, %v7862, 0.0
        %7939 = vadd.xlane.f32.xlu0 %v7938
        %v7940 = vpop.xlane.xlu0 %7939
        %v7941 = vsel %vm7904, %v7863, 0.0
        %7942 = vadd.xlane.f32.xlu0 %v7941
        %v7943 = vpop.xlane.xlu0 %7942
        %v7944 = vsel %vm7897, %v7864, 0.0
        %7945 = vadd.xlane.f32.xlu0 %v7944
        %v7946 = vpop.xlane.xlu0 %7945
        %v7947 = vsel %vm3833, %v7865, 0.0
        %7948 = vadd.xlane.f32.xlu0 %v7947
        %v7949 = vpop.xlane.xlu0 %7948
        %v7950 = vsel %vm7904, %v7866, 0.0
        %7951 = vadd.xlane.f32.xlu0 %v7950
        %v7952 = vpop.xlane.xlu0 %7951
        %v7953 = vsel %vm7897, %v7867, 0.0
        %7954 = vadd.xlane.f32.xlu0 %v7953
        %v7955 = vpop.xlane.xlu0 %7954
        %v7956 = vsel %vm3833, %v7868, 0.0
        %7957 = vadd.xlane.f32.xlu0 %v7956
        %v7958 = vpop.xlane.xlu0 %7957
        %v7959 = vsel %vm7904, %v7869, 0.0
        %7960 = vadd.xlane.f32.xlu0 %v7959
        %v7961 = vpop.xlane.xlu0 %7960
        %v7962 = vsel %vm7897, %v7870, 0.0
        %7963 = vadd.xlane.f32.xlu0 %v7962
        %v7964 = vpop.xlane.xlu0 %7963
        %v7965 = vsel %vm3833, %v7871, 0.0
        %7966 = vadd.xlane.f32.xlu0 %v7965
        %v7967 = vpop.xlane.xlu0 %7966
        %v7968 = vsel %vm7904, %v7872, 0.0
        %7969 = vadd.xlane.f32.xlu0 %v7968
        %v7970 = vpop.xlane.xlu0 %7969
        %v7971 = vsel %vm7897, %v7873, 0.0
        %7972 = vadd.xlane.f32.xlu0 %v7971
        %v7973 = vpop.xlane.xlu0 %7972
        %v7974 = vsel %vm3833, %v7874, 0.0
        %7975 = vadd.xlane.f32.xlu0 %v7974
        %v7976 = vpop.xlane.xlu0 %7975
        %v7977 = vsel %vm7904, %v7875, 0.0
        %7978 = vadd.xlane.f32.xlu0 %v7977
        %v7979 = vpop.xlane.xlu0 %7978
        %v7980 = vsel %vm7897, %v7876, 0.0
        %7981 = vadd.xlane.f32.xlu0 %v7980
        %v7982 = vpop.xlane.xlu0 %7981
        %v7983 = vsel %vm3833, %v7877, 0.0
        %7984 = vadd.xlane.f32.xlu0 %v7983
        %v7985 = vpop.xlane.xlu0 %7984
        %v7986 = vsel %vm7904, %v7878, 0.0
        %7987 = vadd.xlane.f32.xlu0 %v7986
        %v7988 = vpop.xlane.xlu0 %7987
        %v7989 = vsel %vm7897, %v7879, 0.0
        %7990 = vadd.xlane.f32.xlu0 %v7989
        %v7991 = vpop.xlane.xlu0 %7990
        %v7992 = vsel %vm3833, %v7880, 0.0
        %7993 = vadd.xlane.f32.xlu0 %v7992
        %v7994 = vpop.xlane.xlu0 %7993
        %v7995 = vsel %vm7904, %v7881, 0.0
        %7996 = vadd.xlane.f32.xlu0 %v7995
        %v7997 = vpop.xlane.xlu0 %7996
        %v7998 = vsel %vm7897, %v7882, 0.0
        %7999 = vadd.xlane.f32.xlu0 %v7998
        %v8000 = vpop.xlane.xlu0 %7999
        %v8001 = vsel %vm3833, %v7883, 0.0
        %8002 = vadd.xlane.f32.xlu0 %v8001
        %v8003 = vpop.xlane.xlu0 %8002
        %v8004 = vsel %vm7904, %v7884, 0.0
        %8005 = vadd.xlane.f32.xlu0 %v8004
        %v8006 = vpop.xlane.xlu0 %8005
        %v8007 = vsel %vm7897, %v7885, 0.0
        %8008 = vadd.xlane.f32.xlu0 %v8007
        %v8009 = vpop.xlane.xlu0 %8008
        %v8010 = vsel %vm3833, %v7886, 0.0
        %8011 = vadd.xlane.f32.xlu0 %v8010
        %v8012 = vpop.xlane.xlu0 %8011
        %v8013 = vsel %vm7904, %v7887, 0.0
        %8014 = vadd.xlane.f32.xlu0 %v8013
        %v8015 = vpop.xlane.xlu0 %8014
        %v8016 = vsel %vm7897, %v7888, 0.0
        %8017 = vadd.xlane.f32.xlu0 %v8016
        %v8018 = vpop.xlane.xlu0 %8017
        %v8019 = vsel %vm3833, %v7889, 0.0
        %8020 = vadd.xlane.f32.xlu0 %v8019
        %v8021 = vpop.xlane.xlu0 %8020
        %v8022 = vsel %vm7904, %v7890, 0.0
        %8023 = vadd.xlane.f32.xlu0 %v8022
        %v8024 = vpop.xlane.xlu0 %8023
        %v8025 = vsel %vm7897, %v7891, 0.0
        %8026 = vadd.xlane.f32.xlu0 %v8025
        %v8027 = vpop.xlane.xlu0 %8026
        %v8028 = vsel %vm3833, %v7892, 0.0
        %8029 = vadd.xlane.f32.xlu0 %v8028
        %v8030 = vpop.xlane.xlu0 %8029
        %v8031 = vsel %vm7904, %v7893, 0.0
        %8032 = vadd.xlane.f32.xlu0 %v8031
        %v8033 = vpop.xlane.xlu0 %8032
        %v8034 = vsel %vm7897, %v7894, 0.0
        %8035 = vadd.xlane.f32.xlu0 %v8034
        %v8036 = vpop.xlane.xlu0 %8035
        %v8037 = vsel %vm3833, %v7895, 0.0
        %8038 = vadd.xlane.f32.xlu0 %v8037
        %v8039 = vpop.xlane.xlu0 %8038
        %v8040 = vsel %vm7904, %v7896, 0.0
        %8041 = vadd.xlane.f32.xlu0 %v8040
        %v8042 = vpop.xlane.xlu0 %8041
        %s8043 = sld [smem:[#allocation4]]
        %v8044 = vstv %s8043
        %v8045 = vadd.f32 %v7900, %v8044
        %v8046 = vadd.f32 %v7903, %v8044
        %v8047 = vadd.f32 %v7907, %v8044
        %v8048 = vadd.f32 %v7910, %v8044
        %v8049 = vadd.f32 %v7913, %v8044
        %v8050 = vadd.f32 %v7916, %v8044
        %v8051 = vadd.f32 %v7919, %v8044
        %v8052 = vadd.f32 %v7922, %v8044
        %v8053 = vadd.f32 %v7925, %v8044
        %v8054 = vadd.f32 %v7928, %v8044
        %v8055 = vadd.f32 %v7931, %v8044
        %v8056 = vadd.f32 %v7934, %v8044
        %v8057 = vadd.f32 %v7937, %v8044
        %v8058 = vadd.f32 %v7940, %v8044
        %v8059 = vadd.f32 %v7943, %v8044
        %v8060 = vadd.f32 %v7946, %v8044
        %v8061 = vadd.f32 %v7949, %v8044
        %v8062 = vadd.f32 %v7952, %v8044
        %v8063 = vadd.f32 %v7955, %v8044
        %v8064 = vadd.f32 %v7958, %v8044
        %v8065 = vadd.f32 %v7961, %v8044
        %v8066 = vadd.f32 %v7964, %v8044
        %v8067 = vadd.f32 %v7967, %v8044
        %v8068 = vadd.f32 %v7970, %v8044
        %v8069 = vadd.f32 %v7973, %v8044
        %v8070 = vadd.f32 %v7976, %v8044
        %v8071 = vadd.f32 %v7979, %v8044
        %v8072 = vadd.f32 %v7982, %v8044
        %v8073 = vadd.f32 %v7985, %v8044
        %v8074 = vadd.f32 %v7988, %v8044
        %v8075 = vadd.f32 %v7991, %v8044
        %v8076 = vadd.f32 %v7994, %v8044
        %v8077 = vadd.f32 %v7997, %v8044
        %v8078 = vadd.f32 %v8000, %v8044
        %v8079 = vadd.f32 %v8003, %v8044
        %v8080 = vadd.f32 %v8006, %v8044
        %v8081 = vadd.f32 %v8009, %v8044
        %v8082 = vadd.f32 %v8012, %v8044
        %v8083 = vadd.f32 %v8015, %v8044
        %v8084 = vadd.f32 %v8018, %v8044
        %v8085 = vadd.f32 %v8021, %v8044
        %v8086 = vadd.f32 %v8024, %v8044
        %v8087 = vadd.f32 %v8027, %v8044
        %v8088 = vadd.f32 %v8030, %v8044
        %v8089 = vadd.f32 %v8033, %v8044
        %v8090 = vadd.f32 %v8036, %v8044
        %v8091 = vadd.f32 %v8039, %v8044
        %v8092 = vadd.f32 %v8042, %v8044
        %v8093 = vpack.c.bf16 %v8045, %v8045
        %v8094 = vpack.c.bf16 %v8046, %v8046
        %v8095 = vpack.c.bf16 %v8047, %v8047
        %v8096 = vpack.c.bf16 %v8048, %v8048
        %v8097 = vpack.c.bf16 %v8049, %v8049
        %v8098 = vpack.c.bf16 %v8050, %v8050
        %v8099 = vpack.c.bf16 %v8051, %v8051
        %v8100 = vpack.c.bf16 %v8052, %v8052
        %v8101 = vpack.c.bf16 %v8053, %v8053
        %v8102 = vpack.c.bf16 %v8054, %v8054
        %v8103 = vpack.c.bf16 %v8055, %v8055
        %v8104 = vpack.c.bf16 %v8056, %v8056
        %v8105 = vpack.c.bf16 %v8057, %v8057
        %v8106 = vpack.c.bf16 %v8058, %v8058
        %v8107 = vpack.c.bf16 %v8059, %v8059
        %v8108 = vpack.c.bf16 %v8060, %v8060
        %v8109 = vpack.c.bf16 %v8061, %v8061
        %v8110 = vpack.c.bf16 %v8062, %v8062
        %v8111 = vpack.c.bf16 %v8063, %v8063
        %v8112 = vpack.c.bf16 %v8064, %v8064
        %v8113 = vpack.c.bf16 %v8065, %v8065
        %v8114 = vpack.c.bf16 %v8066, %v8066
        %v8115 = vpack.c.bf16 %v8067, %v8067
        %v8116 = vpack.c.bf16 %v8068, %v8068
        %v8117 = vpack.c.bf16 %v8069, %v8069
        %v8118 = vpack.c.bf16 %v8070, %v8070
        %v8119 = vpack.c.bf16 %v8071, %v8071
        %v8120 = vpack.c.bf16 %v8072, %v8072
        %v8121 = vpack.c.bf16 %v8073, %v8073
        %v8122 = vpack.c.bf16 %v8074, %v8074
        %v8123 = vpack.c.bf16 %v8075, %v8075
        %v8124 = vpack.c.bf16 %v8076, %v8076
        %v8125 = vpack.c.bf16 %v8077, %v8077
        %v8126 = vpack.c.bf16 %v8078, %v8078
        %v8127 = vpack.c.bf16 %v8079, %v8079
        %v8128 = vpack.c.bf16 %v8080, %v8080
        %v8129 = vpack.c.bf16 %v8081, %v8081
        %v8130 = vpack.c.bf16 %v8082, %v8082
        %v8131 = vpack.c.bf16 %v8083, %v8083
        %v8132 = vpack.c.bf16 %v8084, %v8084
        %v8133 = vpack.c.bf16 %v8085, %v8085
        %v8134 = vpack.c.bf16 %v8086, %v8086
        %v8135 = vpack.c.bf16 %v8087, %v8087
        %v8136 = vpack.c.bf16 %v8088, %v8088
        %v8137 = vpack.c.bf16 %v8089, %v8089
        %v8138 = vpack.c.bf16 %v8090, %v8090
        %v8139 = vpack.c.bf16 %v8091, %v8091
        %v8140 = vpack.c.bf16 %v8092, %v8092
        %v8189 = vunpack.c.l.b16 %v8093
        %v8190 = vunpack.c.l.b16 %v8094
        %v8191 = vunpack.c.l.b16 %v8095
        %v8192 = vunpack.c.l.b16 %v8096
        %v8193 = vunpack.c.l.b16 %v8097
        %v8194 = vunpack.c.l.b16 %v8098
        %v8195 = vunpack.c.l.b16 %v8099
        %v8196 = vunpack.c.l.b16 %v8100
        %v8197 = vunpack.c.l.b16 %v8101
        %v8198 = vunpack.c.l.b16 %v8102
        %v8199 = vunpack.c.l.b16 %v8103
        %v8200 = vunpack.c.l.b16 %v8104
        %v8201 = vunpack.c.l.b16 %v8105
        %v8202 = vunpack.c.l.b16 %v8106
        %v8203 = vunpack.c.l.b16 %v8107
        %v8204 = vunpack.c.l.b16 %v8108
        %v8205 = vunpack.c.l.b16 %v8109
        %v8206 = vunpack.c.l.b16 %v8110
        %v8207 = vunpack.c.l.b16 %v8111
        %v8208 = vunpack.c.l.b16 %v8112
        %v8209 = vunpack.c.l.b16 %v8113
        %v8210 = vunpack.c.l.b16 %v8114
        %v8211 = vunpack.c.l.b16 %v8115
        %v8212 = vunpack.c.l.b16 %v8116
        %v8213 = vunpack.c.l.b16 %v8117
        %v8214 = vunpack.c.l.b16 %v8118
        %v8215 = vunpack.c.l.b16 %v8119
        %v8216 = vunpack.c.l.b16 %v8120
        %v8217 = vunpack.c.l.b16 %v8121
        %v8218 = vunpack.c.l.b16 %v8122
        %v8219 = vunpack.c.l.b16 %v8123
        %v8220 = vunpack.c.l.b16 %v8124
        %v8221 = vunpack.c.l.b16 %v8125
        %v8222 = vunpack.c.l.b16 %v8126
        %v8223 = vunpack.c.l.b16 %v8127
        %v8224 = vunpack.c.l.b16 %v8128
        %v8225 = vunpack.c.l.b16 %v8129
        %v8226 = vunpack.c.l.b16 %v8130
        %v8227 = vunpack.c.l.b16 %v8131
        %v8228 = vunpack.c.l.b16 %v8132
        %v8229 = vunpack.c.l.b16 %v8133
        %v8230 = vunpack.c.l.b16 %v8134
        %v8231 = vunpack.c.l.b16 %v8135
        %v8232 = vunpack.c.l.b16 %v8136
        %v8233 = vunpack.c.l.b16 %v8137
        %v8234 = vunpack.c.l.b16 %v8138
        %v8235 = vunpack.c.l.b16 %v8139
        %v8236 = vunpack.c.l.b16 %v8140
        %v8237 = vlaneseq
        %v8238 = vand.u32 %v8237, 127
        %v8239 = vadd.s32 %v8238, 7
        %v8240 = vperm.slane %v8189, %v8239
        %v8241 = vadd.s32 %v8238, 4294967295
        %v8242 = vperm.slane %v8190, %v8241
        %vm8243 = vcmask 72712
        %v8244 = vsel %vm8243, %v8242, %v8240
        %v8245 = vadd.s32 %v8238, 4294967287
        %v8246 = vperm.slane %v8191, %v8245
        %vm8247 = vcmask 138312
        %v8248 = vsel %vm8247, %v8246, %v8244
        %v8249 = vperm.slane %v8192, %v8239
        %v8250 = vperm.slane %v8193, %v8241
        %v8251 = vsel %vm8243, %v8250, %v8249
        %v8252 = vperm.slane %v8194, %v8245
        %v8253 = vsel %vm8247, %v8252, %v8251
        %v8254 = vperm.slane %v8195, %v8239
        %v8255 = vperm.slane %v8196, %v8241
        %v8256 = vsel %vm8243, %v8255, %v8254
        %v8257 = vperm.slane %v8197, %v8245
        %v8258 = vsel %vm8247, %v8257, %v8256
        %v8259 = vperm.slane %v8198, %v8239
        %v8260 = vperm.slane %v8199, %v8241
        %v8261 = vsel %vm8243, %v8260, %v8259
        %v8262 = vperm.slane %v8200, %v8245
        %v8263 = vsel %vm8247, %v8262, %v8261
        %v8264 = vperm.slane %v8201, %v8239
        %v8265 = vperm.slane %v8202, %v8241
        %v8266 = vsel %vm8243, %v8265, %v8264
        %v8267 = vperm.slane %v8203, %v8245
        %v8268 = vsel %vm8247, %v8267, %v8266
        %v8269 = vperm.slane %v8204, %v8239
        %v8270 = vperm.slane %v8205, %v8241
        %v8271 = vsel %vm8243, %v8270, %v8269
        %v8272 = vperm.slane %v8206, %v8245
        %v8273 = vsel %vm8247, %v8272, %v8271
        %v8274 = vperm.slane %v8207, %v8239
        %v8275 = vperm.slane %v8208, %v8241
        %v8276 = vsel %vm8243, %v8275, %v8274
        %v8277 = vperm.slane %v8209, %v8245
        %v8278 = vsel %vm8247, %v8277, %v8276
        %v8279 = vperm.slane %v8210, %v8239
        %v8280 = vperm.slane %v8211, %v8241
        %v8281 = vsel %vm8243, %v8280, %v8279
        %v8282 = vperm.slane %v8212, %v8245
        %v8283 = vsel %vm8247, %v8282, %v8281
        %v8284 = vperm.slane %v8213, %v8239
        %v8285 = vperm.slane %v8214, %v8241
        %v8286 = vsel %vm8243, %v8285, %v8284
        %v8287 = vperm.slane %v8215, %v8245
        %v8288 = vsel %vm8247, %v8287, %v8286
        %v8289 = vperm.slane %v8216, %v8239
        %v8290 = vperm.slane %v8217, %v8241
        %v8291 = vsel %vm8243, %v8290, %v8289
        %v8292 = vperm.slane %v8218, %v8245
        %v8293 = vsel %vm8247, %v8292, %v8291
        %v8294 = vperm.slane %v8219, %v8239
        %v8295 = vperm.slane %v8220, %v8241
        %v8296 = vsel %vm8243, %v8295, %v8294
        %v8297 = vperm.slane %v8221, %v8245
        %v8298 = vsel %vm8247, %v8297, %v8296
        %v8299 = vperm.slane %v8222, %v8239
        %v8300 = vperm.slane %v8223, %v8241
        %v8301 = vsel %vm8243, %v8300, %v8299
        %v8302 = vperm.slane %v8224, %v8245
        %v8303 = vsel %vm8247, %v8302, %v8301
        %v8304 = vperm.slane %v8225, %v8239
        %v8305 = vperm.slane %v8226, %v8241
        %v8306 = vsel %vm8243, %v8305, %v8304
        %v8307 = vperm.slane %v8227, %v8245
        %v8308 = vsel %vm8247, %v8307, %v8306
        %v8309 = vperm.slane %v8228, %v8239
        %v8310 = vperm.slane %v8229, %v8241
        %v8311 = vsel %vm8243, %v8310, %v8309
        %v8312 = vperm.slane %v8230, %v8245
        %v8313 = vsel %vm8247, %v8312, %v8311
        %v8314 = vperm.slane %v8231, %v8239
        %v8315 = vperm.slane %v8232, %v8241
        %v8316 = vsel %vm8243, %v8315, %v8314
        %v8317 = vperm.slane %v8233, %v8245
        %v8318 = vsel %vm8247, %v8317, %v8316
        %v8319 = vperm.slane %v8234, %v8239
        %v8320 = vperm.slane %v8235, %v8241
        %v8321 = vsel %vm8243, %v8320, %v8319
        %v8322 = vperm.slane %v8236, %v8245
        %v8323 = vsel %vm8247, %v8322, %v8321
        %vm8324 = vcmask 1041409
        %v8325 = vsel %vm8324, %v8253, %v8248
        %vm8326 = vcmask 1042434
        %v8327 = vsel %vm8326, %v8258, %v8325
        %vm8328 = vcmask 1043459
        %v8329 = vsel %vm8328, %v8263, %v8327
        %vm8330 = vcmask 1044484
        %v8331 = vsel %vm8330, %v8268, %v8329
        %vm8332 = vcmask 1045509
        %v8333 = vsel %vm8332, %v8273, %v8331
        %vm8334 = vcmask 1046534
        %v8335 = vsel %vm8334, %v8278, %v8333
        %vm8336 = vcmask 1047559
        %v8337 = vsel %vm8336, %v8283, %v8335
        %v8338 = vsel %vm8324, %v8293, %v8288
        %v8339 = vsel %vm8326, %v8298, %v8338
        %v8340 = vsel %vm8328, %v8303, %v8339
        %v8341 = vsel %vm8330, %v8308, %v8340
        %v8342 = vsel %vm8332, %v8313, %v8341
        %v8343 = vsel %vm8334, %v8318, %v8342
        %v8344 = vsel %vm8336, %v8323, %v8343
        %v8345 = vpack.c.b16 %v8337, %v8337
        %v8346 = vpack.c.b16 %v8344, %v8344
        %vm8349 = vcmask 125952
        %8350 = vst.msk [vmem:[%s291] sm:$0xf] %vm8349, %v8345
        %8351 = vst.msk [vmem:[%s291 + $0x4] sm:$0xf] %vm8349, %v8346
        %s8352 = sand.u32 %s198, 1
        %s8353 = scalar_lea.sflag [#allocation6], %s8352
        %s8354 = sand.u32 %s198, 1
        %s8355 = smul.addr %s8354, 8
        %s8356 = scalar_lea.vmem [#allocation5], %s8355
        // Predicated region
        $region49: #{rmvpe_forward.1} parent=47 // pred_check
          %p8357 = pneg %p208
        $region50: #{rmvpe_forward.1} parent=47 // pred_check_branch
          %8359 = sbr.rel (%p8357) target = $region52
        $region51: #{rmvpe_forward.1} parent=47 // pred_region
          %s8360 = sadd.s32 %s26, %s27
          %8362 = vsyncadd %s8353, 0
          %s8363 = smul.addr %s8360, 2
          %s8364 = smul.addr %s8363, 4
          %s8365 = scalar_lea.hbm %s7, %s8364
          %s8366 = sshll.u32 %s8356, 4
          %s8367 = int_to_ptr.vmem [resolvable:$true] %s8366
          %s8368 = sshll.u32 %s8365, 4
          %s8369 = int_to_ptr.hbm [resolvable:$true] %s8368
          %8374 = dma.vmem_to_hbm [thread:$0]  %s8367, 128, %s8369, %s8353, 64, 64, 4
        $region52: #{rmvpe_forward.1} parent=47 // pred_fallthru
          _
      $region48: #{rmvpe_forward.1} parent=5 // pred_fallthru
        _
      %p8375 = scmp.le.s32.totalorder 2, %s17
      // Predicated region
      $region53: #{rmvpe_forward.1} parent=5 // pred_check
        %p8376 = pneg %p8375
      $region54: #{rmvpe_forward.1} parent=5 // pred_check_branch
        %8378 = sbr.rel (%p8376) target = $region56
      $region55: #{rmvpe_forward.1} parent=5 // pred_region
        %s8379 = ssub.s32 %s17, 2
        // Predicated region
        $region57: #{rmvpe_forward.1} parent=55 // pred_check
          %p8380 = pneg %p214
        $region58: #{rmvpe_forward.1} parent=55 // pred_check_branch
          %8382 = sbr.rel (%p8380) target = $region60
        $region59: #{rmvpe_forward.1} parent=55 // pred_region
          %s8383 = sand.u32 %s199, 1
          %s8384 = scalar_lea.sflag [#allocation6], %s8383
          %s8385 = sand.u32 %s199, 1
          %s8386 = smul.addr %s8385, 8
          %s8387 = scalar_lea.vmem [#allocation5], %s8386
          %8389 = dma.done %s8384, 128
        $region60: #{rmvpe_forward.1} parent=55 // pred_fallthru
          _
      $region56: #{rmvpe_forward.1} parent=5 // pred_fallthru
        _
    $region6: #{rmvpe_forward.1} parent=1 // loop_footer
      %s21 = sadd.s32 1, %s17
    $region7: #{rmvpe_forward.1} parent=1 // loop_footer_branch
      %16 = sbr.rel target = $region3
    $region8: #{rmvpe_forward.1} parent=1 // loop_exit
      _
    %8390 = vsyncpa [#allocation6], 1
    %s8391 = scalar_lea.sflag [#allocation6], 1
    %8392 = vsyncpa %s8391, 1

</llo_original>
